<compile_context>
chip_gen: v7x
topology: tpu7x:2x2x1
jax: 0.10.0
libtpu: 0.0.40
codegen_flags: <defaults>
</compile_context>

<pallas_src>
import functools

import jax
import jax.numpy as jnp
from jax.experimental import pallas as pl
from jax.experimental.pallas import tpu as pltpu

EPS = 1e-5


def _round_up(x, m):
    return ((x + m - 1) // m) * m


# ----------------------------- Pallas kernels ------------------------------ #

def _conv_bn_stats_kernel(ph_ref, xc_ref, nh_ref, mp_ref, mc_ref, mn_ref,
                          ps_ref, pt_ref, w_ref, b_ref,
                          y_ref, st_ref, act_ref, lhs_ref, *, apply_pre, W, HALO):
    """One TF-row tile: (optional folded-BN affine + ReLU) -> 3x3 conv -> bias -> stats.

    ph/xc/nh : (1, HALO|TF|HALO, CP) f32  previous-halo / current / next-halo row blocks
    mp/mc/mn : (HALO|TF|HALO, 1)     f32  interior-pixel mask for the same rows
    ps/pt    : (1, CP)               f32  pre-affine scale/shift (BN1 folded); used iff apply_pre
    w_ref    : (9*CP, CP)            bf16 conv taps, rows (tap-major, cin), cols cout
    b_ref    : (1, CP)               f32  conv bias
    y_ref    : (1, TF, CP)           f32  conv output rows of this tile (border rows = 0)
    st_ref   : (1, 2, CP)            f32  row 0 = sum(y), row 1 = sum(y*y) over this tile
    act_ref  : (TF + 2*HALO, CP)     bf16 scratch: pre-activated window (halo + tile + halo)
    lhs_ref  : (TF, 9*CP)            bf16 scratch: K-folded conv LHS
    """
    TF = xc_ref.shape[1]
    CP = xc_ref.shape[2]

    def activate(v, m):
        if apply_pre:                                       # fused BN1 affine + ReLU + border mask
            v = jnp.maximum(v * ps_ref[...] + pt_ref[...], 0.0) * m
        return v.astype(jnp.bfloat16)                       # cast once; MXU operands are bf16

    # Assemble the pre-activated window: one pass / one bf16 store per slab, no zeroing.
    act_ref[0:HALO, :] = activate(ph_ref[0], mp_ref[...])
    act_ref[HALO:HALO + TF, :] = activate(xc_ref[0], mc_ref[...])
    act_ref[HALO + TF:HALO + TF + HALO, :] = activate(nh_ref[0], mn_ref[...])

    # Fold the 9 taps into K: column group t holds the window shifted by that tap's offset,
    # so the whole 3x3 conv is a single (TF, 9*CP) @ (9*CP, CP) MXU matmul (f32 accumulate)
    # instead of 9 small dots read-modify-writing the output block.
    for kh in range(3):
        for kw in range(3):
            t = kh * 3 + kw
            delta = (kh - 1) * (W + 2) + (kw - 1)
            lhs_ref[:, t * CP:(t + 1) * CP] = act_ref[HALO + delta:HALO + delta + TF, :]

    acc = jnp.dot(lhs_ref[...], w_ref[...], preferred_element_type=jnp.float32)
    y = (acc + b_ref[...]) * mc_ref[...]                    # bias; border rows stay exactly 0
    y_ref[0] = y                                            # single output store per tile

    # Per-tile partial BatchNorm statistics (border rows contribute 0).
    # TODO(synk): use centered / Welford partials if N*H*W grows enough for
    #             E[x^2] - E[x]^2 cancellation to matter.
    st_ref[0, 0:1, :] = jnp.sum(y, axis=0, keepdims=True)
    st_ref[0, 1:2, :] = jnp.sum(y * y, axis=0, keepdims=True)


def _bn_residual_kernel(y_ref, s_ref, t_ref, r_ref, o_ref):
    """out = y * scale + shift + residual (lane-dense elementwise, tiled)."""
    o_ref[0] = y_ref[0] * s_ref[...] + t_ref[...] + r_ref[0]


# --------------------------- pallas_call wrappers --------------------------- #

def _conv_bn_stats(xf, pre_scale, pre_shift, mask, w_big, bias, *, W, HALO, TF, apply_pre):
    N, RP, CP = xf.shape
    n_tiles = RP // TF
    R = TF // HALO                 # halo-sized blocks per tile
    NB = RP // HALO                # halo-sized blocks per image

    kernel = functools.partial(_conv_bn_stats_kernel, apply_pre=apply_pre, W=W, HALO=HALO)

    cur3 = lambda n, t: (n, t, 0)
    prev3 = lambda n, t: (n, jnp.maximum(t * R - 1, 0), 0)   # clamped rows feed masked outputs only
    next3 = lambda n, t: (n, jnp.minimum(t * R + R, NB - 1), 0)
    curm = lambda n, t: (t, 0)
    prevm = lambda n, t: (jnp.maximum(t * R - 1, 0), 0)
    nextm = lambda n, t: (jnp.minimum(t * R + R, NB - 1), 0)
    const2 = lambda n, t: (0, 0)

    # Explicit scoped-VMEM limit sized from the actual blocks (with margin), >= 32 MiB.
    blk_bytes = (2 * ((TF + 2 * HALO) * CP * 4 + (TF + 2 * HALO) * 4 + 2 * CP * 4
                      + 9 * CP * CP * 2 + CP * 4 + TF * CP * 4 + 2 * CP * 4)
                 + (TF + 2 * HALO) * CP * 2 + TF * 9 * CP * 2)
    vlim = int(min(max(2 * blk_bytes, 32 * 1024 * 1024), 128 * 1024 * 1024))

    flops = 2 * N * RP * CP * CP * 9
    bytes_accessed = int(N * RP * CP * 4 * (2 + 2 * HALO / TF)) + 9 * CP * CP * 2

    # NOTE: grid-invariant operands (weights, bias, pre-affine) could be single-buffered
    # (pipeline_mode=pl.Buffered(1)) to reclaim VMEM headroom at large CP; left default.
    return pl.pallas_call(
        kernel,
        out_shape=(jax.ShapeDtypeStruct((N, RP, CP), jnp.float32),
                   jax.ShapeDtypeStruct((N * n_tiles, 2, CP), jnp.float32)),
        grid=(N, n_tiles),
        in_specs=[
            pl.BlockSpec((1, HALO, CP), prev3),      # previous-tile halo rows
            pl.BlockSpec((1, TF, CP), cur3),         # this tile's rows (streams)
            pl.BlockSpec((1, HALO, CP), next3),      # next-tile halo rows
            pl.BlockSpec((HALO, 1), prevm),          # interior mask for the halo rows
            pl.BlockSpec((TF, 1), curm),             # interior mask for this tile
            pl.BlockSpec((HALO, 1), nextm),
            pl.BlockSpec((1, CP), const2),           # pre-affine scale (grid-invariant)
            pl.BlockSpec((1, CP), const2),           # pre-affine shift (grid-invariant)
            pl.BlockSpec((9 * CP, CP), const2),      # K-folded conv taps (grid-invariant)
            pl.BlockSpec((1, CP), const2),           # conv bias (grid-invariant)
        ],
        out_specs=(
            pl.BlockSpec((1, TF, CP), cur3),
            pl.BlockSpec((1, 2, CP), lambda n, t: (n * n_tiles + t, 0, 0)),
        ),
        scratch_shapes=[pltpu.VMEM((TF + 2 * HALO, CP), jnp.bfloat16),
                        pltpu.VMEM((TF, 9 * CP), jnp.bfloat16)],
        compiler_params=pltpu.CompilerParams(
            dimension_semantics=("parallel", "parallel"),
            vmem_limit_bytes=vlim),
        cost_estimate=pl.CostEstimate(flops=flops, transcendentals=0,
                                      bytes_accessed=bytes_accessed),
    )(xf, xf, xf, mask, mask, mask, pre_scale, pre_shift, w_big, bias)


def _bn_residual(y, scale, shift, res, *, TF):
    N, RP, CP = y.shape
    n_tiles = RP // TF
    tile = lambda n, t: (n, t, 0)
    const2 = lambda n, t: (0, 0)
    return pl.pallas_call(
        _bn_residual_kernel,
        out_shape=jax.ShapeDtypeStruct((N, RP, CP), jnp.float32),
        grid=(N, n_tiles),
        in_specs=[
            pl.BlockSpec((1, TF, CP), tile),
            pl.BlockSpec((1, CP), const2),
            pl.BlockSpec((1, CP), const2),
            pl.BlockSpec((1, TF, CP), tile),
        ],
        out_specs=pl.BlockSpec((1, TF, CP), tile),
        input_output_aliases={0: 0},   # BN2 + residual written in place over y2
        compiler_params=pltpu.CompilerParams(
            dimension_semantics=("parallel", "parallel")),
        cost_estimate=pl.CostEstimate(flops=3 * N * RP * CP, transcendentals=0,
                                      bytes_accessed=3 * N * RP * CP * 4),
    )(y, scale, shift, res)


def _fold_bn(stats, gamma_p, beta_p, count):
    """Fold per-tile (sum, sumsq) partials into a per-channel affine (scale, shift)."""
    ssum = jnp.sum(stats[:, 0, :], axis=0)
    ssq = jnp.sum(stats[:, 1, :], axis=0)
    mean = ssum / count
    var = jnp.maximum(ssq / count - mean * mean, 0.0)        # biased batch variance
    scale = gamma_p * jax.lax.rsqrt(var + EPS)
    shift = beta_p - mean * scale
    cp = scale.shape[0]
    return scale.reshape(1, cp), shift.reshape(1, cp)


# ------------------------------ Forward pass -------------------------------- #

def resblock_forward(x_nchw, params):
    """Pallas-backed ResBlock forward.  x_nchw: (N, C, H, W) float32."""
    N, C, H, W = x_nchw.shape
    # Lane-dense channel padding (multiples of 256 once real C exceeds 128, per 256-wide MXUs).
    CP = 128 if C <= 128 else _round_up(C, 256)
    # TODO(synk): for C << 128 a W*C lane packing (or tap-expanded channels on lanes) would
    #             avoid the ~CP/C inflation of HBM traffic and MXU work from channel padding.
    Rp = (H + 2) * (W + 2)                 # flat rows of one spatially padded image
    HALO = _round_up(W + 3, 16)            # halo rows a 3x3 conv needs in the flat layout
    TF = _round_up(min(2048, max(HALO, (Rp + 1) // 2)), HALO)  # rows per grid tile
    RP = _round_up(Rp, TF)                 # padded row count (multiple of the tile)
    count = float(N * H * W)               # BN population size (interior pixels only)

    # NCHW -> flat padded-row layout (N, RP, CP): zero spatial border, zero channel/tail pad.
    x = jnp.transpose(x_nchw, (0, 2, 3, 1)).astype(jnp.float32)        # NHWC
    xp = jnp.pad(x, ((0, 0), (1, 1), (1, 1), (0, CP - C)))             # (N, H+2, W+2, CP)
    xf = jnp.pad(xp.reshape(N, Rp, CP), ((0, 0), (0, RP - Rp), (0, 0)))

    # Interior-pixel mask over flat rows.
    m2 = jnp.zeros((H + 2, W + 2), jnp.float32).at[1:H + 1, 1:W + 1].set(1.0)
    mask = jnp.pad(m2.reshape(Rp, 1), ((0, RP - Rp), (0, 0)))

    def prep_w(w_oihw):   # PyTorch OIHW -> (9*CP, CP) bf16, rows (tap-major, cin), cols cout
        w9 = jnp.transpose(w_oihw, (2, 3, 1, 0)).reshape(9, C, C)
        w9 = jnp.pad(w9, ((0, 0), (0, CP - C), (0, CP - C)))
        return w9.reshape(9 * CP, CP).astype(jnp.bfloat16)

    def pad_c(v):
        return jnp.pad(v.astype(jnp.float32), (0, CP - C))

    w1, w2 = prep_w(params["w1"]), prep_w(params["w2"])
    b1 = pad_c(params["b1"]).reshape(1, CP)
    b2 = pad_c(params["b2"]).reshape(1, CP)
    g1, be1 = pad_c(params["g1"]), pad_c(params["be1"])
    g2, be2 = pad_c(params["g2"]), pad_c(params["be2"])

    ones = jnp.ones((1, CP), jnp.float32)
    zeros = jnp.zeros((1, CP), jnp.float32)

    # Stage 1: conv1 + bias + per-tile BN statistics (no pre-affine, borders already zero).
    y1, st1 = _conv_bn_stats(xf, ones, zeros, mask, w1, b1,
                             W=W, HALO=HALO, TF=TF, apply_pre=False)
    s1, t1 = _fold_bn(st1, g1, be1, count)

    # Stage 2: BN1 affine + ReLU fused as pre-activation, then conv2 + bias + stats.
    y2, st2 = _conv_bn_stats(y1, s1, t1, mask, w2, b2,
                             W=W, HALO=HALO, TF=TF, apply_pre=True)
    s2, t2 = _fold_bn(st2, g2, be2, count)

    # Stage 3: BN2 affine + residual add (tiled, in place over y2).
    outp = _bn_residual(y2, s2, t2, xf, TF=TF)

    # De-pad back to NCHW (required by the module's interface; pure layout plumbing).
    out = outp[:, :Rp, :].reshape(N, H + 2, W + 2, CP)[:, 1:H + 1, 1:W + 1, :C]
    return jnp.transpose(out, (0, 3, 1, 2))


# --------------------------- Pure-JAX reference ----------------------------- #

def resblock_reference(x_nchw, params):
    def conv(x, w_oihw, b):
        y = jax.lax.conv_general_dilated(
            x, w_oihw, window_strides=(1, 1), padding=((1, 1), (1, 1)),
            dimension_numbers=("NCHW", "OIHW", "NCHW"),
            precision=jax.lax.Precision.HIGHEST,
        )
        return y + b[None, :, None, None]

    def bn(x, g, be):
        mean = jnp.mean(x, axis=(0, 2, 3), keepdims=True)
        var = jnp.mean((x - mean) ** 2, axis=(0, 2, 3), keepdims=True)
        xn = (x - mean) * jax.lax.rsqrt(var + EPS)
        return xn * g[None, :, None, None] + be[None, :, None, None]

    h = conv(x_nchw, params["w1"], params["b1"])
    h = jnp.maximum(bn(h, params["g1"], params["be1"]), 0.0)
    h = conv(h, params["w2"], params["b2"])
    h = bn(h, params["g2"], params["be2"])
    return x_nchw + h


# ---------------------------------- main ------------------------------------ #

if __name__ == "__main__":
    N, C, H, W = 2, 4, 16, 16

    key = jax.random.PRNGKey(0)
    kx, kw1, kb1, kg1, kbe1, kw2, kb2, kg2, kbe2 = jax.random.split(key, 9)

    x = jax.random.normal(kx, (N, C, H, W), dtype=jnp.float32)

    params = {
        # Conv2d(channels, channels, 3, 1, 1) weights: OIHW (C, C, 3, 3), bias (C,)
        "w1": 0.1 * jax.random.normal(kw1, (C, C, 3, 3), dtype=jnp.float32),
        "b1": 0.1 * jax.random.normal(kb1, (C,), dtype=jnp.float32),
        "w2": 0.1 * jax.random.normal(kw2, (C, C, 3, 3), dtype=jnp.float32),
        "b2": 0.1 * jax.random.normal(kb2, (C,), dtype=jnp.float32),
        # BatchNorm2d affine params (gamma, beta), shape (C,)
        "g1": 1.0 + 0.1 * jax.random.normal(kg1, (C,), dtype=jnp.float32),
        "be1": 0.1 * jax.random.normal(kbe1, (C,), dtype=jnp.float32),
        "g2": 1.0 + 0.1 * jax.random.normal(kg2, (C,), dtype=jnp.float32),
        "be2": 0.1 * jax.random.normal(kbe2, (C,), dtype=jnp.float32),
    }

    out = jax.jit(resblock_forward)(x, params)
    out = jax.block_until_ready(out)

    ref = jax.block_until_ready(resblock_reference(x, params))
    assert out.shape == (N, C, H, W) and out.dtype == jnp.float32
    # Tolerance reflects bf16 MXU operands; accumulation, BN statistics and
    # normalization math remain f32.
    assert jnp.allclose(out, ref, atol=2e-2, rtol=2e-2), (
        f"max abs diff = {jnp.max(jnp.abs(out - ref))}"
    )

    print("KERNEL_OK")
</pallas_src>

<mosaic_0001>
module attributes {stable_mosaic.version = 11 : i64} {
  func.func @_conv_bn_stats_kernel(%arg0: i32, %arg1: i32, %arg2: memref<1x32x128xf32, #tpu.memory_space<vmem>>, %arg3: memref<1x192x128xf32, #tpu.memory_space<vmem>>, %arg4: memref<1x32x128xf32, #tpu.memory_space<vmem>>, %arg5: memref<32x1xf32, #tpu.memory_space<vmem>>, %arg6: memref<192x1xf32, #tpu.memory_space<vmem>>, %arg7: memref<32x1xf32, #tpu.memory_space<vmem>>, %arg8: memref<1x128xf32, #tpu.memory_space<vmem>>, %arg9: memref<1x128xf32, #tpu.memory_space<vmem>>, %arg10: memref<1152x128xbf16, #tpu.memory_space<vmem>>, %arg11: memref<1x128xf32, #tpu.memory_space<vmem>>, %arg12: memref<1x192x128xf32, #tpu.memory_space<vmem>>, %arg13: memref<1x2x128xf32, #tpu.memory_space<vmem>>, %arg14: memref<256x128xbf16, #tpu.memory_space<vmem>>, %arg15: memref<192x1152xbf16, #tpu.memory_space<vmem>>) attributes {dimension_semantics = [#tpu.dimension_semantics<parallel>, #tpu.dimension_semantics<parallel>], iteration_bounds = array<i64: 2, 2>, scalar_prefetch = 0 : i64, scratch_operands = 2 : i64, tpu.core_type = #tpu.core_type<tc>, window_params = [{transform_indices = @transform_0, window_bounds = array<i64: 1, 32, 128>}, {transform_indices = @transform_1, window_bounds = array<i64: 1, 192, 128>}, {transform_indices = @transform_2, window_bounds = array<i64: 1, 32, 128>}, {transform_indices = @transform_3, window_bounds = array<i64: 32, 1>}, {transform_indices = @transform_4, window_bounds = array<i64: 192, 1>}, {transform_indices = @transform_5, window_bounds = array<i64: 32, 1>}, {pipeline_mode = #tpu.pipeline_mode<synchronous>, transform_indices = @transform_6, window_bounds = array<i64: 1, 128>}, {pipeline_mode = #tpu.pipeline_mode<synchronous>, transform_indices = @transform_7, window_bounds = array<i64: 1, 128>}, {pipeline_mode = #tpu.pipeline_mode<synchronous>, transform_indices = @transform_8, window_bounds = array<i64: 1152, 128>}, {pipeline_mode = #tpu.pipeline_mode<synchronous>, transform_indices = @transform_9, window_bounds = array<i64: 1, 128>}, {transform_indices = @transform_10, window_bounds = array<i64: 1, 192, 128>}, {transform_indices = @transform_11, window_bounds = array<i64: 1, 2, 128>}]} {
    %c0 = arith.constant 0 : index
    %c0_0 = arith.constant 0 : index
    %c0_1 = arith.constant 0 : index
    %0 = vector.load %arg2[%c0, %c0_0, %c0_1] : memref<1x32x128xf32, #tpu.memory_space<vmem>>, vector<1x32x128xf32>
    %1 = vector.shape_cast %0 : vector<1x32x128xf32> to vector<32x128xf32>
    %2 = arith.truncf %1 : vector<32x128xf32> to vector<32x128xbf16>
    %c0_2 = arith.constant 0 : index
    %c0_3 = arith.constant 0 : index
    %3 = vector.load %arg14[%c0_2, %c0_3] : memref<256x128xbf16, #tpu.memory_space<vmem>>, vector<32x128xbf16>
    tpu.vector_store %arg14[%c0_2, %c0_3], %2 {strides = array<i32>} : memref<256x128xbf16, #tpu.memory_space<vmem>>, vector<32x128xbf16>,
    %c0_4 = arith.constant 0 : index
    %c0_5 = arith.constant 0 : index
    %c0_6 = arith.constant 0 : index
    %4 = vector.load %arg3[%c0_4, %c0_5, %c0_6] : memref<1x192x128xf32, #tpu.memory_space<vmem>>, vector<1x192x128xf32>
    %5 = vector.shape_cast %4 : vector<1x192x128xf32> to vector<192x128xf32>
    %6 = arith.truncf %5 : vector<192x128xf32> to vector<192x128xbf16>
    %c32 = arith.constant 32 : index
    %c0_7 = arith.constant 0 : index
    %7 = vector.load %arg14[%c32, %c0_7] : memref<256x128xbf16, #tpu.memory_space<vmem>>, vector<192x128xbf16>
    tpu.vector_store %arg14[%c32, %c0_7], %6 {strides = array<i32>} : memref<256x128xbf16, #tpu.memory_space<vmem>>, vector<192x128xbf16>,
    %c0_8 = arith.constant 0 : index
    %c0_9 = arith.constant 0 : index
    %c0_10 = arith.constant 0 : index
    %8 = vector.load %arg4[%c0_8, %c0_9, %c0_10] : memref<1x32x128xf32, #tpu.memory_space<vmem>>, vector<1x32x128xf32>
    %9 = vector.shape_cast %8 : vector<1x32x128xf32> to vector<32x128xf32>
    %10 = arith.truncf %9 : vector<32x128xf32> to vector<32x128xbf16>
    %c224 = arith.constant 224 : index
    %c0_11 = arith.constant 0 : index
    %11 = vector.load %arg14[%c224, %c0_11] : memref<256x128xbf16, #tpu.memory_space<vmem>>, vector<32x128xbf16>
    tpu.vector_store %arg14[%c224, %c0_11], %10 {strides = array<i32>} : memref<256x128xbf16, #tpu.memory_space<vmem>>, vector<32x128xbf16>,
    %c13 = arith.constant 13 : index
    %c0_12 = arith.constant 0 : index
    %12 = vector.load %arg14[%c13, %c0_12] : memref<256x128xbf16, #tpu.memory_space<vmem>>, vector<192x128xbf16>
    %c0_13 = arith.constant 0 : index
    %c0_14 = arith.constant 0 : index
    %13 = vector.load %arg15[%c0_13, %c0_14] : memref<192x1152xbf16, #tpu.memory_space<vmem>>, vector<192x128xbf16>
    tpu.vector_store %arg15[%c0_13, %c0_14], %12 {strides = array<i32>} : memref<192x1152xbf16, #tpu.memory_space<vmem>>, vector<192x128xbf16>,
    %c14 = arith.constant 14 : index
    %c0_15 = arith.constant 0 : index
    %14 = vector.load %arg14[%c14, %c0_15] : memref<256x128xbf16, #tpu.memory_space<vmem>>, vector<192x128xbf16>
    %c0_16 = arith.constant 0 : index
    %c128 = arith.constant 128 : index
    %15 = vector.load %arg15[%c0_16, %c128] : memref<192x1152xbf16, #tpu.memory_space<vmem>>, vector<192x128xbf16>
    tpu.vector_store %arg15[%c0_16, %c128], %14 {strides = array<i32>} : memref<192x1152xbf16, #tpu.memory_space<vmem>>, vector<192x128xbf16>,
    %c15 = arith.constant 15 : index
    %c0_17 = arith.constant 0 : index
    %16 = vector.load %arg14[%c15, %c0_17] : memref<256x128xbf16, #tpu.memory_space<vmem>>, vector<192x128xbf16>
    %c0_18 = arith.constant 0 : index
    %c256 = arith.constant 256 : index
    %17 = vector.load %arg15[%c0_18, %c256] : memref<192x1152xbf16, #tpu.memory_space<vmem>>, vector<192x128xbf16>
    tpu.vector_store %arg15[%c0_18, %c256], %16 {strides = array<i32>} : memref<192x1152xbf16, #tpu.memory_space<vmem>>, vector<192x128xbf16>,
    %c31 = arith.constant 31 : index
    %c0_19 = arith.constant 0 : index
    %18 = vector.load %arg14[%c31, %c0_19] : memref<256x128xbf16, #tpu.memory_space<vmem>>, vector<192x128xbf16>
    %c0_20 = arith.constant 0 : index
    %c384 = arith.constant 384 : index
    %19 = vector.load %arg15[%c0_20, %c384] : memref<192x1152xbf16, #tpu.memory_space<vmem>>, vector<192x128xbf16>
    tpu.vector_store %arg15[%c0_20, %c384], %18 {strides = array<i32>} : memref<192x1152xbf16, #tpu.memory_space<vmem>>, vector<192x128xbf16>,
    %c32_21 = arith.constant 32 : index
    %c0_22 = arith.constant 0 : index
    %20 = vector.load %arg14[%c32_21, %c0_22] : memref<256x128xbf16, #tpu.memory_space<vmem>>, vector<192x128xbf16>
    %c0_23 = arith.constant 0 : index
    %c512 = arith.constant 512 : index
    %21 = vector.load %arg15[%c0_23, %c512] : memref<192x1152xbf16, #tpu.memory_space<vmem>>, vector<192x128xbf16>
    tpu.vector_store %arg15[%c0_23, %c512], %20 {strides = array<i32>} : memref<192x1152xbf16, #tpu.memory_space<vmem>>, vector<192x128xbf16>,
    %c33 = arith.constant 33 : index
    %c0_24 = arith.constant 0 : index
    %22 = vector.load %arg14[%c33, %c0_24] : memref<256x128xbf16, #tpu.memory_space<vmem>>, vector<192x128xbf16>
    %c0_25 = arith.constant 0 : index
    %c640 = arith.constant 640 : index
    %23 = vector.load %arg15[%c0_25, %c640] : memref<192x1152xbf16, #tpu.memory_space<vmem>>, vector<192x128xbf16>
    tpu.vector_store %arg15[%c0_25, %c640], %22 {strides = array<i32>} : memref<192x1152xbf16, #tpu.memory_space<vmem>>, vector<192x128xbf16>,
    %c49 = arith.constant 49 : index
    %c0_26 = arith.constant 0 : index
    %24 = vector.load %arg14[%c49, %c0_26] : memref<256x128xbf16, #tpu.memory_space<vmem>>, vector<192x128xbf16>
    %c0_27 = arith.constant 0 : index
    %c768 = arith.constant 768 : index
    %25 = vector.load %arg15[%c0_27, %c768] : memref<192x1152xbf16, #tpu.memory_space<vmem>>, vector<192x128xbf16>
    tpu.vector_store %arg15[%c0_27, %c768], %24 {strides = array<i32>} : memref<192x1152xbf16, #tpu.memory_space<vmem>>, vector<192x128xbf16>,
    %c50 = arith.constant 50 : index
    %c0_28 = arith.constant 0 : index
    %26 = vector.load %arg14[%c50, %c0_28] : memref<256x128xbf16, #tpu.memory_space<vmem>>, vector<192x128xbf16>
    %c0_29 = arith.constant 0 : index
    %c896 = arith.constant 896 : index
    %27 = vector.load %arg15[%c0_29, %c896] : memref<192x1152xbf16, #tpu.memory_space<vmem>>, vector<192x128xbf16>
    tpu.vector_store %arg15[%c0_29, %c896], %26 {strides = array<i32>} : memref<192x1152xbf16, #tpu.memory_space<vmem>>, vector<192x128xbf16>,
    %c51 = arith.constant 51 : index
    %c0_30 = arith.constant 0 : index
    %28 = vector.load %arg14[%c51, %c0_30] : memref<256x128xbf16, #tpu.memory_space<vmem>>, vector<192x128xbf16>
    %c0_31 = arith.constant 0 : index
    %c1024 = arith.constant 1024 : index
    %29 = vector.load %arg15[%c0_31, %c1024] : memref<192x1152xbf16, #tpu.memory_space<vmem>>, vector<192x128xbf16>
    tpu.vector_store %arg15[%c0_31, %c1024], %28 {strides = array<i32>} : memref<192x1152xbf16, #tpu.memory_space<vmem>>, vector<192x128xbf16>,
    %c0_32 = arith.constant 0 : index
    %c0_33 = arith.constant 0 : index
    %30 = vector.load %arg15[%c0_32, %c0_33] : memref<192x1152xbf16, #tpu.memory_space<vmem>>, vector<192x1152xbf16>
    %c0_34 = arith.constant 0 : index
    %c0_35 = arith.constant 0 : index
    %31 = vector.load %arg10[%c0_34, %c0_35] : memref<1152x128xbf16, #tpu.memory_space<vmem>>, vector<1152x128xbf16>
    %cst = arith.constant dense<0.000000e+00> : vector<192x128xf32>
    %32 = tpu.matmul %30, %31, %cst {dimension_numbers = #tpu.dot_dimension_numbers<[1], [0], [0], [1], [0, 0, 1, 1], [], []>} : vector<192x1152xbf16>, vector<1152x128xbf16>, vector<192x128xf32> -> vector<192x128xf32>
    %c0_36 = arith.constant 0 : index
    %c0_37 = arith.constant 0 : index
    %33 = vector.load %arg11[%c0_36, %c0_37] : memref<1x128xf32, #tpu.memory_space<vmem>>, vector<1x128xf32>
    %34 = vector.broadcast %33 : vector<1x128xf32> to vector<192x128xf32>
    %35 = arith.addf %32, %34 : vector<192x128xf32>
    %c0_38 = arith.constant 0 : index
    %c0_39 = arith.constant 0 : index
    %36 = vector.load %arg6[%c0_38, %c0_39] : memref<192x1xf32, #tpu.memory_space<vmem>>, vector<192x1xf32>
    %37 = vector.broadcast %36 : vector<192x1xf32> to vector<192x128xf32>
    %38 = arith.mulf %35, %37 : vector<192x128xf32>
    %c0_40 = arith.constant 0 : index
    %c0_41 = arith.constant 0 : index
    %c0_42 = arith.constant 0 : index
    %39 = vector.load %arg12[%c0_40, %c0_41, %c0_42] : memref<1x192x128xf32, #tpu.memory_space<vmem>>, vector<1x192x128xf32>
    %40 = vector.shape_cast %39 : vector<1x192x128xf32> to vector<192x128xf32>
    %41 = vector.shape_cast %38 : vector<192x128xf32> to vector<1x192x128xf32>
    tpu.vector_store %arg12[%c0_40, %c0_41, %c0_42], %41 {strides = array<i32>} : memref<1x192x128xf32, #tpu.memory_space<vmem>>, vector<1x192x128xf32>,
    %cst_43 = arith.constant dense<0.000000e+00> : vector<128xf32>
    %42 = vector.multi_reduction <add>, %38, %cst_43 [0] : vector<192x128xf32> to vector<128xf32>
    %43 = vector.shape_cast %42 : vector<128xf32> to vector<1x128xf32>
    %c0_44 = arith.constant 0 : index
    %c0_45 = arith.constant 0 : index
    %c0_46 = arith.constant 0 : index
    %44 = vector.load %arg13[%c0_44, %c0_45, %c0_46] : memref<1x2x128xf32, #tpu.memory_space<vmem>>, vector<1x1x128xf32>
    %45 = vector.shape_cast %44 : vector<1x1x128xf32> to vector<1x128xf32>
    %46 = vector.shape_cast %43 : vector<1x128xf32> to vector<1x1x128xf32>
    tpu.vector_store %arg13[%c0_44, %c0_45, %c0_46], %46 {strides = array<i32>} : memref<1x2x128xf32, #tpu.memory_space<vmem>>, vector<1x1x128xf32>,
    %47 = arith.mulf %38, %38 : vector<192x128xf32>
    %cst_47 = arith.constant dense<0.000000e+00> : vector<128xf32>
    %48 = vector.multi_reduction <add>, %47, %cst_47 [0] : vector<192x128xf32> to vector<128xf32>
    %49 = vector.shape_cast %48 : vector<128xf32> to vector<1x128xf32>
    %c0_48 = arith.constant 0 : index
    %c1 = arith.constant 1 : index
    %c0_49 = arith.constant 0 : index
    %50 = vector.load %arg13[%c0_48, %c1, %c0_49] : memref<1x2x128xf32, #tpu.memory_space<vmem>>, vector<1x1x128xf32>
    %51 = vector.shape_cast %50 : vector<1x1x128xf32> to vector<1x128xf32>
    %52 = vector.shape_cast %49 : vector<1x128xf32> to vector<1x1x128xf32>
    tpu.vector_store %arg13[%c0_48, %c1, %c0_49], %52 {strides = array<i32>} : memref<1x2x128xf32, #tpu.memory_space<vmem>>, vector<1x1x128xf32>,
    return
  }
  func.func @transform_0(%arg0: i32, %arg1: i32) -> (i32, i32, i32) {
    %c6_i32 = arith.constant 6 : i32
    %0 = arith.muli %arg1, %c6_i32 : i32
    %c1_i32 = arith.constant 1 : i32
    %1 = arith.subi %0, %c1_i32 : i32
    %c0_i32 = arith.constant 0 : i32
    %2 = arith.maxsi %1, %c0_i32 : i32
    %c0_i32_0 = arith.constant 0 : i32
    %c0_i32_1 = arith.constant 0 : i32
    return %arg0, %2, %c0_i32_0 : i32, i32, i32
  }
  func.func @transform_1(%arg0: i32, %arg1: i32) -> (i32, i32, i32) {
    %c0_i32 = arith.constant 0 : i32
    %c0_i32_0 = arith.constant 0 : i32
    return %arg0, %arg1, %c0_i32 : i32, i32, i32
  }
  func.func @transform_2(%arg0: i32, %arg1: i32) -> (i32, i32, i32) {
    %c6_i32 = arith.constant 6 : i32
    %0 = arith.muli %arg1, %c6_i32 : i32
    %c6_i32_0 = arith.constant 6 : i32
    %1 = arith.addi %0, %c6_i32_0 : i32
    %c11_i32 = arith.constant 11 : i32
    %2 = arith.minsi %1, %c11_i32 : i32
    %c0_i32 = arith.constant 0 : i32
    %c0_i32_1 = arith.constant 0 : i32
    return %arg0, %2, %c0_i32 : i32, i32, i32
  }
  func.func @transform_3(%arg0: i32, %arg1: i32) -> (i32, i32) {
    %c6_i32 = arith.constant 6 : i32
    %0 = arith.muli %arg1, %c6_i32 : i32
    %c1_i32 = arith.constant 1 : i32
    %1 = arith.subi %0, %c1_i32 : i32
    %c0_i32 = arith.constant 0 : i32
    %2 = arith.maxsi %1, %c0_i32 : i32
    %c0_i32_0 = arith.constant 0 : i32
    %c0_i32_1 = arith.constant 0 : i32
    return %2, %c0_i32_0 : i32, i32
  }
  func.func @transform_4(%arg0: i32, %arg1: i32) -> (i32, i32) {
    %c0_i32 = arith.constant 0 : i32
    %c0_i32_0 = arith.constant 0 : i32
    return %arg1, %c0_i32 : i32, i32
  }
  func.func @transform_5(%arg0: i32, %arg1: i32) -> (i32, i32) {
    %c6_i32 = arith.constant 6 : i32
    %0 = arith.muli %arg1, %c6_i32 : i32
    %c6_i32_0 = arith.constant 6 : i32
    %1 = arith.addi %0, %c6_i32_0 : i32
    %c11_i32 = arith.constant 11 : i32
    %2 = arith.minsi %1, %c11_i32 : i32
    %c0_i32 = arith.constant 0 : i32
    %c0_i32_1 = arith.constant 0 : i32
    return %2, %c0_i32 : i32, i32
  }
  func.func @transform_6(%arg0: i32, %arg1: i32) -> (i32, i32) {
    %c0_i32 = arith.constant 0 : i32
    %c0_i32_0 = arith.constant 0 : i32
    %c0_i32_1 = arith.constant 0 : i32
    return %c0_i32, %c0_i32_0 : i32, i32
  }
  func.func @transform_7(%arg0: i32, %arg1: i32) -> (i32, i32) {
    %c0_i32 = arith.constant 0 : i32
    %c0_i32_0 = arith.constant 0 : i32
    %c0_i32_1 = arith.constant 0 : i32
    return %c0_i32, %c0_i32_0 : i32, i32
  }
  func.func @transform_8(%arg0: i32, %arg1: i32) -> (i32, i32) {
    %c0_i32 = arith.constant 0 : i32
    %c0_i32_0 = arith.constant 0 : i32
    %c0_i32_1 = arith.constant 0 : i32
    return %c0_i32, %c0_i32_0 : i32, i32
  }
  func.func @transform_9(%arg0: i32, %arg1: i32) -> (i32, i32) {
    %c0_i32 = arith.constant 0 : i32
    %c0_i32_0 = arith.constant 0 : i32
    %c0_i32_1 = arith.constant 0 : i32
    return %c0_i32, %c0_i32_0 : i32, i32
  }
  func.func @transform_10(%arg0: i32, %arg1: i32) -> (i32, i32, i32) {
    %c0_i32 = arith.constant 0 : i32
    %c0_i32_0 = arith.constant 0 : i32
    return %arg0, %arg1, %c0_i32 : i32, i32, i32
  }
  func.func @transform_11(%arg0: i32, %arg1: i32) -> (i32, i32, i32) {
    %c2_i32 = arith.constant 2 : i32
    %0 = arith.muli %arg0, %c2_i32 : i32
    %1 = arith.addi %0, %arg1 : i32
    %c0_i32 = arith.constant 0 : i32
    %c0_i32_0 = arith.constant 0 : i32
    %c0_i32_1 = arith.constant 0 : i32
    return %1, %c0_i32, %c0_i32_0 : i32, i32, i32
  }
}

module attributes {stable_mosaic.version = 11 : i64} {
  func.func @_bn_residual_kernel(%arg0: i32, %arg1: i32, %arg2: memref<1x192x128xf32, #tpu.memory_space<vmem>>, %arg3: memref<1x128xf32, #tpu.memory_space<vmem>>, %arg4: memref<1x128xf32, #tpu.memory_space<vmem>>, %arg5: memref<1x192x128xf32, #tpu.memory_space<vmem>>, %arg6: memref<1x192x128xf32, #tpu.memory_space<vmem>>) attributes {dimension_semantics = [#tpu.dimension_semantics<parallel>, #tpu.dimension_semantics<parallel>], iteration_bounds = array<i64: 2, 2>, scalar_prefetch = 0 : i64, scratch_operands = 0 : i64, tpu.core_type = #tpu.core_type<tc>, window_params = [{transform_indices = @transform_0, window_bounds = array<i64: 1, 192, 128>}, {pipeline_mode = #tpu.pipeline_mode<synchronous>, transform_indices = @transform_1, window_bounds = array<i64: 1, 128>}, {pipeline_mode = #tpu.pipeline_mode<synchronous>, transform_indices = @transform_2, window_bounds = array<i64: 1, 128>}, {transform_indices = @transform_3, window_bounds = array<i64: 1, 192, 128>}, {transform_indices = @transform_4, window_bounds = array<i64: 1, 192, 128>}]} {
    %c0 = arith.constant 0 : index
    %c0_0 = arith.constant 0 : index
    %c0_1 = arith.constant 0 : index
    %0 = vector.load %arg2[%c0, %c0_0, %c0_1] : memref<1x192x128xf32, #tpu.memory_space<vmem>>, vector<1x192x128xf32>
    %1 = vector.shape_cast %0 : vector<1x192x128xf32> to vector<192x128xf32>
    %c0_2 = arith.constant 0 : index
    %c0_3 = arith.constant 0 : index
    %2 = vector.load %arg3[%c0_2, %c0_3] : memref<1x128xf32, #tpu.memory_space<vmem>>, vector<1x128xf32>
    %3 = vector.broadcast %2 : vector<1x128xf32> to vector<192x128xf32>
    %4 = arith.mulf %1, %3 : vector<192x128xf32>
    %c0_4 = arith.constant 0 : index
    %c0_5 = arith.constant 0 : index
    %5 = vector.load %arg4[%c0_4, %c0_5] : memref<1x128xf32, #tpu.memory_space<vmem>>, vector<1x128xf32>
    %6 = vector.broadcast %5 : vector<1x128xf32> to vector<192x128xf32>
    %7 = arith.addf %4, %6 : vector<192x128xf32>
    %c0_6 = arith.constant 0 : index
    %c0_7 = arith.constant 0 : index
    %c0_8 = arith.constant 0 : index
    %8 = vector.load %arg5[%c0_6, %c0_7, %c0_8] : memref<1x192x128xf32, #tpu.memory_space<vmem>>, vector<1x192x128xf32>
    %9 = vector.shape_cast %8 : vector<1x192x128xf32> to vector<192x128xf32>
    %10 = arith.addf %7, %9 : vector<192x128xf32>
    %c0_9 = arith.constant 0 : index
    %c0_10 = arith.constant 0 : index
    %c0_11 = arith.constant 0 : index
    %11 = vector.load %arg6[%c0_9, %c0_10, %c0_11] : memref<1x192x128xf32, #tpu.memory_space<vmem>>, vector<1x192x128xf32>
    %12 = vector.shape_cast %11 : vector<1x192x128xf32> to vector<192x128xf32>
    %13 = vector.shape_cast %10 : vector<192x128xf32> to vector<1x192x128xf32>
    tpu.vector_store %arg6[%c0_9, %c0_10, %c0_11], %13 {strides = array<i32>} : memref<1x192x128xf32, #tpu.memory_space<vmem>>, vector<1x192x128xf32>,
    return
  }
  func.func @transform_0(%arg0: i32, %arg1: i32) -> (i32, i32, i32) {
    %c0_i32 = arith.constant 0 : i32
    %c0_i32_0 = arith.constant 0 : i32
    return %arg0, %arg1, %c0_i32 : i32, i32, i32
  }
  func.func @transform_1(%arg0: i32, %arg1: i32) -> (i32, i32) {
    %c0_i32 = arith.constant 0 : i32
    %c0_i32_0 = arith.constant 0 : i32
    %c0_i32_1 = arith.constant 0 : i32
    return %c0_i32, %c0_i32_0 : i32, i32
  }
  func.func @transform_2(%arg0: i32, %arg1: i32) -> (i32, i32) {
    %c0_i32 = arith.constant 0 : i32
    %c0_i32_0 = arith.constant 0 : i32
    %c0_i32_1 = arith.constant 0 : i32
    return %c0_i32, %c0_i32_0 : i32, i32
  }
  func.func @transform_3(%arg0: i32, %arg1: i32) -> (i32, i32, i32) {
    %c0_i32 = arith.constant 0 : i32
    %c0_i32_0 = arith.constant 0 : i32
    return %arg0, %arg1, %c0_i32 : i32, i32, i32
  }
  func.func @transform_4(%arg0: i32, %arg1: i32) -> (i32, i32, i32) {
    %c0_i32 = arith.constant 0 : i32
    %c0_i32_0 = arith.constant 0 : i32
    return %arg0, %arg1, %c0_i32 : i32, i32, i32
  }
}

module attributes {stable_mosaic.version = 11 : i64} {
  func.func @_conv_bn_stats_kernel(%arg0: i32, %arg1: i32, %arg2: memref<1x32x128xf32, #tpu.memory_space<vmem>>, %arg3: memref<1x192x128xf32, #tpu.memory_space<vmem>>, %arg4: memref<1x32x128xf32, #tpu.memory_space<vmem>>, %arg5: memref<32x1xf32, #tpu.memory_space<vmem>>, %arg6: memref<192x1xf32, #tpu.memory_space<vmem>>, %arg7: memref<32x1xf32, #tpu.memory_space<vmem>>, %arg8: memref<1x128xf32, #tpu.memory_space<vmem>>, %arg9: memref<1x128xf32, #tpu.memory_space<vmem>>, %arg10: memref<1152x128xbf16, #tpu.memory_space<vmem>>, %arg11: memref<1x128xf32, #tpu.memory_space<vmem>>, %arg12: memref<1x192x128xf32, #tpu.memory_space<vmem>>, %arg13: memref<1x2x128xf32, #tpu.memory_space<vmem>>, %arg14: memref<256x128xbf16, #tpu.memory_space<vmem>>, %arg15: memref<192x1152xbf16, #tpu.memory_space<vmem>>) attributes {dimension_semantics = [#tpu.dimension_semantics<parallel>, #tpu.dimension_semantics<parallel>], iteration_bounds = array<i64: 2, 2>, scalar_prefetch = 0 : i64, scratch_operands = 2 : i64, tpu.core_type = #tpu.core_type<tc>, window_params = [{transform_indices = @transform_0, window_bounds = array<i64: 1, 32, 128>}, {transform_indices = @transform_1, window_bounds = array<i64: 1, 192, 128>}, {transform_indices = @transform_2, window_bounds = array<i64: 1, 32, 128>}, {transform_indices = @transform_3, window_bounds = array<i64: 32, 1>}, {transform_indices = @transform_4, window_bounds = array<i64: 192, 1>}, {transform_indices = @transform_5, window_bounds = array<i64: 32, 1>}, {pipeline_mode = #tpu.pipeline_mode<synchronous>, transform_indices = @transform_6, window_bounds = array<i64: 1, 128>}, {pipeline_mode = #tpu.pipeline_mode<synchronous>, transform_indices = @transform_7, window_bounds = array<i64: 1, 128>}, {pipeline_mode = #tpu.pipeline_mode<synchronous>, transform_indices = @transform_8, window_bounds = array<i64: 1152, 128>}, {pipeline_mode = #tpu.pipeline_mode<synchronous>, transform_indices = @transform_9, window_bounds = array<i64: 1, 128>}, {transform_indices = @transform_10, window_bounds = array<i64: 1, 192, 128>}, {transform_indices = @transform_11, window_bounds = array<i64: 1, 2, 128>}]} {
    %c0 = arith.constant 0 : index
    %c0_0 = arith.constant 0 : index
    %c0_1 = arith.constant 0 : index
    %0 = vector.load %arg2[%c0, %c0_0, %c0_1] : memref<1x32x128xf32, #tpu.memory_space<vmem>>, vector<1x32x128xf32>
    %1 = vector.shape_cast %0 : vector<1x32x128xf32> to vector<32x128xf32>
    %c0_2 = arith.constant 0 : index
    %c0_3 = arith.constant 0 : index
    %2 = vector.load %arg5[%c0_2, %c0_3] : memref<32x1xf32, #tpu.memory_space<vmem>>, vector<32x1xf32>
    %c0_4 = arith.constant 0 : index
    %c0_5 = arith.constant 0 : index
    %3 = vector.load %arg8[%c0_4, %c0_5] : memref<1x128xf32, #tpu.memory_space<vmem>>, vector<1x128xf32>
    %4 = vector.broadcast %3 : vector<1x128xf32> to vector<32x128xf32>
    %5 = arith.mulf %1, %4 : vector<32x128xf32>
    %c0_6 = arith.constant 0 : index
    %c0_7 = arith.constant 0 : index
    %6 = vector.load %arg9[%c0_6, %c0_7] : memref<1x128xf32, #tpu.memory_space<vmem>>, vector<1x128xf32>
    %7 = vector.broadcast %6 : vector<1x128xf32> to vector<32x128xf32>
    %8 = arith.addf %5, %7 : vector<32x128xf32>
    %cst = arith.constant 0.000000e+00 : f32
    %9 = vector.broadcast %cst : f32 to vector<32x128xf32>
    %10 = arith.maximumf %8, %9 : vector<32x128xf32>
    %11 = vector.broadcast %2 : vector<32x1xf32> to vector<32x128xf32>
    %12 = arith.mulf %10, %11 : vector<32x128xf32>
    %13 = arith.truncf %12 : vector<32x128xf32> to vector<32x128xbf16>
    %c0_8 = arith.constant 0 : index
    %c0_9 = arith.constant 0 : index
    %14 = vector.load %arg14[%c0_8, %c0_9] : memref<256x128xbf16, #tpu.memory_space<vmem>>, vector<32x128xbf16>
    tpu.vector_store %arg14[%c0_8, %c0_9], %13 {strides = array<i32>} : memref<256x128xbf16, #tpu.memory_space<vmem>>, vector<32x128xbf16>,
    %c0_10 = arith.constant 0 : index
    %c0_11 = arith.constant 0 : index
    %c0_12 = arith.constant 0 : index
    %15 = vector.load %arg3[%c0_10, %c0_11, %c0_12] : memref<1x192x128xf32, #tpu.memory_space<vmem>>, vector<1x192x128xf32>
    %16 = vector.shape_cast %15 : vector<1x192x128xf32> to vector<192x128xf32>
    %c0_13 = arith.constant 0 : index
    %c0_14 = arith.constant 0 : index
    %17 = vector.load %arg6[%c0_13, %c0_14] : memref<192x1xf32, #tpu.memory_space<vmem>>, vector<192x1xf32>
    %c0_15 = arith.constant 0 : index
    %c0_16 = arith.constant 0 : index
    %18 = vector.load %arg8[%c0_15, %c0_16] : memref<1x128xf32, #tpu.memory_space<vmem>>, vector<1x128xf32>
    %19 = vector.broadcast %18 : vector<1x128xf32> to vector<192x128xf32>
    %20 = arith.mulf %16, %19 : vector<192x128xf32>
    %c0_17 = arith.constant 0 : index
    %c0_18 = arith.constant 0 : index
    %21 = vector.load %arg9[%c0_17, %c0_18] : memref<1x128xf32, #tpu.memory_space<vmem>>, vector<1x128xf32>
    %22 = vector.broadcast %21 : vector<1x128xf32> to vector<192x128xf32>
    %23 = arith.addf %20, %22 : vector<192x128xf32>
    %cst_19 = arith.constant 0.000000e+00 : f32
    %24 = vector.broadcast %cst_19 : f32 to vector<192x128xf32>
    %25 = arith.maximumf %23, %24 : vector<192x128xf32>
    %26 = vector.broadcast %17 : vector<192x1xf32> to vector<192x128xf32>
    %27 = arith.mulf %25, %26 : vector<192x128xf32>
    %28 = arith.truncf %27 : vector<192x128xf32> to vector<192x128xbf16>
    %c32 = arith.constant 32 : index
    %c0_20 = arith.constant 0 : index
    %29 = vector.load %arg14[%c32, %c0_20] : memref<256x128xbf16, #tpu.memory_space<vmem>>, vector<192x128xbf16>
    tpu.vector_store %arg14[%c32, %c0_20], %28 {strides = array<i32>} : memref<256x128xbf16, #tpu.memory_space<vmem>>, vector<192x128xbf16>,
    %c0_21 = arith.constant 0 : index
    %c0_22 = arith.constant 0 : index
    %c0_23 = arith.constant 0 : index
    %30 = vector.load %arg4[%c0_21, %c0_22, %c0_23] : memref<1x32x128xf32, #tpu.memory_space<vmem>>, vector<1x32x128xf32>
    %31 = vector.shape_cast %30 : vector<1x32x128xf32> to vector<32x128xf32>
    %c0_24 = arith.constant 0 : index
    %c0_25 = arith.constant 0 : index
    %32 = vector.load %arg7[%c0_24, %c0_25] : memref<32x1xf32, #tpu.memory_space<vmem>>, vector<32x1xf32>
    %c0_26 = arith.constant 0 : index
    %c0_27 = arith.constant 0 : index
    %33 = vector.load %arg8[%c0_26, %c0_27] : memref<1x128xf32, #tpu.memory_space<vmem>>, vector<1x128xf32>
    %34 = vector.broadcast %33 : vector<1x128xf32> to vector<32x128xf32>
    %35 = arith.mulf %31, %34 : vector<32x128xf32>
    %c0_28 = arith.constant 0 : index
    %c0_29 = arith.constant 0 : index
    %36 = vector.load %arg9[%c0_28, %c0_29] : memref<1x128xf32, #tpu.memory_space<vmem>>, vector<1x128xf32>
    %37 = vector.broadcast %36 : vector<1x128xf32> to vector<32x128xf32>
    %38 = arith.addf %35, %37 : vector<32x128xf32>
    %cst_30 = arith.constant 0.000000e+00 : f32
    %39 = vector.broadcast %cst_30 : f32 to vector<32x128xf32>
    %40 = arith.maximumf %38, %39 : vector<32x128xf32>
    %41 = vector.broadcast %32 : vector<32x1xf32> to vector<32x128xf32>
    %42 = arith.mulf %40, %41 : vector<32x128xf32>
    %43 = arith.truncf %42 : vector<32x128xf32> to vector<32x128xbf16>
    %c224 = arith.constant 224 : index
    %c0_31 = arith.constant 0 : index
    %44 = vector.load %arg14[%c224, %c0_31] : memref<256x128xbf16, #tpu.memory_space<vmem>>, vector<32x128xbf16>
    tpu.vector_store %arg14[%c224, %c0_31], %43 {strides = array<i32>} : memref<256x128xbf16, #tpu.memory_space<vmem>>, vector<32x128xbf16>,
    %c13 = arith.constant 13 : index
    %c0_32 = arith.constant 0 : index
    %45 = vector.load %arg14[%c13, %c0_32] : memref<256x128xbf16, #tpu.memory_space<vmem>>, vector<192x128xbf16>
    %c0_33 = arith.constant 0 : index
    %c0_34 = arith.constant 0 : index
    %46 = vector.load %arg15[%c0_33, %c0_34] : memref<192x1152xbf16, #tpu.memory_space<vmem>>, vector<192x128xbf16>
    tpu.vector_store %arg15[%c0_33, %c0_34], %45 {strides = array<i32>} : memref<192x1152xbf16, #tpu.memory_space<vmem>>, vector<192x128xbf16>,
    %c14 = arith.constant 14 : index
    %c0_35 = arith.constant 0 : index
    %47 = vector.load %arg14[%c14, %c0_35] : memref<256x128xbf16, #tpu.memory_space<vmem>>, vector<192x128xbf16>
    %c0_36 = arith.constant 0 : index
    %c128 = arith.constant 128 : index
    %48 = vector.load %arg15[%c0_36, %c128] : memref<192x1152xbf16, #tpu.memory_space<vmem>>, vector<192x128xbf16>
    tpu.vector_store %arg15[%c0_36, %c128], %47 {strides = array<i32>} : memref<192x1152xbf16, #tpu.memory_space<vmem>>, vector<192x128xbf16>,
    %c15 = arith.constant 15 : index
    %c0_37 = arith.constant 0 : index
    %49 = vector.load %arg14[%c15, %c0_37] : memref<256x128xbf16, #tpu.memory_space<vmem>>, vector<192x128xbf16>
    %c0_38 = arith.constant 0 : index
    %c256 = arith.constant 256 : index
    %50 = vector.load %arg15[%c0_38, %c256] : memref<192x1152xbf16, #tpu.memory_space<vmem>>, vector<192x128xbf16>
    tpu.vector_store %arg15[%c0_38, %c256], %49 {strides = array<i32>} : memref<192x1152xbf16, #tpu.memory_space<vmem>>, vector<192x128xbf16>,
    %c31 = arith.constant 31 : index
    %c0_39 = arith.constant 0 : index
    %51 = vector.load %arg14[%c31, %c0_39] : memref<256x128xbf16, #tpu.memory_space<vmem>>, vector<192x128xbf16>
    %c0_40 = arith.constant 0 : index
    %c384 = arith.constant 384 : index
    %52 = vector.load %arg15[%c0_40, %c384] : memref<192x1152xbf16, #tpu.memory_space<vmem>>, vector<192x128xbf16>
    tpu.vector_store %arg15[%c0_40, %c384], %51 {strides = array<i32>} : memref<192x1152xbf16, #tpu.memory_space<vmem>>, vector<192x128xbf16>,
    %c32_41 = arith.constant 32 : index
    %c0_42 = arith.constant 0 : index
    %53 = vector.load %arg14[%c32_41, %c0_42] : memref<256x128xbf16, #tpu.memory_space<vmem>>, vector<192x128xbf16>
    %c0_43 = arith.constant 0 : index
    %c512 = arith.constant 512 : index
    %54 = vector.load %arg15[%c0_43, %c512] : memref<192x1152xbf16, #tpu.memory_space<vmem>>, vector<192x128xbf16>
    tpu.vector_store %arg15[%c0_43, %c512], %53 {strides = array<i32>} : memref<192x1152xbf16, #tpu.memory_space<vmem>>, vector<192x128xbf16>,
    %c33 = arith.constant 33 : index
    %c0_44 = arith.constant 0 : index
    %55 = vector.load %arg14[%c33, %c0_44] : memref<256x128xbf16, #tpu.memory_space<vmem>>, vector<192x128xbf16>
    %c0_45 = arith.constant 0 : index
    %c640 = arith.constant 640 : index
    %56 = vector.load %arg15[%c0_45, %c640] : memref<192x1152xbf16, #tpu.memory_space<vmem>>, vector<192x128xbf16>
    tpu.vector_store %arg15[%c0_45, %c640], %55 {strides = array<i32>} : memref<192x1152xbf16, #tpu.memory_space<vmem>>, vector<192x128xbf16>,
    %c49 = arith.constant 49 : index
    %c0_46 = arith.constant 0 : index
    %57 = vector.load %arg14[%c49, %c0_46] : memref<256x128xbf16, #tpu.memory_space<vmem>>, vector<192x128xbf16>
    %c0_47 = arith.constant 0 : index
    %c768 = arith.constant 768 : index
    %58 = vector.load %arg15[%c0_47, %c768] : memref<192x1152xbf16, #tpu.memory_space<vmem>>, vector<192x128xbf16>
    tpu.vector_store %arg15[%c0_47, %c768], %57 {strides = array<i32>} : memref<192x1152xbf16, #tpu.memory_space<vmem>>, vector<192x128xbf16>,
    %c50 = arith.constant 50 : index
    %c0_48 = arith.constant 0 : index
    %59 = vector.load %arg14[%c50, %c0_48] : memref<256x128xbf16, #tpu.memory_space<vmem>>, vector<192x128xbf16>
    %c0_49 = arith.constant 0 : index
    %c896 = arith.constant 896 : index
    %60 = vector.load %arg15[%c0_49, %c896] : memref<192x1152xbf16, #tpu.memory_space<vmem>>, vector<192x128xbf16>
    tpu.vector_store %arg15[%c0_49, %c896], %59 {strides = array<i32>} : memref<192x1152xbf16, #tpu.memory_space<vmem>>, vector<192x128xbf16>,
    %c51 = arith.constant 51 : index
    %c0_50 = arith.constant 0 : index
    %61 = vector.load %arg14[%c51, %c0_50] : memref<256x128xbf16, #tpu.memory_space<vmem>>, vector<192x128xbf16>
    %c0_51 = arith.constant 0 : index
    %c1024 = arith.constant 1024 : index
    %62 = vector.load %arg15[%c0_51, %c1024] : memref<192x1152xbf16, #tpu.memory_space<vmem>>, vector<192x128xbf16>
    tpu.vector_store %arg15[%c0_51, %c1024], %61 {strides = array<i32>} : memref<192x1152xbf16, #tpu.memory_space<vmem>>, vector<192x128xbf16>,
    %c0_52 = arith.constant 0 : index
    %c0_53 = arith.constant 0 : index
    %63 = vector.load %arg15[%c0_52, %c0_53] : memref<192x1152xbf16, #tpu.memory_space<vmem>>, vector<192x1152xbf16>
    %c0_54 = arith.constant 0 : index
    %c0_55 = arith.constant 0 : index
    %64 = vector.load %arg10[%c0_54, %c0_55] : memref<1152x128xbf16, #tpu.memory_space<vmem>>, vector<1152x128xbf16>
    %cst_56 = arith.constant dense<0.000000e+00> : vector<192x128xf32>
    %65 = tpu.matmul %63, %64, %cst_56 {dimension_numbers = #tpu.dot_dimension_numbers<[1], [0], [0], [1], [0, 0, 1, 1], [], []>} : vector<192x1152xbf16>, vector<1152x128xbf16>, vector<192x128xf32> -> vector<192x128xf32>
    %c0_57 = arith.constant 0 : index
    %c0_58 = arith.constant 0 : index
    %66 = vector.load %arg11[%c0_57, %c0_58] : memref<1x128xf32, #tpu.memory_space<vmem>>, vector<1x128xf32>
    %67 = vector.broadcast %66 : vector<1x128xf32> to vector<192x128xf32>
    %68 = arith.addf %65, %67 : vector<192x128xf32>
    %c0_59 = arith.constant 0 : index
    %c0_60 = arith.constant 0 : index
    %69 = vector.load %arg6[%c0_59, %c0_60] : memref<192x1xf32, #tpu.memory_space<vmem>>, vector<192x1xf32>
    %70 = vector.broadcast %69 : vector<192x1xf32> to vector<192x128xf32>
    %71 = arith.mulf %68, %70 : vector<192x128xf32>
    %c0_61 = arith.constant 0 : index
    %c0_62 = arith.constant 0 : index
    %c0_63 = arith.constant 0 : index
    %72 = vector.load %arg12[%c0_61, %c0_62, %c0_63] : memref<1x192x128xf32, #tpu.memory_space<vmem>>, vector<1x192x128xf32>
    %73 = vector.shape_cast %72 : vector<1x192x128xf32> to vector<192x128xf32>
    %74 = vector.shape_cast %71 : vector<192x128xf32> to vector<1x192x128xf32>
    tpu.vector_store %arg12[%c0_61, %c0_62, %c0_63], %74 {strides = array<i32>} : memref<1x192x128xf32, #tpu.memory_space<vmem>>, vector<1x192x128xf32>,
    %cst_64 = arith.constant dense<0.000000e+00> : vector<128xf32>
    %75 = vector.multi_reduction <add>, %71, %cst_64 [0] : vector<192x128xf32> to vector<128xf32>
    %76 = vector.shape_cast %75 : vector<128xf32> to vector<1x128xf32>
    %c0_65 = arith.constant 0 : index
    %c0_66 = arith.constant 0 : index
    %c0_67 = arith.constant 0 : index
    %77 = vector.load %arg13[%c0_65, %c0_66, %c0_67] : memref<1x2x128xf32, #tpu.memory_space<vmem>>, vector<1x1x128xf32>
    %78 = vector.shape_cast %77 : vector<1x1x128xf32> to vector<1x128xf32>
    %79 = vector.shape_cast %76 : vector<1x128xf32> to vector<1x1x128xf32>
    tpu.vector_store %arg13[%c0_65, %c0_66, %c0_67], %79 {strides = array<i32>} : memref<1x2x128xf32, #tpu.memory_space<vmem>>, vector<1x1x128xf32>,
    %80 = arith.mulf %71, %71 : vector<192x128xf32>
    %cst_68 = arith.constant dense<0.000000e+00> : vector<128xf32>
    %81 = vector.multi_reduction <add>, %80, %cst_68 [0] : vector<192x128xf32> to vector<128xf32>
    %82 = vector.shape_cast %81 : vector<128xf32> to vector<1x128xf32>
    %c0_69 = arith.constant 0 : index
    %c1 = arith.constant 1 : index
    %c0_70 = arith.constant 0 : index
    %83 = vector.load %arg13[%c0_69, %c1, %c0_70] : memref<1x2x128xf32, #tpu.memory_space<vmem>>, vector<1x1x128xf32>
    %84 = vector.shape_cast %83 : vector<1x1x128xf32> to vector<1x128xf32>
    %85 = vector.shape_cast %82 : vector<1x128xf32> to vector<1x1x128xf32>
    tpu.vector_store %arg13[%c0_69, %c1, %c0_70], %85 {strides = array<i32>} : memref<1x2x128xf32, #tpu.memory_space<vmem>>, vector<1x1x128xf32>,
    return
  }
  func.func @transform_0(%arg0: i32, %arg1: i32) -> (i32, i32, i32) {
    %c6_i32 = arith.constant 6 : i32
    %0 = arith.muli %arg1, %c6_i32 : i32
    %c1_i32 = arith.constant 1 : i32
    %1 = arith.subi %0, %c1_i32 : i32
    %c0_i32 = arith.constant 0 : i32
    %2 = arith.maxsi %1, %c0_i32 : i32
    %c0_i32_0 = arith.constant 0 : i32
    %c0_i32_1 = arith.constant 0 : i32
    return %arg0, %2, %c0_i32_0 : i32, i32, i32
  }
  func.func @transform_1(%arg0: i32, %arg1: i32) -> (i32, i32, i32) {
    %c0_i32 = arith.constant 0 : i32
    %c0_i32_0 = arith.constant 0 : i32
    return %arg0, %arg1, %c0_i32 : i32, i32, i32
  }
  func.func @transform_2(%arg0: i32, %arg1: i32) -> (i32, i32, i32) {
    %c6_i32 = arith.constant 6 : i32
    %0 = arith.muli %arg1, %c6_i32 : i32
    %c6_i32_0 = arith.constant 6 : i32
    %1 = arith.addi %0, %c6_i32_0 : i32
    %c11_i32 = arith.constant 11 : i32
    %2 = arith.minsi %1, %c11_i32 : i32
    %c0_i32 = arith.constant 0 : i32
    %c0_i32_1 = arith.constant 0 : i32
    return %arg0, %2, %c0_i32 : i32, i32, i32
  }
  func.func @transform_3(%arg0: i32, %arg1: i32) -> (i32, i32) {
    %c6_i32 = arith.constant 6 : i32
    %0 = arith.muli %arg1, %c6_i32 : i32
    %c1_i32 = arith.constant 1 : i32
    %1 = arith.subi %0, %c1_i32 : i32
    %c0_i32 = arith.constant 0 : i32
    %2 = arith.maxsi %1, %c0_i32 : i32
    %c0_i32_0 = arith.constant 0 : i32
    %c0_i32_1 = arith.constant 0 : i32
    return %2, %c0_i32_0 : i32, i32
  }
  func.func @transform_4(%arg0: i32, %arg1: i32) -> (i32, i32) {
    %c0_i32 = arith.constant 0 : i32
    %c0_i32_0 = arith.constant 0 : i32
    return %arg1, %c0_i32 : i32, i32
  }
  func.func @transform_5(%arg0: i32, %arg1: i32) -> (i32, i32) {
    %c6_i32 = arith.constant 6 : i32
    %0 = arith.muli %arg1, %c6_i32 : i32
    %c6_i32_0 = arith.constant 6 : i32
    %1 = arith.addi %0, %c6_i32_0 : i32
    %c11_i32 = arith.constant 11 : i32
    %2 = arith.minsi %1, %c11_i32 : i32
    %c0_i32 = arith.constant 0 : i32
    %c0_i32_1 = arith.constant 0 : i32
    return %2, %c0_i32 : i32, i32
  }
  func.func @transform_6(%arg0: i32, %arg1: i32) -> (i32, i32) {
    %c0_i32 = arith.constant 0 : i32
    %c0_i32_0 = arith.constant 0 : i32
    %c0_i32_1 = arith.constant 0 : i32
    return %c0_i32, %c0_i32_0 : i32, i32
  }
  func.func @transform_7(%arg0: i32, %arg1: i32) -> (i32, i32) {
    %c0_i32 = arith.constant 0 : i32
    %c0_i32_0 = arith.constant 0 : i32
    %c0_i32_1 = arith.constant 0 : i32
    return %c0_i32, %c0_i32_0 : i32, i32
  }
  func.func @transform_8(%arg0: i32, %arg1: i32) -> (i32, i32) {
    %c0_i32 = arith.constant 0 : i32
    %c0_i32_0 = arith.constant 0 : i32
    %c0_i32_1 = arith.constant 0 : i32
    return %c0_i32, %c0_i32_0 : i32, i32
  }
  func.func @transform_9(%arg0: i32, %arg1: i32) -> (i32, i32) {
    %c0_i32 = arith.constant 0 : i32
    %c0_i32_0 = arith.constant 0 : i32
    %c0_i32_1 = arith.constant 0 : i32
    return %c0_i32, %c0_i32_0 : i32, i32
  }
  func.func @transform_10(%arg0: i32, %arg1: i32) -> (i32, i32, i32) {
    %c0_i32 = arith.constant 0 : i32
    %c0_i32_0 = arith.constant 0 : i32
    return %arg0, %arg1, %c0_i32 : i32, i32, i32
  }
  func.func @transform_11(%arg0: i32, %arg1: i32) -> (i32, i32, i32) {
    %c2_i32 = arith.constant 2 : i32
    %0 = arith.muli %arg0, %c2_i32 : i32
    %1 = arith.addi %0, %arg1 : i32
    %c0_i32 = arith.constant 0 : i32
    %c0_i32_0 = arith.constant 0 : i32
    %c0_i32_1 = arith.constant 0 : i32
    return %1, %c0_i32, %c0_i32_0 : i32, i32, i32
  }
}

</mosaic_0001>

<llo_original>
// kernel: resblock_forward.5
$region0: #{resblock_forward.5}
  #allocation0 [shape = 'u32[]', space=smem, size = 0x4, offset = 0x4, fixed_abs, tag = 'smem constant byte address 0x4 - core index']
  #allocation1 [shape = 'u32[144,128]{1,0:T(1,128)}', space=vmem, size = 0x12000, scoped, tag = 'internal scratch']
  %s0 = inlined_call_operand.vmem [shape: f32[2,384,128], index: 0, kind: input, shape index: {}, may-alias: {0,4}]
  %s1 = inlined_call_operand.vmem [shape: f32[1,128], index: 1, kind: input, shape index: {}]
  %s2 = inlined_call_operand.vmem [shape: f32[1,128], index: 2, kind: input, shape index: {}]
  %s3 = inlined_call_operand.vmem [shape: f32[2,384,128], index: 3, kind: input, shape index: {}]
  %s4 = inlined_call_operand.vmem [shape: f32[2,384,128], index: 4, kind: output, shape index: {}, may-alias: {0,4}]
  %s5 = sld [smem:[#allocation0]]
  $region49: #{resblock_forward.5} parent=0
    _
  %s7 = ssub.s32 1, %s5
  %s8 = scalar_select 0, %s7, %s5
  loop: start=0, step=1, limit=6
  $region2: #{resblock_forward.5} parent=0 // loop_pre_header
    _
  $region3: #{resblock_forward.5} parent=0 // loop_header
    %s10 = sphi 0, %s14
    %p11 = scmp.ge.s32.totalorder %s10, 6
    %s17 = sphi 0, %s29
    %s18 = sphi 0, %s25
    %s19 = sphi 0, %s17
    %s20 = sphi 0, %s18
    %s21 = sphi 0, %s19
    %s22 = sphi 0, %s20
    %s34 = sphi 0, %s36
    %s37 = sphi 0, %s34
    %s38 = sphi 0, %s37
    %s54 = sphi 0, %s38
    %s58 = sphi 0, %s58
    %s60 = sphi 0, %s58
    %s61 = sphi 0, %s60
    %s75 = sphi 0, %s61
    %s79 = sphi 0, %s79
    %s81 = sphi 0, %s79
    %s82 = sphi 0, %s81
    %s96 = sphi 0, %s82
    %s104 = sphi 0, %s106
    %s107 = sphi 0, %s104
    %s108 = sphi 0, %s107
    %s124 = sphi 0, %s108
    %s132 = sphi 0, %s134
    %s135 = sphi 0, %s132
    %s136 = sphi 0, %s135
    %s152 = sphi 0, %s136
  $region4: #{resblock_forward.5} parent=0 // loop_header_branch
    %13 = sbr.rel (%p11) target = $region8
  $region5: #{resblock_forward.5} parent=0 // loop_body
    %s15 = ssub.s32 %s10, 1
    %s16 = ssub.s32 %s10, 2
    %s23 = sadd.s32 1, %s18
    %p24 = scmp.ge.s32.totalorder %s23, 2
    %s25 = scalar_select %p24, 0, %s23
    %s26 = sadd.s32 1, %s17
    %s27 = scalar_select %p24, %s26, %s17
    %p28 = scmp.ge.s32.totalorder %s27, 2
    %s29 = scalar_select %p28, 0, %s27
    %s30 = ssub.s32 %s17, %s29
    %s31 = ssub.s32 %s18, %s25
    %s32 = sor.u32 %s30, %s31
    %p33 = scmp.eq.s32.totalorder %s32, 0
    %s35 = sadd.s32 %s34, 1
    %s36 = scalar_select %p33, %s34, %s35
    %p39 = pneg %p33
    %p40 = scmp.eq.s32.totalorder %s10, 3
    %p41 = por %p39, %p40
    %p42 = scmp.ne.s32.totalorder %s34, %s37
    %p43 = scmp.eq.s32.totalorder %s10, 0
    %p44 = por %p42, %p43
    %p45 = scmp.ne.s32.totalorder %s34, %s37
    %p46 = scmp.eq.s32.totalorder %s15, 3
    %p47 = por %p45, %p46
    %p48 = scmp.ne.s32.totalorder %s37, %s38
    %p49 = scmp.eq.s32.totalorder %s15, 0
    %p50 = por %p48, %p49
    %p51 = scmp.ne.s32.totalorder %s37, %s38
    %p52 = scmp.eq.s32.totalorder %s16, 3
    %p53 = por %p51, %p52
    %p55 = scmp.ne.s32.totalorder %s38, %s54
    %p56 = scmp.eq.s32.totalorder %s16, 0
    %p57 = por %p55, %p56
    %s59 = sadd.s32 %s58, 1
    %p62 = scmp.eq.s32.totalorder %s10, 3
    %p63 = scmp.ne.s32.totalorder %s58, %s60
    %p64 = scmp.eq.s32.totalorder %s10, 0
    %p65 = por %p63, %p64
    %p66 = scmp.ne.s32.totalorder %s58, %s60
    %p67 = scmp.eq.s32.totalorder %s15, 3
    %p68 = por %p66, %p67
    %p69 = scmp.ne.s32.totalorder %s60, %s61
    %p70 = scmp.eq.s32.totalorder %s15, 0
    %p71 = por %p69, %p70
    %p72 = scmp.ne.s32.totalorder %s60, %s61
    %p73 = scmp.eq.s32.totalorder %s16, 3
    %p74 = por %p72, %p73
    %p76 = scmp.ne.s32.totalorder %s61, %s75
    %p77 = scmp.eq.s32.totalorder %s16, 0
    %p78 = por %p76, %p77
    %s80 = sadd.s32 %s79, 1
    %p83 = scmp.eq.s32.totalorder %s10, 3
    %p84 = scmp.ne.s32.totalorder %s79, %s81
    %p85 = scmp.eq.s32.totalorder %s10, 0
    %p86 = por %p84, %p85
    %p87 = scmp.ne.s32.totalorder %s79, %s81
    %p88 = scmp.eq.s32.totalorder %s15, 3
    %p89 = por %p87, %p88
    %p90 = scmp.ne.s32.totalorder %s81, %s82
    %p91 = scmp.eq.s32.totalorder %s15, 0
    %p92 = por %p90, %p91
    %p93 = scmp.ne.s32.totalorder %s81, %s82
    %p94 = scmp.eq.s32.totalorder %s16, 3
    %p95 = por %p93, %p94
    %p97 = scmp.ne.s32.totalorder %s82, %s96
    %p98 = scmp.eq.s32.totalorder %s16, 0
    %p99 = por %p97, %p98
    %s100 = ssub.s32 %s17, %s29
    %s101 = ssub.s32 %s18, %s25
    %s102 = sor.u32 %s100, %s101
    %p103 = scmp.eq.s32.totalorder %s102, 0
    %s105 = sadd.s32 %s104, 1
    %s106 = scalar_select %p103, %s104, %s105
    %p109 = pneg %p103
    %p110 = scmp.eq.s32.totalorder %s10, 3
    %p111 = por %p109, %p110
    %p112 = scmp.ne.s32.totalorder %s104, %s107
    %p113 = scmp.eq.s32.totalorder %s10, 0
    %p114 = por %p112, %p113
    %p115 = scmp.ne.s32.totalorder %s104, %s107
    %p116 = scmp.eq.s32.totalorder %s15, 3
    %p117 = por %p115, %p116
    %p118 = scmp.ne.s32.totalorder %s107, %s108
    %p119 = scmp.eq.s32.totalorder %s15, 0
    %p120 = por %p118, %p119
    %p121 = scmp.ne.s32.totalorder %s107, %s108
    %p122 = scmp.eq.s32.totalorder %s16, 3
    %p123 = por %p121, %p122
    %p125 = scmp.ne.s32.totalorder %s108, %s124
    %p126 = scmp.eq.s32.totalorder %s16, 0
    %p127 = por %p125, %p126
    %s128 = ssub.s32 %s17, %s29
    %s129 = ssub.s32 %s18, %s25
    %s130 = sor.u32 %s128, %s129
    %p131 = scmp.eq.s32.totalorder %s130, 0
    %s133 = sadd.s32 %s132, 1
    %s134 = scalar_select %p131, %s132, %s133
    %p137 = pneg %p131
    %p138 = scmp.eq.s32.totalorder %s10, 3
    %p139 = por %p137, %p138
    %p140 = scmp.ne.s32.totalorder %s132, %s135
    %p141 = scmp.eq.s32.totalorder %s10, 0
    %p142 = por %p140, %p141
    %p143 = scmp.ne.s32.totalorder %s132, %s135
    %p144 = scmp.eq.s32.totalorder %s15, 3
    %p145 = por %p143, %p144
    %p146 = scmp.ne.s32.totalorder %s135, %s136
    %p147 = scmp.eq.s32.totalorder %s15, 0
    %p148 = por %p146, %p147
    %p149 = scmp.ne.s32.totalorder %s135, %s136
    %p150 = scmp.eq.s32.totalorder %s16, 3
    %p151 = por %p149, %p150
    %p153 = scmp.ne.s32.totalorder %s136, %s152
    %p154 = scmp.eq.s32.totalorder %s16, 0
    %p155 = por %p153, %p154
    %p156 = scmp.le.s32.totalorder 1, %s10
    %p157 = scmp.lt.s32.totalorder %s10, 5
    %p158 = pnand %p156, %p157
    %p159 = pneg %p158
    // Predicated region
    $region9: #{resblock_forward.5} parent=5 // pred_check
      _
    $region10: #{resblock_forward.5} parent=5 // pred_check_branch
      %161 = sbr.rel (%p158) target = $region12
    $region11: #{resblock_forward.5} parent=5 // pred_region
      %s162 = ssub.s32 %s10, 1
      // Predicated region
      $region13: #{resblock_forward.5} parent=11 // pred_check
        %p163 = pneg %p71
      $region14: #{resblock_forward.5} parent=11 // pred_check_branch
        %165 = sbr.rel (%p163) target = $region16
      $region15: #{resblock_forward.5} parent=11 // pred_region
        _
      $region16: #{resblock_forward.5} parent=11 // pred_fallthru
        _
      // Predicated region
      $region17: #{resblock_forward.5} parent=11 // pred_check
        %p166 = pneg %p92
      $region18: #{resblock_forward.5} parent=11 // pred_check_branch
        %168 = sbr.rel (%p166) target = $region20
      $region19: #{resblock_forward.5} parent=11 // pred_region
        _
      $region20: #{resblock_forward.5} parent=11 // pred_fallthru
        _
    $region12: #{resblock_forward.5} parent=5 // pred_fallthru
      _
    %p169 = scmp.lt.s32.totalorder %s10, 4
    // Predicated region
    $region21: #{resblock_forward.5} parent=5 // pred_check
      %p170 = pneg %p169
    $region22: #{resblock_forward.5} parent=5 // pred_check_branch
      %172 = sbr.rel (%p170) target = $region24
    $region23: #{resblock_forward.5} parent=5 // pred_region
      // Predicated region
      $region25: #{resblock_forward.5} parent=23 // pred_check
        %p173 = pneg %p44
      $region26: #{resblock_forward.5} parent=23 // pred_check_branch
        %175 = sbr.rel (%p173) target = $region28
      $region27: #{resblock_forward.5} parent=23 // pred_region
        %s176 = smul.u32 24, %s18
        %p177 = scmp.lt.s32.totalorder %s17, 1
        %s178 = scalar_select %p177, %s17, 1
        %p179 = scmp.lt.s32.totalorder %s176, 47
        %s180 = scalar_select %p179, %s176, 47
        %s181 = smul.addr %s178, 48
        %s182 = sadd.s32 %s180, %s181
        %s183 = smul.addr %s182, 8
        %s184 = scalar_lea.vmem %s0, %s183
        %s185 = smul.u32 24, %s18
      $region28: #{resblock_forward.5} parent=23 // pred_fallthru
        _
      // Predicated region
      $region29: #{resblock_forward.5} parent=23 // pred_check
        %p186 = pneg %p114
      $region30: #{resblock_forward.5} parent=23 // pred_check_branch
        %188 = sbr.rel (%p186) target = $region32
      $region31: #{resblock_forward.5} parent=23 // pred_region
        %s189 = smul.u32 24, %s18
        %p190 = scmp.lt.s32.totalorder %s17, 1
        %s191 = scalar_select %p190, %s17, 1
        %p192 = scmp.lt.s32.totalorder %s189, 47
        %s193 = scalar_select %p192, %s189, 47
        %s194 = smul.addr %s191, 48
        %s195 = sadd.s32 %s193, %s194
        %s196 = smul.addr %s195, 8
        %s197 = scalar_lea.vmem %s3, %s196
        %s198 = smul.u32 24, %s18
      $region32: #{resblock_forward.5} parent=23 // pred_fallthru
        _
    $region24: #{resblock_forward.5} parent=5 // pred_fallthru
      _
    %p199 = scmp.le.s32.totalorder 1, %s10
    %p200 = scmp.lt.s32.totalorder %s10, 5
    %p201 = pnand %p199, %p200
    %p202 = pneg %p201
    // Predicated region
    $region33: #{resblock_forward.5} parent=5 // pred_check
      _
    $region34: #{resblock_forward.5} parent=5 // pred_check_branch
      %204 = sbr.rel (%p201) target = $region36
    $region35: #{resblock_forward.5} parent=5 // pred_region
      %s205 = ssub.s32 %s10, 1
      %s206 = smul.u32 24, %s20
      %p207 = scmp.lt.s32.totalorder %s19, 1
      %s208 = scalar_select %p207, %s19, 1
      %p209 = scmp.lt.s32.totalorder %s206, 47
      %s210 = scalar_select %p209, %s206, 47
      %s211 = smul.addr %s208, 48
      %s212 = sadd.s32 %s210, %s211
      %s213 = smul.addr %s212, 8
      %s214 = scalar_lea.vmem %s0, %s213
      %p215 = pneg %p50
      %p216 = pneg %p47
      %p217 = pneg %p71
      %p218 = pneg %p68
      %p219 = pneg %p92
      %p220 = pneg %p89
      %s221 = smul.u32 24, %s20
      %p222 = scmp.lt.s32.totalorder %s19, 1
      %s223 = scalar_select %p222, %s19, 1
      %p224 = scmp.lt.s32.totalorder %s221, 47
      %s225 = scalar_select %p224, %s221, 47
      %s226 = smul.addr %s223, 48
      %s227 = sadd.s32 %s225, %s226
      %s228 = smul.addr %s227, 8
      %s229 = scalar_lea.vmem %s3, %s228
      %p230 = pneg %p120
      %p231 = pneg %p117
      %p232 = pneg %p148
      %p233 = pneg %p145
      %s234 = smul.u32 24, %s20
      %p235 = scmp.lt.s32.totalorder %s19, 1
      %s236 = scalar_select %p235, %s19, 1
      %p237 = scmp.lt.s32.totalorder %s234, 47
      %s238 = scalar_select %p237, %s234, 47
      %s239 = smul.addr %s236, 48
      %s240 = sadd.s32 %s238, %s239
      %s241 = smul.addr %s240, 8
      %s242 = scalar_lea.vmem %s4, %s241
      %s243 = smul.u32 24, %s20
      %p244 = scmp.lt.s32.totalorder %s19, 1
      %s245 = scalar_select %p244, %s19, 1
      %p246 = scmp.lt.s32.totalorder %s243, 47
      %s247 = scalar_select %p246, %s243, 47
      %s248 = smul.addr %s245, 48
      %s249 = sadd.s32 %s247, %s248
      %s250 = smul.addr %s249, 8
      %s251 = scalar_lea.vmem %s0, %s250
      %s252 = smul.u32 24, %s20
      %s253 = smul.u32 24, %s20
      %p254 = scmp.lt.s32.totalorder %s19, 1
      %s255 = scalar_select %p254, %s19, 1
      %p256 = scmp.lt.s32.totalorder %s253, 47
      %s257 = scalar_select %p256, %s253, 47
      %s258 = smul.addr %s255, 48
      %s259 = sadd.s32 %s257, %s258
      %s260 = smul.addr %s259, 8
      %s261 = scalar_lea.vmem %s3, %s260
      %s262 = smul.u32 24, %s20
      %s263 = smul.u32 24, %s20
      %p264 = scmp.lt.s32.totalorder %s19, 1
      %s265 = scalar_select %p264, %s19, 1
      %p266 = scmp.lt.s32.totalorder %s263, 47
      %s267 = scalar_select %p266, %s263, 47
      %s268 = smul.addr %s265, 48
      %s269 = sadd.s32 %s267, %s268
      %s270 = smul.addr %s269, 8
      %s271 = scalar_lea.vmem %s4, %s270
      %s272 = smul.u32 24, %s20
      %v273 = vld [vmem:[%s251] sm:$0xff]
      %v274 = vld [vmem:[%s251 + $0x8] sm:$0xff]
      %v275 = vld [vmem:[%s251 + $0x10] sm:$0xff]
      %v276 = vld [vmem:[%s251 + $0x18] sm:$0xff]
      %v277 = vld [vmem:[%s251 + $0x20] sm:$0xff]
      %v278 = vld [vmem:[%s251 + $0x28] sm:$0xff]
      %v279 = vld [vmem:[%s251 + $0x30] sm:$0xff]
      %v280 = vld [vmem:[%s251 + $0x38] sm:$0xff]
      %v281 = vld [vmem:[%s251 + $0x40] sm:$0xff]
      %v282 = vld [vmem:[%s251 + $0x48] sm:$0xff]
      %v283 = vld [vmem:[%s251 + $0x50] sm:$0xff]
      %v284 = vld [vmem:[%s251 + $0x58] sm:$0xff]
      %v285 = vld [vmem:[%s251 + $0x60] sm:$0xff]
      %v286 = vld [vmem:[%s251 + $0x68] sm:$0xff]
      %v287 = vld [vmem:[%s251 + $0x70] sm:$0xff]
      %v288 = vld [vmem:[%s251 + $0x78] sm:$0xff]
      %v289 = vld [vmem:[%s251 + $0x80] sm:$0xff]
      %v290 = vld [vmem:[%s251 + $0x88] sm:$0xff]
      %v291 = vld [vmem:[%s251 + $0x90] sm:$0xff]
      %v292 = vld [vmem:[%s251 + $0x98] sm:$0xff]
      %v293 = vld [vmem:[%s251 + $0xa0] sm:$0xff]
      %v294 = vld [vmem:[%s251 + $0xa8] sm:$0xff]
      %v295 = vld [vmem:[%s251 + $0xb0] sm:$0xff]
      %v296 = vld [vmem:[%s251 + $0xb8] sm:$0xff]
      %v297 = vld [vmem:[%s1] sm:$0x1]
      %v299 = vlaneseq
      %v300 = vshrl.u32 %v299, 7
      %v301 = vsub.s32 0, %v300
      %v302 = vrot.slane %v297, %v301
      %v304 = vmul.f32 %v273, %v302
      %v305 = vmul.f32 %v274, %v302
      %v306 = vmul.f32 %v275, %v302
      %v307 = vmul.f32 %v276, %v302
      %v308 = vmul.f32 %v277, %v302
      %v309 = vmul.f32 %v278, %v302
      %v310 = vmul.f32 %v279, %v302
      %v311 = vmul.f32 %v280, %v302
      %v312 = vmul.f32 %v281, %v302
      %v313 = vmul.f32 %v282, %v302
      %v314 = vmul.f32 %v283, %v302
      %v315 = vmul.f32 %v284, %v302
      %v316 = vmul.f32 %v285, %v302
      %v317 = vmul.f32 %v286, %v302
      %v318 = vmul.f32 %v287, %v302
      %v319 = vmul.f32 %v288, %v302
      %v320 = vmul.f32 %v289, %v302
      %v321 = vmul.f32 %v290, %v302
      %v322 = vmul.f32 %v291, %v302
      %v323 = vmul.f32 %v292, %v302
      %v324 = vmul.f32 %v293, %v302
      %v325 = vmul.f32 %v294, %v302
      %v326 = vmul.f32 %v295, %v302
      %v327 = vmul.f32 %v296, %v302
      %v328 = vld [vmem:[%s2] sm:$0x1]
      %v330 = vlaneseq
      %v331 = vshrl.u32 %v330, 7
      %v332 = vsub.s32 0, %v331
      %v333 = vrot.slane %v328, %v332
      %v335 = vadd.f32 %v304, %v333
      %v336 = vadd.f32 %v305, %v333
      %v337 = vadd.f32 %v306, %v333
      %v338 = vadd.f32 %v307, %v333
      %v339 = vadd.f32 %v308, %v333
      %v340 = vadd.f32 %v309, %v333
      %v341 = vadd.f32 %v310, %v333
      %v342 = vadd.f32 %v311, %v333
      %v343 = vadd.f32 %v312, %v333
      %v344 = vadd.f32 %v313, %v333
      %v345 = vadd.f32 %v314, %v333
      %v346 = vadd.f32 %v315, %v333
      %v347 = vadd.f32 %v316, %v333
      %v348 = vadd.f32 %v317, %v333
      %v349 = vadd.f32 %v318, %v333
      %v350 = vadd.f32 %v319, %v333
      %v351 = vadd.f32 %v320, %v333
      %v352 = vadd.f32 %v321, %v333
      %v353 = vadd.f32 %v322, %v333
      %v354 = vadd.f32 %v323, %v333
      %v355 = vadd.f32 %v324, %v333
      %v356 = vadd.f32 %v325, %v333
      %v357 = vadd.f32 %v326, %v333
      %v358 = vadd.f32 %v327, %v333
      %v359 = vld [vmem:[%s261] sm:$0xff]
      %v360 = vld [vmem:[%s261 + $0x8] sm:$0xff]
      %v361 = vld [vmem:[%s261 + $0x10] sm:$0xff]
      %v362 = vld [vmem:[%s261 + $0x18] sm:$0xff]
      %v363 = vld [vmem:[%s261 + $0x20] sm:$0xff]
      %v364 = vld [vmem:[%s261 + $0x28] sm:$0xff]
      %v365 = vld [vmem:[%s261 + $0x30] sm:$0xff]
      %v366 = vld [vmem:[%s261 + $0x38] sm:$0xff]
      %v367 = vld [vmem:[%s261 + $0x40] sm:$0xff]
      %v368 = vld [vmem:[%s261 + $0x48] sm:$0xff]
      %v369 = vld [vmem:[%s261 + $0x50] sm:$0xff]
      %v370 = vld [vmem:[%s261 + $0x58] sm:$0xff]
      %v371 = vld [vmem:[%s261 + $0x60] sm:$0xff]
      %v372 = vld [vmem:[%s261 + $0x68] sm:$0xff]
      %v373 = vld [vmem:[%s261 + $0x70] sm:$0xff]
      %v374 = vld [vmem:[%s261 + $0x78] sm:$0xff]
      %v375 = vld [vmem:[%s261 + $0x80] sm:$0xff]
      %v376 = vld [vmem:[%s261 + $0x88] sm:$0xff]
      %v377 = vld [vmem:[%s261 + $0x90] sm:$0xff]
      %v378 = vld [vmem:[%s261 + $0x98] sm:$0xff]
      %v379 = vld [vmem:[%s261 + $0xa0] sm:$0xff]
      %v380 = vld [vmem:[%s261 + $0xa8] sm:$0xff]
      %v381 = vld [vmem:[%s261 + $0xb0] sm:$0xff]
      %v382 = vld [vmem:[%s261 + $0xb8] sm:$0xff]
      %v383 = vadd.f32 %v335, %v359
      %v384 = vadd.f32 %v336, %v360
      %v385 = vadd.f32 %v337, %v361
      %v386 = vadd.f32 %v338, %v362
      %v387 = vadd.f32 %v339, %v363
      %v388 = vadd.f32 %v340, %v364
      %v389 = vadd.f32 %v341, %v365
      %v390 = vadd.f32 %v342, %v366
      %v391 = vadd.f32 %v343, %v367
      %v392 = vadd.f32 %v344, %v368
      %v393 = vadd.f32 %v345, %v369
      %v394 = vadd.f32 %v346, %v370
      %v395 = vadd.f32 %v347, %v371
      %v396 = vadd.f32 %v348, %v372
      %v397 = vadd.f32 %v349, %v373
      %v398 = vadd.f32 %v350, %v374
      %v399 = vadd.f32 %v351, %v375
      %v400 = vadd.f32 %v352, %v376
      %v401 = vadd.f32 %v353, %v377
      %v402 = vadd.f32 %v354, %v378
      %v403 = vadd.f32 %v355, %v379
      %v404 = vadd.f32 %v356, %v380
      %v405 = vadd.f32 %v357, %v381
      %v406 = vadd.f32 %v358, %v382
      %407 = vst [vmem:[%s271] sm:$0xff] %v383
      %408 = vst [vmem:[%s271 + $0x8] sm:$0xff] %v384
      %409 = vst [vmem:[%s271 + $0x10] sm:$0xff] %v385
      %410 = vst [vmem:[%s271 + $0x18] sm:$0xff] %v386
      %411 = vst [vmem:[%s271 + $0x20] sm:$0xff] %v387
      %412 = vst [vmem:[%s271 + $0x28] sm:$0xff] %v388
      %413 = vst [vmem:[%s271 + $0x30] sm:$0xff] %v389
      %414 = vst [vmem:[%s271 + $0x38] sm:$0xff] %v390
      %415 = vst [vmem:[%s271 + $0x40] sm:$0xff] %v391
      %416 = vst [vmem:[%s271 + $0x48] sm:$0xff] %v392
      %417 = vst [vmem:[%s271 + $0x50] sm:$0xff] %v393
      %418 = vst [vmem:[%s271 + $0x58] sm:$0xff] %v394
      %419 = vst [vmem:[%s271 + $0x60] sm:$0xff] %v395
      %420 = vst [vmem:[%s271 + $0x68] sm:$0xff] %v396
      %421 = vst [vmem:[%s271 + $0x70] sm:$0xff] %v397
      %422 = vst [vmem:[%s271 + $0x78] sm:$0xff] %v398
      %423 = vst [vmem:[%s271 + $0x80] sm:$0xff] %v399
      %424 = vst [vmem:[%s271 + $0x88] sm:$0xff] %v400
      %425 = vst [vmem:[%s271 + $0x90] sm:$0xff] %v401
      %426 = vst [vmem:[%s271 + $0x98] sm:$0xff] %v402
      %427 = vst [vmem:[%s271 + $0xa0] sm:$0xff] %v403
      %428 = vst [vmem:[%s271 + $0xa8] sm:$0xff] %v404
      %429 = vst [vmem:[%s271 + $0xb0] sm:$0xff] %v405
      %430 = vst [vmem:[%s271 + $0xb8] sm:$0xff] %v406
      %s431 = smul.u32 24, %s20
      %p432 = scmp.lt.s32.totalorder %s19, 1
      %s433 = scalar_select %p432, %s19, 1
      %p434 = scmp.lt.s32.totalorder %s431, 47
      %s435 = scalar_select %p434, %s431, 47
      %s436 = smul.addr %s433, 48
      %s437 = sadd.s32 %s435, %s436
      %s438 = smul.addr %s437, 8
      %s439 = scalar_lea.vmem %s4, %s438
      // Predicated region
      $region37: #{resblock_forward.5} parent=35 // pred_check
        %p440 = pneg %p145
      $region38: #{resblock_forward.5} parent=35 // pred_check_branch
        %442 = sbr.rel (%p440) target = $region40
      $region39: #{resblock_forward.5} parent=35 // pred_region
        %s443 = smul.u32 24, %s20
      $region40: #{resblock_forward.5} parent=35 // pred_fallthru
        _
    $region36: #{resblock_forward.5} parent=5 // pred_fallthru
      _
    %p444 = scmp.le.s32.totalorder 2, %s10
    // Predicated region
    $region41: #{resblock_forward.5} parent=5 // pred_check
      %p445 = pneg %p444
    $region42: #{resblock_forward.5} parent=5 // pred_check_branch
      %447 = sbr.rel (%p445) target = $region44
    $region43: #{resblock_forward.5} parent=5 // pred_region
      %s448 = ssub.s32 %s10, 2
      // Predicated region
      $region45: #{resblock_forward.5} parent=43 // pred_check
        %p449 = pneg %p151
      $region46: #{resblock_forward.5} parent=43 // pred_check_branch
        %451 = sbr.rel (%p449) target = $region48
      $region47: #{resblock_forward.5} parent=43 // pred_region
        %s452 = smul.u32 24, %s22
        %p453 = scmp.lt.s32.totalorder %s21, 1
        %s454 = scalar_select %p453, %s21, 1
        %p455 = scmp.lt.s32.totalorder %s452, 47
        %s456 = scalar_select %p455, %s452, 47
        %s457 = smul.addr %s454, 48
        %s458 = sadd.s32 %s456, %s457
        %s459 = smul.addr %s458, 8
        %s460 = scalar_lea.vmem %s4, %s459
      $region48: #{resblock_forward.5} parent=43 // pred_fallthru
        _
    $region44: #{resblock_forward.5} parent=5 // pred_fallthru
      _
  $region6: #{resblock_forward.5} parent=0 // loop_footer
    %s14 = sadd.s32 1, %s10
  $region7: #{resblock_forward.5} parent=0 // loop_footer_branch
    %9 = sbr.rel target = $region3
  $region8: #{resblock_forward.5} parent=0 // loop_exit
    _

// kernel: resblock_forward.3
$region0: #{resblock_forward.3}
  #allocation0 [shape = 'u32[]', space=smem, size = 0x4, offset = 0x4, fixed_abs, tag = 'smem constant byte address 0x4 - core index']
  #allocation1 [shape = 'u32[144,128]{1,0:T(1,128)}', space=vmem, size = 0x12000, scoped, tag = 'internal scratch']
  #allocation2 [shape = 'bf16[256,128]{1,0:T(16,128)(2,1)}', space=vmem, size = 0x10000, scoped, tag = 'scratch operand']
  #allocation3 [shape = 'bf16[192,1152]{1,0:T(16,128)(2,1)}', space=vmem, size = 0x6c000, scoped, tag = 'scratch operand']
  %s0 = inlined_call_operand.vmem [shape: f32[2,384,128], index: 0, kind: input, shape index: {}, may-alias: {0,1,2}]
  %s1 = inlined_call_operand.vmem [shape: f32[2,384,128], index: 1, kind: input, shape index: {}, may-alias: {0,1,2}]
  %s2 = inlined_call_operand.vmem [shape: f32[2,384,128], index: 2, kind: input, shape index: {}, may-alias: {0,1,2}]
  %s3 = inlined_call_operand.vmem [shape: f32[384,1], index: 3, kind: input, shape index: {}, may-alias: {3,4,5}]
  %s4 = inlined_call_operand.vmem [shape: f32[384,1], index: 4, kind: input, shape index: {}, may-alias: {3,4,5}]
  %s5 = inlined_call_operand.vmem [shape: f32[384,1], index: 5, kind: input, shape index: {}, may-alias: {3,4,5}]
  %s6 = inlined_call_operand.vmem [shape: f32[1,128], index: 6, kind: input, shape index: {}]
  %s7 = inlined_call_operand.vmem [shape: f32[1,128], index: 7, kind: input, shape index: {}]
  %s8 = inlined_call_operand.vmem [shape: bf16[1152,128], index: 8, kind: input, shape index: {}]
  %s9 = inlined_call_operand.vmem [shape: f32[1,128], index: 9, kind: input, shape index: {}]
  %s10 = inlined_call_operand.vmem [shape: f32[2,384,128], index: 10, kind: output, shape index: {0}]
  %s11 = inlined_call_operand.vmem [shape: f32[4,2,128], index: 11, kind: output, shape index: {1}]
  %12 = xla_tuple %s10, %s11
  %s13 = sld [smem:[#allocation0]]
  $region81: #{resblock_forward.3} parent=0
    _
  %s15 = ssub.s32 1, %s13
  %s16 = scalar_select 0, %s15, %s13
  loop: start=0, step=1, limit=6
  $region2: #{resblock_forward.3} parent=0 // loop_pre_header
    _
  $region3: #{resblock_forward.3} parent=0 // loop_header
    %s18 = sphi 0, %s22
    %p19 = scmp.ge.s32.totalorder %s18, 6
    %s25 = sphi 0, %s37
    %s26 = sphi 0, %s33
    %s27 = sphi 0, %s25
    %s28 = sphi 0, %s26
    %s29 = sphi 0, %s27
    %s30 = sphi 0, %s28
    %s50 = sphi 0, %s52
    %s53 = sphi 0, %s50
    %s54 = sphi 0, %s53
    %s70 = sphi 0, %s54
    %s78 = sphi 0, %s80
    %s81 = sphi 0, %s78
    %s82 = sphi 0, %s81
    %s98 = sphi 0, %s82
    %s114 = sphi 0, %s116
    %s117 = sphi 0, %s114
    %s118 = sphi 0, %s117
    %s134 = sphi 0, %s118
    %s148 = sphi 0, %s150
    %s151 = sphi 0, %s148
    %s152 = sphi 0, %s151
    %s168 = sphi 0, %s152
    %s174 = sphi 0, %s176
    %s177 = sphi 0, %s174
    %s178 = sphi 0, %s177
    %s194 = sphi 0, %s178
    %s208 = sphi 0, %s210
    %s211 = sphi 0, %s208
    %s212 = sphi 0, %s211
    %s228 = sphi 0, %s212
    %s232 = sphi 0, %s232
    %s234 = sphi 0, %s232
    %s235 = sphi 0, %s234
    %s249 = sphi 0, %s235
    %s253 = sphi 0, %s253
    %s255 = sphi 0, %s253
    %s256 = sphi 0, %s255
    %s270 = sphi 0, %s256
    %s274 = sphi 0, %s274
    %s276 = sphi 0, %s274
    %s277 = sphi 0, %s276
    %s291 = sphi 0, %s277
    %s295 = sphi 0, %s295
    %s297 = sphi 0, %s295
    %s298 = sphi 0, %s297
    %s312 = sphi 0, %s298
    %s320 = sphi 0, %s322
    %s323 = sphi 0, %s320
    %s324 = sphi 0, %s323
    %s340 = sphi 0, %s324
    %s350 = sphi 0, %s352
    %s353 = sphi 0, %s350
    %s354 = sphi 0, %s353
    %s370 = sphi 0, %s354
  $region4: #{resblock_forward.3} parent=0 // loop_header_branch
    %21 = sbr.rel (%p19) target = $region8
  $region5: #{resblock_forward.3} parent=0 // loop_body
    %s23 = ssub.s32 %s18, 1
    %s24 = ssub.s32 %s18, 2
    %s31 = sadd.s32 1, %s26
    %p32 = scmp.ge.s32.totalorder %s31, 2
    %s33 = scalar_select %p32, 0, %s31
    %s34 = sadd.s32 1, %s25
    %s35 = scalar_select %p32, %s34, %s25
    %p36 = scmp.ge.s32.totalorder %s35, 2
    %s37 = scalar_select %p36, 0, %s35
    %s38 = smul.u32 %s26, 6
    %s39 = ssub.s32 %s38, 1
    %p40 = scmp.gt.s32.totalorder %s39, 0
    %s41 = scalar_select %p40, %s39, 0
    %s42 = smul.u32 %s33, 6
    %s43 = ssub.s32 %s42, 1
    %p44 = scmp.gt.s32.totalorder %s43, 0
    %s45 = scalar_select %p44, %s43, 0
    %s46 = ssub.s32 %s25, %s37
    %s47 = ssub.s32 %s41, %s45
    %s48 = sor.u32 %s46, %s47
    %p49 = scmp.eq.s32.totalorder %s48, 0
    %s51 = sadd.s32 %s50, 1
    %s52 = scalar_select %p49, %s50, %s51
    %p55 = pneg %p49
    %p56 = scmp.eq.s32.totalorder %s18, 3
    %p57 = por %p55, %p56
    %p58 = scmp.ne.s32.totalorder %s50, %s53
    %p59 = scmp.eq.s32.totalorder %s18, 0
    %p60 = por %p58, %p59
    %p61 = scmp.ne.s32.totalorder %s50, %s53
    %p62 = scmp.eq.s32.totalorder %s23, 3
    %p63 = por %p61, %p62
    %p64 = scmp.ne.s32.totalorder %s53, %s54
    %p65 = scmp.eq.s32.totalorder %s23, 0
    %p66 = por %p64, %p65
    %p67 = scmp.ne.s32.totalorder %s53, %s54
    %p68 = scmp.eq.s32.totalorder %s24, 3
    %p69 = por %p67, %p68
    %p71 = scmp.ne.s32.totalorder %s54, %s70
    %p72 = scmp.eq.s32.totalorder %s24, 0
    %p73 = por %p71, %p72
    %s74 = ssub.s32 %s25, %s37
    %s75 = ssub.s32 %s26, %s33
    %s76 = sor.u32 %s74, %s75
    %p77 = scmp.eq.s32.totalorder %s76, 0
    %s79 = sadd.s32 %s78, 1
    %s80 = scalar_select %p77, %s78, %s79
    %p83 = pneg %p77
    %p84 = scmp.eq.s32.totalorder %s18, 3
    %p85 = por %p83, %p84
    %p86 = scmp.ne.s32.totalorder %s78, %s81
    %p87 = scmp.eq.s32.totalorder %s18, 0
    %p88 = por %p86, %p87
    %p89 = scmp.ne.s32.totalorder %s78, %s81
    %p90 = scmp.eq.s32.totalorder %s23, 3
    %p91 = por %p89, %p90
    %p92 = scmp.ne.s32.totalorder %s81, %s82
    %p93 = scmp.eq.s32.totalorder %s23, 0
    %p94 = por %p92, %p93
    %p95 = scmp.ne.s32.totalorder %s81, %s82
    %p96 = scmp.eq.s32.totalorder %s24, 3
    %p97 = por %p95, %p96
    %p99 = scmp.ne.s32.totalorder %s82, %s98
    %p100 = scmp.eq.s32.totalorder %s24, 0
    %p101 = por %p99, %p100
    %s102 = smul.u32 %s26, 6
    %s103 = sadd.s32 %s102, 6
    %p104 = scmp.lt.s32.totalorder %s103, 11
    %s105 = scalar_select %p104, %s103, 11
    %s106 = smul.u32 %s33, 6
    %s107 = sadd.s32 %s106, 6
    %p108 = scmp.lt.s32.totalorder %s107, 11
    %s109 = scalar_select %p108, %s107, 11
    %s110 = ssub.s32 %s25, %s37
    %s111 = ssub.s32 %s105, %s109
    %s112 = sor.u32 %s110, %s111
    %p113 = scmp.eq.s32.totalorder %s112, 0
    %s115 = sadd.s32 %s114, 1
    %s116 = scalar_select %p113, %s114, %s115
    %p119 = pneg %p113
    %p120 = scmp.eq.s32.totalorder %s18, 3
    %p121 = por %p119, %p120
    %p122 = scmp.ne.s32.totalorder %s114, %s117
    %p123 = scmp.eq.s32.totalorder %s18, 0
    %p124 = por %p122, %p123
    %p125 = scmp.ne.s32.totalorder %s114, %s117
    %p126 = scmp.eq.s32.totalorder %s23, 3
    %p127 = por %p125, %p126
    %p128 = scmp.ne.s32.totalorder %s117, %s118
    %p129 = scmp.eq.s32.totalorder %s23, 0
    %p130 = por %p128, %p129
    %p131 = scmp.ne.s32.totalorder %s117, %s118
    %p132 = scmp.eq.s32.totalorder %s24, 3
    %p133 = por %p131, %p132
    %p135 = scmp.ne.s32.totalorder %s118, %s134
    %p136 = scmp.eq.s32.totalorder %s24, 0
    %p137 = por %p135, %p136
    %s138 = smul.u32 %s26, 6
    %s139 = ssub.s32 %s138, 1
    %p140 = scmp.gt.s32.totalorder %s139, 0
    %s141 = scalar_select %p140, %s139, 0
    %s142 = smul.u32 %s33, 6
    %s143 = ssub.s32 %s142, 1
    %p144 = scmp.gt.s32.totalorder %s143, 0
    %s145 = scalar_select %p144, %s143, 0
    %s146 = ssub.s32 %s141, %s145
    %p147 = scmp.eq.s32.totalorder %s146, 0
    %s149 = sadd.s32 %s148, 1
    %s150 = scalar_select %p147, %s148, %s149
    %p153 = pneg %p147
    %p154 = scmp.eq.s32.totalorder %s18, 3
    %p155 = por %p153, %p154
    %p156 = scmp.ne.s32.totalorder %s148, %s151
    %p157 = scmp.eq.s32.totalorder %s18, 0
    %p158 = por %p156, %p157
    %p159 = scmp.ne.s32.totalorder %s148, %s151
    %p160 = scmp.eq.s32.totalorder %s23, 3
    %p161 = por %p159, %p160
    %p162 = scmp.ne.s32.totalorder %s151, %s152
    %p163 = scmp.eq.s32.totalorder %s23, 0
    %p164 = por %p162, %p163
    %p165 = scmp.ne.s32.totalorder %s151, %s152
    %p166 = scmp.eq.s32.totalorder %s24, 3
    %p167 = por %p165, %p166
    %p169 = scmp.ne.s32.totalorder %s152, %s168
    %p170 = scmp.eq.s32.totalorder %s24, 0
    %p171 = por %p169, %p170
    %s172 = ssub.s32 %s26, %s33
    %p173 = scmp.eq.s32.totalorder %s172, 0
    %s175 = sadd.s32 %s174, 1
    %s176 = scalar_select %p173, %s174, %s175
    %p179 = pneg %p173
    %p180 = scmp.eq.s32.totalorder %s18, 3
    %p181 = por %p179, %p180
    %p182 = scmp.ne.s32.totalorder %s174, %s177
    %p183 = scmp.eq.s32.totalorder %s18, 0
    %p184 = por %p182, %p183
    %p185 = scmp.ne.s32.totalorder %s174, %s177
    %p186 = scmp.eq.s32.totalorder %s23, 3
    %p187 = por %p185, %p186
    %p188 = scmp.ne.s32.totalorder %s177, %s178
    %p189 = scmp.eq.s32.totalorder %s23, 0
    %p190 = por %p188, %p189
    %p191 = scmp.ne.s32.totalorder %s177, %s178
    %p192 = scmp.eq.s32.totalorder %s24, 3
    %p193 = por %p191, %p192
    %p195 = scmp.ne.s32.totalorder %s178, %s194
    %p196 = scmp.eq.s32.totalorder %s24, 0
    %p197 = por %p195, %p196
    %s198 = smul.u32 %s26, 6
    %s199 = sadd.s32 %s198, 6
    %p200 = scmp.lt.s32.totalorder %s199, 11
    %s201 = scalar_select %p200, %s199, 11
    %s202 = smul.u32 %s33, 6
    %s203 = sadd.s32 %s202, 6
    %p204 = scmp.lt.s32.totalorder %s203, 11
    %s205 = scalar_select %p204, %s203, 11
    %s206 = ssub.s32 %s201, %s205
    %p207 = scmp.eq.s32.totalorder %s206, 0
    %s209 = sadd.s32 %s208, 1
    %s210 = scalar_select %p207, %s208, %s209
    %p213 = pneg %p207
    %p214 = scmp.eq.s32.totalorder %s18, 3
    %p215 = por %p213, %p214
    %p216 = scmp.ne.s32.totalorder %s208, %s211
    %p217 = scmp.eq.s32.totalorder %s18, 0
    %p218 = por %p216, %p217
    %p219 = scmp.ne.s32.totalorder %s208, %s211
    %p220 = scmp.eq.s32.totalorder %s23, 3
    %p221 = por %p219, %p220
    %p222 = scmp.ne.s32.totalorder %s211, %s212
    %p223 = scmp.eq.s32.totalorder %s23, 0
    %p224 = por %p222, %p223
    %p225 = scmp.ne.s32.totalorder %s211, %s212
    %p226 = scmp.eq.s32.totalorder %s24, 3
    %p227 = por %p225, %p226
    %p229 = scmp.ne.s32.totalorder %s212, %s228
    %p230 = scmp.eq.s32.totalorder %s24, 0
    %p231 = por %p229, %p230
    %s233 = sadd.s32 %s232, 1
    %p236 = scmp.eq.s32.totalorder %s18, 3
    %p237 = scmp.ne.s32.totalorder %s232, %s234
    %p238 = scmp.eq.s32.totalorder %s18, 0
    %p239 = por %p237, %p238
    %p240 = scmp.ne.s32.totalorder %s232, %s234
    %p241 = scmp.eq.s32.totalorder %s23, 3
    %p242 = por %p240, %p241
    %p243 = scmp.ne.s32.totalorder %s234, %s235
    %p244 = scmp.eq.s32.totalorder %s23, 0
    %p245 = por %p243, %p244
    %p246 = scmp.ne.s32.totalorder %s234, %s235
    %p247 = scmp.eq.s32.totalorder %s24, 3
    %p248 = por %p246, %p247
    %p250 = scmp.ne.s32.totalorder %s235, %s249
    %p251 = scmp.eq.s32.totalorder %s24, 0
    %p252 = por %p250, %p251
    %s254 = sadd.s32 %s253, 1
    %p257 = scmp.eq.s32.totalorder %s18, 3
    %p258 = scmp.ne.s32.totalorder %s253, %s255
    %p259 = scmp.eq.s32.totalorder %s18, 0
    %p260 = por %p258, %p259
    %p261 = scmp.ne.s32.totalorder %s253, %s255
    %p262 = scmp.eq.s32.totalorder %s23, 3
    %p263 = por %p261, %p262
    %p264 = scmp.ne.s32.totalorder %s255, %s256
    %p265 = scmp.eq.s32.totalorder %s23, 0
    %p266 = por %p264, %p265
    %p267 = scmp.ne.s32.totalorder %s255, %s256
    %p268 = scmp.eq.s32.totalorder %s24, 3
    %p269 = por %p267, %p268
    %p271 = scmp.ne.s32.totalorder %s256, %s270
    %p272 = scmp.eq.s32.totalorder %s24, 0
    %p273 = por %p271, %p272
    %s275 = sadd.s32 %s274, 1
    %p278 = scmp.eq.s32.totalorder %s18, 3
    %p279 = scmp.ne.s32.totalorder %s274, %s276
    %p280 = scmp.eq.s32.totalorder %s18, 0
    %p281 = por %p279, %p280
    %p282 = scmp.ne.s32.totalorder %s274, %s276
    %p283 = scmp.eq.s32.totalorder %s23, 3
    %p284 = por %p282, %p283
    %p285 = scmp.ne.s32.totalorder %s276, %s277
    %p286 = scmp.eq.s32.totalorder %s23, 0
    %p287 = por %p285, %p286
    %p288 = scmp.ne.s32.totalorder %s276, %s277
    %p289 = scmp.eq.s32.totalorder %s24, 3
    %p290 = por %p288, %p289
    %p292 = scmp.ne.s32.totalorder %s277, %s291
    %p293 = scmp.eq.s32.totalorder %s24, 0
    %p294 = por %p292, %p293
    %s296 = sadd.s32 %s295, 1
    %p299 = scmp.eq.s32.totalorder %s18, 3
    %p300 = scmp.ne.s32.totalorder %s295, %s297
    %p301 = scmp.eq.s32.totalorder %s18, 0
    %p302 = por %p300, %p301
    %p303 = scmp.ne.s32.totalorder %s295, %s297
    %p304 = scmp.eq.s32.totalorder %s23, 3
    %p305 = por %p303, %p304
    %p306 = scmp.ne.s32.totalorder %s297, %s298
    %p307 = scmp.eq.s32.totalorder %s23, 0
    %p308 = por %p306, %p307
    %p309 = scmp.ne.s32.totalorder %s297, %s298
    %p310 = scmp.eq.s32.totalorder %s24, 3
    %p311 = por %p309, %p310
    %p313 = scmp.ne.s32.totalorder %s298, %s312
    %p314 = scmp.eq.s32.totalorder %s24, 0
    %p315 = por %p313, %p314
    %s316 = ssub.s32 %s25, %s37
    %s317 = ssub.s32 %s26, %s33
    %s318 = sor.u32 %s316, %s317
    %p319 = scmp.eq.s32.totalorder %s318, 0
    %s321 = sadd.s32 %s320, 1
    %s322 = scalar_select %p319, %s320, %s321
    %p325 = pneg %p319
    %p326 = scmp.eq.s32.totalorder %s18, 3
    %p327 = por %p325, %p326
    %p328 = scmp.ne.s32.totalorder %s320, %s323
    %p329 = scmp.eq.s32.totalorder %s18, 0
    %p330 = por %p328, %p329
    %p331 = scmp.ne.s32.totalorder %s320, %s323
    %p332 = scmp.eq.s32.totalorder %s23, 3
    %p333 = por %p331, %p332
    %p334 = scmp.ne.s32.totalorder %s323, %s324
    %p335 = scmp.eq.s32.totalorder %s23, 0
    %p336 = por %p334, %p335
    %p337 = scmp.ne.s32.totalorder %s323, %s324
    %p338 = scmp.eq.s32.totalorder %s24, 3
    %p339 = por %p337, %p338
    %p341 = scmp.ne.s32.totalorder %s324, %s340
    %p342 = scmp.eq.s32.totalorder %s24, 0
    %p343 = por %p341, %p342
    %s344 = smul.u32 %s25, 2
    %s345 = sadd.s32 %s344, %s26
    %s346 = smul.u32 %s37, 2
    %s347 = sadd.s32 %s346, %s33
    %s348 = ssub.s32 %s345, %s347
    %p349 = scmp.eq.s32.totalorder %s348, 0
    %s351 = sadd.s32 %s350, 1
    %s352 = scalar_select %p349, %s350, %s351
    %p355 = pneg %p349
    %p356 = scmp.eq.s32.totalorder %s18, 3
    %p357 = por %p355, %p356
    %p358 = scmp.ne.s32.totalorder %s350, %s353
    %p359 = scmp.eq.s32.totalorder %s18, 0
    %p360 = por %p358, %p359
    %p361 = scmp.ne.s32.totalorder %s350, %s353
    %p362 = scmp.eq.s32.totalorder %s23, 3
    %p363 = por %p361, %p362
    %p364 = scmp.ne.s32.totalorder %s353, %s354
    %p365 = scmp.eq.s32.totalorder %s23, 0
    %p366 = por %p364, %p365
    %p367 = scmp.ne.s32.totalorder %s353, %s354
    %p368 = scmp.eq.s32.totalorder %s24, 3
    %p369 = por %p367, %p368
    %p371 = scmp.ne.s32.totalorder %s354, %s370
    %p372 = scmp.eq.s32.totalorder %s24, 0
    %p373 = por %p371, %p372
    %p374 = scmp.le.s32.totalorder 1, %s18
    %p375 = scmp.lt.s32.totalorder %s18, 5
    %p376 = pnand %p374, %p375
    %p377 = pneg %p376
    // Predicated region
    $region9: #{resblock_forward.3} parent=5 // pred_check
      _
    $region10: #{resblock_forward.3} parent=5 // pred_check_branch
      %379 = sbr.rel (%p376) target = $region12
    $region11: #{resblock_forward.3} parent=5 // pred_region
      %s380 = ssub.s32 %s18, 1
      // Predicated region
      $region13: #{resblock_forward.3} parent=11 // pred_check
        %p381 = pneg %p245
      $region14: #{resblock_forward.3} parent=11 // pred_check_branch
        %383 = sbr.rel (%p381) target = $region16
      $region15: #{resblock_forward.3} parent=11 // pred_region
        _
      $region16: #{resblock_forward.3} parent=11 // pred_fallthru
        _
      // Predicated region
      $region17: #{resblock_forward.3} parent=11 // pred_check
        %p384 = pneg %p266
      $region18: #{resblock_forward.3} parent=11 // pred_check_branch
        %386 = sbr.rel (%p384) target = $region20
      $region19: #{resblock_forward.3} parent=11 // pred_region
        _
      $region20: #{resblock_forward.3} parent=11 // pred_fallthru
        _
      // Predicated region
      $region21: #{resblock_forward.3} parent=11 // pred_check
        %p387 = pneg %p287
      $region22: #{resblock_forward.3} parent=11 // pred_check_branch
        %389 = sbr.rel (%p387) target = $region24
      $region23: #{resblock_forward.3} parent=11 // pred_region
        _
      $region24: #{resblock_forward.3} parent=11 // pred_fallthru
        _
      // Predicated region
      $region25: #{resblock_forward.3} parent=11 // pred_check
        %p390 = pneg %p308
      $region26: #{resblock_forward.3} parent=11 // pred_check_branch
        %392 = sbr.rel (%p390) target = $region28
      $region27: #{resblock_forward.3} parent=11 // pred_region
        _
      $region28: #{resblock_forward.3} parent=11 // pred_fallthru
        _
    $region12: #{resblock_forward.3} parent=5 // pred_fallthru
      _
    %p393 = scmp.lt.s32.totalorder %s18, 4
    // Predicated region
    $region29: #{resblock_forward.3} parent=5 // pred_check
      %p394 = pneg %p393
    $region30: #{resblock_forward.3} parent=5 // pred_check_branch
      %396 = sbr.rel (%p394) target = $region32
    $region31: #{resblock_forward.3} parent=5 // pred_region
      // Predicated region
      $region33: #{resblock_forward.3} parent=31 // pred_check
        %p397 = pneg %p60
      $region34: #{resblock_forward.3} parent=31 // pred_check_branch
        %399 = sbr.rel (%p397) target = $region36
      $region35: #{resblock_forward.3} parent=31 // pred_region
        %s400 = smul.u32 %s26, 6
        %s401 = ssub.s32 %s400, 1
        %p402 = scmp.gt.s32.totalorder %s401, 0
        %s403 = scalar_select %p402, %s401, 0
        %s404 = smul.u32 4, %s403
        %p405 = scmp.lt.s32.totalorder %s25, 1
        %s406 = scalar_select %p405, %s25, 1
        %p407 = scmp.lt.s32.totalorder %s404, 47
        %s408 = scalar_select %p407, %s404, 47
        %s409 = smul.addr %s406, 48
        %s410 = sadd.s32 %s408, %s409
        %s411 = smul.addr %s410, 8
        %s412 = scalar_lea.vmem %s0, %s411
        %s413 = smul.u32 %s26, 6
        %s414 = ssub.s32 %s413, 1
        %p415 = scmp.gt.s32.totalorder %s414, 0
        %s416 = scalar_select %p415, %s414, 0
        %s417 = smul.u32 4, %s416
      $region36: #{resblock_forward.3} parent=31 // pred_fallthru
        _
      // Predicated region
      $region37: #{resblock_forward.3} parent=31 // pred_check
        %p418 = pneg %p88
      $region38: #{resblock_forward.3} parent=31 // pred_check_branch
        %420 = sbr.rel (%p418) target = $region40
      $region39: #{resblock_forward.3} parent=31 // pred_region
        %s421 = smul.u32 24, %s26
        %p422 = scmp.lt.s32.totalorder %s25, 1
        %s423 = scalar_select %p422, %s25, 1
        %p424 = scmp.lt.s32.totalorder %s421, 47
        %s425 = scalar_select %p424, %s421, 47
        %s426 = smul.addr %s423, 48
        %s427 = sadd.s32 %s425, %s426
        %s428 = smul.addr %s427, 8
        %s429 = scalar_lea.vmem %s1, %s428
        %s430 = smul.u32 24, %s26
      $region40: #{resblock_forward.3} parent=31 // pred_fallthru
        _
      // Predicated region
      $region41: #{resblock_forward.3} parent=31 // pred_check
        %p431 = pneg %p124
      $region42: #{resblock_forward.3} parent=31 // pred_check_branch
        %433 = sbr.rel (%p431) target = $region44
      $region43: #{resblock_forward.3} parent=31 // pred_region
        %s434 = smul.u32 %s26, 6
        %s435 = sadd.s32 %s434, 6
        %p436 = scmp.lt.s32.totalorder %s435, 11
        %s437 = scalar_select %p436, %s435, 11
        %s438 = smul.u32 4, %s437
        %p439 = scmp.lt.s32.totalorder %s25, 1
        %s440 = scalar_select %p439, %s25, 1
        %p441 = scmp.lt.s32.totalorder %s438, 47
        %s442 = scalar_select %p441, %s438, 47
        %s443 = smul.addr %s440, 48
        %s444 = sadd.s32 %s442, %s443
        %s445 = smul.addr %s444, 8
        %s446 = scalar_lea.vmem %s2, %s445
        %s447 = smul.u32 %s26, 6
        %s448 = sadd.s32 %s447, 6
        %p449 = scmp.lt.s32.totalorder %s448, 11
        %s450 = scalar_select %p449, %s448, 11
        %s451 = smul.u32 4, %s450
      $region44: #{resblock_forward.3} parent=31 // pred_fallthru
        _
      // Predicated region
      $region45: #{resblock_forward.3} parent=31 // pred_check
        %p452 = pneg %p158
      $region46: #{resblock_forward.3} parent=31 // pred_check_branch
        %454 = sbr.rel (%p452) target = $region48
      $region47: #{resblock_forward.3} parent=31 // pred_region
        %s455 = smul.u32 %s26, 6
        %s456 = ssub.s32 %s455, 1
        %p457 = scmp.gt.s32.totalorder %s456, 0
        %s458 = scalar_select %p457, %s456, 0
        %s459 = smul.u32 4, %s458
        %p460 = scmp.lt.s32.totalorder %s459, 47
        %s461 = scalar_select %p460, %s459, 47
        %s462 = smul.addr %s461, 8
        %s463 = scalar_lea.vmem %s3, %s462
        %s464 = smul.u32 %s26, 6
        %s465 = ssub.s32 %s464, 1
        %p466 = scmp.gt.s32.totalorder %s465, 0
        %s467 = scalar_select %p466, %s465, 0
        %s468 = smul.u32 4, %s467
      $region48: #{resblock_forward.3} parent=31 // pred_fallthru
        _
      // Predicated region
      $region49: #{resblock_forward.3} parent=31 // pred_check
        %p469 = pneg %p184
      $region50: #{resblock_forward.3} parent=31 // pred_check_branch
        %471 = sbr.rel (%p469) target = $region52
      $region51: #{resblock_forward.3} parent=31 // pred_region
        %s472 = smul.u32 24, %s26
        %p473 = scmp.lt.s32.totalorder %s472, 47
        %s474 = scalar_select %p473, %s472, 47
        %s475 = smul.addr %s474, 8
        %s476 = scalar_lea.vmem %s4, %s475
        %s477 = smul.u32 24, %s26
      $region52: #{resblock_forward.3} parent=31 // pred_fallthru
        _
      // Predicated region
      $region53: #{resblock_forward.3} parent=31 // pred_check
        %p478 = pneg %p218
      $region54: #{resblock_forward.3} parent=31 // pred_check_branch
        %480 = sbr.rel (%p478) target = $region56
      $region55: #{resblock_forward.3} parent=31 // pred_region
        %s481 = smul.u32 %s26, 6
        %s482 = sadd.s32 %s481, 6
        %p483 = scmp.lt.s32.totalorder %s482, 11
        %s484 = scalar_select %p483, %s482, 11
        %s485 = smul.u32 4, %s484
        %p486 = scmp.lt.s32.totalorder %s485, 47
        %s487 = scalar_select %p486, %s485, 47
        %s488 = smul.addr %s487, 8
        %s489 = scalar_lea.vmem %s5, %s488
        %s490 = smul.u32 %s26, 6
        %s491 = sadd.s32 %s490, 6
        %p492 = scmp.lt.s32.totalorder %s491, 11
        %s493 = scalar_select %p492, %s491, 11
        %s494 = smul.u32 4, %s493
      $region56: #{resblock_forward.3} parent=31 // pred_fallthru
        _
    $region32: #{resblock_forward.3} parent=5 // pred_fallthru
      _
    %p495 = scmp.le.s32.totalorder 1, %s18
    %p496 = scmp.lt.s32.totalorder %s18, 5
    %p497 = pnand %p495, %p496
    %p498 = pneg %p497
    // Predicated region
    $region57: #{resblock_forward.3} parent=5 // pred_check
      _
    $region58: #{resblock_forward.3} parent=5 // pred_check_branch
      %500 = sbr.rel (%p497) target = $region60
    $region59: #{resblock_forward.3} parent=5 // pred_region
      %s501 = ssub.s32 %s18, 1
      %s502 = smul.u32 %s28, 6
      %s503 = ssub.s32 %s502, 1
      %p504 = scmp.gt.s32.totalorder %s503, 0
      %s505 = scalar_select %p504, %s503, 0
      %s506 = smul.u32 4, %s505
      %p507 = scmp.lt.s32.totalorder %s27, 1
      %s508 = scalar_select %p507, %s27, 1
      %p509 = scmp.lt.s32.totalorder %s506, 47
      %s510 = scalar_select %p509, %s506, 47
      %s511 = smul.addr %s508, 48
      %s512 = sadd.s32 %s510, %s511
      %s513 = smul.addr %s512, 8
      %s514 = scalar_lea.vmem %s0, %s513
      %p515 = pneg %p66
      %p516 = pneg %p63
      %s517 = smul.u32 24, %s28
      %p518 = scmp.lt.s32.totalorder %s27, 1
      %s519 = scalar_select %p518, %s27, 1
      %p520 = scmp.lt.s32.totalorder %s517, 47
      %s521 = scalar_select %p520, %s517, 47
      %s522 = smul.addr %s519, 48
      %s523 = sadd.s32 %s521, %s522
      %s524 = smul.addr %s523, 8
      %s525 = scalar_lea.vmem %s1, %s524
      %p526 = pneg %p94
      %p527 = pneg %p91
      %s528 = smul.u32 %s28, 6
      %s529 = sadd.s32 %s528, 6
      %p530 = scmp.lt.s32.totalorder %s529, 11
      %s531 = scalar_select %p530, %s529, 11
      %s532 = smul.u32 4, %s531
      %p533 = scmp.lt.s32.totalorder %s27, 1
      %s534 = scalar_select %p533, %s27, 1
      %p535 = scmp.lt.s32.totalorder %s532, 47
      %s536 = scalar_select %p535, %s532, 47
      %s537 = smul.addr %s534, 48
      %s538 = sadd.s32 %s536, %s537
      %s539 = smul.addr %s538, 8
      %s540 = scalar_lea.vmem %s2, %s539
      %p541 = pneg %p130
      %p542 = pneg %p127
      %s543 = smul.u32 %s28, 6
      %s544 = ssub.s32 %s543, 1
      %p545 = scmp.gt.s32.totalorder %s544, 0
      %s546 = scalar_select %p545, %s544, 0
      %s547 = smul.u32 4, %s546
      %p548 = scmp.lt.s32.totalorder %s547, 47
      %s549 = scalar_select %p548, %s547, 47
      %s550 = smul.addr %s549, 8
      %s551 = scalar_lea.vmem %s3, %s550
      %p552 = pneg %p164
      %p553 = pneg %p161
      %s554 = smul.u32 24, %s28
      %p555 = scmp.lt.s32.totalorder %s554, 47
      %s556 = scalar_select %p555, %s554, 47
      %s557 = smul.addr %s556, 8
      %s558 = scalar_lea.vmem %s4, %s557
      %p559 = pneg %p190
      %p560 = pneg %p187
      %s561 = smul.u32 %s28, 6
      %s562 = sadd.s32 %s561, 6
      %p563 = scmp.lt.s32.totalorder %s562, 11
      %s564 = scalar_select %p563, %s562, 11
      %s565 = smul.u32 4, %s564
      %p566 = scmp.lt.s32.totalorder %s565, 47
      %s567 = scalar_select %p566, %s565, 47
      %s568 = smul.addr %s567, 8
      %s569 = scalar_lea.vmem %s5, %s568
      %p570 = pneg %p224
      %p571 = pneg %p221
      %p572 = pneg %p245
      %p573 = pneg %p242
      %p574 = pneg %p266
      %p575 = pneg %p263
      %p576 = pneg %p287
      %p577 = pneg %p284
      %p578 = pneg %p308
      %p579 = pneg %p305
      %p580 = pneg %p336
      %p581 = pneg %p333
      %s582 = smul.u32 24, %s28
      %p583 = scmp.lt.s32.totalorder %s27, 1
      %s584 = scalar_select %p583, %s27, 1
      %p585 = scmp.lt.s32.totalorder %s582, 47
      %s586 = scalar_select %p585, %s582, 47
      %s587 = smul.addr %s584, 48
      %s588 = sadd.s32 %s586, %s587
      %s589 = smul.addr %s588, 8
      %s590 = scalar_lea.vmem %s10, %s589
      %p591 = pneg %p366
      %p592 = pneg %p363
      %s593 = smul.u32 %s27, 2
      %s594 = sadd.s32 %s593, %s28
      %p595 = scmp.lt.s32.totalorder %s594, 3
      %s596 = scalar_select %p595, %s594, 3
      %s597 = smul.addr %s596, 2
      %s598 = scalar_lea.vmem %s11, %s597
      %s599 = smul.u32 %s28, 6
      %s600 = ssub.s32 %s599, 1
      %p601 = scmp.gt.s32.totalorder %s600, 0
      %s602 = scalar_select %p601, %s600, 0
      %s603 = smul.u32 4, %s602
      %p604 = scmp.lt.s32.totalorder %s27, 1
      %s605 = scalar_select %p604, %s27, 1
      %p606 = scmp.lt.s32.totalorder %s603, 47
      %s607 = scalar_select %p606, %s603, 47
      %s608 = smul.addr %s605, 48
      %s609 = sadd.s32 %s607, %s608
      %s610 = smul.addr %s609, 8
      %s611 = scalar_lea.vmem %s0, %s610
      %s612 = smul.u32 %s28, 6
      %s613 = ssub.s32 %s612, 1
      %p614 = scmp.gt.s32.totalorder %s613, 0
      %s615 = scalar_select %p614, %s613, 0
      %s616 = smul.u32 4, %s615
      %s617 = smul.u32 24, %s28
      %p618 = scmp.lt.s32.totalorder %s27, 1
      %s619 = scalar_select %p618, %s27, 1
      %p620 = scmp.lt.s32.totalorder %s617, 47
      %s621 = scalar_select %p620, %s617, 47
      %s622 = smul.addr %s619, 48
      %s623 = sadd.s32 %s621, %s622
      %s624 = smul.addr %s623, 8
      %s625 = scalar_lea.vmem %s1, %s624
      %s626 = smul.u32 24, %s28
      %s627 = smul.u32 %s28, 6
      %s628 = sadd.s32 %s627, 6
      %p629 = scmp.lt.s32.totalorder %s628, 11
      %s630 = scalar_select %p629, %s628, 11
      %s631 = smul.u32 4, %s630
      %p632 = scmp.lt.s32.totalorder %s27, 1
      %s633 = scalar_select %p632, %s27, 1
      %p634 = scmp.lt.s32.totalorder %s631, 47
      %s635 = scalar_select %p634, %s631, 47
      %s636 = smul.addr %s633, 48
      %s637 = sadd.s32 %s635, %s636
      %s638 = smul.addr %s637, 8
      %s639 = scalar_lea.vmem %s2, %s638
      %s640 = smul.u32 %s28, 6
      %s641 = sadd.s32 %s640, 6
      %p642 = scmp.lt.s32.totalorder %s641, 11
      %s643 = scalar_select %p642, %s641, 11
      %s644 = smul.u32 4, %s643
      %s645 = smul.u32 %s28, 6
      %s646 = ssub.s32 %s645, 1
      %p647 = scmp.gt.s32.totalorder %s646, 0
      %s648 = scalar_select %p647, %s646, 0
      %s649 = smul.u32 4, %s648
      %p650 = scmp.lt.s32.totalorder %s649, 47
      %s651 = scalar_select %p650, %s649, 47
      %s652 = smul.addr %s651, 8
      %s653 = scalar_lea.vmem %s3, %s652
      %s654 = smul.u32 %s28, 6
      %s655 = ssub.s32 %s654, 1
      %p656 = scmp.gt.s32.totalorder %s655, 0
      %s657 = scalar_select %p656, %s655, 0
      %s658 = smul.u32 4, %s657
      %s659 = smul.u32 24, %s28
      %p660 = scmp.lt.s32.totalorder %s659, 47
      %s661 = scalar_select %p660, %s659, 47
      %s662 = smul.addr %s661, 8
      %s663 = scalar_lea.vmem %s4, %s662
      %s664 = smul.u32 24, %s28
      %s665 = smul.u32 %s28, 6
      %s666 = sadd.s32 %s665, 6
      %p667 = scmp.lt.s32.totalorder %s666, 11
      %s668 = scalar_select %p667, %s666, 11
      %s669 = smul.u32 4, %s668
      %p670 = scmp.lt.s32.totalorder %s669, 47
      %s671 = scalar_select %p670, %s669, 47
      %s672 = smul.addr %s671, 8
      %s673 = scalar_lea.vmem %s5, %s672
      %s674 = smul.u32 %s28, 6
      %s675 = sadd.s32 %s674, 6
      %p676 = scmp.lt.s32.totalorder %s675, 11
      %s677 = scalar_select %p676, %s675, 11
      %s678 = smul.u32 4, %s677
      %s679 = smul.u32 24, %s28
      %p680 = scmp.lt.s32.totalorder %s27, 1
      %s681 = scalar_select %p680, %s27, 1
      %p682 = scmp.lt.s32.totalorder %s679, 47
      %s683 = scalar_select %p682, %s679, 47
      %s684 = smul.addr %s681, 48
      %s685 = sadd.s32 %s683, %s684
      %s686 = smul.addr %s685, 8
      %s687 = scalar_lea.vmem %s10, %s686
      %s688 = smul.u32 24, %s28
      %s689 = smul.u32 %s27, 2
      %s690 = sadd.s32 %s689, %s28
      %p691 = scmp.lt.s32.totalorder %s690, 3
      %s692 = scalar_select %p691, %s690, 3
      %s693 = smul.addr %s692, 2
      %s694 = scalar_lea.vmem %s11, %s693
      %s695 = smul.u32 %s27, 2
      %s696 = sadd.s32 %s695, %s28
      %v698 = vld [vmem:[%s611] sm:$0xff]
      %v699 = vld [vmem:[%s611 + $0x8] sm:$0xff]
      %v700 = vld [vmem:[%s611 + $0x10] sm:$0xff]
      %v701 = vld [vmem:[%s611 + $0x18] sm:$0xff]
      %v702 = vpack.c.bf16 %v699, %v698
      %v703 = vpack.c.bf16 %v701, %v700
      %704 = vst [vmem:[#allocation2] sm:$0xff] %v702
      %705 = vst [vmem:[#allocation2 + $0x8] sm:$0xff] %v703
      %v706 = vld [vmem:[%s625] sm:$0xff]
      %v707 = vld [vmem:[%s625 + $0x8] sm:$0xff]
      %v708 = vld [vmem:[%s625 + $0x10] sm:$0xff]
      %v709 = vld [vmem:[%s625 + $0x18] sm:$0xff]
      %v710 = vld [vmem:[%s625 + $0x20] sm:$0xff]
      %v711 = vld [vmem:[%s625 + $0x28] sm:$0xff]
      %v712 = vld [vmem:[%s625 + $0x30] sm:$0xff]
      %v713 = vld [vmem:[%s625 + $0x38] sm:$0xff]
      %v714 = vld [vmem:[%s625 + $0x40] sm:$0xff]
      %v715 = vld [vmem:[%s625 + $0x48] sm:$0xff]
      %v716 = vld [vmem:[%s625 + $0x50] sm:$0xff]
      %v717 = vld [vmem:[%s625 + $0x58] sm:$0xff]
      %v718 = vld [vmem:[%s625 + $0x60] sm:$0xff]
      %v719 = vld [vmem:[%s625 + $0x68] sm:$0xff]
      %v720 = vld [vmem:[%s625 + $0x70] sm:$0xff]
      %v721 = vld [vmem:[%s625 + $0x78] sm:$0xff]
      %v722 = vld [vmem:[%s625 + $0x80] sm:$0xff]
      %v723 = vld [vmem:[%s625 + $0x88] sm:$0xff]
      %v724 = vld [vmem:[%s625 + $0x90] sm:$0xff]
      %v725 = vld [vmem:[%s625 + $0x98] sm:$0xff]
      %v726 = vld [vmem:[%s625 + $0xa0] sm:$0xff]
      %v727 = vld [vmem:[%s625 + $0xa8] sm:$0xff]
      %v728 = vld [vmem:[%s625 + $0xb0] sm:$0xff]
      %v729 = vld [vmem:[%s625 + $0xb8] sm:$0xff]
      %v730 = vpack.c.bf16 %v707, %v706
      %v731 = vpack.c.bf16 %v709, %v708
      %v732 = vpack.c.bf16 %v711, %v710
      %v733 = vpack.c.bf16 %v713, %v712
      %v734 = vpack.c.bf16 %v715, %v714
      %v735 = vpack.c.bf16 %v717, %v716
      %v736 = vpack.c.bf16 %v719, %v718
      %v737 = vpack.c.bf16 %v721, %v720
      %v738 = vpack.c.bf16 %v723, %v722
      %v739 = vpack.c.bf16 %v725, %v724
      %v740 = vpack.c.bf16 %v727, %v726
      %v741 = vpack.c.bf16 %v729, %v728
      %742 = vst [vmem:[#allocation2 + $0x10] sm:$0xff] %v730
      %743 = vst [vmem:[#allocation2 + $0x18] sm:$0xff] %v731
      %744 = vst [vmem:[#allocation2 + $0x20] sm:$0xff] %v732
      %745 = vst [vmem:[#allocation2 + $0x28] sm:$0xff] %v733
      %746 = vst [vmem:[#allocation2 + $0x30] sm:$0xff] %v734
      %747 = vst [vmem:[#allocation2 + $0x38] sm:$0xff] %v735
      %748 = vst [vmem:[#allocation2 + $0x40] sm:$0xff] %v736
      %749 = vst [vmem:[#allocation2 + $0x48] sm:$0xff] %v737
      %750 = vst [vmem:[#allocation2 + $0x50] sm:$0xff] %v738
      %751 = vst [vmem:[#allocation2 + $0x58] sm:$0xff] %v739
      %752 = vst [vmem:[#allocation2 + $0x60] sm:$0xff] %v740
      %753 = vst [vmem:[#allocation2 + $0x68] sm:$0xff] %v741
      %v754 = vld [vmem:[%s639] sm:$0xff]
      %v755 = vld [vmem:[%s639 + $0x8] sm:$0xff]
      %v756 = vld [vmem:[%s639 + $0x10] sm:$0xff]
      %v757 = vld [vmem:[%s639 + $0x18] sm:$0xff]
      %v758 = vpack.c.bf16 %v755, %v754
      %v759 = vpack.c.bf16 %v757, %v756
      %760 = vst [vmem:[#allocation2 + $0x70] sm:$0xff] %v758
      %761 = vst [vmem:[#allocation2 + $0x78] sm:$0xff] %v759
      %v762 = vld [vmem:[#allocation2] sm:$0xc0]
      %v763 = vld [vmem:[#allocation2 + $0x8] sm:$0xff]
      %v764 = vld [vmem:[#allocation2 + $0x10] sm:$0xff]
      %v765 = vld [vmem:[#allocation2 + $0x18] sm:$0xff]
      %v766 = vld [vmem:[#allocation2 + $0x20] sm:$0xff]
      %v767 = vld [vmem:[#allocation2 + $0x28] sm:$0xff]
      %v768 = vld [vmem:[#allocation2 + $0x30] sm:$0xff]
      %v769 = vld [vmem:[#allocation2 + $0x38] sm:$0xff]
      %v770 = vld [vmem:[#allocation2 + $0x40] sm:$0xff]
      %v771 = vld [vmem:[#allocation2 + $0x48] sm:$0xff]
      %v772 = vld [vmem:[#allocation2 + $0x50] sm:$0xff]
      %v773 = vld [vmem:[#allocation2 + $0x58] sm:$0xff]
      %v774 = vld [vmem:[#allocation2 + $0x60] sm:$0x7f]
      %vm775 = vsmask.f32 1280
      %v777 = vshrl.u32 %v762, 16
      %v779 = vrot.slane %v777, 6
      %v780 = vshll.u32 %v762, 16
      %v782 = vrot.slane %v780, 7
      %v783 = vor.u32 %v779, %v782
      %v785 = vshrl.u32 %v763, 16
      %v787 = vrot.slane %v785, 6
      %v788 = vshll.u32 %v763, 16
      %v790 = vrot.slane %v788, 7
      %v791 = vor.u32 %v787, %v790
      %v792 = vsel %vm775, %v783, %v791
      %v794 = vshrl.u32 %v764, 16
      %v796 = vrot.slane %v794, 6
      %v797 = vshll.u32 %v764, 16
      %v799 = vrot.slane %v797, 7
      %v800 = vor.u32 %v796, %v799
      %v801 = vsel %vm775, %v791, %v800
      %v803 = vshrl.u32 %v765, 16
      %v805 = vrot.slane %v803, 6
      %v806 = vshll.u32 %v765, 16
      %v808 = vrot.slane %v806, 7
      %v809 = vor.u32 %v805, %v808
      %v810 = vsel %vm775, %v800, %v809
      %v812 = vshrl.u32 %v766, 16
      %v814 = vrot.slane %v812, 6
      %v815 = vshll.u32 %v766, 16
      %v817 = vrot.slane %v815, 7
      %v818 = vor.u32 %v814, %v817
      %v819 = vsel %vm775, %v809, %v818
      %v821 = vshrl.u32 %v767, 16
      %v823 = vrot.slane %v821, 6
      %v824 = vshll.u32 %v767, 16
      %v826 = vrot.slane %v824, 7
      %v827 = vor.u32 %v823, %v826
      %v828 = vsel %vm775, %v818, %v827
      %v830 = vshrl.u32 %v768, 16
      %v832 = vrot.slane %v830, 6
      %v833 = vshll.u32 %v768, 16
      %v835 = vrot.slane %v833, 7
      %v836 = vor.u32 %v832, %v835
      %v837 = vsel %vm775, %v827, %v836
      %v839 = vshrl.u32 %v769, 16
      %v841 = vrot.slane %v839, 6
      %v842 = vshll.u32 %v769, 16
      %v844 = vrot.slane %v842, 7
      %v845 = vor.u32 %v841, %v844
      %v846 = vsel %vm775, %v836, %v845
      %v848 = vshrl.u32 %v770, 16
      %v850 = vrot.slane %v848, 6
      %v851 = vshll.u32 %v770, 16
      %v853 = vrot.slane %v851, 7
      %v854 = vor.u32 %v850, %v853
      %v855 = vsel %vm775, %v845, %v854
      %v857 = vshrl.u32 %v771, 16
      %v859 = vrot.slane %v857, 6
      %v860 = vshll.u32 %v771, 16
      %v862 = vrot.slane %v860, 7
      %v863 = vor.u32 %v859, %v862
      %v864 = vsel %vm775, %v854, %v863
      %v866 = vshrl.u32 %v772, 16
      %v868 = vrot.slane %v866, 6
      %v869 = vshll.u32 %v772, 16
      %v871 = vrot.slane %v869, 7
      %v872 = vor.u32 %v868, %v871
      %v873 = vsel %vm775, %v863, %v872
      %v875 = vshrl.u32 %v773, 16
      %v877 = vrot.slane %v875, 6
      %v878 = vshll.u32 %v773, 16
      %v880 = vrot.slane %v878, 7
      %v881 = vor.u32 %v877, %v880
      %v882 = vsel %vm775, %v872, %v881
      %v884 = vshrl.u32 %v774, 16
      %v886 = vrot.slane %v884, 6
      %v887 = vshll.u32 %v774, 16
      %v889 = vrot.slane %v887, 7
      %v890 = vor.u32 %v886, %v889
      %v891 = vsel %vm775, %v881, %v890
      %904 = vst [vmem:[#allocation3] sm:$0xff] %v792
      %905 = vst [vmem:[#allocation3 + $0x48] sm:$0xff] %v801
      %906 = vst [vmem:[#allocation3 + $0x90] sm:$0xff] %v810
      %907 = vst [vmem:[#allocation3 + $0xd8] sm:$0xff] %v819
      %908 = vst [vmem:[#allocation3 + $0x120] sm:$0xff] %v828
      %909 = vst [vmem:[#allocation3 + $0x168] sm:$0xff] %v837
      %910 = vst [vmem:[#allocation3 + $0x1b0] sm:$0xff] %v846
      %911 = vst [vmem:[#allocation3 + $0x1f8] sm:$0xff] %v855
      %912 = vst [vmem:[#allocation3 + $0x240] sm:$0xff] %v864
      %913 = vst [vmem:[#allocation3 + $0x288] sm:$0xff] %v873
      %914 = vst [vmem:[#allocation3 + $0x2d0] sm:$0xff] %v882
      %915 = vst [vmem:[#allocation3 + $0x318] sm:$0xff] %v891
      %v916 = vld [vmem:[#allocation2] sm:$0x80]
      %v917 = vld [vmem:[#allocation2 + $0x8] sm:$0xff]
      %v918 = vld [vmem:[#allocation2 + $0x10] sm:$0xff]
      %v919 = vld [vmem:[#allocation2 + $0x18] sm:$0xff]
      %v920 = vld [vmem:[#allocation2 + $0x20] sm:$0xff]
      %v921 = vld [vmem:[#allocation2 + $0x28] sm:$0xff]
      %v922 = vld [vmem:[#allocation2 + $0x30] sm:$0xff]
      %v923 = vld [vmem:[#allocation2 + $0x38] sm:$0xff]
      %v924 = vld [vmem:[#allocation2 + $0x40] sm:$0xff]
      %v925 = vld [vmem:[#allocation2 + $0x48] sm:$0xff]
      %v926 = vld [vmem:[#allocation2 + $0x50] sm:$0xff]
      %v927 = vld [vmem:[#allocation2 + $0x58] sm:$0xff]
      %v928 = vld [vmem:[#allocation2 + $0x60] sm:$0x7f]
      %vm942 = vcmask 1040384
      %v943 = vrot.slane %v916, 7
      %v944 = vrot.slane %v917, 7
      %v945 = vsel %vm942, %v943, %v944
      %v946 = vrot.slane %v918, 7
      %v947 = vsel %vm942, %v944, %v946
      %v948 = vrot.slane %v919, 7
      %v949 = vsel %vm942, %v946, %v948
      %v950 = vrot.slane %v920, 7
      %v951 = vsel %vm942, %v948, %v950
      %v952 = vrot.slane %v921, 7
      %v953 = vsel %vm942, %v950, %v952
      %v954 = vrot.slane %v922, 7
      %v955 = vsel %vm942, %v952, %v954
      %v956 = vrot.slane %v923, 7
      %v957 = vsel %vm942, %v954, %v956
      %v958 = vrot.slane %v924, 7
      %v959 = vsel %vm942, %v956, %v958
      %v960 = vrot.slane %v925, 7
      %v961 = vsel %vm942, %v958, %v960
      %v962 = vrot.slane %v926, 7
      %v963 = vsel %vm942, %v960, %v962
      %v964 = vrot.slane %v927, 7
      %v965 = vsel %vm942, %v962, %v964
      %v966 = vrot.slane %v928, 7
      %v967 = vsel %vm942, %v964, %v966
      %980 = vst [vmem:[#allocation3 + $0x8] sm:$0xff] %v945
      %981 = vst [vmem:[#allocation3 + $0x50] sm:$0xff] %v947
      %982 = vst [vmem:[#allocation3 + $0x98] sm:$0xff] %v949
      %983 = vst [vmem:[#allocation3 + $0xe0] sm:$0xff] %v951
      %984 = vst [vmem:[#allocation3 + $0x128] sm:$0xff] %v953
      %985 = vst [vmem:[#allocation3 + $0x170] sm:$0xff] %v955
      %986 = vst [vmem:[#allocation3 + $0x1b8] sm:$0xff] %v957
      %987 = vst [vmem:[#allocation3 + $0x200] sm:$0xff] %v959
      %988 = vst [vmem:[#allocation3 + $0x248] sm:$0xff] %v961
      %989 = vst [vmem:[#allocation3 + $0x290] sm:$0xff] %v963
      %990 = vst [vmem:[#allocation3 + $0x2d8] sm:$0xff] %v965
      %991 = vst [vmem:[#allocation3 + $0x320] sm:$0xff] %v967
      %v992 = vld [vmem:[#allocation2] sm:$0x80]
      %v993 = vld [vmem:[#allocation2 + $0x8] sm:$0xff]
      %v994 = vld [vmem:[#allocation2 + $0x10] sm:$0xff]
      %v995 = vld [vmem:[#allocation2 + $0x18] sm:$0xff]
      %v996 = vld [vmem:[#allocation2 + $0x20] sm:$0xff]
      %v997 = vld [vmem:[#allocation2 + $0x28] sm:$0xff]
      %v998 = vld [vmem:[#allocation2 + $0x30] sm:$0xff]
      %v999 = vld [vmem:[#allocation2 + $0x38] sm:$0xff]
      %v1000 = vld [vmem:[#allocation2 + $0x40] sm:$0xff]
      %v1001 = vld [vmem:[#allocation2 + $0x48] sm:$0xff]
      %v1002 = vld [vmem:[#allocation2 + $0x50] sm:$0xff]
      %v1003 = vld [vmem:[#allocation2 + $0x58] sm:$0xff]
      %v1004 = vld [vmem:[#allocation2 + $0x60] sm:$0xff]
      %vm1005 = vsmask.f32 256
      %v1007 = vshrl.u32 %v992, 16
      %v1009 = vrot.slane %v1007, 7
      %v1011 = vshrl.u32 %v993, 16
      %v1013 = vrot.slane %v1011, 7
      %v1014 = vshll.u32 %v993, 16
      %v1016 = vor.u32 %v1013, %v1014
      %v1017 = vsel %vm1005, %v1009, %v1016
      %v1019 = vshrl.u32 %v994, 16
      %v1021 = vrot.slane %v1019, 7
      %v1022 = vshll.u32 %v994, 16
      %v1024 = vor.u32 %v1021, %v1022
      %v1025 = vsel %vm1005, %v1013, %v1024
      %v1027 = vshrl.u32 %v995, 16
      %v1029 = vrot.slane %v1027, 7
      %v1030 = vshll.u32 %v995, 16
      %v1032 = vor.u32 %v1029, %v1030
      %v1033 = vsel %vm1005, %v1021, %v1032
      %v1035 = vshrl.u32 %v996, 16
      %v1037 = vrot.slane %v1035, 7
      %v1038 = vshll.u32 %v996, 16
      %v1040 = vor.u32 %v1037, %v1038
      %v1041 = vsel %vm1005, %v1029, %v1040
      %v1043 = vshrl.u32 %v997, 16
      %v1045 = vrot.slane %v1043, 7
      %v1046 = vshll.u32 %v997, 16
      %v1048 = vor.u32 %v1045, %v1046
      %v1049 = vsel %vm1005, %v1037, %v1048
      %v1051 = vshrl.u32 %v998, 16
      %v1053 = vrot.slane %v1051, 7
      %v1054 = vshll.u32 %v998, 16
      %v1056 = vor.u32 %v1053, %v1054
      %v1057 = vsel %vm1005, %v1045, %v1056
      %v1059 = vshrl.u32 %v999, 16
      %v1061 = vrot.slane %v1059, 7
      %v1062 = vshll.u32 %v999, 16
      %v1064 = vor.u32 %v1061, %v1062
      %v1065 = vsel %vm1005, %v1053, %v1064
      %v1067 = vshrl.u32 %v1000, 16
      %v1069 = vrot.slane %v1067, 7
      %v1070 = vshll.u32 %v1000, 16
      %v1072 = vor.u32 %v1069, %v1070
      %v1073 = vsel %vm1005, %v1061, %v1072
      %v1075 = vshrl.u32 %v1001, 16
      %v1077 = vrot.slane %v1075, 7
      %v1078 = vshll.u32 %v1001, 16
      %v1080 = vor.u32 %v1077, %v1078
      %v1081 = vsel %vm1005, %v1069, %v1080
      %v1083 = vshrl.u32 %v1002, 16
      %v1085 = vrot.slane %v1083, 7
      %v1086 = vshll.u32 %v1002, 16
      %v1088 = vor.u32 %v1085, %v1086
      %v1089 = vsel %vm1005, %v1077, %v1088
      %v1091 = vshrl.u32 %v1003, 16
      %v1093 = vrot.slane %v1091, 7
      %v1094 = vshll.u32 %v1003, 16
      %v1096 = vor.u32 %v1093, %v1094
      %v1097 = vsel %vm1005, %v1085, %v1096
      %v1099 = vshrl.u32 %v1004, 16
      %v1101 = vrot.slane %v1099, 7
      %v1102 = vshll.u32 %v1004, 16
      %v1104 = vor.u32 %v1101, %v1102
      %v1105 = vsel %vm1005, %v1093, %v1104
      %1118 = vst [vmem:[#allocation3 + $0x10] sm:$0xff] %v1017
      %1119 = vst [vmem:[#allocation3 + $0x58] sm:$0xff] %v1025
      %1120 = vst [vmem:[#allocation3 + $0xa0] sm:$0xff] %v1033
      %1121 = vst [vmem:[#allocation3 + $0xe8] sm:$0xff] %v1041
      %1122 = vst [vmem:[#allocation3 + $0x130] sm:$0xff] %v1049
      %1123 = vst [vmem:[#allocation3 + $0x178] sm:$0xff] %v1057
      %1124 = vst [vmem:[#allocation3 + $0x1c0] sm:$0xff] %v1065
      %1125 = vst [vmem:[#allocation3 + $0x208] sm:$0xff] %v1073
      %1126 = vst [vmem:[#allocation3 + $0x250] sm:$0xff] %v1081
      %1127 = vst [vmem:[#allocation3 + $0x298] sm:$0xff] %v1089
      %1128 = vst [vmem:[#allocation3 + $0x2e0] sm:$0xff] %v1097
      %1129 = vst [vmem:[#allocation3 + $0x328] sm:$0xff] %v1105
      %v1130 = vld [vmem:[#allocation2 + $0x8] sm:$0x80]
      %v1131 = vld [vmem:[#allocation2 + $0x10] sm:$0xff]
      %v1132 = vld [vmem:[#allocation2 + $0x18] sm:$0xff]
      %v1133 = vld [vmem:[#allocation2 + $0x20] sm:$0xff]
      %v1134 = vld [vmem:[#allocation2 + $0x28] sm:$0xff]
      %v1135 = vld [vmem:[#allocation2 + $0x30] sm:$0xff]
      %v1136 = vld [vmem:[#allocation2 + $0x38] sm:$0xff]
      %v1137 = vld [vmem:[#allocation2 + $0x40] sm:$0xff]
      %v1138 = vld [vmem:[#allocation2 + $0x48] sm:$0xff]
      %v1139 = vld [vmem:[#allocation2 + $0x50] sm:$0xff]
      %v1140 = vld [vmem:[#allocation2 + $0x58] sm:$0xff]
      %v1141 = vld [vmem:[#allocation2 + $0x60] sm:$0xff]
      %v1142 = vld [vmem:[#allocation2 + $0x68] sm:$0xff]
      %v1144 = vshrl.u32 %v1130, 16
      %v1146 = vrot.slane %v1144, 7
      %v1148 = vshrl.u32 %v1131, 16
      %v1150 = vrot.slane %v1148, 7
      %v1151 = vshll.u32 %v1131, 16
      %v1153 = vor.u32 %v1150, %v1151
      %v1154 = vsel %vm1005, %v1146, %v1153
      %v1156 = vshrl.u32 %v1132, 16
      %v1158 = vrot.slane %v1156, 7
      %v1159 = vshll.u32 %v1132, 16
      %v1161 = vor.u32 %v1158, %v1159
      %v1162 = vsel %vm1005, %v1150, %v1161
      %v1164 = vshrl.u32 %v1133, 16
      %v1166 = vrot.slane %v1164, 7
      %v1167 = vshll.u32 %v1133, 16
      %v1169 = vor.u32 %v1166, %v1167
      %v1170 = vsel %vm1005, %v1158, %v1169
      %v1172 = vshrl.u32 %v1134, 16
      %v1174 = vrot.slane %v1172, 7
      %v1175 = vshll.u32 %v1134, 16
      %v1177 = vor.u32 %v1174, %v1175
      %v1178 = vsel %vm1005, %v1166, %v1177
      %v1180 = vshrl.u32 %v1135, 16
      %v1182 = vrot.slane %v1180, 7
      %v1183 = vshll.u32 %v1135, 16
      %v1185 = vor.u32 %v1182, %v1183
      %v1186 = vsel %vm1005, %v1174, %v1185
      %v1188 = vshrl.u32 %v1136, 16
      %v1190 = vrot.slane %v1188, 7
      %v1191 = vshll.u32 %v1136, 16
      %v1193 = vor.u32 %v1190, %v1191
      %v1194 = vsel %vm1005, %v1182, %v1193
      %v1196 = vshrl.u32 %v1137, 16
      %v1198 = vrot.slane %v1196, 7
      %v1199 = vshll.u32 %v1137, 16
      %v1201 = vor.u32 %v1198, %v1199
      %v1202 = vsel %vm1005, %v1190, %v1201
      %v1204 = vshrl.u32 %v1138, 16
      %v1206 = vrot.slane %v1204, 7
      %v1207 = vshll.u32 %v1138, 16
      %v1209 = vor.u32 %v1206, %v1207
      %v1210 = vsel %vm1005, %v1198, %v1209
      %v1212 = vshrl.u32 %v1139, 16
      %v1214 = vrot.slane %v1212, 7
      %v1215 = vshll.u32 %v1139, 16
      %v1217 = vor.u32 %v1214, %v1215
      %v1218 = vsel %vm1005, %v1206, %v1217
      %v1220 = vshrl.u32 %v1140, 16
      %v1222 = vrot.slane %v1220, 7
      %v1223 = vshll.u32 %v1140, 16
      %v1225 = vor.u32 %v1222, %v1223
      %v1226 = vsel %vm1005, %v1214, %v1225
      %v1228 = vshrl.u32 %v1141, 16
      %v1230 = vrot.slane %v1228, 7
      %v1231 = vshll.u32 %v1141, 16
      %v1233 = vor.u32 %v1230, %v1231
      %v1234 = vsel %vm1005, %v1222, %v1233
      %v1236 = vshrl.u32 %v1142, 16
      %v1238 = vrot.slane %v1236, 7
      %v1239 = vshll.u32 %v1142, 16
      %v1241 = vor.u32 %v1238, %v1239
      %v1242 = vsel %vm1005, %v1230, %v1241
      %1255 = vst [vmem:[#allocation3 + $0x18] sm:$0xff] %v1154
      %1256 = vst [vmem:[#allocation3 + $0x60] sm:$0xff] %v1162
      %1257 = vst [vmem:[#allocation3 + $0xa8] sm:$0xff] %v1170
      %1258 = vst [vmem:[#allocation3 + $0xf0] sm:$0xff] %v1178
      %1259 = vst [vmem:[#allocation3 + $0x138] sm:$0xff] %v1186
      %1260 = vst [vmem:[#allocation3 + $0x180] sm:$0xff] %v1194
      %1261 = vst [vmem:[#allocation3 + $0x1c8] sm:$0xff] %v1202
      %1262 = vst [vmem:[#allocation3 + $0x210] sm:$0xff] %v1210
      %1263 = vst [vmem:[#allocation3 + $0x258] sm:$0xff] %v1218
      %1264 = vst [vmem:[#allocation3 + $0x2a0] sm:$0xff] %v1226
      %1265 = vst [vmem:[#allocation3 + $0x2e8] sm:$0xff] %v1234
      %1266 = vst [vmem:[#allocation3 + $0x330] sm:$0xff] %v1242
      %v1267 = vld [vmem:[#allocation2 + $0x10] sm:$0xff]
      %v1268 = vld [vmem:[#allocation2 + $0x18] sm:$0xff]
      %v1269 = vld [vmem:[#allocation2 + $0x20] sm:$0xff]
      %v1270 = vld [vmem:[#allocation2 + $0x28] sm:$0xff]
      %v1271 = vld [vmem:[#allocation2 + $0x30] sm:$0xff]
      %v1272 = vld [vmem:[#allocation2 + $0x38] sm:$0xff]
      %v1273 = vld [vmem:[#allocation2 + $0x40] sm:$0xff]
      %v1274 = vld [vmem:[#allocation2 + $0x48] sm:$0xff]
      %v1275 = vld [vmem:[#allocation2 + $0x50] sm:$0xff]
      %v1276 = vld [vmem:[#allocation2 + $0x58] sm:$0xff]
      %v1277 = vld [vmem:[#allocation2 + $0x60] sm:$0xff]
      %v1278 = vld [vmem:[#allocation2 + $0x68] sm:$0xff]
      %1279 = vst [vmem:[#allocation3 + $0x20] sm:$0xff] %v1267
      %1280 = vst [vmem:[#allocation3 + $0x68] sm:$0xff] %v1268
      %1281 = vst [vmem:[#allocation3 + $0xb0] sm:$0xff] %v1269
      %1282 = vst [vmem:[#allocation3 + $0xf8] sm:$0xff] %v1270
      %1283 = vst [vmem:[#allocation3 + $0x140] sm:$0xff] %v1271
      %1284 = vst [vmem:[#allocation3 + $0x188] sm:$0xff] %v1272
      %1285 = vst [vmem:[#allocation3 + $0x1d0] sm:$0xff] %v1273
      %1286 = vst [vmem:[#allocation3 + $0x218] sm:$0xff] %v1274
      %1287 = vst [vmem:[#allocation3 + $0x260] sm:$0xff] %v1275
      %1288 = vst [vmem:[#allocation3 + $0x2a8] sm:$0xff] %v1276
      %1289 = vst [vmem:[#allocation3 + $0x2f0] sm:$0xff] %v1277
      %1290 = vst [vmem:[#allocation3 + $0x338] sm:$0xff] %v1278
      %v1291 = vld [vmem:[#allocation2 + $0x10] sm:$0xff]
      %v1292 = vld [vmem:[#allocation2 + $0x18] sm:$0xff]
      %v1293 = vld [vmem:[#allocation2 + $0x20] sm:$0xff]
      %v1294 = vld [vmem:[#allocation2 + $0x28] sm:$0xff]
      %v1295 = vld [vmem:[#allocation2 + $0x30] sm:$0xff]
      %v1296 = vld [vmem:[#allocation2 + $0x38] sm:$0xff]
      %v1297 = vld [vmem:[#allocation2 + $0x40] sm:$0xff]
      %v1298 = vld [vmem:[#allocation2 + $0x48] sm:$0xff]
      %v1299 = vld [vmem:[#allocation2 + $0x50] sm:$0xff]
      %v1300 = vld [vmem:[#allocation2 + $0x58] sm:$0xff]
      %v1301 = vld [vmem:[#allocation2 + $0x60] sm:$0xff]
      %v1302 = vld [vmem:[#allocation2 + $0x68] sm:$0xff]
      %v1303 = vld [vmem:[#allocation2 + $0x70] sm:$0x1]
      %vm1304 = vsmask.f32 7424
      %v1306 = vshrl.u32 %v1291, 16
      %v1308 = vshll.u32 %v1291, 16
      %v1310 = vrot.slane %v1308, 1
      %v1311 = vor.u32 %v1306, %v1310
      %v1313 = vshll.u32 %v1292, 16
      %v1315 = vrot.slane %v1313, 1
      %v1316 = vsel %vm1304, %v1311, %v1315
      %v1317 = vshrl.u32 %v1292, 16
      %v1319 = vor.u32 %v1317, %v1315
      %v1321 = vshll.u32 %v1293, 16
      %v1323 = vrot.slane %v1321, 1
      %v1324 = vsel %vm1304, %v1319, %v1323
      %v1325 = vshrl.u32 %v1293, 16
      %v1327 = vor.u32 %v1325, %v1323
      %v1329 = vshll.u32 %v1294, 16
      %v1331 = vrot.slane %v1329, 1
      %v1332 = vsel %vm1304, %v1327, %v1331
      %v1333 = vshrl.u32 %v1294, 16
      %v1335 = vor.u32 %v1333, %v1331
      %v1337 = vshll.u32 %v1295, 16
      %v1339 = vrot.slane %v1337, 1
      %v1340 = vsel %vm1304, %v1335, %v1339
      %v1341 = vshrl.u32 %v1295, 16
      %v1343 = vor.u32 %v1341, %v1339
      %v1345 = vshll.u32 %v1296, 16
      %v1347 = vrot.slane %v1345, 1
      %v1348 = vsel %vm1304, %v1343, %v1347
      %v1349 = vshrl.u32 %v1296, 16
      %v1351 = vor.u32 %v1349, %v1347
      %v1353 = vshll.u32 %v1297, 16
      %v1355 = vrot.slane %v1353, 1
      %v1356 = vsel %vm1304, %v1351, %v1355
      %v1357 = vshrl.u32 %v1297, 16
      %v1359 = vor.u32 %v1357, %v1355
      %v1361 = vshll.u32 %v1298, 16
      %v1363 = vrot.slane %v1361, 1
      %v1364 = vsel %vm1304, %v1359, %v1363
      %v1365 = vshrl.u32 %v1298, 16
      %v1367 = vor.u32 %v1365, %v1363
      %v1369 = vshll.u32 %v1299, 16
      %v1371 = vrot.slane %v1369, 1
      %v1372 = vsel %vm1304, %v1367, %v1371
      %v1373 = vshrl.u32 %v1299, 16
      %v1375 = vor.u32 %v1373, %v1371
      %v1377 = vshll.u32 %v1300, 16
      %v1379 = vrot.slane %v1377, 1
      %v1380 = vsel %vm1304, %v1375, %v1379
      %v1381 = vshrl.u32 %v1300, 16
      %v1383 = vor.u32 %v1381, %v1379
      %v1385 = vshll.u32 %v1301, 16
      %v1387 = vrot.slane %v1385, 1
      %v1388 = vsel %vm1304, %v1383, %v1387
      %v1389 = vshrl.u32 %v1301, 16
      %v1391 = vor.u32 %v1389, %v1387
      %v1393 = vshll.u32 %v1302, 16
      %v1395 = vrot.slane %v1393, 1
      %v1396 = vsel %vm1304, %v1391, %v1395
      %v1397 = vshrl.u32 %v1302, 16
      %v1399 = vor.u32 %v1397, %v1395
      %v1401 = vshll.u32 %v1303, 16
      %v1403 = vrot.slane %v1401, 1
      %v1404 = vsel %vm1304, %v1399, %v1403
      %1417 = vst [vmem:[#allocation3 + $0x28] sm:$0xff] %v1316
      %1418 = vst [vmem:[#allocation3 + $0x70] sm:$0xff] %v1324
      %1419 = vst [vmem:[#allocation3 + $0xb8] sm:$0xff] %v1332
      %1420 = vst [vmem:[#allocation3 + $0x100] sm:$0xff] %v1340
      %1421 = vst [vmem:[#allocation3 + $0x148] sm:$0xff] %v1348
      %1422 = vst [vmem:[#allocation3 + $0x190] sm:$0xff] %v1356
      %1423 = vst [vmem:[#allocation3 + $0x1d8] sm:$0xff] %v1364
      %1424 = vst [vmem:[#allocation3 + $0x220] sm:$0xff] %v1372
      %1425 = vst [vmem:[#allocation3 + $0x268] sm:$0xff] %v1380
      %1426 = vst [vmem:[#allocation3 + $0x2b0] sm:$0xff] %v1388
      %1427 = vst [vmem:[#allocation3 + $0x2f8] sm:$0xff] %v1396
      %1428 = vst [vmem:[#allocation3 + $0x340] sm:$0xff] %v1404
      %v1429 = vld [vmem:[#allocation2 + $0x18] sm:$0xff]
      %v1430 = vld [vmem:[#allocation2 + $0x20] sm:$0xff]
      %v1431 = vld [vmem:[#allocation2 + $0x28] sm:$0xff]
      %v1432 = vld [vmem:[#allocation2 + $0x30] sm:$0xff]
      %v1433 = vld [vmem:[#allocation2 + $0x38] sm:$0xff]
      %v1434 = vld [vmem:[#allocation2 + $0x40] sm:$0xff]
      %v1435 = vld [vmem:[#allocation2 + $0x48] sm:$0xff]
      %v1436 = vld [vmem:[#allocation2 + $0x50] sm:$0xff]
      %v1437 = vld [vmem:[#allocation2 + $0x58] sm:$0xff]
      %v1438 = vld [vmem:[#allocation2 + $0x60] sm:$0xff]
      %v1439 = vld [vmem:[#allocation2 + $0x68] sm:$0xff]
      %v1440 = vld [vmem:[#allocation2 + $0x70] sm:$0xff]
      %v1441 = vld [vmem:[#allocation2 + $0x78] sm:$0x1]
      %v1443 = vshrl.u32 %v1429, 16
      %v1445 = vshll.u32 %v1429, 16
      %v1447 = vrot.slane %v1445, 1
      %v1448 = vor.u32 %v1443, %v1447
      %v1450 = vshll.u32 %v1430, 16
      %v1452 = vrot.slane %v1450, 1
      %v1453 = vsel %vm1304, %v1448, %v1452
      %v1454 = vshrl.u32 %v1430, 16
      %v1456 = vor.u32 %v1454, %v1452
      %v1458 = vshll.u32 %v1431, 16
      %v1460 = vrot.slane %v1458, 1
      %v1461 = vsel %vm1304, %v1456, %v1460
      %v1462 = vshrl.u32 %v1431, 16
      %v1464 = vor.u32 %v1462, %v1460
      %v1466 = vshll.u32 %v1432, 16
      %v1468 = vrot.slane %v1466, 1
      %v1469 = vsel %vm1304, %v1464, %v1468
      %v1470 = vshrl.u32 %v1432, 16
      %v1472 = vor.u32 %v1470, %v1468
      %v1474 = vshll.u32 %v1433, 16
      %v1476 = vrot.slane %v1474, 1
      %v1477 = vsel %vm1304, %v1472, %v1476
      %v1478 = vshrl.u32 %v1433, 16
      %v1480 = vor.u32 %v1478, %v1476
      %v1482 = vshll.u32 %v1434, 16
      %v1484 = vrot.slane %v1482, 1
      %v1485 = vsel %vm1304, %v1480, %v1484
      %v1486 = vshrl.u32 %v1434, 16
      %v1488 = vor.u32 %v1486, %v1484
      %v1490 = vshll.u32 %v1435, 16
      %v1492 = vrot.slane %v1490, 1
      %v1493 = vsel %vm1304, %v1488, %v1492
      %v1494 = vshrl.u32 %v1435, 16
      %v1496 = vor.u32 %v1494, %v1492
      %v1498 = vshll.u32 %v1436, 16
      %v1500 = vrot.slane %v1498, 1
      %v1501 = vsel %vm1304, %v1496, %v1500
      %v1502 = vshrl.u32 %v1436, 16
      %v1504 = vor.u32 %v1502, %v1500
      %v1506 = vshll.u32 %v1437, 16
      %v1508 = vrot.slane %v1506, 1
      %v1509 = vsel %vm1304, %v1504, %v1508
      %v1510 = vshrl.u32 %v1437, 16
      %v1512 = vor.u32 %v1510, %v1508
      %v1514 = vshll.u32 %v1438, 16
      %v1516 = vrot.slane %v1514, 1
      %v1517 = vsel %vm1304, %v1512, %v1516
      %v1518 = vshrl.u32 %v1438, 16
      %v1520 = vor.u32 %v1518, %v1516
      %v1522 = vshll.u32 %v1439, 16
      %v1524 = vrot.slane %v1522, 1
      %v1525 = vsel %vm1304, %v1520, %v1524
      %v1526 = vshrl.u32 %v1439, 16
      %v1528 = vor.u32 %v1526, %v1524
      %v1530 = vshll.u32 %v1440, 16
      %v1532 = vrot.slane %v1530, 1
      %v1533 = vsel %vm1304, %v1528, %v1532
      %v1534 = vshrl.u32 %v1440, 16
      %v1536 = vor.u32 %v1534, %v1532
      %v1538 = vshll.u32 %v1441, 16
      %v1540 = vrot.slane %v1538, 1
      %v1541 = vsel %vm1304, %v1536, %v1540
      %1554 = vst [vmem:[#allocation3 + $0x30] sm:$0xff] %v1453
      %1555 = vst [vmem:[#allocation3 + $0x78] sm:$0xff] %v1461
      %1556 = vst [vmem:[#allocation3 + $0xc0] sm:$0xff] %v1469
      %1557 = vst [vmem:[#allocation3 + $0x108] sm:$0xff] %v1477
      %1558 = vst [vmem:[#allocation3 + $0x150] sm:$0xff] %v1485
      %1559 = vst [vmem:[#allocation3 + $0x198] sm:$0xff] %v1493
      %1560 = vst [vmem:[#allocation3 + $0x1e0] sm:$0xff] %v1501
      %1561 = vst [vmem:[#allocation3 + $0x228] sm:$0xff] %v1509
      %1562 = vst [vmem:[#allocation3 + $0x270] sm:$0xff] %v1517
      %1563 = vst [vmem:[#allocation3 + $0x2b8] sm:$0xff] %v1525
      %1564 = vst [vmem:[#allocation3 + $0x300] sm:$0xff] %v1533
      %1565 = vst [vmem:[#allocation3 + $0x348] sm:$0xff] %v1541
      %v1566 = vld [vmem:[#allocation2 + $0x18] sm:$0xfe]
      %v1567 = vld [vmem:[#allocation2 + $0x20] sm:$0xff]
      %v1568 = vld [vmem:[#allocation2 + $0x28] sm:$0xff]
      %v1569 = vld [vmem:[#allocation2 + $0x30] sm:$0xff]
      %v1570 = vld [vmem:[#allocation2 + $0x38] sm:$0xff]
      %v1571 = vld [vmem:[#allocation2 + $0x40] sm:$0xff]
      %v1572 = vld [vmem:[#allocation2 + $0x48] sm:$0xff]
      %v1573 = vld [vmem:[#allocation2 + $0x50] sm:$0xff]
      %v1574 = vld [vmem:[#allocation2 + $0x58] sm:$0xff]
      %v1575 = vld [vmem:[#allocation2 + $0x60] sm:$0xff]
      %v1576 = vld [vmem:[#allocation2 + $0x68] sm:$0xff]
      %v1577 = vld [vmem:[#allocation2 + $0x70] sm:$0xff]
      %v1578 = vld [vmem:[#allocation2 + $0x78] sm:$0x1]
      %vm1592 = vcmask 1046528
      %v1593 = vrot.slane %v1566, 1
      %v1594 = vrot.slane %v1567, 1
      %v1595 = vsel %vm1592, %v1593, %v1594
      %v1596 = vrot.slane %v1568, 1
      %v1597 = vsel %vm1592, %v1594, %v1596
      %v1598 = vrot.slane %v1569, 1
      %v1599 = vsel %vm1592, %v1596, %v1598
      %v1600 = vrot.slane %v1570, 1
      %v1601 = vsel %vm1592, %v1598, %v1600
      %v1602 = vrot.slane %v1571, 1
      %v1603 = vsel %vm1592, %v1600, %v1602
      %v1604 = vrot.slane %v1572, 1
      %v1605 = vsel %vm1592, %v1602, %v1604
      %v1606 = vrot.slane %v1573, 1
      %v1607 = vsel %vm1592, %v1604, %v1606
      %v1608 = vrot.slane %v1574, 1
      %v1609 = vsel %vm1592, %v1606, %v1608
      %v1610 = vrot.slane %v1575, 1
      %v1611 = vsel %vm1592, %v1608, %v1610
      %v1612 = vrot.slane %v1576, 1
      %v1613 = vsel %vm1592, %v1610, %v1612
      %v1614 = vrot.slane %v1577, 1
      %v1615 = vsel %vm1592, %v1612, %v1614
      %v1616 = vrot.slane %v1578, 1
      %v1617 = vsel %vm1592, %v1614, %v1616
      %1630 = vst [vmem:[#allocation3 + $0x38] sm:$0xff] %v1595
      %1631 = vst [vmem:[#allocation3 + $0x80] sm:$0xff] %v1597
      %1632 = vst [vmem:[#allocation3 + $0xc8] sm:$0xff] %v1599
      %1633 = vst [vmem:[#allocation3 + $0x110] sm:$0xff] %v1601
      %1634 = vst [vmem:[#allocation3 + $0x158] sm:$0xff] %v1603
      %1635 = vst [vmem:[#allocation3 + $0x1a0] sm:$0xff] %v1605
      %1636 = vst [vmem:[#allocation3 + $0x1e8] sm:$0xff] %v1607
      %1637 = vst [vmem:[#allocation3 + $0x230] sm:$0xff] %v1609
      %1638 = vst [vmem:[#allocation3 + $0x278] sm:$0xff] %v1611
      %1639 = vst [vmem:[#allocation3 + $0x2c0] sm:$0xff] %v1613
      %1640 = vst [vmem:[#allocation3 + $0x308] sm:$0xff] %v1615
      %1641 = vst [vmem:[#allocation3 + $0x350] sm:$0xff] %v1617
      %v1642 = vld [vmem:[#allocation2 + $0x18] sm:$0xfe]
      %v1643 = vld [vmem:[#allocation2 + $0x20] sm:$0xff]
      %v1644 = vld [vmem:[#allocation2 + $0x28] sm:$0xff]
      %v1645 = vld [vmem:[#allocation2 + $0x30] sm:$0xff]
      %v1646 = vld [vmem:[#allocation2 + $0x38] sm:$0xff]
      %v1647 = vld [vmem:[#allocation2 + $0x40] sm:$0xff]
      %v1648 = vld [vmem:[#allocation2 + $0x48] sm:$0xff]
      %v1649 = vld [vmem:[#allocation2 + $0x50] sm:$0xff]
      %v1650 = vld [vmem:[#allocation2 + $0x58] sm:$0xff]
      %v1651 = vld [vmem:[#allocation2 + $0x60] sm:$0xff]
      %v1652 = vld [vmem:[#allocation2 + $0x68] sm:$0xff]
      %v1653 = vld [vmem:[#allocation2 + $0x70] sm:$0xff]
      %v1654 = vld [vmem:[#allocation2 + $0x78] sm:$0x3]
      %vm1655 = vsmask.f32 6400
      %v1657 = vshrl.u32 %v1642, 16
      %v1659 = vrot.slane %v1657, 1
      %v1660 = vshll.u32 %v1642, 16
      %v1662 = vrot.slane %v1660, 2
      %v1663 = vor.u32 %v1659, %v1662
      %v1665 = vshrl.u32 %v1643, 16
      %v1667 = vrot.slane %v1665, 1
      %v1668 = vshll.u32 %v1643, 16
      %v1670 = vrot.slane %v1668, 2
      %v1671 = vor.u32 %v1667, %v1670
      %v1672 = vsel %vm1655, %v1663, %v1671
      %v1674 = vshrl.u32 %v1644, 16
      %v1676 = vrot.slane %v1674, 1
      %v1677 = vshll.u32 %v1644, 16
      %v1679 = vrot.slane %v1677, 2
      %v1680 = vor.u32 %v1676, %v1679
      %v1681 = vsel %vm1655, %v1671, %v1680
      %v1683 = vshrl.u32 %v1645, 16
      %v1685 = vrot.slane %v1683, 1
      %v1686 = vshll.u32 %v1645, 16
      %v1688 = vrot.slane %v1686, 2
      %v1689 = vor.u32 %v1685, %v1688
      %v1690 = vsel %vm1655, %v1680, %v1689
      %v1692 = vshrl.u32 %v1646, 16
      %v1694 = vrot.slane %v1692, 1
      %v1695 = vshll.u32 %v1646, 16
      %v1697 = vrot.slane %v1695, 2
      %v1698 = vor.u32 %v1694, %v1697
      %v1699 = vsel %vm1655, %v1689, %v1698
      %v1701 = vshrl.u32 %v1647, 16
      %v1703 = vrot.slane %v1701, 1
      %v1704 = vshll.u32 %v1647, 16
      %v1706 = vrot.slane %v1704, 2
      %v1707 = vor.u32 %v1703, %v1706
      %v1708 = vsel %vm1655, %v1698, %v1707
      %v1710 = vshrl.u32 %v1648, 16
      %v1712 = vrot.slane %v1710, 1
      %v1713 = vshll.u32 %v1648, 16
      %v1715 = vrot.slane %v1713, 2
      %v1716 = vor.u32 %v1712, %v1715
      %v1717 = vsel %vm1655, %v1707, %v1716
      %v1719 = vshrl.u32 %v1649, 16
      %v1721 = vrot.slane %v1719, 1
      %v1722 = vshll.u32 %v1649, 16
      %v1724 = vrot.slane %v1722, 2
      %v1725 = vor.u32 %v1721, %v1724
      %v1726 = vsel %vm1655, %v1716, %v1725
      %v1728 = vshrl.u32 %v1650, 16
      %v1730 = vrot.slane %v1728, 1
      %v1731 = vshll.u32 %v1650, 16
      %v1733 = vrot.slane %v1731, 2
      %v1734 = vor.u32 %v1730, %v1733
      %v1735 = vsel %vm1655, %v1725, %v1734
      %v1737 = vshrl.u32 %v1651, 16
      %v1739 = vrot.slane %v1737, 1
      %v1740 = vshll.u32 %v1651, 16
      %v1742 = vrot.slane %v1740, 2
      %v1743 = vor.u32 %v1739, %v1742
      %v1744 = vsel %vm1655, %v1734, %v1743
      %v1746 = vshrl.u32 %v1652, 16
      %v1748 = vrot.slane %v1746, 1
      %v1749 = vshll.u32 %v1652, 16
      %v1751 = vrot.slane %v1749, 2
      %v1752 = vor.u32 %v1748, %v1751
      %v1753 = vsel %vm1655, %v1743, %v1752
      %v1755 = vshrl.u32 %v1653, 16
      %v1757 = vrot.slane %v1755, 1
      %v1758 = vshll.u32 %v1653, 16
      %v1760 = vrot.slane %v1758, 2
      %v1761 = vor.u32 %v1757, %v1760
      %v1762 = vsel %vm1655, %v1752, %v1761
      %v1764 = vshrl.u32 %v1654, 16
      %v1766 = vrot.slane %v1764, 1
      %v1767 = vshll.u32 %v1654, 16
      %v1769 = vrot.slane %v1767, 2
      %v1770 = vor.u32 %v1766, %v1769
      %v1771 = vsel %vm1655, %v1761, %v1770
      %1784 = vst [vmem:[#allocation3 + $0x40] sm:$0xff] %v1672
      %1785 = vst [vmem:[#allocation3 + $0x88] sm:$0xff] %v1681
      %1786 = vst [vmem:[#allocation3 + $0xd0] sm:$0xff] %v1690
      %1787 = vst [vmem:[#allocation3 + $0x118] sm:$0xff] %v1699
      %1788 = vst [vmem:[#allocation3 + $0x160] sm:$0xff] %v1708
      %1789 = vst [vmem:[#allocation3 + $0x1a8] sm:$0xff] %v1717
      %1790 = vst [vmem:[#allocation3 + $0x1f0] sm:$0xff] %v1726
      %1791 = vst [vmem:[#allocation3 + $0x238] sm:$0xff] %v1735
      %1792 = vst [vmem:[#allocation3 + $0x280] sm:$0xff] %v1744
      %1793 = vst [vmem:[#allocation3 + $0x2c8] sm:$0xff] %v1753
      %1794 = vst [vmem:[#allocation3 + $0x310] sm:$0xff] %v1762
      %1795 = vst [vmem:[#allocation3 + $0x358] sm:$0xff] %v1771
      %v1796 = vld [vmem:[#allocation3] sm:$0xff]
      %v1797 = vld [vmem:[#allocation3 + $0x8] sm:$0xff]
      %v1798 = vld [vmem:[#allocation3 + $0x10] sm:$0xff]
      %v1799 = vld [vmem:[#allocation3 + $0x18] sm:$0xff]
      %v1800 = vld [vmem:[#allocation3 + $0x20] sm:$0xff]
      %v1801 = vld [vmem:[#allocation3 + $0x28] sm:$0xff]
      %v1802 = vld [vmem:[#allocation3 + $0x30] sm:$0xff]
      %v1803 = vld [vmem:[#allocation3 + $0x38] sm:$0xff]
      %v1804 = vld [vmem:[#allocation3 + $0x40] sm:$0xff]
      %v1805 = vld [vmem:[#allocation3 + $0x48] sm:$0xff]
      %v1806 = vld [vmem:[#allocation3 + $0x50] sm:$0xff]
      %v1807 = vld [vmem:[#allocation3 + $0x58] sm:$0xff]
      %v1808 = vld [vmem:[#allocation3 + $0x60] sm:$0xff]
      %v1809 = vld [vmem:[#allocation3 + $0x68] sm:$0xff]
      %v1810 = vld [vmem:[#allocation3 + $0x70] sm:$0xff]
      %v1811 = vld [vmem:[#allocation3 + $0x78] sm:$0xff]
      %v1812 = vld [vmem:[#allocation3 + $0x80] sm:$0xff]
      %v1813 = vld [vmem:[#allocation3 + $0x88] sm:$0xff]
      %v1814 = vld [vmem:[#allocation3 + $0x90] sm:$0xff]
      %v1815 = vld [vmem:[#allocation3 + $0x98] sm:$0xff]
      %v1816 = vld [vmem:[#allocation3 + $0xa0] sm:$0xff]
      %v1817 = vld [vmem:[#allocation3 + $0xa8] sm:$0xff]
      %v1818 = vld [vmem:[#allocation3 + $0xb0] sm:$0xff]
      %v1819 = vld [vmem:[#allocation3 + $0xb8] sm:$0xff]
      %v1820 = vld [vmem:[#allocation3 + $0xc0] sm:$0xff]
      %v1821 = vld [vmem:[#allocation3 + $0xc8] sm:$0xff]
      %v1822 = vld [vmem:[#allocation3 + $0xd0] sm:$0xff]
      %v1823 = vld [vmem:[#allocation3 + $0xd8] sm:$0xff]
      %v1824 = vld [vmem:[#allocation3 + $0xe0] sm:$0xff]
      %v1825 = vld [vmem:[#allocation3 + $0xe8] sm:$0xff]
      %v1826 = vld [vmem:[#allocation3 + $0xf0] sm:$0xff]
      %v1827 = vld [vmem:[#allocation3 + $0xf8] sm:$0xff]
      %v1828 = vld [vmem:[#allocation3 + $0x100] sm:$0xff]
      %v1829 = vld [vmem:[#allocation3 + $0x108] sm:$0xff]
      %v1830 = vld [vmem:[#allocation3 + $0x110] sm:$0xff]
      %v1831 = vld [vmem:[#allocation3 + $0x118] sm:$0xff]
      %v1832 = vld [vmem:[#allocation3 + $0x120] sm:$0xff]
      %v1833 = vld [vmem:[#allocation3 + $0x128] sm:$0xff]
      %v1834 = vld [vmem:[#allocation3 + $0x130] sm:$0xff]
      %v1835 = vld [vmem:[#allocation3 + $0x138] sm:$0xff]
      %v1836 = vld [vmem:[#allocation3 + $0x140] sm:$0xff]
      %v1837 = vld [vmem:[#allocation3 + $0x148] sm:$0xff]
      %v1838 = vld [vmem:[#allocation3 + $0x150] sm:$0xff]
      %v1839 = vld [vmem:[#allocation3 + $0x158] sm:$0xff]
      %v1840 = vld [vmem:[#allocation3 + $0x160] sm:$0xff]
      %v1841 = vld [vmem:[#allocation3 + $0x168] sm:$0xff]
      %v1842 = vld [vmem:[#allocation3 + $0x170] sm:$0xff]
      %v1843 = vld [vmem:[#allocation3 + $0x178] sm:$0xff]
      %v1844 = vld [vmem:[#allocation3 + $0x180] sm:$0xff]
      %v1845 = vld [vmem:[#allocation3 + $0x188] sm:$0xff]
      %v1846 = vld [vmem:[#allocation3 + $0x190] sm:$0xff]
      %v1847 = vld [vmem:[#allocation3 + $0x198] sm:$0xff]
      %v1848 = vld [vmem:[#allocation3 + $0x1a0] sm:$0xff]
      %v1849 = vld [vmem:[#allocation3 + $0x1a8] sm:$0xff]
      %v1850 = vld [vmem:[#allocation3 + $0x1b0] sm:$0xff]
      %v1851 = vld [vmem:[#allocation3 + $0x1b8] sm:$0xff]
      %v1852 = vld [vmem:[#allocation3 + $0x1c0] sm:$0xff]
      %v1853 = vld [vmem:[#allocation3 + $0x1c8] sm:$0xff]
      %v1854 = vld [vmem:[#allocation3 + $0x1d0] sm:$0xff]
      %v1855 = vld [vmem:[#allocation3 + $0x1d8] sm:$0xff]
      %v1856 = vld [vmem:[#allocation3 + $0x1e0] sm:$0xff]
      %v1857 = vld [vmem:[#allocation3 + $0x1e8] sm:$0xff]
      %v1858 = vld [vmem:[#allocation3 + $0x1f0] sm:$0xff]
      %v1859 = vld [vmem:[#allocation3 + $0x1f8] sm:$0xff]
      %v1860 = vld [vmem:[#allocation3 + $0x200] sm:$0xff]
      %v1861 = vld [vmem:[#allocation3 + $0x208] sm:$0xff]
      %v1862 = vld [vmem:[#allocation3 + $0x210] sm:$0xff]
      %v1863 = vld [vmem:[#allocation3 + $0x218] sm:$0xff]
      %v1864 = vld [vmem:[#allocation3 + $0x220] sm:$0xff]
      %v1865 = vld [vmem:[#allocation3 + $0x228] sm:$0xff]
      %v1866 = vld [vmem:[#allocation3 + $0x230] sm:$0xff]
      %v1867 = vld [vmem:[#allocation3 + $0x238] sm:$0xff]
      %v1868 = vld [vmem:[#allocation3 + $0x240] sm:$0xff]
      %v1869 = vld [vmem:[#allocation3 + $0x248] sm:$0xff]
      %v1870 = vld [vmem:[#allocation3 + $0x250] sm:$0xff]
      %v1871 = vld [vmem:[#allocation3 + $0x258] sm:$0xff]
      %v1872 = vld [vmem:[#allocation3 + $0x260] sm:$0xff]
      %v1873 = vld [vmem:[#allocation3 + $0x268] sm:$0xff]
      %v1874 = vld [vmem:[#allocation3 + $0x270] sm:$0xff]
      %v1875 = vld [vmem:[#allocation3 + $0x278] sm:$0xff]
      %v1876 = vld [vmem:[#allocation3 + $0x280] sm:$0xff]
      %v1877 = vld [vmem:[#allocation3 + $0x288] sm:$0xff]
      %v1878 = vld [vmem:[#allocation3 + $0x290] sm:$0xff]
      %v1879 = vld [vmem:[#allocation3 + $0x298] sm:$0xff]
      %v1880 = vld [vmem:[#allocation3 + $0x2a0] sm:$0xff]
      %v1881 = vld [vmem:[#allocation3 + $0x2a8] sm:$0xff]
      %v1882 = vld [vmem:[#allocation3 + $0x2b0] sm:$0xff]
      %v1883 = vld [vmem:[#allocation3 + $0x2b8] sm:$0xff]
      %v1884 = vld [vmem:[#allocation3 + $0x2c0] sm:$0xff]
      %v1885 = vld [vmem:[#allocation3 + $0x2c8] sm:$0xff]
      %v1886 = vld [vmem:[#allocation3 + $0x2d0] sm:$0xff]
      %v1887 = vld [vmem:[#allocation3 + $0x2d8] sm:$0xff]
      %v1888 = vld [vmem:[#allocation3 + $0x2e0] sm:$0xff]
      %v1889 = vld [vmem:[#allocation3 + $0x2e8] sm:$0xff]
      %v1890 = vld [vmem:[#allocation3 + $0x2f0] sm:$0xff]
      %v1891 = vld [vmem:[#allocation3 + $0x2f8] sm:$0xff]
      %v1892 = vld [vmem:[#allocation3 + $0x300] sm:$0xff]
      %v1893 = vld [vmem:[#allocation3 + $0x308] sm:$0xff]
      %v1894 = vld [vmem:[#allocation3 + $0x310] sm:$0xff]
      %v1895 = vld [vmem:[#allocation3 + $0x318] sm:$0xff]
      %v1896 = vld [vmem:[#allocation3 + $0x320] sm:$0xff]
      %v1897 = vld [vmem:[#allocation3 + $0x328] sm:$0xff]
      %v1898 = vld [vmem:[#allocation3 + $0x330] sm:$0xff]
      %v1899 = vld [vmem:[#allocation3 + $0x338] sm:$0xff]
      %v1900 = vld [vmem:[#allocation3 + $0x340] sm:$0xff]
      %v1901 = vld [vmem:[#allocation3 + $0x348] sm:$0xff]
      %v1902 = vld [vmem:[#allocation3 + $0x350] sm:$0xff]
      %v1903 = vld [vmem:[#allocation3 + $0x358] sm:$0xff]
      %v1904 = vld [vmem:[%s8] sm:$0xf]
      %v1905 = vld [vmem:[%s8 + $0x4] sm:$0xf]
      %v1906 = vld [vmem:[%s8 + $0x8] sm:$0xf]
      %v1907 = vld [vmem:[%s8 + $0xc] sm:$0xf]
      %v1908 = vld [vmem:[%s8 + $0x10] sm:$0xf]
      %v1909 = vld [vmem:[%s8 + $0x14] sm:$0xf]
      %v1910 = vld [vmem:[%s8 + $0x18] sm:$0xf]
      %v1911 = vld [vmem:[%s8 + $0x1c] sm:$0xf]
      %v1912 = vld [vmem:[%s8 + $0x20] sm:$0xf]
      %v1913 = vld [vmem:[%s8 + $0x24] sm:$0xf]
      %v1914 = vld [vmem:[%s8 + $0x28] sm:$0xf]
      %v1915 = vld [vmem:[%s8 + $0x2c] sm:$0xf]
      %v1916 = vld [vmem:[%s8 + $0x30] sm:$0xf]
      %v1917 = vld [vmem:[%s8 + $0x34] sm:$0xf]
      %v1918 = vld [vmem:[%s8 + $0x38] sm:$0xf]
      %v1919 = vld [vmem:[%s8 + $0x3c] sm:$0xf]
      %v1920 = vld [vmem:[%s8 + $0x40] sm:$0xf]
      %v1921 = vld [vmem:[%s8 + $0x44] sm:$0xf]
      %v1922 = vld [vmem:[%s8 + $0x48] sm:$0xf]
      %v1923 = vld [vmem:[%s8 + $0x4c] sm:$0xf]
      %v1924 = vld [vmem:[%s8 + $0x50] sm:$0xf]
      %v1925 = vld [vmem:[%s8 + $0x54] sm:$0xf]
      %v1926 = vld [vmem:[%s8 + $0x58] sm:$0xf]
      %v1927 = vld [vmem:[%s8 + $0x5c] sm:$0xf]
      %v1928 = vld [vmem:[%s8 + $0x60] sm:$0xf]
      %v1929 = vld [vmem:[%s8 + $0x64] sm:$0xf]
      %v1930 = vld [vmem:[%s8 + $0x68] sm:$0xf]
      %v1931 = vld [vmem:[%s8 + $0x6c] sm:$0xf]
      %v1932 = vld [vmem:[%s8 + $0x70] sm:$0xf]
      %v1933 = vld [vmem:[%s8 + $0x74] sm:$0xf]
      %v1934 = vld [vmem:[%s8 + $0x78] sm:$0xf]
      %v1935 = vld [vmem:[%s8 + $0x7c] sm:$0xf]
      %v1936 = vld [vmem:[%s8 + $0x80] sm:$0xf]
      %v1937 = vld [vmem:[%s8 + $0x84] sm:$0xf]
      %v1938 = vld [vmem:[%s8 + $0x88] sm:$0xf]
      %v1939 = vld [vmem:[%s8 + $0x8c] sm:$0xf]
      %v1940 = vld [vmem:[%s8 + $0x90] sm:$0xf]
      %v1941 = vld [vmem:[%s8 + $0x94] sm:$0xf]
      %v1942 = vld [vmem:[%s8 + $0x98] sm:$0xf]
      %v1943 = vld [vmem:[%s8 + $0x9c] sm:$0xf]
      %v1944 = vld [vmem:[%s8 + $0xa0] sm:$0xf]
      %v1945 = vld [vmem:[%s8 + $0xa4] sm:$0xf]
      %v1946 = vld [vmem:[%s8 + $0xa8] sm:$0xf]
      %v1947 = vld [vmem:[%s8 + $0xac] sm:$0xf]
      %v1948 = vld [vmem:[%s8 + $0xb0] sm:$0xf]
      %v1949 = vld [vmem:[%s8 + $0xb4] sm:$0xf]
      %v1950 = vld [vmem:[%s8 + $0xb8] sm:$0xf]
      %v1951 = vld [vmem:[%s8 + $0xbc] sm:$0xf]
      %v1952 = vld [vmem:[%s8 + $0xc0] sm:$0xf]
      %v1953 = vld [vmem:[%s8 + $0xc4] sm:$0xf]
      %v1954 = vld [vmem:[%s8 + $0xc8] sm:$0xf]
      %v1955 = vld [vmem:[%s8 + $0xcc] sm:$0xf]
      %v1956 = vld [vmem:[%s8 + $0xd0] sm:$0xf]
      %v1957 = vld [vmem:[%s8 + $0xd4] sm:$0xf]
      %v1958 = vld [vmem:[%s8 + $0xd8] sm:$0xf]
      %v1959 = vld [vmem:[%s8 + $0xdc] sm:$0xf]
      %v1960 = vld [vmem:[%s8 + $0xe0] sm:$0xf]
      %v1961 = vld [vmem:[%s8 + $0xe4] sm:$0xf]
      %v1962 = vld [vmem:[%s8 + $0xe8] sm:$0xf]
      %v1963 = vld [vmem:[%s8 + $0xec] sm:$0xf]
      %v1964 = vld [vmem:[%s8 + $0xf0] sm:$0xf]
      %v1965 = vld [vmem:[%s8 + $0xf4] sm:$0xf]
      %v1966 = vld [vmem:[%s8 + $0xf8] sm:$0xf]
      %v1967 = vld [vmem:[%s8 + $0xfc] sm:$0xf]
      %v1968 = vld [vmem:[%s8 + $0x100] sm:$0xf]
      %v1969 = vld [vmem:[%s8 + $0x104] sm:$0xf]
      %v1970 = vld [vmem:[%s8 + $0x108] sm:$0xf]
      %v1971 = vld [vmem:[%s8 + $0x10c] sm:$0xf]
      %v1972 = vld [vmem:[%s8 + $0x110] sm:$0xf]
      %v1973 = vld [vmem:[%s8 + $0x114] sm:$0xf]
      %v1974 = vld [vmem:[%s8 + $0x118] sm:$0xf]
      %v1975 = vld [vmem:[%s8 + $0x11c] sm:$0xf]
      %v1976 = vld [vmem:[%s8 + $0x120] sm:$0xf]
      %v1977 = vld [vmem:[%s8 + $0x124] sm:$0xf]
      %v1978 = vld [vmem:[%s8 + $0x128] sm:$0xf]
      %v1979 = vld [vmem:[%s8 + $0x12c] sm:$0xf]
      %v1980 = vld [vmem:[%s8 + $0x130] sm:$0xf]
      %v1981 = vld [vmem:[%s8 + $0x134] sm:$0xf]
      %v1982 = vld [vmem:[%s8 + $0x138] sm:$0xf]
      %v1983 = vld [vmem:[%s8 + $0x13c] sm:$0xf]
      %v1984 = vld [vmem:[%s8 + $0x140] sm:$0xf]
      %v1985 = vld [vmem:[%s8 + $0x144] sm:$0xf]
      %v1986 = vld [vmem:[%s8 + $0x148] sm:$0xf]
      %v1987 = vld [vmem:[%s8 + $0x14c] sm:$0xf]
      %v1988 = vld [vmem:[%s8 + $0x150] sm:$0xf]
      %v1989 = vld [vmem:[%s8 + $0x154] sm:$0xf]
      %v1990 = vld [vmem:[%s8 + $0x158] sm:$0xf]
      %v1991 = vld [vmem:[%s8 + $0x15c] sm:$0xf]
      %v1992 = vld [vmem:[%s8 + $0x160] sm:$0xf]
      %v1993 = vld [vmem:[%s8 + $0x164] sm:$0xf]
      %v1994 = vld [vmem:[%s8 + $0x168] sm:$0xf]
      %v1995 = vld [vmem:[%s8 + $0x16c] sm:$0xf]
      %v1996 = vld [vmem:[%s8 + $0x170] sm:$0xf]
      %v1997 = vld [vmem:[%s8 + $0x174] sm:$0xf]
      %v1998 = vld [vmem:[%s8 + $0x178] sm:$0xf]
      %v1999 = vld [vmem:[%s8 + $0x17c] sm:$0xf]
      %v2000 = vld [vmem:[%s8 + $0x180] sm:$0xf]
      %v2001 = vld [vmem:[%s8 + $0x184] sm:$0xf]
      %v2002 = vld [vmem:[%s8 + $0x188] sm:$0xf]
      %v2003 = vld [vmem:[%s8 + $0x18c] sm:$0xf]
      %v2004 = vld [vmem:[%s8 + $0x190] sm:$0xf]
      %v2005 = vld [vmem:[%s8 + $0x194] sm:$0xf]
      %v2006 = vld [vmem:[%s8 + $0x198] sm:$0xf]
      %v2007 = vld [vmem:[%s8 + $0x19c] sm:$0xf]
      %v2008 = vld [vmem:[%s8 + $0x1a0] sm:$0xf]
      %v2009 = vld [vmem:[%s8 + $0x1a4] sm:$0xf]
      %v2010 = vld [vmem:[%s8 + $0x1a8] sm:$0xf]
      %v2011 = vld [vmem:[%s8 + $0x1ac] sm:$0xf]
      %v2012 = vld [vmem:[%s8 + $0x1b0] sm:$0xf]
      %v2013 = vld [vmem:[%s8 + $0x1b4] sm:$0xf]
      %v2014 = vld [vmem:[%s8 + $0x1b8] sm:$0xf]
      %v2015 = vld [vmem:[%s8 + $0x1bc] sm:$0xf]
      %v2016 = vld [vmem:[%s8 + $0x1c0] sm:$0xf]
      %v2017 = vld [vmem:[%s8 + $0x1c4] sm:$0xf]
      %v2018 = vld [vmem:[%s8 + $0x1c8] sm:$0xf]
      %v2019 = vld [vmem:[%s8 + $0x1cc] sm:$0xf]
      %v2020 = vld [vmem:[%s8 + $0x1d0] sm:$0xf]
      %v2021 = vld [vmem:[%s8 + $0x1d4] sm:$0xf]
      %v2022 = vld [vmem:[%s8 + $0x1d8] sm:$0xf]
      %v2023 = vld [vmem:[%s8 + $0x1dc] sm:$0xf]
      %v2024 = vld [vmem:[%s8 + $0x1e0] sm:$0xf]
      %v2025 = vld [vmem:[%s8 + $0x1e4] sm:$0xf]
      %v2026 = vld [vmem:[%s8 + $0x1e8] sm:$0xf]
      %v2027 = vld [vmem:[%s8 + $0x1ec] sm:$0xf]
      %v2028 = vld [vmem:[%s8 + $0x1f0] sm:$0xf]
      %v2029 = vld [vmem:[%s8 + $0x1f4] sm:$0xf]
      %v2030 = vld [vmem:[%s8 + $0x1f8] sm:$0xf]
      %v2031 = vld [vmem:[%s8 + $0x1fc] sm:$0xf]
      %v2032 = vld [vmem:[%s8 + $0x200] sm:$0xf]
      %v2033 = vld [vmem:[%s8 + $0x204] sm:$0xf]
      %v2034 = vld [vmem:[%s8 + $0x208] sm:$0xf]
      %v2035 = vld [vmem:[%s8 + $0x20c] sm:$0xf]
      %v2036 = vld [vmem:[%s8 + $0x210] sm:$0xf]
      %v2037 = vld [vmem:[%s8 + $0x214] sm:$0xf]
      %v2038 = vld [vmem:[%s8 + $0x218] sm:$0xf]
      %v2039 = vld [vmem:[%s8 + $0x21c] sm:$0xf]
      %v2040 = vld [vmem:[%s8 + $0x220] sm:$0xf]
      %v2041 = vld [vmem:[%s8 + $0x224] sm:$0xf]
      %v2042 = vld [vmem:[%s8 + $0x228] sm:$0xf]
      %v2043 = vld [vmem:[%s8 + $0x22c] sm:$0xf]
      %v2044 = vld [vmem:[%s8 + $0x230] sm:$0xf]
      %v2045 = vld [vmem:[%s8 + $0x234] sm:$0xf]
      %v2046 = vld [vmem:[%s8 + $0x238] sm:$0xf]
      %v2047 = vld [vmem:[%s8 + $0x23c] sm:$0xf]
      %v2048 = vld [vmem:[%s9] sm:$0x1]
      %v2050 = vlaneseq
      %v2051 = vshrl.u32 %v2050, 7
      %v2052 = vsub.s32 0, %v2051
      %v2053 = vrot.slane %v2048, %v2052
      %v2199 = vunpack.c.l.b16 %v1904
      %v2200 = vunpack.c.l.b16 %v1905
      %v2201 = vunpack.c.l.b16 %v1906
      %v2202 = vunpack.c.l.b16 %v1907
      %v2203 = vunpack.c.l.b16 %v1908
      %v2204 = vunpack.c.l.b16 %v1909
      %v2205 = vunpack.c.l.b16 %v1910
      %v2206 = vunpack.c.l.b16 %v1911
      %v2207 = vunpack.c.l.b16 %v1912
      %v2208 = vunpack.c.l.b16 %v1913
      %v2209 = vunpack.c.l.b16 %v1914
      %v2210 = vunpack.c.l.b16 %v1915
      %v2211 = vunpack.c.l.b16 %v1916
      %v2212 = vunpack.c.l.b16 %v1917
      %v2213 = vunpack.c.l.b16 %v1918
      %v2214 = vunpack.c.l.b16 %v1919
      %v2215 = vunpack.c.l.b16 %v1920
      %v2216 = vunpack.c.l.b16 %v1921
      %v2217 = vunpack.c.l.b16 %v1922
      %v2218 = vunpack.c.l.b16 %v1923
      %v2219 = vunpack.c.l.b16 %v1924
      %v2220 = vunpack.c.l.b16 %v1925
      %v2221 = vunpack.c.l.b16 %v1926
      %v2222 = vunpack.c.l.b16 %v1927
      %v2223 = vunpack.c.l.b16 %v1928
      %v2224 = vunpack.c.l.b16 %v1929
      %v2225 = vunpack.c.l.b16 %v1930
      %v2226 = vunpack.c.l.b16 %v1931
      %v2227 = vunpack.c.l.b16 %v1932
      %v2228 = vunpack.c.l.b16 %v1933
      %v2229 = vunpack.c.l.b16 %v1934
      %v2230 = vunpack.c.l.b16 %v1935
      %v2231 = vunpack.c.l.b16 %v1936
      %v2232 = vunpack.c.l.b16 %v1937
      %v2233 = vunpack.c.l.b16 %v1938
      %v2234 = vunpack.c.l.b16 %v1939
      %v2235 = vunpack.c.l.b16 %v1940
      %v2236 = vunpack.c.l.b16 %v1941
      %v2237 = vunpack.c.l.b16 %v1942
      %v2238 = vunpack.c.l.b16 %v1943
      %v2239 = vunpack.c.l.b16 %v1944
      %v2240 = vunpack.c.l.b16 %v1945
      %v2241 = vunpack.c.l.b16 %v1946
      %v2242 = vunpack.c.l.b16 %v1947
      %v2243 = vunpack.c.l.b16 %v1948
      %v2244 = vunpack.c.l.b16 %v1949
      %v2245 = vunpack.c.l.b16 %v1950
      %v2246 = vunpack.c.l.b16 %v1951
      %v2247 = vunpack.c.l.b16 %v1952
      %v2248 = vunpack.c.l.b16 %v1953
      %v2249 = vunpack.c.l.b16 %v1954
      %v2250 = vunpack.c.l.b16 %v1955
      %v2251 = vunpack.c.l.b16 %v1956
      %v2252 = vunpack.c.l.b16 %v1957
      %v2253 = vunpack.c.l.b16 %v1958
      %v2254 = vunpack.c.l.b16 %v1959
      %v2255 = vunpack.c.l.b16 %v1960
      %v2256 = vunpack.c.l.b16 %v1961
      %v2257 = vunpack.c.l.b16 %v1962
      %v2258 = vunpack.c.l.b16 %v1963
      %v2259 = vunpack.c.l.b16 %v1964
      %v2260 = vunpack.c.l.b16 %v1965
      %v2261 = vunpack.c.l.b16 %v1966
      %v2262 = vunpack.c.l.b16 %v1967
      %v2263 = vunpack.c.l.b16 %v1968
      %v2264 = vunpack.c.l.b16 %v1969
      %v2265 = vunpack.c.l.b16 %v1970
      %v2266 = vunpack.c.l.b16 %v1971
      %v2267 = vunpack.c.l.b16 %v1972
      %v2268 = vunpack.c.l.b16 %v1973
      %v2269 = vunpack.c.l.b16 %v1974
      %v2270 = vunpack.c.l.b16 %v1975
      %v2271 = vunpack.c.l.b16 %v1976
      %v2272 = vunpack.c.l.b16 %v1977
      %v2273 = vunpack.c.l.b16 %v1978
      %v2274 = vunpack.c.l.b16 %v1979
      %v2275 = vunpack.c.l.b16 %v1980
      %v2276 = vunpack.c.l.b16 %v1981
      %v2277 = vunpack.c.l.b16 %v1982
      %v2278 = vunpack.c.l.b16 %v1983
      %v2279 = vunpack.c.l.b16 %v1984
      %v2280 = vunpack.c.l.b16 %v1985
      %v2281 = vunpack.c.l.b16 %v1986
      %v2282 = vunpack.c.l.b16 %v1987
      %v2283 = vunpack.c.l.b16 %v1988
      %v2284 = vunpack.c.l.b16 %v1989
      %v2285 = vunpack.c.l.b16 %v1990
      %v2286 = vunpack.c.l.b16 %v1991
      %v2287 = vunpack.c.l.b16 %v1992
      %v2288 = vunpack.c.l.b16 %v1993
      %v2289 = vunpack.c.l.b16 %v1994
      %v2290 = vunpack.c.l.b16 %v1995
      %v2291 = vunpack.c.l.b16 %v1996
      %v2292 = vunpack.c.l.b16 %v1997
      %v2293 = vunpack.c.l.b16 %v1998
      %v2294 = vunpack.c.l.b16 %v1999
      %v2295 = vunpack.c.l.b16 %v2000
      %v2296 = vunpack.c.l.b16 %v2001
      %v2297 = vunpack.c.l.b16 %v2002
      %v2298 = vunpack.c.l.b16 %v2003
      %v2299 = vunpack.c.l.b16 %v2004
      %v2300 = vunpack.c.l.b16 %v2005
      %v2301 = vunpack.c.l.b16 %v2006
      %v2302 = vunpack.c.l.b16 %v2007
      %v2303 = vunpack.c.l.b16 %v2008
      %v2304 = vunpack.c.l.b16 %v2009
      %v2305 = vunpack.c.l.b16 %v2010
      %v2306 = vunpack.c.l.b16 %v2011
      %v2307 = vunpack.c.l.b16 %v2012
      %v2308 = vunpack.c.l.b16 %v2013
      %v2309 = vunpack.c.l.b16 %v2014
      %v2310 = vunpack.c.l.b16 %v2015
      %v2311 = vunpack.c.l.b16 %v2016
      %v2312 = vunpack.c.l.b16 %v2017
      %v2313 = vunpack.c.l.b16 %v2018
      %v2314 = vunpack.c.l.b16 %v2019
      %v2315 = vunpack.c.l.b16 %v2020
      %v2316 = vunpack.c.l.b16 %v2021
      %v2317 = vunpack.c.l.b16 %v2022
      %v2318 = vunpack.c.l.b16 %v2023
      %v2319 = vunpack.c.l.b16 %v2024
      %v2320 = vunpack.c.l.b16 %v2025
      %v2321 = vunpack.c.l.b16 %v2026
      %v2322 = vunpack.c.l.b16 %v2027
      %v2323 = vunpack.c.l.b16 %v2028
      %v2324 = vunpack.c.l.b16 %v2029
      %v2325 = vunpack.c.l.b16 %v2030
      %v2326 = vunpack.c.l.b16 %v2031
      %v2327 = vunpack.c.l.b16 %v2032
      %v2328 = vunpack.c.l.b16 %v2033
      %v2329 = vunpack.c.l.b16 %v2034
      %v2330 = vunpack.c.l.b16 %v2035
      %v2331 = vunpack.c.l.b16 %v2036
      %v2332 = vunpack.c.l.b16 %v2037
      %v2333 = vunpack.c.l.b16 %v2038
      %v2334 = vunpack.c.l.b16 %v2039
      %v2335 = vunpack.c.l.b16 %v2040
      %v2336 = vunpack.c.l.b16 %v2041
      %v2337 = vunpack.c.l.b16 %v2042
      %v2338 = vunpack.c.l.b16 %v2043
      %v2339 = vunpack.c.l.b16 %v2044
      %v2340 = vunpack.c.l.b16 %v2045
      %v2341 = vunpack.c.l.b16 %v2046
      %v2342 = vunpack.c.l.b16 %v2047
      %v2343 = vpack.c.b16 %v2200, %v2199
      %v2344 = vpack.c.b16 %v2202, %v2201
      %v2345 = vpack.c.b16 %v2204, %v2203
      %v2346 = vpack.c.b16 %v2206, %v2205
      %v2347 = vpack.c.b16 %v2208, %v2207
      %v2348 = vpack.c.b16 %v2210, %v2209
      %v2349 = vpack.c.b16 %v2212, %v2211
      %v2350 = vpack.c.b16 %v2214, %v2213
      %v2351 = vpack.c.b16 %v2216, %v2215
      %v2352 = vpack.c.b16 %v2218, %v2217
      %v2353 = vpack.c.b16 %v2220, %v2219
      %v2354 = vpack.c.b16 %v2222, %v2221
      %v2355 = vpack.c.b16 %v2224, %v2223
      %v2356 = vpack.c.b16 %v2226, %v2225
      %v2357 = vpack.c.b16 %v2228, %v2227
      %v2358 = vpack.c.b16 %v2230, %v2229
      %v2359 = vpack.c.b16 %v2232, %v2231
      %v2360 = vpack.c.b16 %v2234, %v2233
      %v2361 = vpack.c.b16 %v2236, %v2235
      %v2362 = vpack.c.b16 %v2238, %v2237
      %v2363 = vpack.c.b16 %v2240, %v2239
      %v2364 = vpack.c.b16 %v2242, %v2241
      %v2365 = vpack.c.b16 %v2244, %v2243
      %v2366 = vpack.c.b16 %v2246, %v2245
      %v2367 = vpack.c.b16 %v2248, %v2247
      %v2368 = vpack.c.b16 %v2250, %v2249
      %v2369 = vpack.c.b16 %v2252, %v2251
      %v2370 = vpack.c.b16 %v2254, %v2253
      %v2371 = vpack.c.b16 %v2256, %v2255
      %v2372 = vpack.c.b16 %v2258, %v2257
      %v2373 = vpack.c.b16 %v2260, %v2259
      %v2374 = vpack.c.b16 %v2262, %v2261
      %v2375 = vpack.c.b16 %v2264, %v2263
      %v2376 = vpack.c.b16 %v2266, %v2265
      %v2377 = vpack.c.b16 %v2268, %v2267
      %v2378 = vpack.c.b16 %v2270, %v2269
      %v2379 = vpack.c.b16 %v2272, %v2271
      %v2380 = vpack.c.b16 %v2274, %v2273
      %v2381 = vpack.c.b16 %v2276, %v2275
      %v2382 = vpack.c.b16 %v2278, %v2277
      %v2383 = vpack.c.b16 %v2280, %v2279
      %v2384 = vpack.c.b16 %v2282, %v2281
      %v2385 = vpack.c.b16 %v2284, %v2283
      %v2386 = vpack.c.b16 %v2286, %v2285
      %v2387 = vpack.c.b16 %v2288, %v2287
      %v2388 = vpack.c.b16 %v2290, %v2289
      %v2389 = vpack.c.b16 %v2292, %v2291
      %v2390 = vpack.c.b16 %v2294, %v2293
      %v2391 = vpack.c.b16 %v2296, %v2295
      %v2392 = vpack.c.b16 %v2298, %v2297
      %v2393 = vpack.c.b16 %v2300, %v2299
      %v2394 = vpack.c.b16 %v2302, %v2301
      %v2395 = vpack.c.b16 %v2304, %v2303
      %v2396 = vpack.c.b16 %v2306, %v2305
      %v2397 = vpack.c.b16 %v2308, %v2307
      %v2398 = vpack.c.b16 %v2310, %v2309
      %v2399 = vpack.c.b16 %v2312, %v2311
      %v2400 = vpack.c.b16 %v2314, %v2313
      %v2401 = vpack.c.b16 %v2316, %v2315
      %v2402 = vpack.c.b16 %v2318, %v2317
      %v2403 = vpack.c.b16 %v2320, %v2319
      %v2404 = vpack.c.b16 %v2322, %v2321
      %v2405 = vpack.c.b16 %v2324, %v2323
      %v2406 = vpack.c.b16 %v2326, %v2325
      %v2407 = vpack.c.b16 %v2328, %v2327
      %v2408 = vpack.c.b16 %v2330, %v2329
      %v2409 = vpack.c.b16 %v2332, %v2331
      %v2410 = vpack.c.b16 %v2334, %v2333
      %v2411 = vpack.c.b16 %v2336, %v2335
      %v2412 = vpack.c.b16 %v2338, %v2337
      %v2413 = vpack.c.b16 %v2340, %v2339
      %v2414 = vpack.c.b16 %v2342, %v2341
      %2487 = vmatprep.subr.bf16.mxu0 0
      %2488 = vmatpush1.bf16.msra.mxu0 %v2343
      %2489 = vmatprep.subr.bf16.mxu0 0
      %2490 = vmatpush1.bf16.msra.mxu0 %v2344
      %2491 = vmatprep.subr.bf16.mxu0 0
      %2492 = vmatpush1.bf16.msra.mxu0 %v2345
      %2493 = vmatprep.subr.bf16.mxu0 0
      %2494 = vmatpush1.bf16.msra.mxu0 %v2346
      %2495 = vmatprep.subr.bf16.mxu0 0
      %2496 = vmatpush1.bf16.msra.mxu0 %v2347
      %2497 = vmatprep.subr.bf16.mxu0 0
      %2498 = vmatpush1.bf16.msra.mxu0 %v2348
      %2499 = vmatprep.subr.bf16.mxu0 0
      %2500 = vmatpush1.bf16.msra.mxu0 %v2349
      %2501 = vmatprep.subr.bf16.mxu0 0
      %2502 = vmatpush1.bf16.msra.mxu0 %v2350
      %2503 = vmatprep.subr.bf16.mxu0 0
      %2504 = vmatpush1.bf16.msra.mxu0 %v2351
      %2505 = vmatprep.subr.bf16.mxu0 0
      %2506 = vmatpush1.bf16.msra.mxu0 %v2352
      %2507 = vmatprep.subr.bf16.mxu0 0
      %2508 = vmatpush1.bf16.msra.mxu0 %v2353
      %2509 = vmatprep.subr.bf16.mxu0 0
      %2510 = vmatpush1.bf16.msra.mxu0 %v2354
      %2511 = vmatprep.subr.bf16.mxu0 0
      %2512 = vmatpush1.bf16.msra.mxu0 %v2355
      %2513 = vmatprep.subr.bf16.mxu0 0
      %2514 = vmatpush1.bf16.msra.mxu0 %v2356
      %2515 = vmatprep.subr.bf16.mxu0 0
      %2516 = vmatpush1.bf16.msra.mxu0 %v2357
      %2517 = vmatprep.subr.bf16.mxu0 0
      %2518 = vmatpush1.bf16.msra.mxu0 %v2358
      %2519 = vmatprep.mubr.bf16.mxu0 %v1797
      %2520 = vmatmul.mubr.bf16.gmra.mrb[0].mxu0 %v1796
      %v2521 = vpop.f32.mrb[0].mxu0
      %v2522 = vadd.f32 %v2053, %v2521
      %v2523 = vpop.f32.mrb[0].mxu0
      %v2524 = vpop.f32.mrb[0].mxu0
      %v2525 = vadd.f32 %v2053, %v2524
      %v2526 = vpop.f32.mrb[0].mxu0
      %2527 = vmatprep.mubr.bf16.mxu0 %v1806
      %2528 = vmatmul.mubr.bf16.gmra.mrb[0].mxu0 %v1805
      %v2529 = vpop.f32.mrb[0].mxu0
      %v2530 = vadd.f32 %v2053, %v2529
      %v2531 = vpop.f32.mrb[0].mxu0
      %v2532 = vpop.f32.mrb[0].mxu0
      %v2533 = vadd.f32 %v2053, %v2532
      %v2534 = vpop.f32.mrb[0].mxu0
      %2535 = vmatprep.mubr.bf16.mxu0 %v1815
      %2536 = vmatmul.mubr.bf16.gmra.mrb[0].mxu0 %v1814
      %v2537 = vpop.f32.mrb[0].mxu0
      %v2538 = vadd.f32 %v2053, %v2537
      %v2539 = vpop.f32.mrb[0].mxu0
      %v2540 = vpop.f32.mrb[0].mxu0
      %v2541 = vadd.f32 %v2053, %v2540
      %v2542 = vpop.f32.mrb[0].mxu0
      %2543 = vmatprep.mubr.bf16.mxu0 %v1824
      %2544 = vmatmul.mubr.bf16.gmra.mrb[0].mxu0 %v1823
      %v2545 = vpop.f32.mrb[0].mxu0
      %v2546 = vadd.f32 %v2053, %v2545
      %v2547 = vpop.f32.mrb[0].mxu0
      %v2548 = vpop.f32.mrb[0].mxu0
      %v2549 = vadd.f32 %v2053, %v2548
      %v2550 = vpop.f32.mrb[0].mxu0
      %2551 = vmatprep.mubr.bf16.mxu0 %v1833
      %2552 = vmatmul.mubr.bf16.gmra.mrb[0].mxu0 %v1832
      %v2553 = vpop.f32.mrb[0].mxu0
      %v2554 = vadd.f32 %v2053, %v2553
      %v2555 = vpop.f32.mrb[0].mxu0
      %v2556 = vpop.f32.mrb[0].mxu0
      %v2557 = vadd.f32 %v2053, %v2556
      %v2558 = vpop.f32.mrb[0].mxu0
      %2559 = vmatprep.mubr.bf16.mxu0 %v1842
      %2560 = vmatmul.mubr.bf16.gmra.mrb[0].mxu0 %v1841
      %v2561 = vpop.f32.mrb[0].mxu0
      %v2562 = vadd.f32 %v2053, %v2561
      %v2563 = vpop.f32.mrb[0].mxu0
      %v2564 = vpop.f32.mrb[0].mxu0
      %v2565 = vadd.f32 %v2053, %v2564
      %v2566 = vpop.f32.mrb[0].mxu0
      %2567 = vmatprep.mubr.bf16.mxu0 %v1851
      %2568 = vmatmul.mubr.bf16.gmra.mrb[0].mxu0 %v1850
      %v2569 = vpop.f32.mrb[0].mxu0
      %v2570 = vadd.f32 %v2053, %v2569
      %v2571 = vpop.f32.mrb[0].mxu0
      %v2572 = vpop.f32.mrb[0].mxu0
      %v2573 = vadd.f32 %v2053, %v2572
      %v2574 = vpop.f32.mrb[0].mxu0
      %2575 = vmatprep.mubr.bf16.mxu0 %v1860
      %2576 = vmatmul.mubr.bf16.gmra.mrb[0].mxu0 %v1859
      %v2577 = vpop.f32.mrb[0].mxu0
      %v2578 = vadd.f32 %v2053, %v2577
      %v2579 = vpop.f32.mrb[0].mxu0
      %v2580 = vpop.f32.mrb[0].mxu0
      %v2581 = vadd.f32 %v2053, %v2580
      %v2582 = vpop.f32.mrb[0].mxu0
      %2583 = vmatprep.mubr.bf16.mxu0 %v1869
      %2584 = vmatmul.mubr.bf16.gmra.mrb[0].mxu0 %v1868
      %v2585 = vpop.f32.mrb[0].mxu0
      %v2586 = vadd.f32 %v2053, %v2585
      %v2587 = vpop.f32.mrb[0].mxu0
      %v2588 = vpop.f32.mrb[0].mxu0
      %v2589 = vadd.f32 %v2053, %v2588
      %v2590 = vpop.f32.mrb[0].mxu0
      %2591 = vmatprep.mubr.bf16.mxu0 %v1878
      %2592 = vmatmul.mubr.bf16.gmra.mrb[0].mxu0 %v1877
      %v2593 = vpop.f32.mrb[0].mxu0
      %v2594 = vadd.f32 %v2053, %v2593
      %v2595 = vpop.f32.mrb[0].mxu0
      %v2596 = vpop.f32.mrb[0].mxu0
      %v2597 = vadd.f32 %v2053, %v2596
      %v2598 = vpop.f32.mrb[0].mxu0
      %2599 = vmatprep.mubr.bf16.mxu0 %v1887
      %2600 = vmatmul.mubr.bf16.gmra.mrb[0].mxu0 %v1886
      %v2601 = vpop.f32.mrb[0].mxu0
      %v2602 = vadd.f32 %v2053, %v2601
      %v2603 = vpop.f32.mrb[0].mxu0
      %v2604 = vpop.f32.mrb[0].mxu0
      %v2605 = vadd.f32 %v2053, %v2604
      %v2606 = vpop.f32.mrb[0].mxu0
      %2607 = vmatprep.mubr.bf16.mxu0 %v1896
      %2608 = vmatmul.mubr.bf16.gmra.mrb[0].mxu0 %v1895
      %v2609 = vpop.f32.mrb[0].mxu0
      %v2610 = vadd.f32 %v2053, %v2609
      %v2611 = vpop.f32.mrb[0].mxu0
      %v2612 = vpop.f32.mrb[0].mxu0
      %v2613 = vadd.f32 %v2053, %v2612
      %v2614 = vpop.f32.mrb[0].mxu0
      %2615 = vdwg.mxu0
      %2616 = vmatprep.subr.bf16.mxu0 0
      %2617 = vmatpush1.bf16.msra.mxu0 %v2359
      %2618 = vmatprep.subr.bf16.mxu0 0
      %2619 = vmatpush1.bf16.msra.mxu0 %v2360
      %2620 = vmatprep.subr.bf16.mxu0 0
      %2621 = vmatpush1.bf16.msra.mxu0 %v2361
      %2622 = vmatprep.subr.bf16.mxu0 0
      %2623 = vmatpush1.bf16.msra.mxu0 %v2362
      %2624 = vmatprep.subr.bf16.mxu0 0
      %2625 = vmatpush1.bf16.msra.mxu0 %v2363
      %2626 = vmatprep.subr.bf16.mxu0 0
      %2627 = vmatpush1.bf16.msra.mxu0 %v2364
      %2628 = vmatprep.subr.bf16.mxu0 0
      %2629 = vmatpush1.bf16.msra.mxu0 %v2365
      %2630 = vmatprep.subr.bf16.mxu0 0
      %2631 = vmatpush1.bf16.msra.mxu0 %v2366
      %2632 = vmatprep.subr.bf16.mxu0 0
      %2633 = vmatpush1.bf16.msra.mxu0 %v2367
      %2634 = vmatprep.subr.bf16.mxu0 0
      %2635 = vmatpush1.bf16.msra.mxu0 %v2368
      %2636 = vmatprep.subr.bf16.mxu0 0
      %2637 = vmatpush1.bf16.msra.mxu0 %v2369
      %2638 = vmatprep.subr.bf16.mxu0 0
      %2639 = vmatpush1.bf16.msra.mxu0 %v2370
      %2640 = vmatprep.subr.bf16.mxu0 0
      %2641 = vmatpush1.bf16.msra.mxu0 %v2371
      %2642 = vmatprep.subr.bf16.mxu0 0
      %2643 = vmatpush1.bf16.msra.mxu0 %v2372
      %2644 = vmatprep.subr.bf16.mxu0 0
      %2645 = vmatpush1.bf16.msra.mxu0 %v2373
      %2646 = vmatprep.subr.bf16.mxu0 0
      %2647 = vmatpush1.bf16.msra.mxu0 %v2374
      %2648 = vmatprep.mubr.bf16.mxu0 %v1799
      %2649 = vmatmul.mubr.bf16.gmra.mrb[0].mxu0 %v1798
      %v2650 = vpop.f32.mrb[0].mxu0
      %v2651 = vadd.f32 %v2522, %v2650
      %v2652 = vpop.f32.mrb[0].mxu0
      %v2653 = vpop.f32.mrb[0].mxu0
      %v2654 = vadd.f32 %v2525, %v2653
      %v2655 = vpop.f32.mrb[0].mxu0
      %2656 = vmatprep.mubr.bf16.mxu0 %v1808
      %2657 = vmatmul.mubr.bf16.gmra.mrb[0].mxu0 %v1807
      %v2658 = vpop.f32.mrb[0].mxu0
      %v2659 = vadd.f32 %v2530, %v2658
      %v2660 = vpop.f32.mrb[0].mxu0
      %v2661 = vpop.f32.mrb[0].mxu0
      %v2662 = vadd.f32 %v2533, %v2661
      %v2663 = vpop.f32.mrb[0].mxu0
      %2664 = vmatprep.mubr.bf16.mxu0 %v1817
      %2665 = vmatmul.mubr.bf16.gmra.mrb[0].mxu0 %v1816
      %v2666 = vpop.f32.mrb[0].mxu0
      %v2667 = vadd.f32 %v2538, %v2666
      %v2668 = vpop.f32.mrb[0].mxu0
      %v2669 = vpop.f32.mrb[0].mxu0
      %v2670 = vadd.f32 %v2541, %v2669
      %v2671 = vpop.f32.mrb[0].mxu0
      %2672 = vmatprep.mubr.bf16.mxu0 %v1826
      %2673 = vmatmul.mubr.bf16.gmra.mrb[0].mxu0 %v1825
      %v2674 = vpop.f32.mrb[0].mxu0
      %v2675 = vadd.f32 %v2546, %v2674
      %v2676 = vpop.f32.mrb[0].mxu0
      %v2677 = vpop.f32.mrb[0].mxu0
      %v2678 = vadd.f32 %v2549, %v2677
      %v2679 = vpop.f32.mrb[0].mxu0
      %2680 = vmatprep.mubr.bf16.mxu0 %v1835
      %2681 = vmatmul.mubr.bf16.gmra.mrb[0].mxu0 %v1834
      %v2682 = vpop.f32.mrb[0].mxu0
      %v2683 = vadd.f32 %v2554, %v2682
      %v2684 = vpop.f32.mrb[0].mxu0
      %v2685 = vpop.f32.mrb[0].mxu0
      %v2686 = vadd.f32 %v2557, %v2685
      %v2687 = vpop.f32.mrb[0].mxu0
      %2688 = vmatprep.mubr.bf16.mxu0 %v1844
      %2689 = vmatmul.mubr.bf16.gmra.mrb[0].mxu0 %v1843
      %v2690 = vpop.f32.mrb[0].mxu0
      %v2691 = vadd.f32 %v2562, %v2690
      %v2692 = vpop.f32.mrb[0].mxu0
      %v2693 = vpop.f32.mrb[0].mxu0
      %v2694 = vadd.f32 %v2565, %v2693
      %v2695 = vpop.f32.mrb[0].mxu0
      %2696 = vmatprep.mubr.bf16.mxu0 %v1853
      %2697 = vmatmul.mubr.bf16.gmra.mrb[0].mxu0 %v1852
      %v2698 = vpop.f32.mrb[0].mxu0
      %v2699 = vadd.f32 %v2570, %v2698
      %v2700 = vpop.f32.mrb[0].mxu0
      %v2701 = vpop.f32.mrb[0].mxu0
      %v2702 = vadd.f32 %v2573, %v2701
      %v2703 = vpop.f32.mrb[0].mxu0
      %2704 = vmatprep.mubr.bf16.mxu0 %v1862
      %2705 = vmatmul.mubr.bf16.gmra.mrb[0].mxu0 %v1861
      %v2706 = vpop.f32.mrb[0].mxu0
      %v2707 = vadd.f32 %v2578, %v2706
      %v2708 = vpop.f32.mrb[0].mxu0
      %v2709 = vpop.f32.mrb[0].mxu0
      %v2710 = vadd.f32 %v2581, %v2709
      %v2711 = vpop.f32.mrb[0].mxu0
      %2712 = vmatprep.mubr.bf16.mxu0 %v1871
      %2713 = vmatmul.mubr.bf16.gmra.mrb[0].mxu0 %v1870
      %v2714 = vpop.f32.mrb[0].mxu0
      %v2715 = vadd.f32 %v2586, %v2714
      %v2716 = vpop.f32.mrb[0].mxu0
      %v2717 = vpop.f32.mrb[0].mxu0
      %v2718 = vadd.f32 %v2589, %v2717
      %v2719 = vpop.f32.mrb[0].mxu0
      %2720 = vmatprep.mubr.bf16.mxu0 %v1880
      %2721 = vmatmul.mubr.bf16.gmra.mrb[0].mxu0 %v1879
      %v2722 = vpop.f32.mrb[0].mxu0
      %v2723 = vadd.f32 %v2594, %v2722
      %v2724 = vpop.f32.mrb[0].mxu0
      %v2725 = vpop.f32.mrb[0].mxu0
      %v2726 = vadd.f32 %v2597, %v2725
      %v2727 = vpop.f32.mrb[0].mxu0
      %2728 = vmatprep.mubr.bf16.mxu0 %v1889
      %2729 = vmatmul.mubr.bf16.gmra.mrb[0].mxu0 %v1888
      %v2730 = vpop.f32.mrb[0].mxu0
      %v2731 = vadd.f32 %v2602, %v2730
      %v2732 = vpop.f32.mrb[0].mxu0
      %v2733 = vpop.f32.mrb[0].mxu0
      %v2734 = vadd.f32 %v2605, %v2733
      %v2735 = vpop.f32.mrb[0].mxu0
      %2736 = vmatprep.mubr.bf16.mxu0 %v1898
      %2737 = vmatmul.mubr.bf16.gmra.mrb[0].mxu0 %v1897
      %v2738 = vpop.f32.mrb[0].mxu0
      %v2739 = vadd.f32 %v2610, %v2738
      %v2740 = vpop.f32.mrb[0].mxu0
      %v2741 = vpop.f32.mrb[0].mxu0
      %v2742 = vadd.f32 %v2613, %v2741
      %v2743 = vpop.f32.mrb[0].mxu0
      %2744 = vdwg.mxu0
      %2745 = vmatprep.subr.bf16.mxu0 0
      %2746 = vmatpush1.bf16.msra.mxu0 %v2375
      %2747 = vmatprep.subr.bf16.mxu0 0
      %2748 = vmatpush1.bf16.msra.mxu0 %v2376
      %2749 = vmatprep.subr.bf16.mxu0 0
      %2750 = vmatpush1.bf16.msra.mxu0 %v2377
      %2751 = vmatprep.subr.bf16.mxu0 0
      %2752 = vmatpush1.bf16.msra.mxu0 %v2378
      %2753 = vmatprep.subr.bf16.mxu0 0
      %2754 = vmatpush1.bf16.msra.mxu0 %v2379
      %2755 = vmatprep.subr.bf16.mxu0 0
      %2756 = vmatpush1.bf16.msra.mxu0 %v2380
      %2757 = vmatprep.subr.bf16.mxu0 0
      %2758 = vmatpush1.bf16.msra.mxu0 %v2381
      %2759 = vmatprep.subr.bf16.mxu0 0
      %2760 = vmatpush1.bf16.msra.mxu0 %v2382
      %2761 = vmatprep.subr.bf16.mxu0 0
      %2762 = vmatpush1.bf16.msra.mxu0 %v2383
      %2763 = vmatprep.subr.bf16.mxu0 0
      %2764 = vmatpush1.bf16.msra.mxu0 %v2384
      %2765 = vmatprep.subr.bf16.mxu0 0
      %2766 = vmatpush1.bf16.msra.mxu0 %v2385
      %2767 = vmatprep.subr.bf16.mxu0 0
      %2768 = vmatpush1.bf16.msra.mxu0 %v2386
      %2769 = vmatprep.subr.bf16.mxu0 0
      %2770 = vmatpush1.bf16.msra.mxu0 %v2387
      %2771 = vmatprep.subr.bf16.mxu0 0
      %2772 = vmatpush1.bf16.msra.mxu0 %v2388
      %2773 = vmatprep.subr.bf16.mxu0 0
      %2774 = vmatpush1.bf16.msra.mxu0 %v2389
      %2775 = vmatprep.subr.bf16.mxu0 0
      %2776 = vmatpush1.bf16.msra.mxu0 %v2390
      %2777 = vmatprep.mubr.bf16.mxu0 %v1801
      %2778 = vmatmul.mubr.bf16.gmra.mrb[0].mxu0 %v1800
      %v2779 = vpop.f32.mrb[0].mxu0
      %v2780 = vadd.f32 %v2651, %v2779
      %v2781 = vpop.f32.mrb[0].mxu0
      %v2782 = vpop.f32.mrb[0].mxu0
      %v2783 = vadd.f32 %v2654, %v2782
      %v2784 = vpop.f32.mrb[0].mxu0
      %2785 = vmatprep.mubr.bf16.mxu0 %v1810
      %2786 = vmatmul.mubr.bf16.gmra.mrb[0].mxu0 %v1809
      %v2787 = vpop.f32.mrb[0].mxu0
      %v2788 = vadd.f32 %v2659, %v2787
      %v2789 = vpop.f32.mrb[0].mxu0
      %v2790 = vpop.f32.mrb[0].mxu0
      %v2791 = vadd.f32 %v2662, %v2790
      %v2792 = vpop.f32.mrb[0].mxu0
      %2793 = vmatprep.mubr.bf16.mxu0 %v1819
      %2794 = vmatmul.mubr.bf16.gmra.mrb[0].mxu0 %v1818
      %v2795 = vpop.f32.mrb[0].mxu0
      %v2796 = vadd.f32 %v2667, %v2795
      %v2797 = vpop.f32.mrb[0].mxu0
      %v2798 = vpop.f32.mrb[0].mxu0
      %v2799 = vadd.f32 %v2670, %v2798
      %v2800 = vpop.f32.mrb[0].mxu0
      %2801 = vmatprep.mubr.bf16.mxu0 %v1828
      %2802 = vmatmul.mubr.bf16.gmra.mrb[0].mxu0 %v1827
      %v2803 = vpop.f32.mrb[0].mxu0
      %v2804 = vadd.f32 %v2675, %v2803
      %v2805 = vpop.f32.mrb[0].mxu0
      %v2806 = vpop.f32.mrb[0].mxu0
      %v2807 = vadd.f32 %v2678, %v2806
      %v2808 = vpop.f32.mrb[0].mxu0
      %2809 = vmatprep.mubr.bf16.mxu0 %v1837
      %2810 = vmatmul.mubr.bf16.gmra.mrb[0].mxu0 %v1836
      %v2811 = vpop.f32.mrb[0].mxu0
      %v2812 = vadd.f32 %v2683, %v2811
      %v2813 = vpop.f32.mrb[0].mxu0
      %v2814 = vpop.f32.mrb[0].mxu0
      %v2815 = vadd.f32 %v2686, %v2814
      %v2816 = vpop.f32.mrb[0].mxu0
      %2817 = vmatprep.mubr.bf16.mxu0 %v1846
      %2818 = vmatmul.mubr.bf16.gmra.mrb[0].mxu0 %v1845
      %v2819 = vpop.f32.mrb[0].mxu0
      %v2820 = vadd.f32 %v2691, %v2819
      %v2821 = vpop.f32.mrb[0].mxu0
      %v2822 = vpop.f32.mrb[0].mxu0
      %v2823 = vadd.f32 %v2694, %v2822
      %v2824 = vpop.f32.mrb[0].mxu0
      %2825 = vmatprep.mubr.bf16.mxu0 %v1855
      %2826 = vmatmul.mubr.bf16.gmra.mrb[0].mxu0 %v1854
      %v2827 = vpop.f32.mrb[0].mxu0
      %v2828 = vadd.f32 %v2699, %v2827
      %v2829 = vpop.f32.mrb[0].mxu0
      %v2830 = vpop.f32.mrb[0].mxu0
      %v2831 = vadd.f32 %v2702, %v2830
      %v2832 = vpop.f32.mrb[0].mxu0
      %2833 = vmatprep.mubr.bf16.mxu0 %v1864
      %2834 = vmatmul.mubr.bf16.gmra.mrb[0].mxu0 %v1863
      %v2835 = vpop.f32.mrb[0].mxu0
      %v2836 = vadd.f32 %v2707, %v2835
      %v2837 = vpop.f32.mrb[0].mxu0
      %v2838 = vpop.f32.mrb[0].mxu0
      %v2839 = vadd.f32 %v2710, %v2838
      %v2840 = vpop.f32.mrb[0].mxu0
      %2841 = vmatprep.mubr.bf16.mxu0 %v1873
      %2842 = vmatmul.mubr.bf16.gmra.mrb[0].mxu0 %v1872
      %v2843 = vpop.f32.mrb[0].mxu0
      %v2844 = vadd.f32 %v2715, %v2843
      %v2845 = vpop.f32.mrb[0].mxu0
      %v2846 = vpop.f32.mrb[0].mxu0
      %v2847 = vadd.f32 %v2718, %v2846
      %v2848 = vpop.f32.mrb[0].mxu0
      %2849 = vmatprep.mubr.bf16.mxu0 %v1882
      %2850 = vmatmul.mubr.bf16.gmra.mrb[0].mxu0 %v1881
      %v2851 = vpop.f32.mrb[0].mxu0
      %v2852 = vadd.f32 %v2723, %v2851
      %v2853 = vpop.f32.mrb[0].mxu0
      %v2854 = vpop.f32.mrb[0].mxu0
      %v2855 = vadd.f32 %v2726, %v2854
      %v2856 = vpop.f32.mrb[0].mxu0
      %2857 = vmatprep.mubr.bf16.mxu0 %v1891
      %2858 = vmatmul.mubr.bf16.gmra.mrb[0].mxu0 %v1890
      %v2859 = vpop.f32.mrb[0].mxu0
      %v2860 = vadd.f32 %v2731, %v2859
      %v2861 = vpop.f32.mrb[0].mxu0
      %v2862 = vpop.f32.mrb[0].mxu0
      %v2863 = vadd.f32 %v2734, %v2862
      %v2864 = vpop.f32.mrb[0].mxu0
      %2865 = vmatprep.mubr.bf16.mxu0 %v1900
      %2866 = vmatmul.mubr.bf16.gmra.mrb[0].mxu0 %v1899
      %v2867 = vpop.f32.mrb[0].mxu0
      %v2868 = vadd.f32 %v2739, %v2867
      %v2869 = vpop.f32.mrb[0].mxu0
      %v2870 = vpop.f32.mrb[0].mxu0
      %v2871 = vadd.f32 %v2742, %v2870
      %v2872 = vpop.f32.mrb[0].mxu0
      %2873 = vdwg.mxu0
      %2874 = vmatprep.subr.bf16.mxu0 0
      %2875 = vmatpush1.bf16.msra.mxu0 %v2391
      %2876 = vmatprep.subr.bf16.mxu0 0
      %2877 = vmatpush1.bf16.msra.mxu0 %v2392
      %2878 = vmatprep.subr.bf16.mxu0 0
      %2879 = vmatpush1.bf16.msra.mxu0 %v2393
      %2880 = vmatprep.subr.bf16.mxu0 0
      %2881 = vmatpush1.bf16.msra.mxu0 %v2394
      %2882 = vmatprep.subr.bf16.mxu0 0
      %2883 = vmatpush1.bf16.msra.mxu0 %v2395
      %2884 = vmatprep.subr.bf16.mxu0 0
      %2885 = vmatpush1.bf16.msra.mxu0 %v2396
      %2886 = vmatprep.subr.bf16.mxu0 0
      %2887 = vmatpush1.bf16.msra.mxu0 %v2397
      %2888 = vmatprep.subr.bf16.mxu0 0
      %2889 = vmatpush1.bf16.msra.mxu0 %v2398
      %2890 = vmatprep.subr.bf16.mxu0 0
      %2891 = vmatpush1.bf16.msra.mxu0 %v2399
      %2892 = vmatprep.subr.bf16.mxu0 0
      %2893 = vmatpush1.bf16.msra.mxu0 %v2400
      %2894 = vmatprep.subr.bf16.mxu0 0
      %2895 = vmatpush1.bf16.msra.mxu0 %v2401
      %2896 = vmatprep.subr.bf16.mxu0 0
      %2897 = vmatpush1.bf16.msra.mxu0 %v2402
      %2898 = vmatprep.subr.bf16.mxu0 0
      %2899 = vmatpush1.bf16.msra.mxu0 %v2403
      %2900 = vmatprep.subr.bf16.mxu0 0
      %2901 = vmatpush1.bf16.msra.mxu0 %v2404
      %2902 = vmatprep.subr.bf16.mxu0 0
      %2903 = vmatpush1.bf16.msra.mxu0 %v2405
      %2904 = vmatprep.subr.bf16.mxu0 0
      %2905 = vmatpush1.bf16.msra.mxu0 %v2406
      %2906 = vmatprep.mubr.bf16.mxu0 %v1803
      %2907 = vmatmul.mubr.bf16.gmra.mrb[0].mxu0 %v1802
      %v2908 = vpop.f32.mrb[0].mxu0
      %v2909 = vadd.f32 %v2780, %v2908
      %v2910 = vpop.f32.mrb[0].mxu0
      %v2911 = vpop.f32.mrb[0].mxu0
      %v2912 = vadd.f32 %v2783, %v2911
      %v2913 = vpop.f32.mrb[0].mxu0
      %2914 = vmatprep.mubr.bf16.mxu0 %v1812
      %2915 = vmatmul.mubr.bf16.gmra.mrb[0].mxu0 %v1811
      %v2916 = vpop.f32.mrb[0].mxu0
      %v2917 = vadd.f32 %v2788, %v2916
      %v2918 = vpop.f32.mrb[0].mxu0
      %v2919 = vpop.f32.mrb[0].mxu0
      %v2920 = vadd.f32 %v2791, %v2919
      %v2921 = vpop.f32.mrb[0].mxu0
      %2922 = vmatprep.mubr.bf16.mxu0 %v1821
      %2923 = vmatmul.mubr.bf16.gmra.mrb[0].mxu0 %v1820
      %v2924 = vpop.f32.mrb[0].mxu0
      %v2925 = vadd.f32 %v2796, %v2924
      %v2926 = vpop.f32.mrb[0].mxu0
      %v2927 = vpop.f32.mrb[0].mxu0
      %v2928 = vadd.f32 %v2799, %v2927
      %v2929 = vpop.f32.mrb[0].mxu0
      %2930 = vmatprep.mubr.bf16.mxu0 %v1830
      %2931 = vmatmul.mubr.bf16.gmra.mrb[0].mxu0 %v1829
      %v2932 = vpop.f32.mrb[0].mxu0
      %v2933 = vadd.f32 %v2804, %v2932
      %v2934 = vpop.f32.mrb[0].mxu0
      %v2935 = vpop.f32.mrb[0].mxu0
      %v2936 = vadd.f32 %v2807, %v2935
      %v2937 = vpop.f32.mrb[0].mxu0
      %2938 = vmatprep.mubr.bf16.mxu0 %v1839
      %2939 = vmatmul.mubr.bf16.gmra.mrb[0].mxu0 %v1838
      %v2940 = vpop.f32.mrb[0].mxu0
      %v2941 = vadd.f32 %v2812, %v2940
      %v2942 = vpop.f32.mrb[0].mxu0
      %v2943 = vpop.f32.mrb[0].mxu0
      %v2944 = vadd.f32 %v2815, %v2943
      %v2945 = vpop.f32.mrb[0].mxu0
      %2946 = vmatprep.mubr.bf16.mxu0 %v1848
      %2947 = vmatmul.mubr.bf16.gmra.mrb[0].mxu0 %v1847
      %v2948 = vpop.f32.mrb[0].mxu0
      %v2949 = vadd.f32 %v2820, %v2948
      %v2950 = vpop.f32.mrb[0].mxu0
      %v2951 = vpop.f32.mrb[0].mxu0
      %v2952 = vadd.f32 %v2823, %v2951
      %v2953 = vpop.f32.mrb[0].mxu0
      %2954 = vmatprep.mubr.bf16.mxu0 %v1857
      %2955 = vmatmul.mubr.bf16.gmra.mrb[0].mxu0 %v1856
      %v2956 = vpop.f32.mrb[0].mxu0
      %v2957 = vadd.f32 %v2828, %v2956
      %v2958 = vpop.f32.mrb[0].mxu0
      %v2959 = vpop.f32.mrb[0].mxu0
      %v2960 = vadd.f32 %v2831, %v2959
      %v2961 = vpop.f32.mrb[0].mxu0
      %2962 = vmatprep.mubr.bf16.mxu0 %v1866
      %2963 = vmatmul.mubr.bf16.gmra.mrb[0].mxu0 %v1865
      %v2964 = vpop.f32.mrb[0].mxu0
      %v2965 = vadd.f32 %v2836, %v2964
      %v2966 = vpop.f32.mrb[0].mxu0
      %v2967 = vpop.f32.mrb[0].mxu0
      %v2968 = vadd.f32 %v2839, %v2967
      %v2969 = vpop.f32.mrb[0].mxu0
      %2970 = vmatprep.mubr.bf16.mxu0 %v1875
      %2971 = vmatmul.mubr.bf16.gmra.mrb[0].mxu0 %v1874
      %v2972 = vpop.f32.mrb[0].mxu0
      %v2973 = vadd.f32 %v2844, %v2972
      %v2974 = vpop.f32.mrb[0].mxu0
      %v2975 = vpop.f32.mrb[0].mxu0
      %v2976 = vadd.f32 %v2847, %v2975
      %v2977 = vpop.f32.mrb[0].mxu0
      %2978 = vmatprep.mubr.bf16.mxu0 %v1884
      %2979 = vmatmul.mubr.bf16.gmra.mrb[0].mxu0 %v1883
      %v2980 = vpop.f32.mrb[0].mxu0
      %v2981 = vadd.f32 %v2852, %v2980
      %v2982 = vpop.f32.mrb[0].mxu0
      %v2983 = vpop.f32.mrb[0].mxu0
      %v2984 = vadd.f32 %v2855, %v2983
      %v2985 = vpop.f32.mrb[0].mxu0
      %2986 = vmatprep.mubr.bf16.mxu0 %v1893
      %2987 = vmatmul.mubr.bf16.gmra.mrb[0].mxu0 %v1892
      %v2988 = vpop.f32.mrb[0].mxu0
      %v2989 = vadd.f32 %v2860, %v2988
      %v2990 = vpop.f32.mrb[0].mxu0
      %v2991 = vpop.f32.mrb[0].mxu0
      %v2992 = vadd.f32 %v2863, %v2991
      %v2993 = vpop.f32.mrb[0].mxu0
      %2994 = vmatprep.mubr.bf16.mxu0 %v1902
      %2995 = vmatmul.mubr.bf16.gmra.mrb[0].mxu0 %v1901
      %v2996 = vpop.f32.mrb[0].mxu0
      %v2997 = vadd.f32 %v2868, %v2996
      %v2998 = vpop.f32.mrb[0].mxu0
      %v2999 = vpop.f32.mrb[0].mxu0
      %v3000 = vadd.f32 %v2871, %v2999
      %v3001 = vpop.f32.mrb[0].mxu0
      %3002 = vdwg.mxu0
      %3003 = vmatprep.subr.bf16.mxu0 0
      %3004 = vmatpush1.bf16.msra.mxu0 %v2407
      %3005 = vmatprep.subr.bf16.mxu0 0
      %3006 = vmatpush1.bf16.msra.mxu0 %v2408
      %3007 = vmatprep.subr.bf16.mxu0 0
      %3008 = vmatpush1.bf16.msra.mxu0 %v2409
      %3009 = vmatprep.subr.bf16.mxu0 0
      %3010 = vmatpush1.bf16.msra.mxu0 %v2410
      %3011 = vmatprep.subr.bf16.mxu0 0
      %3012 = vmatpush1.bf16.msra.mxu0 %v2411
      %3013 = vmatprep.subr.bf16.mxu0 0
      %3014 = vmatpush1.bf16.msra.mxu0 %v2412
      %3015 = vmatprep.subr.bf16.mxu0 0
      %3016 = vmatpush1.bf16.msra.mxu0 %v2413
      %3017 = vmatprep.subr.bf16.mxu0 0
      %3018 = vmatpush1.bf16.msra.mxu0 %v2414
      %3019 = vmatprep.subr.bf16.mxu0 0
      %3020 = vmatpush1.bf16.msra.mxu0 0
      %3021 = vmatprep.subr.bf16.mxu0 0
      %3022 = vmatpush1.bf16.msra.mxu0 0
      %3023 = vmatprep.subr.bf16.mxu0 0
      %3024 = vmatpush1.bf16.msra.mxu0 0
      %3025 = vmatprep.subr.bf16.mxu0 0
      %3026 = vmatpush1.bf16.msra.mxu0 0
      %3027 = vmatprep.subr.bf16.mxu0 0
      %3028 = vmatpush1.bf16.msra.mxu0 0
      %3029 = vmatprep.subr.bf16.mxu0 0
      %3030 = vmatpush1.bf16.msra.mxu0 0
      %3031 = vmatprep.subr.bf16.mxu0 0
      %3032 = vmatpush1.bf16.msra.mxu0 0
      %3033 = vmatprep.subr.bf16.mxu0 0
      %3034 = vmatpush1.bf16.msra.mxu0 0
      %3035 = vmatprep.mubr.bf16.mxu0 0
      %3036 = vmatmul.mubr.bf16.gmra.mrb[0].mxu0 %v1804
      %v3037 = vpop.f32.mrb[0].mxu0
      %v3038 = vadd.f32 %v2909, %v3037
      %v3039 = vpop.f32.mrb[0].mxu0
      %v3040 = vpop.f32.mrb[0].mxu0
      %v3041 = vadd.f32 %v2912, %v3040
      %v3042 = vpop.f32.mrb[0].mxu0
      %3043 = vmatprep.mubr.bf16.mxu0 0
      %3044 = vmatmul.mubr.bf16.gmra.mrb[0].mxu0 %v1813
      %v3045 = vpop.f32.mrb[0].mxu0
      %v3046 = vadd.f32 %v2917, %v3045
      %v3047 = vpop.f32.mrb[0].mxu0
      %v3048 = vpop.f32.mrb[0].mxu0
      %v3049 = vadd.f32 %v2920, %v3048
      %v3050 = vpop.f32.mrb[0].mxu0
      %3051 = vmatprep.mubr.bf16.mxu0 0
      %3052 = vmatmul.mubr.bf16.gmra.mrb[0].mxu0 %v1822
      %v3053 = vpop.f32.mrb[0].mxu0
      %v3054 = vadd.f32 %v2925, %v3053
      %v3055 = vpop.f32.mrb[0].mxu0
      %v3056 = vpop.f32.mrb[0].mxu0
      %v3057 = vadd.f32 %v2928, %v3056
      %v3058 = vpop.f32.mrb[0].mxu0
      %3059 = vmatprep.mubr.bf16.mxu0 0
      %3060 = vmatmul.mubr.bf16.gmra.mrb[0].mxu0 %v1831
      %v3061 = vpop.f32.mrb[0].mxu0
      %v3062 = vadd.f32 %v2933, %v3061
      %v3063 = vpop.f32.mrb[0].mxu0
      %v3064 = vpop.f32.mrb[0].mxu0
      %v3065 = vadd.f32 %v2936, %v3064
      %v3066 = vpop.f32.mrb[0].mxu0
      %3067 = vmatprep.mubr.bf16.mxu0 0
      %3068 = vmatmul.mubr.bf16.gmra.mrb[0].mxu0 %v1840
      %v3069 = vpop.f32.mrb[0].mxu0
      %v3070 = vadd.f32 %v2941, %v3069
      %v3071 = vpop.f32.mrb[0].mxu0
      %v3072 = vpop.f32.mrb[0].mxu0
      %v3073 = vadd.f32 %v2944, %v3072
      %v3074 = vpop.f32.mrb[0].mxu0
      %3075 = vmatprep.mubr.bf16.mxu0 0
      %3076 = vmatmul.mubr.bf16.gmra.mrb[0].mxu0 %v1849
      %v3077 = vpop.f32.mrb[0].mxu0
      %v3078 = vadd.f32 %v2949, %v3077
      %v3079 = vpop.f32.mrb[0].mxu0
      %v3080 = vpop.f32.mrb[0].mxu0
      %v3081 = vadd.f32 %v2952, %v3080
      %v3082 = vpop.f32.mrb[0].mxu0
      %3083 = vmatprep.mubr.bf16.mxu0 0
      %3084 = vmatmul.mubr.bf16.gmra.mrb[0].mxu0 %v1858
      %v3085 = vpop.f32.mrb[0].mxu0
      %v3086 = vadd.f32 %v2957, %v3085
      %v3087 = vpop.f32.mrb[0].mxu0
      %v3088 = vpop.f32.mrb[0].mxu0
      %v3089 = vadd.f32 %v2960, %v3088
      %v3090 = vpop.f32.mrb[0].mxu0
      %3091 = vmatprep.mubr.bf16.mxu0 0
      %3092 = vmatmul.mubr.bf16.gmra.mrb[0].mxu0 %v1867
      %v3093 = vpop.f32.mrb[0].mxu0
      %v3094 = vadd.f32 %v2965, %v3093
      %v3095 = vpop.f32.mrb[0].mxu0
      %v3096 = vpop.f32.mrb[0].mxu0
      %v3097 = vadd.f32 %v2968, %v3096
      %v3098 = vpop.f32.mrb[0].mxu0
      %3099 = vmatprep.mubr.bf16.mxu0 0
      %3100 = vmatmul.mubr.bf16.gmra.mrb[0].mxu0 %v1876
      %v3101 = vpop.f32.mrb[0].mxu0
      %v3102 = vadd.f32 %v2973, %v3101
      %v3103 = vpop.f32.mrb[0].mxu0
      %v3104 = vpop.f32.mrb[0].mxu0
      %v3105 = vadd.f32 %v2976, %v3104
      %v3106 = vpop.f32.mrb[0].mxu0
      %3107 = vmatprep.mubr.bf16.mxu0 0
      %3108 = vmatmul.mubr.bf16.gmra.mrb[0].mxu0 %v1885
      %v3109 = vpop.f32.mrb[0].mxu0
      %v3110 = vadd.f32 %v2981, %v3109
      %v3111 = vpop.f32.mrb[0].mxu0
      %v3112 = vpop.f32.mrb[0].mxu0
      %v3113 = vadd.f32 %v2984, %v3112
      %v3114 = vpop.f32.mrb[0].mxu0
      %3115 = vmatprep.mubr.bf16.mxu0 0
      %3116 = vmatmul.mubr.bf16.gmra.mrb[0].mxu0 %v1894
      %v3117 = vpop.f32.mrb[0].mxu0
      %v3118 = vadd.f32 %v2989, %v3117
      %v3119 = vpop.f32.mrb[0].mxu0
      %v3120 = vpop.f32.mrb[0].mxu0
      %v3121 = vadd.f32 %v2992, %v3120
      %v3122 = vpop.f32.mrb[0].mxu0
      %3123 = vmatprep.mubr.bf16.mxu0 0
      %3124 = vmatmul.mubr.bf16.gmra.mrb[0].mxu0 %v1903
      %v3125 = vpop.f32.mrb[0].mxu0
      %v3126 = vadd.f32 %v2997, %v3125
      %v3127 = vpop.f32.mrb[0].mxu0
      %v3128 = vpop.f32.mrb[0].mxu0
      %v3129 = vadd.f32 %v3000, %v3128
      %v3130 = vpop.f32.mrb[0].mxu0
      %3131 = vdwg.mxu0
      %v3132 = vld [vmem:[%s663] sm:$0xff]
      %v3133 = vld [vmem:[%s663 + $0x8] sm:$0xff]
      %v3134 = vld [vmem:[%s663 + $0x10] sm:$0xff]
      %v3135 = vld [vmem:[%s663 + $0x18] sm:$0xff]
      %v3136 = vld [vmem:[%s663 + $0x20] sm:$0xff]
      %v3137 = vld [vmem:[%s663 + $0x28] sm:$0xff]
      %v3138 = vld [vmem:[%s663 + $0x30] sm:$0xff]
      %v3139 = vld [vmem:[%s663 + $0x38] sm:$0xff]
      %v3140 = vld [vmem:[%s663 + $0x40] sm:$0xff]
      %v3141 = vld [vmem:[%s663 + $0x48] sm:$0xff]
      %v3142 = vld [vmem:[%s663 + $0x50] sm:$0xff]
      %v3143 = vld [vmem:[%s663 + $0x58] sm:$0xff]
      %v3144 = vld [vmem:[%s663 + $0x60] sm:$0xff]
      %v3145 = vld [vmem:[%s663 + $0x68] sm:$0xff]
      %v3146 = vld [vmem:[%s663 + $0x70] sm:$0xff]
      %v3147 = vld [vmem:[%s663 + $0x78] sm:$0xff]
      %v3148 = vld [vmem:[%s663 + $0x80] sm:$0xff]
      %v3149 = vld [vmem:[%s663 + $0x88] sm:$0xff]
      %v3150 = vld [vmem:[%s663 + $0x90] sm:$0xff]
      %v3151 = vld [vmem:[%s663 + $0x98] sm:$0xff]
      %v3152 = vld [vmem:[%s663 + $0xa0] sm:$0xff]
      %v3153 = vld [vmem:[%s663 + $0xa8] sm:$0xff]
      %v3154 = vld [vmem:[%s663 + $0xb0] sm:$0xff]
      %v3155 = vld [vmem:[%s663 + $0xb8] sm:$0xff]
      %3157 = vset.pattern.permute.xlu0 0
      %3158 = vperm.xlu0 %3157, %v3132
      %v3159 = vpop.permute.xlu0 %3158
      %3162 = vset.pattern.permute.xlu0 0
      %3163 = vperm.xlu0 %3162, %v3133
      %v3164 = vpop.permute.xlu0 %3163
      %3167 = vset.pattern.permute.xlu0 0
      %3168 = vperm.xlu0 %3167, %v3134
      %v3169 = vpop.permute.xlu0 %3168
      %3172 = vset.pattern.permute.xlu0 0
      %3173 = vperm.xlu0 %3172, %v3135
      %v3174 = vpop.permute.xlu0 %3173
      %3177 = vset.pattern.permute.xlu0 0
      %3178 = vperm.xlu0 %3177, %v3136
      %v3179 = vpop.permute.xlu0 %3178
      %3182 = vset.pattern.permute.xlu0 0
      %3183 = vperm.xlu0 %3182, %v3137
      %v3184 = vpop.permute.xlu0 %3183
      %3187 = vset.pattern.permute.xlu0 0
      %3188 = vperm.xlu0 %3187, %v3138
      %v3189 = vpop.permute.xlu0 %3188
      %3192 = vset.pattern.permute.xlu0 0
      %3193 = vperm.xlu0 %3192, %v3139
      %v3194 = vpop.permute.xlu0 %3193
      %3197 = vset.pattern.permute.xlu0 0
      %3198 = vperm.xlu0 %3197, %v3140
      %v3199 = vpop.permute.xlu0 %3198
      %3202 = vset.pattern.permute.xlu0 0
      %3203 = vperm.xlu0 %3202, %v3141
      %v3204 = vpop.permute.xlu0 %3203
      %3207 = vset.pattern.permute.xlu0 0
      %3208 = vperm.xlu0 %3207, %v3142
      %v3209 = vpop.permute.xlu0 %3208
      %3212 = vset.pattern.permute.xlu0 0
      %3213 = vperm.xlu0 %3212, %v3143
      %v3214 = vpop.permute.xlu0 %3213
      %3217 = vset.pattern.permute.xlu0 0
      %3218 = vperm.xlu0 %3217, %v3144
      %v3219 = vpop.permute.xlu0 %3218
      %3222 = vset.pattern.permute.xlu0 0
      %3223 = vperm.xlu0 %3222, %v3145
      %v3224 = vpop.permute.xlu0 %3223
      %3227 = vset.pattern.permute.xlu0 0
      %3228 = vperm.xlu0 %3227, %v3146
      %v3229 = vpop.permute.xlu0 %3228
      %3232 = vset.pattern.permute.xlu0 0
      %3233 = vperm.xlu0 %3232, %v3147
      %v3234 = vpop.permute.xlu0 %3233
      %3237 = vset.pattern.permute.xlu0 0
      %3238 = vperm.xlu0 %3237, %v3148
      %v3239 = vpop.permute.xlu0 %3238
      %3242 = vset.pattern.permute.xlu0 0
      %3243 = vperm.xlu0 %3242, %v3149
      %v3244 = vpop.permute.xlu0 %3243
      %3247 = vset.pattern.permute.xlu0 0
      %3248 = vperm.xlu0 %3247, %v3150
      %v3249 = vpop.permute.xlu0 %3248
      %3252 = vset.pattern.permute.xlu0 0
      %3253 = vperm.xlu0 %3252, %v3151
      %v3254 = vpop.permute.xlu0 %3253
      %3257 = vset.pattern.permute.xlu0 0
      %3258 = vperm.xlu0 %3257, %v3152
      %v3259 = vpop.permute.xlu0 %3258
      %3262 = vset.pattern.permute.xlu0 0
      %3263 = vperm.xlu0 %3262, %v3153
      %v3264 = vpop.permute.xlu0 %3263
      %3267 = vset.pattern.permute.xlu0 0
      %3268 = vperm.xlu0 %3267, %v3154
      %v3269 = vpop.permute.xlu0 %3268
      %3272 = vset.pattern.permute.xlu0 0
      %3273 = vperm.xlu0 %3272, %v3155
      %v3274 = vpop.permute.xlu0 %3273
      %v3276 = vmul.f32 %v3038, %v3159
      %v3277 = vmul.f32 %v3041, %v3164
      %v3278 = vmul.f32 %v3046, %v3169
      %v3279 = vmul.f32 %v3049, %v3174
      %v3280 = vmul.f32 %v3054, %v3179
      %v3281 = vmul.f32 %v3057, %v3184
      %v3282 = vmul.f32 %v3062, %v3189
      %v3283 = vmul.f32 %v3065, %v3194
      %v3284 = vmul.f32 %v3070, %v3199
      %v3285 = vmul.f32 %v3073, %v3204
      %v3286 = vmul.f32 %v3078, %v3209
      %v3287 = vmul.f32 %v3081, %v3214
      %v3288 = vmul.f32 %v3086, %v3219
      %v3289 = vmul.f32 %v3089, %v3224
      %v3290 = vmul.f32 %v3094, %v3229
      %v3291 = vmul.f32 %v3097, %v3234
      %v3292 = vmul.f32 %v3102, %v3239
      %v3293 = vmul.f32 %v3105, %v3244
      %v3294 = vmul.f32 %v3110, %v3249
      %v3295 = vmul.f32 %v3113, %v3254
      %v3296 = vmul.f32 %v3118, %v3259
      %v3297 = vmul.f32 %v3121, %v3264
      %v3298 = vmul.f32 %v3126, %v3269
      %v3299 = vmul.f32 %v3129, %v3274
      %3300 = vst [vmem:[%s687] sm:$0xff] %v3276
      %3301 = vst [vmem:[%s687 + $0x8] sm:$0xff] %v3277
      %3302 = vst [vmem:[%s687 + $0x10] sm:$0xff] %v3278
      %3303 = vst [vmem:[%s687 + $0x18] sm:$0xff] %v3279
      %3304 = vst [vmem:[%s687 + $0x20] sm:$0xff] %v3280
      %3305 = vst [vmem:[%s687 + $0x28] sm:$0xff] %v3281
      %3306 = vst [vmem:[%s687 + $0x30] sm:$0xff] %v3282
      %3307 = vst [vmem:[%s687 + $0x38] sm:$0xff] %v3283
      %3308 = vst [vmem:[%s687 + $0x40] sm:$0xff] %v3284
      %3309 = vst [vmem:[%s687 + $0x48] sm:$0xff] %v3285
      %3310 = vst [vmem:[%s687 + $0x50] sm:$0xff] %v3286
      %3311 = vst [vmem:[%s687 + $0x58] sm:$0xff] %v3287
      %3312 = vst [vmem:[%s687 + $0x60] sm:$0xff] %v3288
      %3313 = vst [vmem:[%s687 + $0x68] sm:$0xff] %v3289
      %3314 = vst [vmem:[%s687 + $0x70] sm:$0xff] %v3290
      %3315 = vst [vmem:[%s687 + $0x78] sm:$0xff] %v3291
      %3316 = vst [vmem:[%s687 + $0x80] sm:$0xff] %v3292
      %3317 = vst [vmem:[%s687 + $0x88] sm:$0xff] %v3293
      %3318 = vst [vmem:[%s687 + $0x90] sm:$0xff] %v3294
      %3319 = vst [vmem:[%s687 + $0x98] sm:$0xff] %v3295
      %3320 = vst [vmem:[%s687 + $0xa0] sm:$0xff] %v3296
      %3321 = vst [vmem:[%s687 + $0xa8] sm:$0xff] %v3297
      %3322 = vst [vmem:[%s687 + $0xb0] sm:$0xff] %v3298
      %3323 = vst [vmem:[%s687 + $0xb8] sm:$0xff] %v3299
      %v3324 = vadd.f32 %v3276, %v3277
      %v3325 = vadd.f32 %v3324, %v3278
      %v3326 = vadd.f32 %v3325, %v3279
      %v3327 = vadd.f32 %v3326, %v3280
      %v3328 = vadd.f32 %v3327, %v3281
      %v3329 = vadd.f32 %v3328, %v3282
      %v3330 = vadd.f32 %v3329, %v3283
      %v3331 = vadd.f32 %v3330, %v3284
      %v3332 = vadd.f32 %v3331, %v3285
      %v3333 = vadd.f32 %v3332, %v3286
      %v3334 = vadd.f32 %v3333, %v3287
      %v3335 = vadd.f32 %v3334, %v3288
      %v3336 = vadd.f32 %v3335, %v3289
      %v3337 = vadd.f32 %v3336, %v3290
      %v3338 = vadd.f32 %v3337, %v3291
      %v3339 = vadd.f32 %v3338, %v3292
      %v3340 = vadd.f32 %v3339, %v3293
      %v3341 = vadd.f32 %v3340, %v3294
      %v3342 = vadd.f32 %v3341, %v3295
      %v3343 = vadd.f32 %v3342, %v3296
      %v3344 = vadd.f32 %v3343, %v3297
      %v3345 = vadd.f32 %v3344, %v3298
      %v3346 = vadd.f32 %v3345, %v3299
      %v3347 = vrot.slane %v3346, 4
      %v3348 = vadd.f32 %v3346, %v3347
      %v3349 = vrot.slane %v3348, 2
      %v3350 = vadd.f32 %v3348, %v3349
      %v3351 = vrot.slane %v3350, 1
      %v3352 = vadd.f32 %v3350, %v3351
      %3353 = vst [vmem:[%s694] sm:$0x1] %v3352
      %v3354 = vmul.f32 %v3276, %v3276
      %v3355 = vmul.f32 %v3277, %v3277
      %v3356 = vmul.f32 %v3278, %v3278
      %v3357 = vmul.f32 %v3279, %v3279
      %v3358 = vmul.f32 %v3280, %v3280
      %v3359 = vmul.f32 %v3281, %v3281
      %v3360 = vmul.f32 %v3282, %v3282
      %v3361 = vmul.f32 %v3283, %v3283
      %v3362 = vmul.f32 %v3284, %v3284
      %v3363 = vmul.f32 %v3285, %v3285
      %v3364 = vmul.f32 %v3286, %v3286
      %v3365 = vmul.f32 %v3287, %v3287
      %v3366 = vmul.f32 %v3288, %v3288
      %v3367 = vmul.f32 %v3289, %v3289
      %v3368 = vmul.f32 %v3290, %v3290
      %v3369 = vmul.f32 %v3291, %v3291
      %v3370 = vmul.f32 %v3292, %v3292
      %v3371 = vmul.f32 %v3293, %v3293
      %v3372 = vmul.f32 %v3294, %v3294
      %v3373 = vmul.f32 %v3295, %v3295
      %v3374 = vmul.f32 %v3296, %v3296
      %v3375 = vmul.f32 %v3297, %v3297
      %v3376 = vmul.f32 %v3298, %v3298
      %v3377 = vmul.f32 %v3299, %v3299
      %v3378 = vadd.f32 %v3354, %v3355
      %v3379 = vadd.f32 %v3378, %v3356
      %v3380 = vadd.f32 %v3379, %v3357
      %v3381 = vadd.f32 %v3380, %v3358
      %v3382 = vadd.f32 %v3381, %v3359
      %v3383 = vadd.f32 %v3382, %v3360
      %v3384 = vadd.f32 %v3383, %v3361
      %v3385 = vadd.f32 %v3384, %v3362
      %v3386 = vadd.f32 %v3385, %v3363
      %v3387 = vadd.f32 %v3386, %v3364
      %v3388 = vadd.f32 %v3387, %v3365
      %v3389 = vadd.f32 %v3388, %v3366
      %v3390 = vadd.f32 %v3389, %v3367
      %v3391 = vadd.f32 %v3390, %v3368
      %v3392 = vadd.f32 %v3391, %v3369
      %v3393 = vadd.f32 %v3392, %v3370
      %v3394 = vadd.f32 %v3393, %v3371
      %v3395 = vadd.f32 %v3394, %v3372
      %v3396 = vadd.f32 %v3395, %v3373
      %v3397 = vadd.f32 %v3396, %v3374
      %v3398 = vadd.f32 %v3397, %v3375
      %v3399 = vadd.f32 %v3398, %v3376
      %v3400 = vadd.f32 %v3399, %v3377
      %v3401 = vrot.slane %v3400, 4
      %v3402 = vadd.f32 %v3400, %v3401
      %v3403 = vrot.slane %v3402, 2
      %v3404 = vadd.f32 %v3402, %v3403
      %v3405 = vrot.slane %v3404, 1
      %v3406 = vadd.f32 %v3404, %v3405
      %3407 = vst [vmem:[%s694 + $0x1] sm:$0x1] %v3406
      %s3408 = smul.u32 24, %s28
      %p3409 = scmp.lt.s32.totalorder %s27, 1
      %s3410 = scalar_select %p3409, %s27, 1
      %p3411 = scmp.lt.s32.totalorder %s3408, 47
      %s3412 = scalar_select %p3411, %s3408, 47
      %s3413 = smul.addr %s3410, 48
      %s3414 = sadd.s32 %s3412, %s3413
      %s3415 = smul.addr %s3414, 8
      %s3416 = scalar_lea.vmem %s10, %s3415
      %s3417 = smul.u32 %s27, 2
      %s3418 = sadd.s32 %s3417, %s28
      %p3419 = scmp.lt.s32.totalorder %s3418, 3
      %s3420 = scalar_select %p3419, %s3418, 3
      %s3421 = smul.addr %s3420, 2
      %s3422 = scalar_lea.vmem %s11, %s3421
      // Predicated region
      $region61: #{resblock_forward.3} parent=59 // pred_check
        %p3423 = pneg %p333
      $region62: #{resblock_forward.3} parent=59 // pred_check_branch
        %3425 = sbr.rel (%p3423) target = $region64
      $region63: #{resblock_forward.3} parent=59 // pred_region
        %s3426 = smul.u32 24, %s28
      $region64: #{resblock_forward.3} parent=59 // pred_fallthru
        _
      // Predicated region
      $region65: #{resblock_forward.3} parent=59 // pred_check
        %p3427 = pneg %p363
      $region66: #{resblock_forward.3} parent=59 // pred_check_branch
        %3429 = sbr.rel (%p3427) target = $region68
      $region67: #{resblock_forward.3} parent=59 // pred_region
        %s3430 = smul.u32 %s27, 2
        %s3431 = sadd.s32 %s3430, %s28
      $region68: #{resblock_forward.3} parent=59 // pred_fallthru
        _
    $region60: #{resblock_forward.3} parent=5 // pred_fallthru
      _
    %p3432 = scmp.le.s32.totalorder 2, %s18
    // Predicated region
    $region69: #{resblock_forward.3} parent=5 // pred_check
      %p3433 = pneg %p3432
    $region70: #{resblock_forward.3} parent=5 // pred_check_branch
      %3435 = sbr.rel (%p3433) target = $region72
    $region71: #{resblock_forward.3} parent=5 // pred_region
      %s3436 = ssub.s32 %s18, 2
      // Predicated region
      $region73: #{resblock_forward.3} parent=71 // pred_check
        %p3437 = pneg %p339
      $region74: #{resblock_forward.3} parent=71 // pred_check_branch
        %3439 = sbr.rel (%p3437) target = $region76
      $region75: #{resblock_forward.3} parent=71 // pred_region
        %s3440 = smul.u32 24, %s30
        %p3441 = scmp.lt.s32.totalorder %s29, 1
        %s3442 = scalar_select %p3441, %s29, 1
        %p3443 = scmp.lt.s32.totalorder %s3440, 47
        %s3444 = scalar_select %p3443, %s3440, 47
        %s3445 = smul.addr %s3442, 48
        %s3446 = sadd.s32 %s3444, %s3445
        %s3447 = smul.addr %s3446, 8
        %s3448 = scalar_lea.vmem %s10, %s3447
      $region76: #{resblock_forward.3} parent=71 // pred_fallthru
        _
      // Predicated region
      $region77: #{resblock_forward.3} parent=71 // pred_check
        %p3449 = pneg %p369
      $region78: #{resblock_forward.3} parent=71 // pred_check_branch
        %3451 = sbr.rel (%p3449) target = $region80
      $region79: #{resblock_forward.3} parent=71 // pred_region
        %s3452 = smul.u32 %s29, 2
        %s3453 = sadd.s32 %s3452, %s30
        %p3454 = scmp.lt.s32.totalorder %s3453, 3
        %s3455 = scalar_select %p3454, %s3453, 3
        %s3456 = smul.addr %s3455, 2
        %s3457 = scalar_lea.vmem %s11, %s3456
      $region80: #{resblock_forward.3} parent=71 // pred_fallthru
        _
    $region72: #{resblock_forward.3} parent=5 // pred_fallthru
      _
  $region6: #{resblock_forward.3} parent=0 // loop_footer
    %s22 = sadd.s32 1, %s18
  $region7: #{resblock_forward.3} parent=0 // loop_footer_branch
    %17 = sbr.rel target = $region3
  $region8: #{resblock_forward.3} parent=0 // loop_exit
    _

// kernel: resblock_forward.4
$region0: #{resblock_forward.4}
  #allocation0 [shape = 'u32[]', space=smem, size = 0x4, offset = 0x4, fixed_abs, tag = 'smem constant byte address 0x4 - core index']
  #allocation1 [shape = 'u32[144,128]{1,0:T(1,128)}', space=vmem, size = 0x12000, scoped, tag = 'internal scratch']
  #allocation2 [shape = 'bf16[256,128]{1,0:T(16,128)(2,1)}', space=vmem, size = 0x10000, scoped, tag = 'scratch operand']
  #allocation3 [shape = 'bf16[192,1152]{1,0:T(16,128)(2,1)}', space=vmem, size = 0x6c000, scoped, tag = 'scratch operand']
  %s0 = inlined_call_operand.vmem [shape: f32[2,384,128], index: 0, kind: input, shape index: {}, may-alias: {0,1,2}]
  %s1 = inlined_call_operand.vmem [shape: f32[2,384,128], index: 1, kind: input, shape index: {}, may-alias: {0,1,2}]
  %s2 = inlined_call_operand.vmem [shape: f32[2,384,128], index: 2, kind: input, shape index: {}, may-alias: {0,1,2}]
  %s3 = inlined_call_operand.vmem [shape: f32[384,1], index: 3, kind: input, shape index: {}, may-alias: {3,4,5}]
  %s4 = inlined_call_operand.vmem [shape: f32[384,1], index: 4, kind: input, shape index: {}, may-alias: {3,4,5}]
  %s5 = inlined_call_operand.vmem [shape: f32[384,1], index: 5, kind: input, shape index: {}, may-alias: {3,4,5}]
  %s6 = inlined_call_operand.vmem [shape: f32[1,128], index: 6, kind: input, shape index: {}]
  %s7 = inlined_call_operand.vmem [shape: f32[1,128], index: 7, kind: input, shape index: {}]
  %s8 = inlined_call_operand.vmem [shape: bf16[1152,128], index: 8, kind: input, shape index: {}]
  %s9 = inlined_call_operand.vmem [shape: f32[1,128], index: 9, kind: input, shape index: {}]
  %s10 = inlined_call_operand.vmem [shape: f32[2,384,128], index: 10, kind: output, shape index: {0}]
  %s11 = inlined_call_operand.vmem [shape: f32[4,2,128], index: 11, kind: output, shape index: {1}]
  %12 = xla_tuple %s10, %s11
  %s13 = sld [smem:[#allocation0]]
  $region81: #{resblock_forward.4} parent=0
    _
  %s15 = ssub.s32 1, %s13
  %s16 = scalar_select 0, %s15, %s13
  loop: start=0, step=1, limit=6
  $region2: #{resblock_forward.4} parent=0 // loop_pre_header
    _
  $region3: #{resblock_forward.4} parent=0 // loop_header
    %s18 = sphi 0, %s22
    %p19 = scmp.ge.s32.totalorder %s18, 6
    %s25 = sphi 0, %s37
    %s26 = sphi 0, %s33
    %s27 = sphi 0, %s25
    %s28 = sphi 0, %s26
    %s29 = sphi 0, %s27
    %s30 = sphi 0, %s28
    %s50 = sphi 0, %s52
    %s53 = sphi 0, %s50
    %s54 = sphi 0, %s53
    %s70 = sphi 0, %s54
    %s78 = sphi 0, %s80
    %s81 = sphi 0, %s78
    %s82 = sphi 0, %s81
    %s98 = sphi 0, %s82
    %s114 = sphi 0, %s116
    %s117 = sphi 0, %s114
    %s118 = sphi 0, %s117
    %s134 = sphi 0, %s118
    %s148 = sphi 0, %s150
    %s151 = sphi 0, %s148
    %s152 = sphi 0, %s151
    %s168 = sphi 0, %s152
    %s174 = sphi 0, %s176
    %s177 = sphi 0, %s174
    %s178 = sphi 0, %s177
    %s194 = sphi 0, %s178
    %s208 = sphi 0, %s210
    %s211 = sphi 0, %s208
    %s212 = sphi 0, %s211
    %s228 = sphi 0, %s212
    %s232 = sphi 0, %s232
    %s234 = sphi 0, %s232
    %s235 = sphi 0, %s234
    %s249 = sphi 0, %s235
    %s253 = sphi 0, %s253
    %s255 = sphi 0, %s253
    %s256 = sphi 0, %s255
    %s270 = sphi 0, %s256
    %s274 = sphi 0, %s274
    %s276 = sphi 0, %s274
    %s277 = sphi 0, %s276
    %s291 = sphi 0, %s277
    %s295 = sphi 0, %s295
    %s297 = sphi 0, %s295
    %s298 = sphi 0, %s297
    %s312 = sphi 0, %s298
    %s320 = sphi 0, %s322
    %s323 = sphi 0, %s320
    %s324 = sphi 0, %s323
    %s340 = sphi 0, %s324
    %s350 = sphi 0, %s352
    %s353 = sphi 0, %s350
    %s354 = sphi 0, %s353
    %s370 = sphi 0, %s354
  $region4: #{resblock_forward.4} parent=0 // loop_header_branch
    %21 = sbr.rel (%p19) target = $region8
  $region5: #{resblock_forward.4} parent=0 // loop_body
    %s23 = ssub.s32 %s18, 1
    %s24 = ssub.s32 %s18, 2
    %s31 = sadd.s32 1, %s26
    %p32 = scmp.ge.s32.totalorder %s31, 2
    %s33 = scalar_select %p32, 0, %s31
    %s34 = sadd.s32 1, %s25
    %s35 = scalar_select %p32, %s34, %s25
    %p36 = scmp.ge.s32.totalorder %s35, 2
    %s37 = scalar_select %p36, 0, %s35
    %s38 = smul.u32 %s26, 6
    %s39 = ssub.s32 %s38, 1
    %p40 = scmp.gt.s32.totalorder %s39, 0
    %s41 = scalar_select %p40, %s39, 0
    %s42 = smul.u32 %s33, 6
    %s43 = ssub.s32 %s42, 1
    %p44 = scmp.gt.s32.totalorder %s43, 0
    %s45 = scalar_select %p44, %s43, 0
    %s46 = ssub.s32 %s25, %s37
    %s47 = ssub.s32 %s41, %s45
    %s48 = sor.u32 %s46, %s47
    %p49 = scmp.eq.s32.totalorder %s48, 0
    %s51 = sadd.s32 %s50, 1
    %s52 = scalar_select %p49, %s50, %s51
    %p55 = pneg %p49
    %p56 = scmp.eq.s32.totalorder %s18, 3
    %p57 = por %p55, %p56
    %p58 = scmp.ne.s32.totalorder %s50, %s53
    %p59 = scmp.eq.s32.totalorder %s18, 0
    %p60 = por %p58, %p59
    %p61 = scmp.ne.s32.totalorder %s50, %s53
    %p62 = scmp.eq.s32.totalorder %s23, 3
    %p63 = por %p61, %p62
    %p64 = scmp.ne.s32.totalorder %s53, %s54
    %p65 = scmp.eq.s32.totalorder %s23, 0
    %p66 = por %p64, %p65
    %p67 = scmp.ne.s32.totalorder %s53, %s54
    %p68 = scmp.eq.s32.totalorder %s24, 3
    %p69 = por %p67, %p68
    %p71 = scmp.ne.s32.totalorder %s54, %s70
    %p72 = scmp.eq.s32.totalorder %s24, 0
    %p73 = por %p71, %p72
    %s74 = ssub.s32 %s25, %s37
    %s75 = ssub.s32 %s26, %s33
    %s76 = sor.u32 %s74, %s75
    %p77 = scmp.eq.s32.totalorder %s76, 0
    %s79 = sadd.s32 %s78, 1
    %s80 = scalar_select %p77, %s78, %s79
    %p83 = pneg %p77
    %p84 = scmp.eq.s32.totalorder %s18, 3
    %p85 = por %p83, %p84
    %p86 = scmp.ne.s32.totalorder %s78, %s81
    %p87 = scmp.eq.s32.totalorder %s18, 0
    %p88 = por %p86, %p87
    %p89 = scmp.ne.s32.totalorder %s78, %s81
    %p90 = scmp.eq.s32.totalorder %s23, 3
    %p91 = por %p89, %p90
    %p92 = scmp.ne.s32.totalorder %s81, %s82
    %p93 = scmp.eq.s32.totalorder %s23, 0
    %p94 = por %p92, %p93
    %p95 = scmp.ne.s32.totalorder %s81, %s82
    %p96 = scmp.eq.s32.totalorder %s24, 3
    %p97 = por %p95, %p96
    %p99 = scmp.ne.s32.totalorder %s82, %s98
    %p100 = scmp.eq.s32.totalorder %s24, 0
    %p101 = por %p99, %p100
    %s102 = smul.u32 %s26, 6
    %s103 = sadd.s32 %s102, 6
    %p104 = scmp.lt.s32.totalorder %s103, 11
    %s105 = scalar_select %p104, %s103, 11
    %s106 = smul.u32 %s33, 6
    %s107 = sadd.s32 %s106, 6
    %p108 = scmp.lt.s32.totalorder %s107, 11
    %s109 = scalar_select %p108, %s107, 11
    %s110 = ssub.s32 %s25, %s37
    %s111 = ssub.s32 %s105, %s109
    %s112 = sor.u32 %s110, %s111
    %p113 = scmp.eq.s32.totalorder %s112, 0
    %s115 = sadd.s32 %s114, 1
    %s116 = scalar_select %p113, %s114, %s115
    %p119 = pneg %p113
    %p120 = scmp.eq.s32.totalorder %s18, 3
    %p121 = por %p119, %p120
    %p122 = scmp.ne.s32.totalorder %s114, %s117
    %p123 = scmp.eq.s32.totalorder %s18, 0
    %p124 = por %p122, %p123
    %p125 = scmp.ne.s32.totalorder %s114, %s117
    %p126 = scmp.eq.s32.totalorder %s23, 3
    %p127 = por %p125, %p126
    %p128 = scmp.ne.s32.totalorder %s117, %s118
    %p129 = scmp.eq.s32.totalorder %s23, 0
    %p130 = por %p128, %p129
    %p131 = scmp.ne.s32.totalorder %s117, %s118
    %p132 = scmp.eq.s32.totalorder %s24, 3
    %p133 = por %p131, %p132
    %p135 = scmp.ne.s32.totalorder %s118, %s134
    %p136 = scmp.eq.s32.totalorder %s24, 0
    %p137 = por %p135, %p136
    %s138 = smul.u32 %s26, 6
    %s139 = ssub.s32 %s138, 1
    %p140 = scmp.gt.s32.totalorder %s139, 0
    %s141 = scalar_select %p140, %s139, 0
    %s142 = smul.u32 %s33, 6
    %s143 = ssub.s32 %s142, 1
    %p144 = scmp.gt.s32.totalorder %s143, 0
    %s145 = scalar_select %p144, %s143, 0
    %s146 = ssub.s32 %s141, %s145
    %p147 = scmp.eq.s32.totalorder %s146, 0
    %s149 = sadd.s32 %s148, 1
    %s150 = scalar_select %p147, %s148, %s149
    %p153 = pneg %p147
    %p154 = scmp.eq.s32.totalorder %s18, 3
    %p155 = por %p153, %p154
    %p156 = scmp.ne.s32.totalorder %s148, %s151
    %p157 = scmp.eq.s32.totalorder %s18, 0
    %p158 = por %p156, %p157
    %p159 = scmp.ne.s32.totalorder %s148, %s151
    %p160 = scmp.eq.s32.totalorder %s23, 3
    %p161 = por %p159, %p160
    %p162 = scmp.ne.s32.totalorder %s151, %s152
    %p163 = scmp.eq.s32.totalorder %s23, 0
    %p164 = por %p162, %p163
    %p165 = scmp.ne.s32.totalorder %s151, %s152
    %p166 = scmp.eq.s32.totalorder %s24, 3
    %p167 = por %p165, %p166
    %p169 = scmp.ne.s32.totalorder %s152, %s168
    %p170 = scmp.eq.s32.totalorder %s24, 0
    %p171 = por %p169, %p170
    %s172 = ssub.s32 %s26, %s33
    %p173 = scmp.eq.s32.totalorder %s172, 0
    %s175 = sadd.s32 %s174, 1
    %s176 = scalar_select %p173, %s174, %s175
    %p179 = pneg %p173
    %p180 = scmp.eq.s32.totalorder %s18, 3
    %p181 = por %p179, %p180
    %p182 = scmp.ne.s32.totalorder %s174, %s177
    %p183 = scmp.eq.s32.totalorder %s18, 0
    %p184 = por %p182, %p183
    %p185 = scmp.ne.s32.totalorder %s174, %s177
    %p186 = scmp.eq.s32.totalorder %s23, 3
    %p187 = por %p185, %p186
    %p188 = scmp.ne.s32.totalorder %s177, %s178
    %p189 = scmp.eq.s32.totalorder %s23, 0
    %p190 = por %p188, %p189
    %p191 = scmp.ne.s32.totalorder %s177, %s178
    %p192 = scmp.eq.s32.totalorder %s24, 3
    %p193 = por %p191, %p192
    %p195 = scmp.ne.s32.totalorder %s178, %s194
    %p196 = scmp.eq.s32.totalorder %s24, 0
    %p197 = por %p195, %p196
    %s198 = smul.u32 %s26, 6
    %s199 = sadd.s32 %s198, 6
    %p200 = scmp.lt.s32.totalorder %s199, 11
    %s201 = scalar_select %p200, %s199, 11
    %s202 = smul.u32 %s33, 6
    %s203 = sadd.s32 %s202, 6
    %p204 = scmp.lt.s32.totalorder %s203, 11
    %s205 = scalar_select %p204, %s203, 11
    %s206 = ssub.s32 %s201, %s205
    %p207 = scmp.eq.s32.totalorder %s206, 0
    %s209 = sadd.s32 %s208, 1
    %s210 = scalar_select %p207, %s208, %s209
    %p213 = pneg %p207
    %p214 = scmp.eq.s32.totalorder %s18, 3
    %p215 = por %p213, %p214
    %p216 = scmp.ne.s32.totalorder %s208, %s211
    %p217 = scmp.eq.s32.totalorder %s18, 0
    %p218 = por %p216, %p217
    %p219 = scmp.ne.s32.totalorder %s208, %s211
    %p220 = scmp.eq.s32.totalorder %s23, 3
    %p221 = por %p219, %p220
    %p222 = scmp.ne.s32.totalorder %s211, %s212
    %p223 = scmp.eq.s32.totalorder %s23, 0
    %p224 = por %p222, %p223
    %p225 = scmp.ne.s32.totalorder %s211, %s212
    %p226 = scmp.eq.s32.totalorder %s24, 3
    %p227 = por %p225, %p226
    %p229 = scmp.ne.s32.totalorder %s212, %s228
    %p230 = scmp.eq.s32.totalorder %s24, 0
    %p231 = por %p229, %p230
    %s233 = sadd.s32 %s232, 1
    %p236 = scmp.eq.s32.totalorder %s18, 3
    %p237 = scmp.ne.s32.totalorder %s232, %s234
    %p238 = scmp.eq.s32.totalorder %s18, 0
    %p239 = por %p237, %p238
    %p240 = scmp.ne.s32.totalorder %s232, %s234
    %p241 = scmp.eq.s32.totalorder %s23, 3
    %p242 = por %p240, %p241
    %p243 = scmp.ne.s32.totalorder %s234, %s235
    %p244 = scmp.eq.s32.totalorder %s23, 0
    %p245 = por %p243, %p244
    %p246 = scmp.ne.s32.totalorder %s234, %s235
    %p247 = scmp.eq.s32.totalorder %s24, 3
    %p248 = por %p246, %p247
    %p250 = scmp.ne.s32.totalorder %s235, %s249
    %p251 = scmp.eq.s32.totalorder %s24, 0
    %p252 = por %p250, %p251
    %s254 = sadd.s32 %s253, 1
    %p257 = scmp.eq.s32.totalorder %s18, 3
    %p258 = scmp.ne.s32.totalorder %s253, %s255
    %p259 = scmp.eq.s32.totalorder %s18, 0
    %p260 = por %p258, %p259
    %p261 = scmp.ne.s32.totalorder %s253, %s255
    %p262 = scmp.eq.s32.totalorder %s23, 3
    %p263 = por %p261, %p262
    %p264 = scmp.ne.s32.totalorder %s255, %s256
    %p265 = scmp.eq.s32.totalorder %s23, 0
    %p266 = por %p264, %p265
    %p267 = scmp.ne.s32.totalorder %s255, %s256
    %p268 = scmp.eq.s32.totalorder %s24, 3
    %p269 = por %p267, %p268
    %p271 = scmp.ne.s32.totalorder %s256, %s270
    %p272 = scmp.eq.s32.totalorder %s24, 0
    %p273 = por %p271, %p272
    %s275 = sadd.s32 %s274, 1
    %p278 = scmp.eq.s32.totalorder %s18, 3
    %p279 = scmp.ne.s32.totalorder %s274, %s276
    %p280 = scmp.eq.s32.totalorder %s18, 0
    %p281 = por %p279, %p280
    %p282 = scmp.ne.s32.totalorder %s274, %s276
    %p283 = scmp.eq.s32.totalorder %s23, 3
    %p284 = por %p282, %p283
    %p285 = scmp.ne.s32.totalorder %s276, %s277
    %p286 = scmp.eq.s32.totalorder %s23, 0
    %p287 = por %p285, %p286
    %p288 = scmp.ne.s32.totalorder %s276, %s277
    %p289 = scmp.eq.s32.totalorder %s24, 3
    %p290 = por %p288, %p289
    %p292 = scmp.ne.s32.totalorder %s277, %s291
    %p293 = scmp.eq.s32.totalorder %s24, 0
    %p294 = por %p292, %p293
    %s296 = sadd.s32 %s295, 1
    %p299 = scmp.eq.s32.totalorder %s18, 3
    %p300 = scmp.ne.s32.totalorder %s295, %s297
    %p301 = scmp.eq.s32.totalorder %s18, 0
    %p302 = por %p300, %p301
    %p303 = scmp.ne.s32.totalorder %s295, %s297
    %p304 = scmp.eq.s32.totalorder %s23, 3
    %p305 = por %p303, %p304
    %p306 = scmp.ne.s32.totalorder %s297, %s298
    %p307 = scmp.eq.s32.totalorder %s23, 0
    %p308 = por %p306, %p307
    %p309 = scmp.ne.s32.totalorder %s297, %s298
    %p310 = scmp.eq.s32.totalorder %s24, 3
    %p311 = por %p309, %p310
    %p313 = scmp.ne.s32.totalorder %s298, %s312
    %p314 = scmp.eq.s32.totalorder %s24, 0
    %p315 = por %p313, %p314
    %s316 = ssub.s32 %s25, %s37
    %s317 = ssub.s32 %s26, %s33
    %s318 = sor.u32 %s316, %s317
    %p319 = scmp.eq.s32.totalorder %s318, 0
    %s321 = sadd.s32 %s320, 1
    %s322 = scalar_select %p319, %s320, %s321
    %p325 = pneg %p319
    %p326 = scmp.eq.s32.totalorder %s18, 3
    %p327 = por %p325, %p326
    %p328 = scmp.ne.s32.totalorder %s320, %s323
    %p329 = scmp.eq.s32.totalorder %s18, 0
    %p330 = por %p328, %p329
    %p331 = scmp.ne.s32.totalorder %s320, %s323
    %p332 = scmp.eq.s32.totalorder %s23, 3
    %p333 = por %p331, %p332
    %p334 = scmp.ne.s32.totalorder %s323, %s324
    %p335 = scmp.eq.s32.totalorder %s23, 0
    %p336 = por %p334, %p335
    %p337 = scmp.ne.s32.totalorder %s323, %s324
    %p338 = scmp.eq.s32.totalorder %s24, 3
    %p339 = por %p337, %p338
    %p341 = scmp.ne.s32.totalorder %s324, %s340
    %p342 = scmp.eq.s32.totalorder %s24, 0
    %p343 = por %p341, %p342
    %s344 = smul.u32 %s25, 2
    %s345 = sadd.s32 %s344, %s26
    %s346 = smul.u32 %s37, 2
    %s347 = sadd.s32 %s346, %s33
    %s348 = ssub.s32 %s345, %s347
    %p349 = scmp.eq.s32.totalorder %s348, 0
    %s351 = sadd.s32 %s350, 1
    %s352 = scalar_select %p349, %s350, %s351
    %p355 = pneg %p349
    %p356 = scmp.eq.s32.totalorder %s18, 3
    %p357 = por %p355, %p356
    %p358 = scmp.ne.s32.totalorder %s350, %s353
    %p359 = scmp.eq.s32.totalorder %s18, 0
    %p360 = por %p358, %p359
    %p361 = scmp.ne.s32.totalorder %s350, %s353
    %p362 = scmp.eq.s32.totalorder %s23, 3
    %p363 = por %p361, %p362
    %p364 = scmp.ne.s32.totalorder %s353, %s354
    %p365 = scmp.eq.s32.totalorder %s23, 0
    %p366 = por %p364, %p365
    %p367 = scmp.ne.s32.totalorder %s353, %s354
    %p368 = scmp.eq.s32.totalorder %s24, 3
    %p369 = por %p367, %p368
    %p371 = scmp.ne.s32.totalorder %s354, %s370
    %p372 = scmp.eq.s32.totalorder %s24, 0
    %p373 = por %p371, %p372
    %p374 = scmp.le.s32.totalorder 1, %s18
    %p375 = scmp.lt.s32.totalorder %s18, 5
    %p376 = pnand %p374, %p375
    %p377 = pneg %p376
    // Predicated region
    $region9: #{resblock_forward.4} parent=5 // pred_check
      _
    $region10: #{resblock_forward.4} parent=5 // pred_check_branch
      %379 = sbr.rel (%p376) target = $region12
    $region11: #{resblock_forward.4} parent=5 // pred_region
      %s380 = ssub.s32 %s18, 1
      // Predicated region
      $region13: #{resblock_forward.4} parent=11 // pred_check
        %p381 = pneg %p245
      $region14: #{resblock_forward.4} parent=11 // pred_check_branch
        %383 = sbr.rel (%p381) target = $region16
      $region15: #{resblock_forward.4} parent=11 // pred_region
        _
      $region16: #{resblock_forward.4} parent=11 // pred_fallthru
        _
      // Predicated region
      $region17: #{resblock_forward.4} parent=11 // pred_check
        %p384 = pneg %p266
      $region18: #{resblock_forward.4} parent=11 // pred_check_branch
        %386 = sbr.rel (%p384) target = $region20
      $region19: #{resblock_forward.4} parent=11 // pred_region
        _
      $region20: #{resblock_forward.4} parent=11 // pred_fallthru
        _
      // Predicated region
      $region21: #{resblock_forward.4} parent=11 // pred_check
        %p387 = pneg %p287
      $region22: #{resblock_forward.4} parent=11 // pred_check_branch
        %389 = sbr.rel (%p387) target = $region24
      $region23: #{resblock_forward.4} parent=11 // pred_region
        _
      $region24: #{resblock_forward.4} parent=11 // pred_fallthru
        _
      // Predicated region
      $region25: #{resblock_forward.4} parent=11 // pred_check
        %p390 = pneg %p308
      $region26: #{resblock_forward.4} parent=11 // pred_check_branch
        %392 = sbr.rel (%p390) target = $region28
      $region27: #{resblock_forward.4} parent=11 // pred_region
        _
      $region28: #{resblock_forward.4} parent=11 // pred_fallthru
        _
    $region12: #{resblock_forward.4} parent=5 // pred_fallthru
      _
    %p393 = scmp.lt.s32.totalorder %s18, 4
    // Predicated region
    $region29: #{resblock_forward.4} parent=5 // pred_check
      %p394 = pneg %p393
    $region30: #{resblock_forward.4} parent=5 // pred_check_branch
      %396 = sbr.rel (%p394) target = $region32
    $region31: #{resblock_forward.4} parent=5 // pred_region
      // Predicated region
      $region33: #{resblock_forward.4} parent=31 // pred_check
        %p397 = pneg %p60
      $region34: #{resblock_forward.4} parent=31 // pred_check_branch
        %399 = sbr.rel (%p397) target = $region36
      $region35: #{resblock_forward.4} parent=31 // pred_region
        %s400 = smul.u32 %s26, 6
        %s401 = ssub.s32 %s400, 1
        %p402 = scmp.gt.s32.totalorder %s401, 0
        %s403 = scalar_select %p402, %s401, 0
        %s404 = smul.u32 4, %s403
        %p405 = scmp.lt.s32.totalorder %s25, 1
        %s406 = scalar_select %p405, %s25, 1
        %p407 = scmp.lt.s32.totalorder %s404, 47
        %s408 = scalar_select %p407, %s404, 47
        %s409 = smul.addr %s406, 48
        %s410 = sadd.s32 %s408, %s409
        %s411 = smul.addr %s410, 8
        %s412 = scalar_lea.vmem %s0, %s411
        %s413 = smul.u32 %s26, 6
        %s414 = ssub.s32 %s413, 1
        %p415 = scmp.gt.s32.totalorder %s414, 0
        %s416 = scalar_select %p415, %s414, 0
        %s417 = smul.u32 4, %s416
      $region36: #{resblock_forward.4} parent=31 // pred_fallthru
        _
      // Predicated region
      $region37: #{resblock_forward.4} parent=31 // pred_check
        %p418 = pneg %p88
      $region38: #{resblock_forward.4} parent=31 // pred_check_branch
        %420 = sbr.rel (%p418) target = $region40
      $region39: #{resblock_forward.4} parent=31 // pred_region
        %s421 = smul.u32 24, %s26
        %p422 = scmp.lt.s32.totalorder %s25, 1
        %s423 = scalar_select %p422, %s25, 1
        %p424 = scmp.lt.s32.totalorder %s421, 47
        %s425 = scalar_select %p424, %s421, 47
        %s426 = smul.addr %s423, 48
        %s427 = sadd.s32 %s425, %s426
        %s428 = smul.addr %s427, 8
        %s429 = scalar_lea.vmem %s1, %s428
        %s430 = smul.u32 24, %s26
      $region40: #{resblock_forward.4} parent=31 // pred_fallthru
        _
      // Predicated region
      $region41: #{resblock_forward.4} parent=31 // pred_check
        %p431 = pneg %p124
      $region42: #{resblock_forward.4} parent=31 // pred_check_branch
        %433 = sbr.rel (%p431) target = $region44
      $region43: #{resblock_forward.4} parent=31 // pred_region
        %s434 = smul.u32 %s26, 6
        %s435 = sadd.s32 %s434, 6
        %p436 = scmp.lt.s32.totalorder %s435, 11
        %s437 = scalar_select %p436, %s435, 11
        %s438 = smul.u32 4, %s437
        %p439 = scmp.lt.s32.totalorder %s25, 1
        %s440 = scalar_select %p439, %s25, 1
        %p441 = scmp.lt.s32.totalorder %s438, 47
        %s442 = scalar_select %p441, %s438, 47
        %s443 = smul.addr %s440, 48
        %s444 = sadd.s32 %s442, %s443
        %s445 = smul.addr %s444, 8
        %s446 = scalar_lea.vmem %s2, %s445
        %s447 = smul.u32 %s26, 6
        %s448 = sadd.s32 %s447, 6
        %p449 = scmp.lt.s32.totalorder %s448, 11
        %s450 = scalar_select %p449, %s448, 11
        %s451 = smul.u32 4, %s450
      $region44: #{resblock_forward.4} parent=31 // pred_fallthru
        _
      // Predicated region
      $region45: #{resblock_forward.4} parent=31 // pred_check
        %p452 = pneg %p158
      $region46: #{resblock_forward.4} parent=31 // pred_check_branch
        %454 = sbr.rel (%p452) target = $region48
      $region47: #{resblock_forward.4} parent=31 // pred_region
        %s455 = smul.u32 %s26, 6
        %s456 = ssub.s32 %s455, 1
        %p457 = scmp.gt.s32.totalorder %s456, 0
        %s458 = scalar_select %p457, %s456, 0
        %s459 = smul.u32 4, %s458
        %p460 = scmp.lt.s32.totalorder %s459, 47
        %s461 = scalar_select %p460, %s459, 47
        %s462 = smul.addr %s461, 8
        %s463 = scalar_lea.vmem %s3, %s462
        %s464 = smul.u32 %s26, 6
        %s465 = ssub.s32 %s464, 1
        %p466 = scmp.gt.s32.totalorder %s465, 0
        %s467 = scalar_select %p466, %s465, 0
        %s468 = smul.u32 4, %s467
      $region48: #{resblock_forward.4} parent=31 // pred_fallthru
        _
      // Predicated region
      $region49: #{resblock_forward.4} parent=31 // pred_check
        %p469 = pneg %p184
      $region50: #{resblock_forward.4} parent=31 // pred_check_branch
        %471 = sbr.rel (%p469) target = $region52
      $region51: #{resblock_forward.4} parent=31 // pred_region
        %s472 = smul.u32 24, %s26
        %p473 = scmp.lt.s32.totalorder %s472, 47
        %s474 = scalar_select %p473, %s472, 47
        %s475 = smul.addr %s474, 8
        %s476 = scalar_lea.vmem %s4, %s475
        %s477 = smul.u32 24, %s26
      $region52: #{resblock_forward.4} parent=31 // pred_fallthru
        _
      // Predicated region
      $region53: #{resblock_forward.4} parent=31 // pred_check
        %p478 = pneg %p218
      $region54: #{resblock_forward.4} parent=31 // pred_check_branch
        %480 = sbr.rel (%p478) target = $region56
      $region55: #{resblock_forward.4} parent=31 // pred_region
        %s481 = smul.u32 %s26, 6
        %s482 = sadd.s32 %s481, 6
        %p483 = scmp.lt.s32.totalorder %s482, 11
        %s484 = scalar_select %p483, %s482, 11
        %s485 = smul.u32 4, %s484
        %p486 = scmp.lt.s32.totalorder %s485, 47
        %s487 = scalar_select %p486, %s485, 47
        %s488 = smul.addr %s487, 8
        %s489 = scalar_lea.vmem %s5, %s488
        %s490 = smul.u32 %s26, 6
        %s491 = sadd.s32 %s490, 6
        %p492 = scmp.lt.s32.totalorder %s491, 11
        %s493 = scalar_select %p492, %s491, 11
        %s494 = smul.u32 4, %s493
      $region56: #{resblock_forward.4} parent=31 // pred_fallthru
        _
    $region32: #{resblock_forward.4} parent=5 // pred_fallthru
      _
    %p495 = scmp.le.s32.totalorder 1, %s18
    %p496 = scmp.lt.s32.totalorder %s18, 5
    %p497 = pnand %p495, %p496
    %p498 = pneg %p497
    // Predicated region
    $region57: #{resblock_forward.4} parent=5 // pred_check
      _
    $region58: #{resblock_forward.4} parent=5 // pred_check_branch
      %500 = sbr.rel (%p497) target = $region60
    $region59: #{resblock_forward.4} parent=5 // pred_region
      %s501 = ssub.s32 %s18, 1
      %s502 = smul.u32 %s28, 6
      %s503 = ssub.s32 %s502, 1
      %p504 = scmp.gt.s32.totalorder %s503, 0
      %s505 = scalar_select %p504, %s503, 0
      %s506 = smul.u32 4, %s505
      %p507 = scmp.lt.s32.totalorder %s27, 1
      %s508 = scalar_select %p507, %s27, 1
      %p509 = scmp.lt.s32.totalorder %s506, 47
      %s510 = scalar_select %p509, %s506, 47
      %s511 = smul.addr %s508, 48
      %s512 = sadd.s32 %s510, %s511
      %s513 = smul.addr %s512, 8
      %s514 = scalar_lea.vmem %s0, %s513
      %p515 = pneg %p66
      %p516 = pneg %p63
      %s517 = smul.u32 24, %s28
      %p518 = scmp.lt.s32.totalorder %s27, 1
      %s519 = scalar_select %p518, %s27, 1
      %p520 = scmp.lt.s32.totalorder %s517, 47
      %s521 = scalar_select %p520, %s517, 47
      %s522 = smul.addr %s519, 48
      %s523 = sadd.s32 %s521, %s522
      %s524 = smul.addr %s523, 8
      %s525 = scalar_lea.vmem %s1, %s524
      %p526 = pneg %p94
      %p527 = pneg %p91
      %s528 = smul.u32 %s28, 6
      %s529 = sadd.s32 %s528, 6
      %p530 = scmp.lt.s32.totalorder %s529, 11
      %s531 = scalar_select %p530, %s529, 11
      %s532 = smul.u32 4, %s531
      %p533 = scmp.lt.s32.totalorder %s27, 1
      %s534 = scalar_select %p533, %s27, 1
      %p535 = scmp.lt.s32.totalorder %s532, 47
      %s536 = scalar_select %p535, %s532, 47
      %s537 = smul.addr %s534, 48
      %s538 = sadd.s32 %s536, %s537
      %s539 = smul.addr %s538, 8
      %s540 = scalar_lea.vmem %s2, %s539
      %p541 = pneg %p130
      %p542 = pneg %p127
      %s543 = smul.u32 %s28, 6
      %s544 = ssub.s32 %s543, 1
      %p545 = scmp.gt.s32.totalorder %s544, 0
      %s546 = scalar_select %p545, %s544, 0
      %s547 = smul.u32 4, %s546
      %p548 = scmp.lt.s32.totalorder %s547, 47
      %s549 = scalar_select %p548, %s547, 47
      %s550 = smul.addr %s549, 8
      %s551 = scalar_lea.vmem %s3, %s550
      %p552 = pneg %p164
      %p553 = pneg %p161
      %s554 = smul.u32 24, %s28
      %p555 = scmp.lt.s32.totalorder %s554, 47
      %s556 = scalar_select %p555, %s554, 47
      %s557 = smul.addr %s556, 8
      %s558 = scalar_lea.vmem %s4, %s557
      %p559 = pneg %p190
      %p560 = pneg %p187
      %s561 = smul.u32 %s28, 6
      %s562 = sadd.s32 %s561, 6
      %p563 = scmp.lt.s32.totalorder %s562, 11
      %s564 = scalar_select %p563, %s562, 11
      %s565 = smul.u32 4, %s564
      %p566 = scmp.lt.s32.totalorder %s565, 47
      %s567 = scalar_select %p566, %s565, 47
      %s568 = smul.addr %s567, 8
      %s569 = scalar_lea.vmem %s5, %s568
      %p570 = pneg %p224
      %p571 = pneg %p221
      %p572 = pneg %p245
      %p573 = pneg %p242
      %p574 = pneg %p266
      %p575 = pneg %p263
      %p576 = pneg %p287
      %p577 = pneg %p284
      %p578 = pneg %p308
      %p579 = pneg %p305
      %p580 = pneg %p336
      %p581 = pneg %p333
      %s582 = smul.u32 24, %s28
      %p583 = scmp.lt.s32.totalorder %s27, 1
      %s584 = scalar_select %p583, %s27, 1
      %p585 = scmp.lt.s32.totalorder %s582, 47
      %s586 = scalar_select %p585, %s582, 47
      %s587 = smul.addr %s584, 48
      %s588 = sadd.s32 %s586, %s587
      %s589 = smul.addr %s588, 8
      %s590 = scalar_lea.vmem %s10, %s589
      %p591 = pneg %p366
      %p592 = pneg %p363
      %s593 = smul.u32 %s27, 2
      %s594 = sadd.s32 %s593, %s28
      %p595 = scmp.lt.s32.totalorder %s594, 3
      %s596 = scalar_select %p595, %s594, 3
      %s597 = smul.addr %s596, 2
      %s598 = scalar_lea.vmem %s11, %s597
      %s599 = smul.u32 %s28, 6
      %s600 = ssub.s32 %s599, 1
      %p601 = scmp.gt.s32.totalorder %s600, 0
      %s602 = scalar_select %p601, %s600, 0
      %s603 = smul.u32 4, %s602
      %p604 = scmp.lt.s32.totalorder %s27, 1
      %s605 = scalar_select %p604, %s27, 1
      %p606 = scmp.lt.s32.totalorder %s603, 47
      %s607 = scalar_select %p606, %s603, 47
      %s608 = smul.addr %s605, 48
      %s609 = sadd.s32 %s607, %s608
      %s610 = smul.addr %s609, 8
      %s611 = scalar_lea.vmem %s0, %s610
      %s612 = smul.u32 %s28, 6
      %s613 = ssub.s32 %s612, 1
      %p614 = scmp.gt.s32.totalorder %s613, 0
      %s615 = scalar_select %p614, %s613, 0
      %s616 = smul.u32 4, %s615
      %s617 = smul.u32 24, %s28
      %p618 = scmp.lt.s32.totalorder %s27, 1
      %s619 = scalar_select %p618, %s27, 1
      %p620 = scmp.lt.s32.totalorder %s617, 47
      %s621 = scalar_select %p620, %s617, 47
      %s622 = smul.addr %s619, 48
      %s623 = sadd.s32 %s621, %s622
      %s624 = smul.addr %s623, 8
      %s625 = scalar_lea.vmem %s1, %s624
      %s626 = smul.u32 24, %s28
      %s627 = smul.u32 %s28, 6
      %s628 = sadd.s32 %s627, 6
      %p629 = scmp.lt.s32.totalorder %s628, 11
      %s630 = scalar_select %p629, %s628, 11
      %s631 = smul.u32 4, %s630
      %p632 = scmp.lt.s32.totalorder %s27, 1
      %s633 = scalar_select %p632, %s27, 1
      %p634 = scmp.lt.s32.totalorder %s631, 47
      %s635 = scalar_select %p634, %s631, 47
      %s636 = smul.addr %s633, 48
      %s637 = sadd.s32 %s635, %s636
      %s638 = smul.addr %s637, 8
      %s639 = scalar_lea.vmem %s2, %s638
      %s640 = smul.u32 %s28, 6
      %s641 = sadd.s32 %s640, 6
      %p642 = scmp.lt.s32.totalorder %s641, 11
      %s643 = scalar_select %p642, %s641, 11
      %s644 = smul.u32 4, %s643
      %s645 = smul.u32 %s28, 6
      %s646 = ssub.s32 %s645, 1
      %p647 = scmp.gt.s32.totalorder %s646, 0
      %s648 = scalar_select %p647, %s646, 0
      %s649 = smul.u32 4, %s648
      %p650 = scmp.lt.s32.totalorder %s649, 47
      %s651 = scalar_select %p650, %s649, 47
      %s652 = smul.addr %s651, 8
      %s653 = scalar_lea.vmem %s3, %s652
      %s654 = smul.u32 %s28, 6
      %s655 = ssub.s32 %s654, 1
      %p656 = scmp.gt.s32.totalorder %s655, 0
      %s657 = scalar_select %p656, %s655, 0
      %s658 = smul.u32 4, %s657
      %s659 = smul.u32 24, %s28
      %p660 = scmp.lt.s32.totalorder %s659, 47
      %s661 = scalar_select %p660, %s659, 47
      %s662 = smul.addr %s661, 8
      %s663 = scalar_lea.vmem %s4, %s662
      %s664 = smul.u32 24, %s28
      %s665 = smul.u32 %s28, 6
      %s666 = sadd.s32 %s665, 6
      %p667 = scmp.lt.s32.totalorder %s666, 11
      %s668 = scalar_select %p667, %s666, 11
      %s669 = smul.u32 4, %s668
      %p670 = scmp.lt.s32.totalorder %s669, 47
      %s671 = scalar_select %p670, %s669, 47
      %s672 = smul.addr %s671, 8
      %s673 = scalar_lea.vmem %s5, %s672
      %s674 = smul.u32 %s28, 6
      %s675 = sadd.s32 %s674, 6
      %p676 = scmp.lt.s32.totalorder %s675, 11
      %s677 = scalar_select %p676, %s675, 11
      %s678 = smul.u32 4, %s677
      %s679 = smul.u32 24, %s28
      %p680 = scmp.lt.s32.totalorder %s27, 1
      %s681 = scalar_select %p680, %s27, 1
      %p682 = scmp.lt.s32.totalorder %s679, 47
      %s683 = scalar_select %p682, %s679, 47
      %s684 = smul.addr %s681, 48
      %s685 = sadd.s32 %s683, %s684
      %s686 = smul.addr %s685, 8
      %s687 = scalar_lea.vmem %s10, %s686
      %s688 = smul.u32 24, %s28
      %s689 = smul.u32 %s27, 2
      %s690 = sadd.s32 %s689, %s28
      %p691 = scmp.lt.s32.totalorder %s690, 3
      %s692 = scalar_select %p691, %s690, 3
      %s693 = smul.addr %s692, 2
      %s694 = scalar_lea.vmem %s11, %s693
      %s695 = smul.u32 %s27, 2
      %s696 = sadd.s32 %s695, %s28
      %v698 = vld [vmem:[%s611] sm:$0xff]
      %v699 = vld [vmem:[%s611 + $0x8] sm:$0xff]
      %v700 = vld [vmem:[%s611 + $0x10] sm:$0xff]
      %v701 = vld [vmem:[%s611 + $0x18] sm:$0xff]
      %v702 = vld [vmem:[%s653] sm:$0xff]
      %v703 = vld [vmem:[%s653 + $0x8] sm:$0xff]
      %v704 = vld [vmem:[%s653 + $0x10] sm:$0xff]
      %v705 = vld [vmem:[%s653 + $0x18] sm:$0xff]
      %v706 = vld [vmem:[%s6] sm:$0x1]
      %v708 = vlaneseq
      %v709 = vshrl.u32 %v708, 7
      %v710 = vsub.s32 0, %v709
      %v711 = vrot.slane %v706, %v710
      %v713 = vmul.f32 %v698, %v711
      %v714 = vmul.f32 %v699, %v711
      %v715 = vmul.f32 %v700, %v711
      %v716 = vmul.f32 %v701, %v711
      %v717 = vld [vmem:[%s7] sm:$0x1]
      %v719 = vlaneseq
      %v720 = vshrl.u32 %v719, 7
      %v721 = vsub.s32 0, %v720
      %v722 = vrot.slane %v717, %v721
      %v724 = vadd.f32 %v713, %v722
      %v725 = vadd.f32 %v714, %v722
      %v726 = vadd.f32 %v715, %v722
      %v727 = vadd.f32 %v716, %v722
      %v728 = vmax.f32 %v724, 0.0
      %v729 = vmax.f32 %v725, 0.0
      %v730 = vmax.f32 %v726, 0.0
      %v731 = vmax.f32 %v727, 0.0
      %733 = vset.pattern.permute.xlu0 0
      %734 = vperm.xlu0 %733, %v702
      %v735 = vpop.permute.xlu0 %734
      %738 = vset.pattern.permute.xlu0 0
      %739 = vperm.xlu0 %738, %v703
      %v740 = vpop.permute.xlu0 %739
      %743 = vset.pattern.permute.xlu0 0
      %744 = vperm.xlu0 %743, %v704
      %v745 = vpop.permute.xlu0 %744
      %748 = vset.pattern.permute.xlu0 0
      %749 = vperm.xlu0 %748, %v705
      %v750 = vpop.permute.xlu0 %749
      %v752 = vmul.f32 %v728, %v735
      %v753 = vmul.f32 %v729, %v740
      %v754 = vmul.f32 %v730, %v745
      %v755 = vmul.f32 %v731, %v750
      %v756 = vpack.c.bf16 %v753, %v752
      %v757 = vpack.c.bf16 %v755, %v754
      %758 = vst [vmem:[#allocation2] sm:$0xff] %v756
      %759 = vst [vmem:[#allocation2 + $0x8] sm:$0xff] %v757
      %v760 = vld [vmem:[%s625] sm:$0xff]
      %v761 = vld [vmem:[%s625 + $0x8] sm:$0xff]
      %v762 = vld [vmem:[%s625 + $0x10] sm:$0xff]
      %v763 = vld [vmem:[%s625 + $0x18] sm:$0xff]
      %v764 = vld [vmem:[%s625 + $0x20] sm:$0xff]
      %v765 = vld [vmem:[%s625 + $0x28] sm:$0xff]
      %v766 = vld [vmem:[%s625 + $0x30] sm:$0xff]
      %v767 = vld [vmem:[%s625 + $0x38] sm:$0xff]
      %v768 = vld [vmem:[%s625 + $0x40] sm:$0xff]
      %v769 = vld [vmem:[%s625 + $0x48] sm:$0xff]
      %v770 = vld [vmem:[%s625 + $0x50] sm:$0xff]
      %v771 = vld [vmem:[%s625 + $0x58] sm:$0xff]
      %v772 = vld [vmem:[%s625 + $0x60] sm:$0xff]
      %v773 = vld [vmem:[%s625 + $0x68] sm:$0xff]
      %v774 = vld [vmem:[%s625 + $0x70] sm:$0xff]
      %v775 = vld [vmem:[%s625 + $0x78] sm:$0xff]
      %v776 = vld [vmem:[%s625 + $0x80] sm:$0xff]
      %v777 = vld [vmem:[%s625 + $0x88] sm:$0xff]
      %v778 = vld [vmem:[%s625 + $0x90] sm:$0xff]
      %v779 = vld [vmem:[%s625 + $0x98] sm:$0xff]
      %v780 = vld [vmem:[%s625 + $0xa0] sm:$0xff]
      %v781 = vld [vmem:[%s625 + $0xa8] sm:$0xff]
      %v782 = vld [vmem:[%s625 + $0xb0] sm:$0xff]
      %v783 = vld [vmem:[%s625 + $0xb8] sm:$0xff]
      %v784 = vld [vmem:[%s663] sm:$0xff]
      %v785 = vld [vmem:[%s663 + $0x8] sm:$0xff]
      %v786 = vld [vmem:[%s663 + $0x10] sm:$0xff]
      %v787 = vld [vmem:[%s663 + $0x18] sm:$0xff]
      %v788 = vld [vmem:[%s663 + $0x20] sm:$0xff]
      %v789 = vld [vmem:[%s663 + $0x28] sm:$0xff]
      %v790 = vld [vmem:[%s663 + $0x30] sm:$0xff]
      %v791 = vld [vmem:[%s663 + $0x38] sm:$0xff]
      %v792 = vld [vmem:[%s663 + $0x40] sm:$0xff]
      %v793 = vld [vmem:[%s663 + $0x48] sm:$0xff]
      %v794 = vld [vmem:[%s663 + $0x50] sm:$0xff]
      %v795 = vld [vmem:[%s663 + $0x58] sm:$0xff]
      %v796 = vld [vmem:[%s663 + $0x60] sm:$0xff]
      %v797 = vld [vmem:[%s663 + $0x68] sm:$0xff]
      %v798 = vld [vmem:[%s663 + $0x70] sm:$0xff]
      %v799 = vld [vmem:[%s663 + $0x78] sm:$0xff]
      %v800 = vld [vmem:[%s663 + $0x80] sm:$0xff]
      %v801 = vld [vmem:[%s663 + $0x88] sm:$0xff]
      %v802 = vld [vmem:[%s663 + $0x90] sm:$0xff]
      %v803 = vld [vmem:[%s663 + $0x98] sm:$0xff]
      %v804 = vld [vmem:[%s663 + $0xa0] sm:$0xff]
      %v805 = vld [vmem:[%s663 + $0xa8] sm:$0xff]
      %v806 = vld [vmem:[%s663 + $0xb0] sm:$0xff]
      %v807 = vld [vmem:[%s663 + $0xb8] sm:$0xff]
      %v808 = vld [vmem:[%s6] sm:$0x1]
      %v810 = vlaneseq
      %v811 = vshrl.u32 %v810, 7
      %v812 = vsub.s32 0, %v811
      %v813 = vrot.slane %v808, %v812
      %v815 = vmul.f32 %v760, %v813
      %v816 = vmul.f32 %v761, %v813
      %v817 = vmul.f32 %v762, %v813
      %v818 = vmul.f32 %v763, %v813
      %v819 = vmul.f32 %v764, %v813
      %v820 = vmul.f32 %v765, %v813
      %v821 = vmul.f32 %v766, %v813
      %v822 = vmul.f32 %v767, %v813
      %v823 = vmul.f32 %v768, %v813
      %v824 = vmul.f32 %v769, %v813
      %v825 = vmul.f32 %v770, %v813
      %v826 = vmul.f32 %v771, %v813
      %v827 = vmul.f32 %v772, %v813
      %v828 = vmul.f32 %v773, %v813
      %v829 = vmul.f32 %v774, %v813
      %v830 = vmul.f32 %v775, %v813
      %v831 = vmul.f32 %v776, %v813
      %v832 = vmul.f32 %v777, %v813
      %v833 = vmul.f32 %v778, %v813
      %v834 = vmul.f32 %v779, %v813
      %v835 = vmul.f32 %v780, %v813
      %v836 = vmul.f32 %v781, %v813
      %v837 = vmul.f32 %v782, %v813
      %v838 = vmul.f32 %v783, %v813
      %v839 = vld [vmem:[%s7] sm:$0x1]
      %v841 = vlaneseq
      %v842 = vshrl.u32 %v841, 7
      %v843 = vsub.s32 0, %v842
      %v844 = vrot.slane %v839, %v843
      %v846 = vadd.f32 %v815, %v844
      %v847 = vadd.f32 %v816, %v844
      %v848 = vadd.f32 %v817, %v844
      %v849 = vadd.f32 %v818, %v844
      %v850 = vadd.f32 %v819, %v844
      %v851 = vadd.f32 %v820, %v844
      %v852 = vadd.f32 %v821, %v844
      %v853 = vadd.f32 %v822, %v844
      %v854 = vadd.f32 %v823, %v844
      %v855 = vadd.f32 %v824, %v844
      %v856 = vadd.f32 %v825, %v844
      %v857 = vadd.f32 %v826, %v844
      %v858 = vadd.f32 %v827, %v844
      %v859 = vadd.f32 %v828, %v844
      %v860 = vadd.f32 %v829, %v844
      %v861 = vadd.f32 %v830, %v844
      %v862 = vadd.f32 %v831, %v844
      %v863 = vadd.f32 %v832, %v844
      %v864 = vadd.f32 %v833, %v844
      %v865 = vadd.f32 %v834, %v844
      %v866 = vadd.f32 %v835, %v844
      %v867 = vadd.f32 %v836, %v844
      %v868 = vadd.f32 %v837, %v844
      %v869 = vadd.f32 %v838, %v844
      %v870 = vmax.f32 %v846, 0.0
      %v871 = vmax.f32 %v847, 0.0
      %v872 = vmax.f32 %v848, 0.0
      %v873 = vmax.f32 %v849, 0.0
      %v874 = vmax.f32 %v850, 0.0
      %v875 = vmax.f32 %v851, 0.0
      %v876 = vmax.f32 %v852, 0.0
      %v877 = vmax.f32 %v853, 0.0
      %v878 = vmax.f32 %v854, 0.0
      %v879 = vmax.f32 %v855, 0.0
      %v880 = vmax.f32 %v856, 0.0
      %v881 = vmax.f32 %v857, 0.0
      %v882 = vmax.f32 %v858, 0.0
      %v883 = vmax.f32 %v859, 0.0
      %v884 = vmax.f32 %v860, 0.0
      %v885 = vmax.f32 %v861, 0.0
      %v886 = vmax.f32 %v862, 0.0
      %v887 = vmax.f32 %v863, 0.0
      %v888 = vmax.f32 %v864, 0.0
      %v889 = vmax.f32 %v865, 0.0
      %v890 = vmax.f32 %v866, 0.0
      %v891 = vmax.f32 %v867, 0.0
      %v892 = vmax.f32 %v868, 0.0
      %v893 = vmax.f32 %v869, 0.0
      %895 = vset.pattern.permute.xlu0 0
      %896 = vperm.xlu0 %895, %v784
      %v897 = vpop.permute.xlu0 %896
      %900 = vset.pattern.permute.xlu0 0
      %901 = vperm.xlu0 %900, %v785
      %v902 = vpop.permute.xlu0 %901
      %905 = vset.pattern.permute.xlu0 0
      %906 = vperm.xlu0 %905, %v786
      %v907 = vpop.permute.xlu0 %906
      %910 = vset.pattern.permute.xlu0 0
      %911 = vperm.xlu0 %910, %v787
      %v912 = vpop.permute.xlu0 %911
      %915 = vset.pattern.permute.xlu0 0
      %916 = vperm.xlu0 %915, %v788
      %v917 = vpop.permute.xlu0 %916
      %920 = vset.pattern.permute.xlu0 0
      %921 = vperm.xlu0 %920, %v789
      %v922 = vpop.permute.xlu0 %921
      %925 = vset.pattern.permute.xlu0 0
      %926 = vperm.xlu0 %925, %v790
      %v927 = vpop.permute.xlu0 %926
      %930 = vset.pattern.permute.xlu0 0
      %931 = vperm.xlu0 %930, %v791
      %v932 = vpop.permute.xlu0 %931
      %935 = vset.pattern.permute.xlu0 0
      %936 = vperm.xlu0 %935, %v792
      %v937 = vpop.permute.xlu0 %936
      %940 = vset.pattern.permute.xlu0 0
      %941 = vperm.xlu0 %940, %v793
      %v942 = vpop.permute.xlu0 %941
      %945 = vset.pattern.permute.xlu0 0
      %946 = vperm.xlu0 %945, %v794
      %v947 = vpop.permute.xlu0 %946
      %950 = vset.pattern.permute.xlu0 0
      %951 = vperm.xlu0 %950, %v795
      %v952 = vpop.permute.xlu0 %951
      %955 = vset.pattern.permute.xlu0 0
      %956 = vperm.xlu0 %955, %v796
      %v957 = vpop.permute.xlu0 %956
      %960 = vset.pattern.permute.xlu0 0
      %961 = vperm.xlu0 %960, %v797
      %v962 = vpop.permute.xlu0 %961
      %965 = vset.pattern.permute.xlu0 0
      %966 = vperm.xlu0 %965, %v798
      %v967 = vpop.permute.xlu0 %966
      %970 = vset.pattern.permute.xlu0 0
      %971 = vperm.xlu0 %970, %v799
      %v972 = vpop.permute.xlu0 %971
      %975 = vset.pattern.permute.xlu0 0
      %976 = vperm.xlu0 %975, %v800
      %v977 = vpop.permute.xlu0 %976
      %980 = vset.pattern.permute.xlu0 0
      %981 = vperm.xlu0 %980, %v801
      %v982 = vpop.permute.xlu0 %981
      %985 = vset.pattern.permute.xlu0 0
      %986 = vperm.xlu0 %985, %v802
      %v987 = vpop.permute.xlu0 %986
      %990 = vset.pattern.permute.xlu0 0
      %991 = vperm.xlu0 %990, %v803
      %v992 = vpop.permute.xlu0 %991
      %995 = vset.pattern.permute.xlu0 0
      %996 = vperm.xlu0 %995, %v804
      %v997 = vpop.permute.xlu0 %996
      %1000 = vset.pattern.permute.xlu0 0
      %1001 = vperm.xlu0 %1000, %v805
      %v1002 = vpop.permute.xlu0 %1001
      %1005 = vset.pattern.permute.xlu0 0
      %1006 = vperm.xlu0 %1005, %v806
      %v1007 = vpop.permute.xlu0 %1006
      %1010 = vset.pattern.permute.xlu0 0
      %1011 = vperm.xlu0 %1010, %v807
      %v1012 = vpop.permute.xlu0 %1011
      %v1014 = vmul.f32 %v870, %v897
      %v1015 = vmul.f32 %v871, %v902
      %v1016 = vmul.f32 %v872, %v907
      %v1017 = vmul.f32 %v873, %v912
      %v1018 = vmul.f32 %v874, %v917
      %v1019 = vmul.f32 %v875, %v922
      %v1020 = vmul.f32 %v876, %v927
      %v1021 = vmul.f32 %v877, %v932
      %v1022 = vmul.f32 %v878, %v937
      %v1023 = vmul.f32 %v879, %v942
      %v1024 = vmul.f32 %v880, %v947
      %v1025 = vmul.f32 %v881, %v952
      %v1026 = vmul.f32 %v882, %v957
      %v1027 = vmul.f32 %v883, %v962
      %v1028 = vmul.f32 %v884, %v967
      %v1029 = vmul.f32 %v885, %v972
      %v1030 = vmul.f32 %v886, %v977
      %v1031 = vmul.f32 %v887, %v982
      %v1032 = vmul.f32 %v888, %v987
      %v1033 = vmul.f32 %v889, %v992
      %v1034 = vmul.f32 %v890, %v997
      %v1035 = vmul.f32 %v891, %v1002
      %v1036 = vmul.f32 %v892, %v1007
      %v1037 = vmul.f32 %v893, %v1012
      %v1038 = vpack.c.bf16 %v1015, %v1014
      %v1039 = vpack.c.bf16 %v1017, %v1016
      %v1040 = vpack.c.bf16 %v1019, %v1018
      %v1041 = vpack.c.bf16 %v1021, %v1020
      %v1042 = vpack.c.bf16 %v1023, %v1022
      %v1043 = vpack.c.bf16 %v1025, %v1024
      %v1044 = vpack.c.bf16 %v1027, %v1026
      %v1045 = vpack.c.bf16 %v1029, %v1028
      %v1046 = vpack.c.bf16 %v1031, %v1030
      %v1047 = vpack.c.bf16 %v1033, %v1032
      %v1048 = vpack.c.bf16 %v1035, %v1034
      %v1049 = vpack.c.bf16 %v1037, %v1036
      %1050 = vst [vmem:[#allocation2 + $0x10] sm:$0xff] %v1038
      %1051 = vst [vmem:[#allocation2 + $0x18] sm:$0xff] %v1039
      %1052 = vst [vmem:[#allocation2 + $0x20] sm:$0xff] %v1040
      %1053 = vst [vmem:[#allocation2 + $0x28] sm:$0xff] %v1041
      %1054 = vst [vmem:[#allocation2 + $0x30] sm:$0xff] %v1042
      %1055 = vst [vmem:[#allocation2 + $0x38] sm:$0xff] %v1043
      %1056 = vst [vmem:[#allocation2 + $0x40] sm:$0xff] %v1044
      %1057 = vst [vmem:[#allocation2 + $0x48] sm:$0xff] %v1045
      %1058 = vst [vmem:[#allocation2 + $0x50] sm:$0xff] %v1046
      %1059 = vst [vmem:[#allocation2 + $0x58] sm:$0xff] %v1047
      %1060 = vst [vmem:[#allocation2 + $0x60] sm:$0xff] %v1048
      %1061 = vst [vmem:[#allocation2 + $0x68] sm:$0xff] %v1049
      %v1062 = vld [vmem:[%s639] sm:$0xff]
      %v1063 = vld [vmem:[%s639 + $0x8] sm:$0xff]
      %v1064 = vld [vmem:[%s639 + $0x10] sm:$0xff]
      %v1065 = vld [vmem:[%s639 + $0x18] sm:$0xff]
      %v1066 = vld [vmem:[%s673] sm:$0xff]
      %v1067 = vld [vmem:[%s673 + $0x8] sm:$0xff]
      %v1068 = vld [vmem:[%s673 + $0x10] sm:$0xff]
      %v1069 = vld [vmem:[%s673 + $0x18] sm:$0xff]
      %v1070 = vld [vmem:[%s6] sm:$0x1]
      %v1072 = vlaneseq
      %v1073 = vshrl.u32 %v1072, 7
      %v1074 = vsub.s32 0, %v1073
      %v1075 = vrot.slane %v1070, %v1074
      %v1077 = vmul.f32 %v1062, %v1075
      %v1078 = vmul.f32 %v1063, %v1075
      %v1079 = vmul.f32 %v1064, %v1075
      %v1080 = vmul.f32 %v1065, %v1075
      %v1081 = vld [vmem:[%s7] sm:$0x1]
      %v1083 = vlaneseq
      %v1084 = vshrl.u32 %v1083, 7
      %v1085 = vsub.s32 0, %v1084
      %v1086 = vrot.slane %v1081, %v1085
      %v1088 = vadd.f32 %v1077, %v1086
      %v1089 = vadd.f32 %v1078, %v1086
      %v1090 = vadd.f32 %v1079, %v1086
      %v1091 = vadd.f32 %v1080, %v1086
      %v1092 = vmax.f32 %v1088, 0.0
      %v1093 = vmax.f32 %v1089, 0.0
      %v1094 = vmax.f32 %v1090, 0.0
      %v1095 = vmax.f32 %v1091, 0.0
      %1097 = vset.pattern.permute.xlu0 0
      %1098 = vperm.xlu0 %1097, %v1066
      %v1099 = vpop.permute.xlu0 %1098
      %1102 = vset.pattern.permute.xlu0 0
      %1103 = vperm.xlu0 %1102, %v1067
      %v1104 = vpop.permute.xlu0 %1103
      %1107 = vset.pattern.permute.xlu0 0
      %1108 = vperm.xlu0 %1107, %v1068
      %v1109 = vpop.permute.xlu0 %1108
      %1112 = vset.pattern.permute.xlu0 0
      %1113 = vperm.xlu0 %1112, %v1069
      %v1114 = vpop.permute.xlu0 %1113
      %v1116 = vmul.f32 %v1092, %v1099
      %v1117 = vmul.f32 %v1093, %v1104
      %v1118 = vmul.f32 %v1094, %v1109
      %v1119 = vmul.f32 %v1095, %v1114
      %v1120 = vpack.c.bf16 %v1117, %v1116
      %v1121 = vpack.c.bf16 %v1119, %v1118
      %1122 = vst [vmem:[#allocation2 + $0x70] sm:$0xff] %v1120
      %1123 = vst [vmem:[#allocation2 + $0x78] sm:$0xff] %v1121
      %v1124 = vld [vmem:[#allocation2] sm:$0xc0]
      %v1125 = vld [vmem:[#allocation2 + $0x8] sm:$0xff]
      %v1126 = vld [vmem:[#allocation2 + $0x10] sm:$0xff]
      %v1127 = vld [vmem:[#allocation2 + $0x18] sm:$0xff]
      %v1128 = vld [vmem:[#allocation2 + $0x20] sm:$0xff]
      %v1129 = vld [vmem:[#allocation2 + $0x28] sm:$0xff]
      %v1130 = vld [vmem:[#allocation2 + $0x30] sm:$0xff]
      %v1131 = vld [vmem:[#allocation2 + $0x38] sm:$0xff]
      %v1132 = vld [vmem:[#allocation2 + $0x40] sm:$0xff]
      %v1133 = vld [vmem:[#allocation2 + $0x48] sm:$0xff]
      %v1134 = vld [vmem:[#allocation2 + $0x50] sm:$0xff]
      %v1135 = vld [vmem:[#allocation2 + $0x58] sm:$0xff]
      %v1136 = vld [vmem:[#allocation2 + $0x60] sm:$0x7f]
      %vm1137 = vsmask.f32 1280
      %v1139 = vshrl.u32 %v1124, 16
      %v1141 = vrot.slane %v1139, 6
      %v1142 = vshll.u32 %v1124, 16
      %v1144 = vrot.slane %v1142, 7
      %v1145 = vor.u32 %v1141, %v1144
      %v1147 = vshrl.u32 %v1125, 16
      %v1149 = vrot.slane %v1147, 6
      %v1150 = vshll.u32 %v1125, 16
      %v1152 = vrot.slane %v1150, 7
      %v1153 = vor.u32 %v1149, %v1152
      %v1154 = vsel %vm1137, %v1145, %v1153
      %v1156 = vshrl.u32 %v1126, 16
      %v1158 = vrot.slane %v1156, 6
      %v1159 = vshll.u32 %v1126, 16
      %v1161 = vrot.slane %v1159, 7
      %v1162 = vor.u32 %v1158, %v1161
      %v1163 = vsel %vm1137, %v1153, %v1162
      %v1165 = vshrl.u32 %v1127, 16
      %v1167 = vrot.slane %v1165, 6
      %v1168 = vshll.u32 %v1127, 16
      %v1170 = vrot.slane %v1168, 7
      %v1171 = vor.u32 %v1167, %v1170
      %v1172 = vsel %vm1137, %v1162, %v1171
      %v1174 = vshrl.u32 %v1128, 16
      %v1176 = vrot.slane %v1174, 6
      %v1177 = vshll.u32 %v1128, 16
      %v1179 = vrot.slane %v1177, 7
      %v1180 = vor.u32 %v1176, %v1179
      %v1181 = vsel %vm1137, %v1171, %v1180
      %v1183 = vshrl.u32 %v1129, 16
      %v1185 = vrot.slane %v1183, 6
      %v1186 = vshll.u32 %v1129, 16
      %v1188 = vrot.slane %v1186, 7
      %v1189 = vor.u32 %v1185, %v1188
      %v1190 = vsel %vm1137, %v1180, %v1189
      %v1192 = vshrl.u32 %v1130, 16
      %v1194 = vrot.slane %v1192, 6
      %v1195 = vshll.u32 %v1130, 16
      %v1197 = vrot.slane %v1195, 7
      %v1198 = vor.u32 %v1194, %v1197
      %v1199 = vsel %vm1137, %v1189, %v1198
      %v1201 = vshrl.u32 %v1131, 16
      %v1203 = vrot.slane %v1201, 6
      %v1204 = vshll.u32 %v1131, 16
      %v1206 = vrot.slane %v1204, 7
      %v1207 = vor.u32 %v1203, %v1206
      %v1208 = vsel %vm1137, %v1198, %v1207
      %v1210 = vshrl.u32 %v1132, 16
      %v1212 = vrot.slane %v1210, 6
      %v1213 = vshll.u32 %v1132, 16
      %v1215 = vrot.slane %v1213, 7
      %v1216 = vor.u32 %v1212, %v1215
      %v1217 = vsel %vm1137, %v1207, %v1216
      %v1219 = vshrl.u32 %v1133, 16
      %v1221 = vrot.slane %v1219, 6
      %v1222 = vshll.u32 %v1133, 16
      %v1224 = vrot.slane %v1222, 7
      %v1225 = vor.u32 %v1221, %v1224
      %v1226 = vsel %vm1137, %v1216, %v1225
      %v1228 = vshrl.u32 %v1134, 16
      %v1230 = vrot.slane %v1228, 6
      %v1231 = vshll.u32 %v1134, 16
      %v1233 = vrot.slane %v1231, 7
      %v1234 = vor.u32 %v1230, %v1233
      %v1235 = vsel %vm1137, %v1225, %v1234
      %v1237 = vshrl.u32 %v1135, 16
      %v1239 = vrot.slane %v1237, 6
      %v1240 = vshll.u32 %v1135, 16
      %v1242 = vrot.slane %v1240, 7
      %v1243 = vor.u32 %v1239, %v1242
      %v1244 = vsel %vm1137, %v1234, %v1243
      %v1246 = vshrl.u32 %v1136, 16
      %v1248 = vrot.slane %v1246, 6
      %v1249 = vshll.u32 %v1136, 16
      %v1251 = vrot.slane %v1249, 7
      %v1252 = vor.u32 %v1248, %v1251
      %v1253 = vsel %vm1137, %v1243, %v1252
      %1266 = vst [vmem:[#allocation3] sm:$0xff] %v1154
      %1267 = vst [vmem:[#allocation3 + $0x48] sm:$0xff] %v1163
      %1268 = vst [vmem:[#allocation3 + $0x90] sm:$0xff] %v1172
      %1269 = vst [vmem:[#allocation3 + $0xd8] sm:$0xff] %v1181
      %1270 = vst [vmem:[#allocation3 + $0x120] sm:$0xff] %v1190
      %1271 = vst [vmem:[#allocation3 + $0x168] sm:$0xff] %v1199
      %1272 = vst [vmem:[#allocation3 + $0x1b0] sm:$0xff] %v1208
      %1273 = vst [vmem:[#allocation3 + $0x1f8] sm:$0xff] %v1217
      %1274 = vst [vmem:[#allocation3 + $0x240] sm:$0xff] %v1226
      %1275 = vst [vmem:[#allocation3 + $0x288] sm:$0xff] %v1235
      %1276 = vst [vmem:[#allocation3 + $0x2d0] sm:$0xff] %v1244
      %1277 = vst [vmem:[#allocation3 + $0x318] sm:$0xff] %v1253
      %v1278 = vld [vmem:[#allocation2] sm:$0x80]
      %v1279 = vld [vmem:[#allocation2 + $0x8] sm:$0xff]
      %v1280 = vld [vmem:[#allocation2 + $0x10] sm:$0xff]
      %v1281 = vld [vmem:[#allocation2 + $0x18] sm:$0xff]
      %v1282 = vld [vmem:[#allocation2 + $0x20] sm:$0xff]
      %v1283 = vld [vmem:[#allocation2 + $0x28] sm:$0xff]
      %v1284 = vld [vmem:[#allocation2 + $0x30] sm:$0xff]
      %v1285 = vld [vmem:[#allocation2 + $0x38] sm:$0xff]
      %v1286 = vld [vmem:[#allocation2 + $0x40] sm:$0xff]
      %v1287 = vld [vmem:[#allocation2 + $0x48] sm:$0xff]
      %v1288 = vld [vmem:[#allocation2 + $0x50] sm:$0xff]
      %v1289 = vld [vmem:[#allocation2 + $0x58] sm:$0xff]
      %v1290 = vld [vmem:[#allocation2 + $0x60] sm:$0x7f]
      %vm1304 = vcmask 1040384
      %v1305 = vrot.slane %v1278, 7
      %v1306 = vrot.slane %v1279, 7
      %v1307 = vsel %vm1304, %v1305, %v1306
      %v1308 = vrot.slane %v1280, 7
      %v1309 = vsel %vm1304, %v1306, %v1308
      %v1310 = vrot.slane %v1281, 7
      %v1311 = vsel %vm1304, %v1308, %v1310
      %v1312 = vrot.slane %v1282, 7
      %v1313 = vsel %vm1304, %v1310, %v1312
      %v1314 = vrot.slane %v1283, 7
      %v1315 = vsel %vm1304, %v1312, %v1314
      %v1316 = vrot.slane %v1284, 7
      %v1317 = vsel %vm1304, %v1314, %v1316
      %v1318 = vrot.slane %v1285, 7
      %v1319 = vsel %vm1304, %v1316, %v1318
      %v1320 = vrot.slane %v1286, 7
      %v1321 = vsel %vm1304, %v1318, %v1320
      %v1322 = vrot.slane %v1287, 7
      %v1323 = vsel %vm1304, %v1320, %v1322
      %v1324 = vrot.slane %v1288, 7
      %v1325 = vsel %vm1304, %v1322, %v1324
      %v1326 = vrot.slane %v1289, 7
      %v1327 = vsel %vm1304, %v1324, %v1326
      %v1328 = vrot.slane %v1290, 7
      %v1329 = vsel %vm1304, %v1326, %v1328
      %1342 = vst [vmem:[#allocation3 + $0x8] sm:$0xff] %v1307
      %1343 = vst [vmem:[#allocation3 + $0x50] sm:$0xff] %v1309
      %1344 = vst [vmem:[#allocation3 + $0x98] sm:$0xff] %v1311
      %1345 = vst [vmem:[#allocation3 + $0xe0] sm:$0xff] %v1313
      %1346 = vst [vmem:[#allocation3 + $0x128] sm:$0xff] %v1315
      %1347 = vst [vmem:[#allocation3 + $0x170] sm:$0xff] %v1317
      %1348 = vst [vmem:[#allocation3 + $0x1b8] sm:$0xff] %v1319
      %1349 = vst [vmem:[#allocation3 + $0x200] sm:$0xff] %v1321
      %1350 = vst [vmem:[#allocation3 + $0x248] sm:$0xff] %v1323
      %1351 = vst [vmem:[#allocation3 + $0x290] sm:$0xff] %v1325
      %1352 = vst [vmem:[#allocation3 + $0x2d8] sm:$0xff] %v1327
      %1353 = vst [vmem:[#allocation3 + $0x320] sm:$0xff] %v1329
      %v1354 = vld [vmem:[#allocation2] sm:$0x80]
      %v1355 = vld [vmem:[#allocation2 + $0x8] sm:$0xff]
      %v1356 = vld [vmem:[#allocation2 + $0x10] sm:$0xff]
      %v1357 = vld [vmem:[#allocation2 + $0x18] sm:$0xff]
      %v1358 = vld [vmem:[#allocation2 + $0x20] sm:$0xff]
      %v1359 = vld [vmem:[#allocation2 + $0x28] sm:$0xff]
      %v1360 = vld [vmem:[#allocation2 + $0x30] sm:$0xff]
      %v1361 = vld [vmem:[#allocation2 + $0x38] sm:$0xff]
      %v1362 = vld [vmem:[#allocation2 + $0x40] sm:$0xff]
      %v1363 = vld [vmem:[#allocation2 + $0x48] sm:$0xff]
      %v1364 = vld [vmem:[#allocation2 + $0x50] sm:$0xff]
      %v1365 = vld [vmem:[#allocation2 + $0x58] sm:$0xff]
      %v1366 = vld [vmem:[#allocation2 + $0x60] sm:$0xff]
      %vm1367 = vsmask.f32 256
      %v1369 = vshrl.u32 %v1354, 16
      %v1371 = vrot.slane %v1369, 7
      %v1373 = vshrl.u32 %v1355, 16
      %v1375 = vrot.slane %v1373, 7
      %v1376 = vshll.u32 %v1355, 16
      %v1378 = vor.u32 %v1375, %v1376
      %v1379 = vsel %vm1367, %v1371, %v1378
      %v1381 = vshrl.u32 %v1356, 16
      %v1383 = vrot.slane %v1381, 7
      %v1384 = vshll.u32 %v1356, 16
      %v1386 = vor.u32 %v1383, %v1384
      %v1387 = vsel %vm1367, %v1375, %v1386
      %v1389 = vshrl.u32 %v1357, 16
      %v1391 = vrot.slane %v1389, 7
      %v1392 = vshll.u32 %v1357, 16
      %v1394 = vor.u32 %v1391, %v1392
      %v1395 = vsel %vm1367, %v1383, %v1394
      %v1397 = vshrl.u32 %v1358, 16
      %v1399 = vrot.slane %v1397, 7
      %v1400 = vshll.u32 %v1358, 16
      %v1402 = vor.u32 %v1399, %v1400
      %v1403 = vsel %vm1367, %v1391, %v1402
      %v1405 = vshrl.u32 %v1359, 16
      %v1407 = vrot.slane %v1405, 7
      %v1408 = vshll.u32 %v1359, 16
      %v1410 = vor.u32 %v1407, %v1408
      %v1411 = vsel %vm1367, %v1399, %v1410
      %v1413 = vshrl.u32 %v1360, 16
      %v1415 = vrot.slane %v1413, 7
      %v1416 = vshll.u32 %v1360, 16
      %v1418 = vor.u32 %v1415, %v1416
      %v1419 = vsel %vm1367, %v1407, %v1418
      %v1421 = vshrl.u32 %v1361, 16
      %v1423 = vrot.slane %v1421, 7
      %v1424 = vshll.u32 %v1361, 16
      %v1426 = vor.u32 %v1423, %v1424
      %v1427 = vsel %vm1367, %v1415, %v1426
      %v1429 = vshrl.u32 %v1362, 16
      %v1431 = vrot.slane %v1429, 7
      %v1432 = vshll.u32 %v1362, 16
      %v1434 = vor.u32 %v1431, %v1432
      %v1435 = vsel %vm1367, %v1423, %v1434
      %v1437 = vshrl.u32 %v1363, 16
      %v1439 = vrot.slane %v1437, 7
      %v1440 = vshll.u32 %v1363, 16
      %v1442 = vor.u32 %v1439, %v1440
      %v1443 = vsel %vm1367, %v1431, %v1442
      %v1445 = vshrl.u32 %v1364, 16
      %v1447 = vrot.slane %v1445, 7
      %v1448 = vshll.u32 %v1364, 16
      %v1450 = vor.u32 %v1447, %v1448
      %v1451 = vsel %vm1367, %v1439, %v1450
      %v1453 = vshrl.u32 %v1365, 16
      %v1455 = vrot.slane %v1453, 7
      %v1456 = vshll.u32 %v1365, 16
      %v1458 = vor.u32 %v1455, %v1456
      %v1459 = vsel %vm1367, %v1447, %v1458
      %v1461 = vshrl.u32 %v1366, 16
      %v1463 = vrot.slane %v1461, 7
      %v1464 = vshll.u32 %v1366, 16
      %v1466 = vor.u32 %v1463, %v1464
      %v1467 = vsel %vm1367, %v1455, %v1466
      %1480 = vst [vmem:[#allocation3 + $0x10] sm:$0xff] %v1379
      %1481 = vst [vmem:[#allocation3 + $0x58] sm:$0xff] %v1387
      %1482 = vst [vmem:[#allocation3 + $0xa0] sm:$0xff] %v1395
      %1483 = vst [vmem:[#allocation3 + $0xe8] sm:$0xff] %v1403
      %1484 = vst [vmem:[#allocation3 + $0x130] sm:$0xff] %v1411
      %1485 = vst [vmem:[#allocation3 + $0x178] sm:$0xff] %v1419
      %1486 = vst [vmem:[#allocation3 + $0x1c0] sm:$0xff] %v1427
      %1487 = vst [vmem:[#allocation3 + $0x208] sm:$0xff] %v1435
      %1488 = vst [vmem:[#allocation3 + $0x250] sm:$0xff] %v1443
      %1489 = vst [vmem:[#allocation3 + $0x298] sm:$0xff] %v1451
      %1490 = vst [vmem:[#allocation3 + $0x2e0] sm:$0xff] %v1459
      %1491 = vst [vmem:[#allocation3 + $0x328] sm:$0xff] %v1467
      %v1492 = vld [vmem:[#allocation2 + $0x8] sm:$0x80]
      %v1493 = vld [vmem:[#allocation2 + $0x10] sm:$0xff]
      %v1494 = vld [vmem:[#allocation2 + $0x18] sm:$0xff]
      %v1495 = vld [vmem:[#allocation2 + $0x20] sm:$0xff]
      %v1496 = vld [vmem:[#allocation2 + $0x28] sm:$0xff]
      %v1497 = vld [vmem:[#allocation2 + $0x30] sm:$0xff]
      %v1498 = vld [vmem:[#allocation2 + $0x38] sm:$0xff]
      %v1499 = vld [vmem:[#allocation2 + $0x40] sm:$0xff]
      %v1500 = vld [vmem:[#allocation2 + $0x48] sm:$0xff]
      %v1501 = vld [vmem:[#allocation2 + $0x50] sm:$0xff]
      %v1502 = vld [vmem:[#allocation2 + $0x58] sm:$0xff]
      %v1503 = vld [vmem:[#allocation2 + $0x60] sm:$0xff]
      %v1504 = vld [vmem:[#allocation2 + $0x68] sm:$0xff]
      %v1506 = vshrl.u32 %v1492, 16
      %v1508 = vrot.slane %v1506, 7
      %v1510 = vshrl.u32 %v1493, 16
      %v1512 = vrot.slane %v1510, 7
      %v1513 = vshll.u32 %v1493, 16
      %v1515 = vor.u32 %v1512, %v1513
      %v1516 = vsel %vm1367, %v1508, %v1515
      %v1518 = vshrl.u32 %v1494, 16
      %v1520 = vrot.slane %v1518, 7
      %v1521 = vshll.u32 %v1494, 16
      %v1523 = vor.u32 %v1520, %v1521
      %v1524 = vsel %vm1367, %v1512, %v1523
      %v1526 = vshrl.u32 %v1495, 16
      %v1528 = vrot.slane %v1526, 7
      %v1529 = vshll.u32 %v1495, 16
      %v1531 = vor.u32 %v1528, %v1529
      %v1532 = vsel %vm1367, %v1520, %v1531
      %v1534 = vshrl.u32 %v1496, 16
      %v1536 = vrot.slane %v1534, 7
      %v1537 = vshll.u32 %v1496, 16
      %v1539 = vor.u32 %v1536, %v1537
      %v1540 = vsel %vm1367, %v1528, %v1539
      %v1542 = vshrl.u32 %v1497, 16
      %v1544 = vrot.slane %v1542, 7
      %v1545 = vshll.u32 %v1497, 16
      %v1547 = vor.u32 %v1544, %v1545
      %v1548 = vsel %vm1367, %v1536, %v1547
      %v1550 = vshrl.u32 %v1498, 16
      %v1552 = vrot.slane %v1550, 7
      %v1553 = vshll.u32 %v1498, 16
      %v1555 = vor.u32 %v1552, %v1553
      %v1556 = vsel %vm1367, %v1544, %v1555
      %v1558 = vshrl.u32 %v1499, 16
      %v1560 = vrot.slane %v1558, 7
      %v1561 = vshll.u32 %v1499, 16
      %v1563 = vor.u32 %v1560, %v1561
      %v1564 = vsel %vm1367, %v1552, %v1563
      %v1566 = vshrl.u32 %v1500, 16
      %v1568 = vrot.slane %v1566, 7
      %v1569 = vshll.u32 %v1500, 16
      %v1571 = vor.u32 %v1568, %v1569
      %v1572 = vsel %vm1367, %v1560, %v1571
      %v1574 = vshrl.u32 %v1501, 16
      %v1576 = vrot.slane %v1574, 7
      %v1577 = vshll.u32 %v1501, 16
      %v1579 = vor.u32 %v1576, %v1577
      %v1580 = vsel %vm1367, %v1568, %v1579
      %v1582 = vshrl.u32 %v1502, 16
      %v1584 = vrot.slane %v1582, 7
      %v1585 = vshll.u32 %v1502, 16
      %v1587 = vor.u32 %v1584, %v1585
      %v1588 = vsel %vm1367, %v1576, %v1587
      %v1590 = vshrl.u32 %v1503, 16
      %v1592 = vrot.slane %v1590, 7
      %v1593 = vshll.u32 %v1503, 16
      %v1595 = vor.u32 %v1592, %v1593
      %v1596 = vsel %vm1367, %v1584, %v1595
      %v1598 = vshrl.u32 %v1504, 16
      %v1600 = vrot.slane %v1598, 7
      %v1601 = vshll.u32 %v1504, 16
      %v1603 = vor.u32 %v1600, %v1601
      %v1604 = vsel %vm1367, %v1592, %v1603
      %1617 = vst [vmem:[#allocation3 + $0x18] sm:$0xff] %v1516
      %1618 = vst [vmem:[#allocation3 + $0x60] sm:$0xff] %v1524
      %1619 = vst [vmem:[#allocation3 + $0xa8] sm:$0xff] %v1532
      %1620 = vst [vmem:[#allocation3 + $0xf0] sm:$0xff] %v1540
      %1621 = vst [vmem:[#allocation3 + $0x138] sm:$0xff] %v1548
      %1622 = vst [vmem:[#allocation3 + $0x180] sm:$0xff] %v1556
      %1623 = vst [vmem:[#allocation3 + $0x1c8] sm:$0xff] %v1564
      %1624 = vst [vmem:[#allocation3 + $0x210] sm:$0xff] %v1572
      %1625 = vst [vmem:[#allocation3 + $0x258] sm:$0xff] %v1580
      %1626 = vst [vmem:[#allocation3 + $0x2a0] sm:$0xff] %v1588
      %1627 = vst [vmem:[#allocation3 + $0x2e8] sm:$0xff] %v1596
      %1628 = vst [vmem:[#allocation3 + $0x330] sm:$0xff] %v1604
      %v1629 = vld [vmem:[#allocation2 + $0x10] sm:$0xff]
      %v1630 = vld [vmem:[#allocation2 + $0x18] sm:$0xff]
      %v1631 = vld [vmem:[#allocation2 + $0x20] sm:$0xff]
      %v1632 = vld [vmem:[#allocation2 + $0x28] sm:$0xff]
      %v1633 = vld [vmem:[#allocation2 + $0x30] sm:$0xff]
      %v1634 = vld [vmem:[#allocation2 + $0x38] sm:$0xff]
      %v1635 = vld [vmem:[#allocation2 + $0x40] sm:$0xff]
      %v1636 = vld [vmem:[#allocation2 + $0x48] sm:$0xff]
      %v1637 = vld [vmem:[#allocation2 + $0x50] sm:$0xff]
      %v1638 = vld [vmem:[#allocation2 + $0x58] sm:$0xff]
      %v1639 = vld [vmem:[#allocation2 + $0x60] sm:$0xff]
      %v1640 = vld [vmem:[#allocation2 + $0x68] sm:$0xff]
      %1641 = vst [vmem:[#allocation3 + $0x20] sm:$0xff] %v1629
      %1642 = vst [vmem:[#allocation3 + $0x68] sm:$0xff] %v1630
      %1643 = vst [vmem:[#allocation3 + $0xb0] sm:$0xff] %v1631
      %1644 = vst [vmem:[#allocation3 + $0xf8] sm:$0xff] %v1632
      %1645 = vst [vmem:[#allocation3 + $0x140] sm:$0xff] %v1633
      %1646 = vst [vmem:[#allocation3 + $0x188] sm:$0xff] %v1634
      %1647 = vst [vmem:[#allocation3 + $0x1d0] sm:$0xff] %v1635
      %1648 = vst [vmem:[#allocation3 + $0x218] sm:$0xff] %v1636
      %1649 = vst [vmem:[#allocation3 + $0x260] sm:$0xff] %v1637
      %1650 = vst [vmem:[#allocation3 + $0x2a8] sm:$0xff] %v1638
      %1651 = vst [vmem:[#allocation3 + $0x2f0] sm:$0xff] %v1639
      %1652 = vst [vmem:[#allocation3 + $0x338] sm:$0xff] %v1640
      %v1653 = vld [vmem:[#allocation2 + $0x10] sm:$0xff]
      %v1654 = vld [vmem:[#allocation2 + $0x18] sm:$0xff]
      %v1655 = vld [vmem:[#allocation2 + $0x20] sm:$0xff]
      %v1656 = vld [vmem:[#allocation2 + $0x28] sm:$0xff]
      %v1657 = vld [vmem:[#allocation2 + $0x30] sm:$0xff]
      %v1658 = vld [vmem:[#allocation2 + $0x38] sm:$0xff]
      %v1659 = vld [vmem:[#allocation2 + $0x40] sm:$0xff]
      %v1660 = vld [vmem:[#allocation2 + $0x48] sm:$0xff]
      %v1661 = vld [vmem:[#allocation2 + $0x50] sm:$0xff]
      %v1662 = vld [vmem:[#allocation2 + $0x58] sm:$0xff]
      %v1663 = vld [vmem:[#allocation2 + $0x60] sm:$0xff]
      %v1664 = vld [vmem:[#allocation2 + $0x68] sm:$0xff]
      %v1665 = vld [vmem:[#allocation2 + $0x70] sm:$0x1]
      %vm1666 = vsmask.f32 7424
      %v1668 = vshrl.u32 %v1653, 16
      %v1670 = vshll.u32 %v1653, 16
      %v1672 = vrot.slane %v1670, 1
      %v1673 = vor.u32 %v1668, %v1672
      %v1675 = vshll.u32 %v1654, 16
      %v1677 = vrot.slane %v1675, 1
      %v1678 = vsel %vm1666, %v1673, %v1677
      %v1679 = vshrl.u32 %v1654, 16
      %v1681 = vor.u32 %v1679, %v1677
      %v1683 = vshll.u32 %v1655, 16
      %v1685 = vrot.slane %v1683, 1
      %v1686 = vsel %vm1666, %v1681, %v1685
      %v1687 = vshrl.u32 %v1655, 16
      %v1689 = vor.u32 %v1687, %v1685
      %v1691 = vshll.u32 %v1656, 16
      %v1693 = vrot.slane %v1691, 1
      %v1694 = vsel %vm1666, %v1689, %v1693
      %v1695 = vshrl.u32 %v1656, 16
      %v1697 = vor.u32 %v1695, %v1693
      %v1699 = vshll.u32 %v1657, 16
      %v1701 = vrot.slane %v1699, 1
      %v1702 = vsel %vm1666, %v1697, %v1701
      %v1703 = vshrl.u32 %v1657, 16
      %v1705 = vor.u32 %v1703, %v1701
      %v1707 = vshll.u32 %v1658, 16
      %v1709 = vrot.slane %v1707, 1
      %v1710 = vsel %vm1666, %v1705, %v1709
      %v1711 = vshrl.u32 %v1658, 16
      %v1713 = vor.u32 %v1711, %v1709
      %v1715 = vshll.u32 %v1659, 16
      %v1717 = vrot.slane %v1715, 1
      %v1718 = vsel %vm1666, %v1713, %v1717
      %v1719 = vshrl.u32 %v1659, 16
      %v1721 = vor.u32 %v1719, %v1717
      %v1723 = vshll.u32 %v1660, 16
      %v1725 = vrot.slane %v1723, 1
      %v1726 = vsel %vm1666, %v1721, %v1725
      %v1727 = vshrl.u32 %v1660, 16
      %v1729 = vor.u32 %v1727, %v1725
      %v1731 = vshll.u32 %v1661, 16
      %v1733 = vrot.slane %v1731, 1
      %v1734 = vsel %vm1666, %v1729, %v1733
      %v1735 = vshrl.u32 %v1661, 16
      %v1737 = vor.u32 %v1735, %v1733
      %v1739 = vshll.u32 %v1662, 16
      %v1741 = vrot.slane %v1739, 1
      %v1742 = vsel %vm1666, %v1737, %v1741
      %v1743 = vshrl.u32 %v1662, 16
      %v1745 = vor.u32 %v1743, %v1741
      %v1747 = vshll.u32 %v1663, 16
      %v1749 = vrot.slane %v1747, 1
      %v1750 = vsel %vm1666, %v1745, %v1749
      %v1751 = vshrl.u32 %v1663, 16
      %v1753 = vor.u32 %v1751, %v1749
      %v1755 = vshll.u32 %v1664, 16
      %v1757 = vrot.slane %v1755, 1
      %v1758 = vsel %vm1666, %v1753, %v1757
      %v1759 = vshrl.u32 %v1664, 16
      %v1761 = vor.u32 %v1759, %v1757
      %v1763 = vshll.u32 %v1665, 16
      %v1765 = vrot.slane %v1763, 1
      %v1766 = vsel %vm1666, %v1761, %v1765
      %1779 = vst [vmem:[#allocation3 + $0x28] sm:$0xff] %v1678
      %1780 = vst [vmem:[#allocation3 + $0x70] sm:$0xff] %v1686
      %1781 = vst [vmem:[#allocation3 + $0xb8] sm:$0xff] %v1694
      %1782 = vst [vmem:[#allocation3 + $0x100] sm:$0xff] %v1702
      %1783 = vst [vmem:[#allocation3 + $0x148] sm:$0xff] %v1710
      %1784 = vst [vmem:[#allocation3 + $0x190] sm:$0xff] %v1718
      %1785 = vst [vmem:[#allocation3 + $0x1d8] sm:$0xff] %v1726
      %1786 = vst [vmem:[#allocation3 + $0x220] sm:$0xff] %v1734
      %1787 = vst [vmem:[#allocation3 + $0x268] sm:$0xff] %v1742
      %1788 = vst [vmem:[#allocation3 + $0x2b0] sm:$0xff] %v1750
      %1789 = vst [vmem:[#allocation3 + $0x2f8] sm:$0xff] %v1758
      %1790 = vst [vmem:[#allocation3 + $0x340] sm:$0xff] %v1766
      %v1791 = vld [vmem:[#allocation2 + $0x18] sm:$0xff]
      %v1792 = vld [vmem:[#allocation2 + $0x20] sm:$0xff]
      %v1793 = vld [vmem:[#allocation2 + $0x28] sm:$0xff]
      %v1794 = vld [vmem:[#allocation2 + $0x30] sm:$0xff]
      %v1795 = vld [vmem:[#allocation2 + $0x38] sm:$0xff]
      %v1796 = vld [vmem:[#allocation2 + $0x40] sm:$0xff]
      %v1797 = vld [vmem:[#allocation2 + $0x48] sm:$0xff]
      %v1798 = vld [vmem:[#allocation2 + $0x50] sm:$0xff]
      %v1799 = vld [vmem:[#allocation2 + $0x58] sm:$0xff]
      %v1800 = vld [vmem:[#allocation2 + $0x60] sm:$0xff]
      %v1801 = vld [vmem:[#allocation2 + $0x68] sm:$0xff]
      %v1802 = vld [vmem:[#allocation2 + $0x70] sm:$0xff]
      %v1803 = vld [vmem:[#allocation2 + $0x78] sm:$0x1]
      %v1805 = vshrl.u32 %v1791, 16
      %v1807 = vshll.u32 %v1791, 16
      %v1809 = vrot.slane %v1807, 1
      %v1810 = vor.u32 %v1805, %v1809
      %v1812 = vshll.u32 %v1792, 16
      %v1814 = vrot.slane %v1812, 1
      %v1815 = vsel %vm1666, %v1810, %v1814
      %v1816 = vshrl.u32 %v1792, 16
      %v1818 = vor.u32 %v1816, %v1814
      %v1820 = vshll.u32 %v1793, 16
      %v1822 = vrot.slane %v1820, 1
      %v1823 = vsel %vm1666, %v1818, %v1822
      %v1824 = vshrl.u32 %v1793, 16
      %v1826 = vor.u32 %v1824, %v1822
      %v1828 = vshll.u32 %v1794, 16
      %v1830 = vrot.slane %v1828, 1
      %v1831 = vsel %vm1666, %v1826, %v1830
      %v1832 = vshrl.u32 %v1794, 16
      %v1834 = vor.u32 %v1832, %v1830
      %v1836 = vshll.u32 %v1795, 16
      %v1838 = vrot.slane %v1836, 1
      %v1839 = vsel %vm1666, %v1834, %v1838
      %v1840 = vshrl.u32 %v1795, 16
      %v1842 = vor.u32 %v1840, %v1838
      %v1844 = vshll.u32 %v1796, 16
      %v1846 = vrot.slane %v1844, 1
      %v1847 = vsel %vm1666, %v1842, %v1846
      %v1848 = vshrl.u32 %v1796, 16
      %v1850 = vor.u32 %v1848, %v1846
      %v1852 = vshll.u32 %v1797, 16
      %v1854 = vrot.slane %v1852, 1
      %v1855 = vsel %vm1666, %v1850, %v1854
      %v1856 = vshrl.u32 %v1797, 16
      %v1858 = vor.u32 %v1856, %v1854
      %v1860 = vshll.u32 %v1798, 16
      %v1862 = vrot.slane %v1860, 1
      %v1863 = vsel %vm1666, %v1858, %v1862
      %v1864 = vshrl.u32 %v1798, 16
      %v1866 = vor.u32 %v1864, %v1862
      %v1868 = vshll.u32 %v1799, 16
      %v1870 = vrot.slane %v1868, 1
      %v1871 = vsel %vm1666, %v1866, %v1870
      %v1872 = vshrl.u32 %v1799, 16
      %v1874 = vor.u32 %v1872, %v1870
      %v1876 = vshll.u32 %v1800, 16
      %v1878 = vrot.slane %v1876, 1
      %v1879 = vsel %vm1666, %v1874, %v1878
      %v1880 = vshrl.u32 %v1800, 16
      %v1882 = vor.u32 %v1880, %v1878
      %v1884 = vshll.u32 %v1801, 16
      %v1886 = vrot.slane %v1884, 1
      %v1887 = vsel %vm1666, %v1882, %v1886
      %v1888 = vshrl.u32 %v1801, 16
      %v1890 = vor.u32 %v1888, %v1886
      %v1892 = vshll.u32 %v1802, 16
      %v1894 = vrot.slane %v1892, 1
      %v1895 = vsel %vm1666, %v1890, %v1894
      %v1896 = vshrl.u32 %v1802, 16
      %v1898 = vor.u32 %v1896, %v1894
      %v1900 = vshll.u32 %v1803, 16
      %v1902 = vrot.slane %v1900, 1
      %v1903 = vsel %vm1666, %v1898, %v1902
      %1916 = vst [vmem:[#allocation3 + $0x30] sm:$0xff] %v1815
      %1917 = vst [vmem:[#allocation3 + $0x78] sm:$0xff] %v1823
      %1918 = vst [vmem:[#allocation3 + $0xc0] sm:$0xff] %v1831
      %1919 = vst [vmem:[#allocation3 + $0x108] sm:$0xff] %v1839
      %1920 = vst [vmem:[#allocation3 + $0x150] sm:$0xff] %v1847
      %1921 = vst [vmem:[#allocation3 + $0x198] sm:$0xff] %v1855
      %1922 = vst [vmem:[#allocation3 + $0x1e0] sm:$0xff] %v1863
      %1923 = vst [vmem:[#allocation3 + $0x228] sm:$0xff] %v1871
      %1924 = vst [vmem:[#allocation3 + $0x270] sm:$0xff] %v1879
      %1925 = vst [vmem:[#allocation3 + $0x2b8] sm:$0xff] %v1887
      %1926 = vst [vmem:[#allocation3 + $0x300] sm:$0xff] %v1895
      %1927 = vst [vmem:[#allocation3 + $0x348] sm:$0xff] %v1903
      %v1928 = vld [vmem:[#allocation2 + $0x18] sm:$0xfe]
      %v1929 = vld [vmem:[#allocation2 + $0x20] sm:$0xff]
      %v1930 = vld [vmem:[#allocation2 + $0x28] sm:$0xff]
      %v1931 = vld [vmem:[#allocation2 + $0x30] sm:$0xff]
      %v1932 = vld [vmem:[#allocation2 + $0x38] sm:$0xff]
      %v1933 = vld [vmem:[#allocation2 + $0x40] sm:$0xff]
      %v1934 = vld [vmem:[#allocation2 + $0x48] sm:$0xff]
      %v1935 = vld [vmem:[#allocation2 + $0x50] sm:$0xff]
      %v1936 = vld [vmem:[#allocation2 + $0x58] sm:$0xff]
      %v1937 = vld [vmem:[#allocation2 + $0x60] sm:$0xff]
      %v1938 = vld [vmem:[#allocation2 + $0x68] sm:$0xff]
      %v1939 = vld [vmem:[#allocation2 + $0x70] sm:$0xff]
      %v1940 = vld [vmem:[#allocation2 + $0x78] sm:$0x1]
      %vm1954 = vcmask 1046528
      %v1955 = vrot.slane %v1928, 1
      %v1956 = vrot.slane %v1929, 1
      %v1957 = vsel %vm1954, %v1955, %v1956
      %v1958 = vrot.slane %v1930, 1
      %v1959 = vsel %vm1954, %v1956, %v1958
      %v1960 = vrot.slane %v1931, 1
      %v1961 = vsel %vm1954, %v1958, %v1960
      %v1962 = vrot.slane %v1932, 1
      %v1963 = vsel %vm1954, %v1960, %v1962
      %v1964 = vrot.slane %v1933, 1
      %v1965 = vsel %vm1954, %v1962, %v1964
      %v1966 = vrot.slane %v1934, 1
      %v1967 = vsel %vm1954, %v1964, %v1966
      %v1968 = vrot.slane %v1935, 1
      %v1969 = vsel %vm1954, %v1966, %v1968
      %v1970 = vrot.slane %v1936, 1
      %v1971 = vsel %vm1954, %v1968, %v1970
      %v1972 = vrot.slane %v1937, 1
      %v1973 = vsel %vm1954, %v1970, %v1972
      %v1974 = vrot.slane %v1938, 1
      %v1975 = vsel %vm1954, %v1972, %v1974
      %v1976 = vrot.slane %v1939, 1
      %v1977 = vsel %vm1954, %v1974, %v1976
      %v1978 = vrot.slane %v1940, 1
      %v1979 = vsel %vm1954, %v1976, %v1978
      %1992 = vst [vmem:[#allocation3 + $0x38] sm:$0xff] %v1957
      %1993 = vst [vmem:[#allocation3 + $0x80] sm:$0xff] %v1959
      %1994 = vst [vmem:[#allocation3 + $0xc8] sm:$0xff] %v1961
      %1995 = vst [vmem:[#allocation3 + $0x110] sm:$0xff] %v1963
      %1996 = vst [vmem:[#allocation3 + $0x158] sm:$0xff] %v1965
      %1997 = vst [vmem:[#allocation3 + $0x1a0] sm:$0xff] %v1967
      %1998 = vst [vmem:[#allocation3 + $0x1e8] sm:$0xff] %v1969
      %1999 = vst [vmem:[#allocation3 + $0x230] sm:$0xff] %v1971
      %2000 = vst [vmem:[#allocation3 + $0x278] sm:$0xff] %v1973
      %2001 = vst [vmem:[#allocation3 + $0x2c0] sm:$0xff] %v1975
      %2002 = vst [vmem:[#allocation3 + $0x308] sm:$0xff] %v1977
      %2003 = vst [vmem:[#allocation3 + $0x350] sm:$0xff] %v1979
      %v2004 = vld [vmem:[#allocation2 + $0x18] sm:$0xfe]
      %v2005 = vld [vmem:[#allocation2 + $0x20] sm:$0xff]
      %v2006 = vld [vmem:[#allocation2 + $0x28] sm:$0xff]
      %v2007 = vld [vmem:[#allocation2 + $0x30] sm:$0xff]
      %v2008 = vld [vmem:[#allocation2 + $0x38] sm:$0xff]
      %v2009 = vld [vmem:[#allocation2 + $0x40] sm:$0xff]
      %v2010 = vld [vmem:[#allocation2 + $0x48] sm:$0xff]
      %v2011 = vld [vmem:[#allocation2 + $0x50] sm:$0xff]
      %v2012 = vld [vmem:[#allocation2 + $0x58] sm:$0xff]
      %v2013 = vld [vmem:[#allocation2 + $0x60] sm:$0xff]
      %v2014 = vld [vmem:[#allocation2 + $0x68] sm:$0xff]
      %v2015 = vld [vmem:[#allocation2 + $0x70] sm:$0xff]
      %v2016 = vld [vmem:[#allocation2 + $0x78] sm:$0x3]
      %vm2017 = vsmask.f32 6400
      %v2019 = vshrl.u32 %v2004, 16
      %v2021 = vrot.slane %v2019, 1
      %v2022 = vshll.u32 %v2004, 16
      %v2024 = vrot.slane %v2022, 2
      %v2025 = vor.u32 %v2021, %v2024
      %v2027 = vshrl.u32 %v2005, 16
      %v2029 = vrot.slane %v2027, 1
      %v2030 = vshll.u32 %v2005, 16
      %v2032 = vrot.slane %v2030, 2
      %v2033 = vor.u32 %v2029, %v2032
      %v2034 = vsel %vm2017, %v2025, %v2033
      %v2036 = vshrl.u32 %v2006, 16
      %v2038 = vrot.slane %v2036, 1
      %v2039 = vshll.u32 %v2006, 16
      %v2041 = vrot.slane %v2039, 2
      %v2042 = vor.u32 %v2038, %v2041
      %v2043 = vsel %vm2017, %v2033, %v2042
      %v2045 = vshrl.u32 %v2007, 16
      %v2047 = vrot.slane %v2045, 1
      %v2048 = vshll.u32 %v2007, 16
      %v2050 = vrot.slane %v2048, 2
      %v2051 = vor.u32 %v2047, %v2050
      %v2052 = vsel %vm2017, %v2042, %v2051
      %v2054 = vshrl.u32 %v2008, 16
      %v2056 = vrot.slane %v2054, 1
      %v2057 = vshll.u32 %v2008, 16
      %v2059 = vrot.slane %v2057, 2
      %v2060 = vor.u32 %v2056, %v2059
      %v2061 = vsel %vm2017, %v2051, %v2060
      %v2063 = vshrl.u32 %v2009, 16
      %v2065 = vrot.slane %v2063, 1
      %v2066 = vshll.u32 %v2009, 16
      %v2068 = vrot.slane %v2066, 2
      %v2069 = vor.u32 %v2065, %v2068
      %v2070 = vsel %vm2017, %v2060, %v2069
      %v2072 = vshrl.u32 %v2010, 16
      %v2074 = vrot.slane %v2072, 1
      %v2075 = vshll.u32 %v2010, 16
      %v2077 = vrot.slane %v2075, 2
      %v2078 = vor.u32 %v2074, %v2077
      %v2079 = vsel %vm2017, %v2069, %v2078
      %v2081 = vshrl.u32 %v2011, 16
      %v2083 = vrot.slane %v2081, 1
      %v2084 = vshll.u32 %v2011, 16
      %v2086 = vrot.slane %v2084, 2
      %v2087 = vor.u32 %v2083, %v2086
      %v2088 = vsel %vm2017, %v2078, %v2087
      %v2090 = vshrl.u32 %v2012, 16
      %v2092 = vrot.slane %v2090, 1
      %v2093 = vshll.u32 %v2012, 16
      %v2095 = vrot.slane %v2093, 2
      %v2096 = vor.u32 %v2092, %v2095
      %v2097 = vsel %vm2017, %v2087, %v2096
      %v2099 = vshrl.u32 %v2013, 16
      %v2101 = vrot.slane %v2099, 1
      %v2102 = vshll.u32 %v2013, 16
      %v2104 = vrot.slane %v2102, 2
      %v2105 = vor.u32 %v2101, %v2104
      %v2106 = vsel %vm2017, %v2096, %v2105
      %v2108 = vshrl.u32 %v2014, 16
      %v2110 = vrot.slane %v2108, 1
      %v2111 = vshll.u32 %v2014, 16
      %v2113 = vrot.slane %v2111, 2
      %v2114 = vor.u32 %v2110, %v2113
      %v2115 = vsel %vm2017, %v2105, %v2114
      %v2117 = vshrl.u32 %v2015, 16
      %v2119 = vrot.slane %v2117, 1
      %v2120 = vshll.u32 %v2015, 16
      %v2122 = vrot.slane %v2120, 2
      %v2123 = vor.u32 %v2119, %v2122
      %v2124 = vsel %vm2017, %v2114, %v2123
      %v2126 = vshrl.u32 %v2016, 16
      %v2128 = vrot.slane %v2126, 1
      %v2129 = vshll.u32 %v2016, 16
      %v2131 = vrot.slane %v2129, 2
      %v2132 = vor.u32 %v2128, %v2131
      %v2133 = vsel %vm2017, %v2123, %v2132
      %2146 = vst [vmem:[#allocation3 + $0x40] sm:$0xff] %v2034
      %2147 = vst [vmem:[#allocation3 + $0x88] sm:$0xff] %v2043
      %2148 = vst [vmem:[#allocation3 + $0xd0] sm:$0xff] %v2052
      %2149 = vst [vmem:[#allocation3 + $0x118] sm:$0xff] %v2061
      %2150 = vst [vmem:[#allocation3 + $0x160] sm:$0xff] %v2070
      %2151 = vst [vmem:[#allocation3 + $0x1a8] sm:$0xff] %v2079
      %2152 = vst [vmem:[#allocation3 + $0x1f0] sm:$0xff] %v2088
      %2153 = vst [vmem:[#allocation3 + $0x238] sm:$0xff] %v2097
      %2154 = vst [vmem:[#allocation3 + $0x280] sm:$0xff] %v2106
      %2155 = vst [vmem:[#allocation3 + $0x2c8] sm:$0xff] %v2115
      %2156 = vst [vmem:[#allocation3 + $0x310] sm:$0xff] %v2124
      %2157 = vst [vmem:[#allocation3 + $0x358] sm:$0xff] %v2133
      %v2158 = vld [vmem:[#allocation3] sm:$0xff]
      %v2159 = vld [vmem:[#allocation3 + $0x8] sm:$0xff]
      %v2160 = vld [vmem:[#allocation3 + $0x10] sm:$0xff]
      %v2161 = vld [vmem:[#allocation3 + $0x18] sm:$0xff]
      %v2162 = vld [vmem:[#allocation3 + $0x20] sm:$0xff]
      %v2163 = vld [vmem:[#allocation3 + $0x28] sm:$0xff]
      %v2164 = vld [vmem:[#allocation3 + $0x30] sm:$0xff]
      %v2165 = vld [vmem:[#allocation3 + $0x38] sm:$0xff]
      %v2166 = vld [vmem:[#allocation3 + $0x40] sm:$0xff]
      %v2167 = vld [vmem:[#allocation3 + $0x48] sm:$0xff]
      %v2168 = vld [vmem:[#allocation3 + $0x50] sm:$0xff]
      %v2169 = vld [vmem:[#allocation3 + $0x58] sm:$0xff]
      %v2170 = vld [vmem:[#allocation3 + $0x60] sm:$0xff]
      %v2171 = vld [vmem:[#allocation3 + $0x68] sm:$0xff]
      %v2172 = vld [vmem:[#allocation3 + $0x70] sm:$0xff]
      %v2173 = vld [vmem:[#allocation3 + $0x78] sm:$0xff]
      %v2174 = vld [vmem:[#allocation3 + $0x80] sm:$0xff]
      %v2175 = vld [vmem:[#allocation3 + $0x88] sm:$0xff]
      %v2176 = vld [vmem:[#allocation3 + $0x90] sm:$0xff]
      %v2177 = vld [vmem:[#allocation3 + $0x98] sm:$0xff]
      %v2178 = vld [vmem:[#allocation3 + $0xa0] sm:$0xff]
      %v2179 = vld [vmem:[#allocation3 + $0xa8] sm:$0xff]
      %v2180 = vld [vmem:[#allocation3 + $0xb0] sm:$0xff]
      %v2181 = vld [vmem:[#allocation3 + $0xb8] sm:$0xff]
      %v2182 = vld [vmem:[#allocation3 + $0xc0] sm:$0xff]
      %v2183 = vld [vmem:[#allocation3 + $0xc8] sm:$0xff]
      %v2184 = vld [vmem:[#allocation3 + $0xd0] sm:$0xff]
      %v2185 = vld [vmem:[#allocation3 + $0xd8] sm:$0xff]
      %v2186 = vld [vmem:[#allocation3 + $0xe0] sm:$0xff]
      %v2187 = vld [vmem:[#allocation3 + $0xe8] sm:$0xff]
      %v2188 = vld [vmem:[#allocation3 + $0xf0] sm:$0xff]
      %v2189 = vld [vmem:[#allocation3 + $0xf8] sm:$0xff]
      %v2190 = vld [vmem:[#allocation3 + $0x100] sm:$0xff]
      %v2191 = vld [vmem:[#allocation3 + $0x108] sm:$0xff]
      %v2192 = vld [vmem:[#allocation3 + $0x110] sm:$0xff]
      %v2193 = vld [vmem:[#allocation3 + $0x118] sm:$0xff]
      %v2194 = vld [vmem:[#allocation3 + $0x120] sm:$0xff]
      %v2195 = vld [vmem:[#allocation3 + $0x128] sm:$0xff]
      %v2196 = vld [vmem:[#allocation3 + $0x130] sm:$0xff]
      %v2197 = vld [vmem:[#allocation3 + $0x138] sm:$0xff]
      %v2198 = vld [vmem:[#allocation3 + $0x140] sm:$0xff]
      %v2199 = vld [vmem:[#allocation3 + $0x148] sm:$0xff]
      %v2200 = vld [vmem:[#allocation3 + $0x150] sm:$0xff]
      %v2201 = vld [vmem:[#allocation3 + $0x158] sm:$0xff]
      %v2202 = vld [vmem:[#allocation3 + $0x160] sm:$0xff]
      %v2203 = vld [vmem:[#allocation3 + $0x168] sm:$0xff]
      %v2204 = vld [vmem:[#allocation3 + $0x170] sm:$0xff]
      %v2205 = vld [vmem:[#allocation3 + $0x178] sm:$0xff]
      %v2206 = vld [vmem:[#allocation3 + $0x180] sm:$0xff]
      %v2207 = vld [vmem:[#allocation3 + $0x188] sm:$0xff]
      %v2208 = vld [vmem:[#allocation3 + $0x190] sm:$0xff]
      %v2209 = vld [vmem:[#allocation3 + $0x198] sm:$0xff]
      %v2210 = vld [vmem:[#allocation3 + $0x1a0] sm:$0xff]
      %v2211 = vld [vmem:[#allocation3 + $0x1a8] sm:$0xff]
      %v2212 = vld [vmem:[#allocation3 + $0x1b0] sm:$0xff]
      %v2213 = vld [vmem:[#allocation3 + $0x1b8] sm:$0xff]
      %v2214 = vld [vmem:[#allocation3 + $0x1c0] sm:$0xff]
      %v2215 = vld [vmem:[#allocation3 + $0x1c8] sm:$0xff]
      %v2216 = vld [vmem:[#allocation3 + $0x1d0] sm:$0xff]
      %v2217 = vld [vmem:[#allocation3 + $0x1d8] sm:$0xff]
      %v2218 = vld [vmem:[#allocation3 + $0x1e0] sm:$0xff]
      %v2219 = vld [vmem:[#allocation3 + $0x1e8] sm:$0xff]
      %v2220 = vld [vmem:[#allocation3 + $0x1f0] sm:$0xff]
      %v2221 = vld [vmem:[#allocation3 + $0x1f8] sm:$0xff]
      %v2222 = vld [vmem:[#allocation3 + $0x200] sm:$0xff]
      %v2223 = vld [vmem:[#allocation3 + $0x208] sm:$0xff]
      %v2224 = vld [vmem:[#allocation3 + $0x210] sm:$0xff]
      %v2225 = vld [vmem:[#allocation3 + $0x218] sm:$0xff]
      %v2226 = vld [vmem:[#allocation3 + $0x220] sm:$0xff]
      %v2227 = vld [vmem:[#allocation3 + $0x228] sm:$0xff]
      %v2228 = vld [vmem:[#allocation3 + $0x230] sm:$0xff]
      %v2229 = vld [vmem:[#allocation3 + $0x238] sm:$0xff]
      %v2230 = vld [vmem:[#allocation3 + $0x240] sm:$0xff]
      %v2231 = vld [vmem:[#allocation3 + $0x248] sm:$0xff]
      %v2232 = vld [vmem:[#allocation3 + $0x250] sm:$0xff]
      %v2233 = vld [vmem:[#allocation3 + $0x258] sm:$0xff]
      %v2234 = vld [vmem:[#allocation3 + $0x260] sm:$0xff]
      %v2235 = vld [vmem:[#allocation3 + $0x268] sm:$0xff]
      %v2236 = vld [vmem:[#allocation3 + $0x270] sm:$0xff]
      %v2237 = vld [vmem:[#allocation3 + $0x278] sm:$0xff]
      %v2238 = vld [vmem:[#allocation3 + $0x280] sm:$0xff]
      %v2239 = vld [vmem:[#allocation3 + $0x288] sm:$0xff]
      %v2240 = vld [vmem:[#allocation3 + $0x290] sm:$0xff]
      %v2241 = vld [vmem:[#allocation3 + $0x298] sm:$0xff]
      %v2242 = vld [vmem:[#allocation3 + $0x2a0] sm:$0xff]
      %v2243 = vld [vmem:[#allocation3 + $0x2a8] sm:$0xff]
      %v2244 = vld [vmem:[#allocation3 + $0x2b0] sm:$0xff]
      %v2245 = vld [vmem:[#allocation3 + $0x2b8] sm:$0xff]
      %v2246 = vld [vmem:[#allocation3 + $0x2c0] sm:$0xff]
      %v2247 = vld [vmem:[#allocation3 + $0x2c8] sm:$0xff]
      %v2248 = vld [vmem:[#allocation3 + $0x2d0] sm:$0xff]
      %v2249 = vld [vmem:[#allocation3 + $0x2d8] sm:$0xff]
      %v2250 = vld [vmem:[#allocation3 + $0x2e0] sm:$0xff]
      %v2251 = vld [vmem:[#allocation3 + $0x2e8] sm:$0xff]
      %v2252 = vld [vmem:[#allocation3 + $0x2f0] sm:$0xff]
      %v2253 = vld [vmem:[#allocation3 + $0x2f8] sm:$0xff]
      %v2254 = vld [vmem:[#allocation3 + $0x300] sm:$0xff]
      %v2255 = vld [vmem:[#allocation3 + $0x308] sm:$0xff]
      %v2256 = vld [vmem:[#allocation3 + $0x310] sm:$0xff]
      %v2257 = vld [vmem:[#allocation3 + $0x318] sm:$0xff]
      %v2258 = vld [vmem:[#allocation3 + $0x320] sm:$0xff]
      %v2259 = vld [vmem:[#allocation3 + $0x328] sm:$0xff]
      %v2260 = vld [vmem:[#allocation3 + $0x330] sm:$0xff]
      %v2261 = vld [vmem:[#allocation3 + $0x338] sm:$0xff]
      %v2262 = vld [vmem:[#allocation3 + $0x340] sm:$0xff]
      %v2263 = vld [vmem:[#allocation3 + $0x348] sm:$0xff]
      %v2264 = vld [vmem:[#allocation3 + $0x350] sm:$0xff]
      %v2265 = vld [vmem:[#allocation3 + $0x358] sm:$0xff]
      %v2266 = vld [vmem:[%s8] sm:$0xf]
      %v2267 = vld [vmem:[%s8 + $0x4] sm:$0xf]
      %v2268 = vld [vmem:[%s8 + $0x8] sm:$0xf]
      %v2269 = vld [vmem:[%s8 + $0xc] sm:$0xf]
      %v2270 = vld [vmem:[%s8 + $0x10] sm:$0xf]
      %v2271 = vld [vmem:[%s8 + $0x14] sm:$0xf]
      %v2272 = vld [vmem:[%s8 + $0x18] sm:$0xf]
      %v2273 = vld [vmem:[%s8 + $0x1c] sm:$0xf]
      %v2274 = vld [vmem:[%s8 + $0x20] sm:$0xf]
      %v2275 = vld [vmem:[%s8 + $0x24] sm:$0xf]
      %v2276 = vld [vmem:[%s8 + $0x28] sm:$0xf]
      %v2277 = vld [vmem:[%s8 + $0x2c] sm:$0xf]
      %v2278 = vld [vmem:[%s8 + $0x30] sm:$0xf]
      %v2279 = vld [vmem:[%s8 + $0x34] sm:$0xf]
      %v2280 = vld [vmem:[%s8 + $0x38] sm:$0xf]
      %v2281 = vld [vmem:[%s8 + $0x3c] sm:$0xf]
      %v2282 = vld [vmem:[%s8 + $0x40] sm:$0xf]
      %v2283 = vld [vmem:[%s8 + $0x44] sm:$0xf]
      %v2284 = vld [vmem:[%s8 + $0x48] sm:$0xf]
      %v2285 = vld [vmem:[%s8 + $0x4c] sm:$0xf]
      %v2286 = vld [vmem:[%s8 + $0x50] sm:$0xf]
      %v2287 = vld [vmem:[%s8 + $0x54] sm:$0xf]
      %v2288 = vld [vmem:[%s8 + $0x58] sm:$0xf]
      %v2289 = vld [vmem:[%s8 + $0x5c] sm:$0xf]
      %v2290 = vld [vmem:[%s8 + $0x60] sm:$0xf]
      %v2291 = vld [vmem:[%s8 + $0x64] sm:$0xf]
      %v2292 = vld [vmem:[%s8 + $0x68] sm:$0xf]
      %v2293 = vld [vmem:[%s8 + $0x6c] sm:$0xf]
      %v2294 = vld [vmem:[%s8 + $0x70] sm:$0xf]
      %v2295 = vld [vmem:[%s8 + $0x74] sm:$0xf]
      %v2296 = vld [vmem:[%s8 + $0x78] sm:$0xf]
      %v2297 = vld [vmem:[%s8 + $0x7c] sm:$0xf]
      %v2298 = vld [vmem:[%s8 + $0x80] sm:$0xf]
      %v2299 = vld [vmem:[%s8 + $0x84] sm:$0xf]
      %v2300 = vld [vmem:[%s8 + $0x88] sm:$0xf]
      %v2301 = vld [vmem:[%s8 + $0x8c] sm:$0xf]
      %v2302 = vld [vmem:[%s8 + $0x90] sm:$0xf]
      %v2303 = vld [vmem:[%s8 + $0x94] sm:$0xf]
      %v2304 = vld [vmem:[%s8 + $0x98] sm:$0xf]
      %v2305 = vld [vmem:[%s8 + $0x9c] sm:$0xf]
      %v2306 = vld [vmem:[%s8 + $0xa0] sm:$0xf]
      %v2307 = vld [vmem:[%s8 + $0xa4] sm:$0xf]
      %v2308 = vld [vmem:[%s8 + $0xa8] sm:$0xf]
      %v2309 = vld [vmem:[%s8 + $0xac] sm:$0xf]
      %v2310 = vld [vmem:[%s8 + $0xb0] sm:$0xf]
      %v2311 = vld [vmem:[%s8 + $0xb4] sm:$0xf]
      %v2312 = vld [vmem:[%s8 + $0xb8] sm:$0xf]
      %v2313 = vld [vmem:[%s8 + $0xbc] sm:$0xf]
      %v2314 = vld [vmem:[%s8 + $0xc0] sm:$0xf]
      %v2315 = vld [vmem:[%s8 + $0xc4] sm:$0xf]
      %v2316 = vld [vmem:[%s8 + $0xc8] sm:$0xf]
      %v2317 = vld [vmem:[%s8 + $0xcc] sm:$0xf]
      %v2318 = vld [vmem:[%s8 + $0xd0] sm:$0xf]
      %v2319 = vld [vmem:[%s8 + $0xd4] sm:$0xf]
      %v2320 = vld [vmem:[%s8 + $0xd8] sm:$0xf]
      %v2321 = vld [vmem:[%s8 + $0xdc] sm:$0xf]
      %v2322 = vld [vmem:[%s8 + $0xe0] sm:$0xf]
      %v2323 = vld [vmem:[%s8 + $0xe4] sm:$0xf]
      %v2324 = vld [vmem:[%s8 + $0xe8] sm:$0xf]
      %v2325 = vld [vmem:[%s8 + $0xec] sm:$0xf]
      %v2326 = vld [vmem:[%s8 + $0xf0] sm:$0xf]
      %v2327 = vld [vmem:[%s8 + $0xf4] sm:$0xf]
      %v2328 = vld [vmem:[%s8 + $0xf8] sm:$0xf]
      %v2329 = vld [vmem:[%s8 + $0xfc] sm:$0xf]
      %v2330 = vld [vmem:[%s8 + $0x100] sm:$0xf]
      %v2331 = vld [vmem:[%s8 + $0x104] sm:$0xf]
      %v2332 = vld [vmem:[%s8 + $0x108] sm:$0xf]
      %v2333 = vld [vmem:[%s8 + $0x10c] sm:$0xf]
      %v2334 = vld [vmem:[%s8 + $0x110] sm:$0xf]
      %v2335 = vld [vmem:[%s8 + $0x114] sm:$0xf]
      %v2336 = vld [vmem:[%s8 + $0x118] sm:$0xf]
      %v2337 = vld [vmem:[%s8 + $0x11c] sm:$0xf]
      %v2338 = vld [vmem:[%s8 + $0x120] sm:$0xf]
      %v2339 = vld [vmem:[%s8 + $0x124] sm:$0xf]
      %v2340 = vld [vmem:[%s8 + $0x128] sm:$0xf]
      %v2341 = vld [vmem:[%s8 + $0x12c] sm:$0xf]
      %v2342 = vld [vmem:[%s8 + $0x130] sm:$0xf]
      %v2343 = vld [vmem:[%s8 + $0x134] sm:$0xf]
      %v2344 = vld [vmem:[%s8 + $0x138] sm:$0xf]
      %v2345 = vld [vmem:[%s8 + $0x13c] sm:$0xf]
      %v2346 = vld [vmem:[%s8 + $0x140] sm:$0xf]
      %v2347 = vld [vmem:[%s8 + $0x144] sm:$0xf]
      %v2348 = vld [vmem:[%s8 + $0x148] sm:$0xf]
      %v2349 = vld [vmem:[%s8 + $0x14c] sm:$0xf]
      %v2350 = vld [vmem:[%s8 + $0x150] sm:$0xf]
      %v2351 = vld [vmem:[%s8 + $0x154] sm:$0xf]
      %v2352 = vld [vmem:[%s8 + $0x158] sm:$0xf]
      %v2353 = vld [vmem:[%s8 + $0x15c] sm:$0xf]
      %v2354 = vld [vmem:[%s8 + $0x160] sm:$0xf]
      %v2355 = vld [vmem:[%s8 + $0x164] sm:$0xf]
      %v2356 = vld [vmem:[%s8 + $0x168] sm:$0xf]
      %v2357 = vld [vmem:[%s8 + $0x16c] sm:$0xf]
      %v2358 = vld [vmem:[%s8 + $0x170] sm:$0xf]
      %v2359 = vld [vmem:[%s8 + $0x174] sm:$0xf]
      %v2360 = vld [vmem:[%s8 + $0x178] sm:$0xf]
      %v2361 = vld [vmem:[%s8 + $0x17c] sm:$0xf]
      %v2362 = vld [vmem:[%s8 + $0x180] sm:$0xf]
      %v2363 = vld [vmem:[%s8 + $0x184] sm:$0xf]
      %v2364 = vld [vmem:[%s8 + $0x188] sm:$0xf]
      %v2365 = vld [vmem:[%s8 + $0x18c] sm:$0xf]
      %v2366 = vld [vmem:[%s8 + $0x190] sm:$0xf]
      %v2367 = vld [vmem:[%s8 + $0x194] sm:$0xf]
      %v2368 = vld [vmem:[%s8 + $0x198] sm:$0xf]
      %v2369 = vld [vmem:[%s8 + $0x19c] sm:$0xf]
      %v2370 = vld [vmem:[%s8 + $0x1a0] sm:$0xf]
      %v2371 = vld [vmem:[%s8 + $0x1a4] sm:$0xf]
      %v2372 = vld [vmem:[%s8 + $0x1a8] sm:$0xf]
      %v2373 = vld [vmem:[%s8 + $0x1ac] sm:$0xf]
      %v2374 = vld [vmem:[%s8 + $0x1b0] sm:$0xf]
      %v2375 = vld [vmem:[%s8 + $0x1b4] sm:$0xf]
      %v2376 = vld [vmem:[%s8 + $0x1b8] sm:$0xf]
      %v2377 = vld [vmem:[%s8 + $0x1bc] sm:$0xf]
      %v2378 = vld [vmem:[%s8 + $0x1c0] sm:$0xf]
      %v2379 = vld [vmem:[%s8 + $0x1c4] sm:$0xf]
      %v2380 = vld [vmem:[%s8 + $0x1c8] sm:$0xf]
      %v2381 = vld [vmem:[%s8 + $0x1cc] sm:$0xf]
      %v2382 = vld [vmem:[%s8 + $0x1d0] sm:$0xf]
      %v2383 = vld [vmem:[%s8 + $0x1d4] sm:$0xf]
      %v2384 = vld [vmem:[%s8 + $0x1d8] sm:$0xf]
      %v2385 = vld [vmem:[%s8 + $0x1dc] sm:$0xf]
      %v2386 = vld [vmem:[%s8 + $0x1e0] sm:$0xf]
      %v2387 = vld [vmem:[%s8 + $0x1e4] sm:$0xf]
      %v2388 = vld [vmem:[%s8 + $0x1e8] sm:$0xf]
      %v2389 = vld [vmem:[%s8 + $0x1ec] sm:$0xf]
      %v2390 = vld [vmem:[%s8 + $0x1f0] sm:$0xf]
      %v2391 = vld [vmem:[%s8 + $0x1f4] sm:$0xf]
      %v2392 = vld [vmem:[%s8 + $0x1f8] sm:$0xf]
      %v2393 = vld [vmem:[%s8 + $0x1fc] sm:$0xf]
      %v2394 = vld [vmem:[%s8 + $0x200] sm:$0xf]
      %v2395 = vld [vmem:[%s8 + $0x204] sm:$0xf]
      %v2396 = vld [vmem:[%s8 + $0x208] sm:$0xf]
      %v2397 = vld [vmem:[%s8 + $0x20c] sm:$0xf]
      %v2398 = vld [vmem:[%s8 + $0x210] sm:$0xf]
      %v2399 = vld [vmem:[%s8 + $0x214] sm:$0xf]
      %v2400 = vld [vmem:[%s8 + $0x218] sm:$0xf]
      %v2401 = vld [vmem:[%s8 + $0x21c] sm:$0xf]
      %v2402 = vld [vmem:[%s8 + $0x220] sm:$0xf]
      %v2403 = vld [vmem:[%s8 + $0x224] sm:$0xf]
      %v2404 = vld [vmem:[%s8 + $0x228] sm:$0xf]
      %v2405 = vld [vmem:[%s8 + $0x22c] sm:$0xf]
      %v2406 = vld [vmem:[%s8 + $0x230] sm:$0xf]
      %v2407 = vld [vmem:[%s8 + $0x234] sm:$0xf]
      %v2408 = vld [vmem:[%s8 + $0x238] sm:$0xf]
      %v2409 = vld [vmem:[%s8 + $0x23c] sm:$0xf]
      %v2410 = vld [vmem:[%s9] sm:$0x1]
      %v2412 = vlaneseq
      %v2413 = vshrl.u32 %v2412, 7
      %v2414 = vsub.s32 0, %v2413
      %v2415 = vrot.slane %v2410, %v2414
      %v2561 = vunpack.c.l.b16 %v2266
      %v2562 = vunpack.c.l.b16 %v2267
      %v2563 = vunpack.c.l.b16 %v2268
      %v2564 = vunpack.c.l.b16 %v2269
      %v2565 = vunpack.c.l.b16 %v2270
      %v2566 = vunpack.c.l.b16 %v2271
      %v2567 = vunpack.c.l.b16 %v2272
      %v2568 = vunpack.c.l.b16 %v2273
      %v2569 = vunpack.c.l.b16 %v2274
      %v2570 = vunpack.c.l.b16 %v2275
      %v2571 = vunpack.c.l.b16 %v2276
      %v2572 = vunpack.c.l.b16 %v2277
      %v2573 = vunpack.c.l.b16 %v2278
      %v2574 = vunpack.c.l.b16 %v2279
      %v2575 = vunpack.c.l.b16 %v2280
      %v2576 = vunpack.c.l.b16 %v2281
      %v2577 = vunpack.c.l.b16 %v2282
      %v2578 = vunpack.c.l.b16 %v2283
      %v2579 = vunpack.c.l.b16 %v2284
      %v2580 = vunpack.c.l.b16 %v2285
      %v2581 = vunpack.c.l.b16 %v2286
      %v2582 = vunpack.c.l.b16 %v2287
      %v2583 = vunpack.c.l.b16 %v2288
      %v2584 = vunpack.c.l.b16 %v2289
      %v2585 = vunpack.c.l.b16 %v2290
      %v2586 = vunpack.c.l.b16 %v2291
      %v2587 = vunpack.c.l.b16 %v2292
      %v2588 = vunpack.c.l.b16 %v2293
      %v2589 = vunpack.c.l.b16 %v2294
      %v2590 = vunpack.c.l.b16 %v2295
      %v2591 = vunpack.c.l.b16 %v2296
      %v2592 = vunpack.c.l.b16 %v2297
      %v2593 = vunpack.c.l.b16 %v2298
      %v2594 = vunpack.c.l.b16 %v2299
      %v2595 = vunpack.c.l.b16 %v2300
      %v2596 = vunpack.c.l.b16 %v2301
      %v2597 = vunpack.c.l.b16 %v2302
      %v2598 = vunpack.c.l.b16 %v2303
      %v2599 = vunpack.c.l.b16 %v2304
      %v2600 = vunpack.c.l.b16 %v2305
      %v2601 = vunpack.c.l.b16 %v2306
      %v2602 = vunpack.c.l.b16 %v2307
      %v2603 = vunpack.c.l.b16 %v2308
      %v2604 = vunpack.c.l.b16 %v2309
      %v2605 = vunpack.c.l.b16 %v2310
      %v2606 = vunpack.c.l.b16 %v2311
      %v2607 = vunpack.c.l.b16 %v2312
      %v2608 = vunpack.c.l.b16 %v2313
      %v2609 = vunpack.c.l.b16 %v2314
      %v2610 = vunpack.c.l.b16 %v2315
      %v2611 = vunpack.c.l.b16 %v2316
      %v2612 = vunpack.c.l.b16 %v2317
      %v2613 = vunpack.c.l.b16 %v2318
      %v2614 = vunpack.c.l.b16 %v2319
      %v2615 = vunpack.c.l.b16 %v2320
      %v2616 = vunpack.c.l.b16 %v2321
      %v2617 = vunpack.c.l.b16 %v2322
      %v2618 = vunpack.c.l.b16 %v2323
      %v2619 = vunpack.c.l.b16 %v2324
      %v2620 = vunpack.c.l.b16 %v2325
      %v2621 = vunpack.c.l.b16 %v2326
      %v2622 = vunpack.c.l.b16 %v2327
      %v2623 = vunpack.c.l.b16 %v2328
      %v2624 = vunpack.c.l.b16 %v2329
      %v2625 = vunpack.c.l.b16 %v2330
      %v2626 = vunpack.c.l.b16 %v2331
      %v2627 = vunpack.c.l.b16 %v2332
      %v2628 = vunpack.c.l.b16 %v2333
      %v2629 = vunpack.c.l.b16 %v2334
      %v2630 = vunpack.c.l.b16 %v2335
      %v2631 = vunpack.c.l.b16 %v2336
      %v2632 = vunpack.c.l.b16 %v2337
      %v2633 = vunpack.c.l.b16 %v2338
      %v2634 = vunpack.c.l.b16 %v2339
      %v2635 = vunpack.c.l.b16 %v2340
      %v2636 = vunpack.c.l.b16 %v2341
      %v2637 = vunpack.c.l.b16 %v2342
      %v2638 = vunpack.c.l.b16 %v2343
      %v2639 = vunpack.c.l.b16 %v2344
      %v2640 = vunpack.c.l.b16 %v2345
      %v2641 = vunpack.c.l.b16 %v2346
      %v2642 = vunpack.c.l.b16 %v2347
      %v2643 = vunpack.c.l.b16 %v2348
      %v2644 = vunpack.c.l.b16 %v2349
      %v2645 = vunpack.c.l.b16 %v2350
      %v2646 = vunpack.c.l.b16 %v2351
      %v2647 = vunpack.c.l.b16 %v2352
      %v2648 = vunpack.c.l.b16 %v2353
      %v2649 = vunpack.c.l.b16 %v2354
      %v2650 = vunpack.c.l.b16 %v2355
      %v2651 = vunpack.c.l.b16 %v2356
      %v2652 = vunpack.c.l.b16 %v2357
      %v2653 = vunpack.c.l.b16 %v2358
      %v2654 = vunpack.c.l.b16 %v2359
      %v2655 = vunpack.c.l.b16 %v2360
      %v2656 = vunpack.c.l.b16 %v2361
      %v2657 = vunpack.c.l.b16 %v2362
      %v2658 = vunpack.c.l.b16 %v2363
      %v2659 = vunpack.c.l.b16 %v2364
      %v2660 = vunpack.c.l.b16 %v2365
      %v2661 = vunpack.c.l.b16 %v2366
      %v2662 = vunpack.c.l.b16 %v2367
      %v2663 = vunpack.c.l.b16 %v2368
      %v2664 = vunpack.c.l.b16 %v2369
      %v2665 = vunpack.c.l.b16 %v2370
      %v2666 = vunpack.c.l.b16 %v2371
      %v2667 = vunpack.c.l.b16 %v2372
      %v2668 = vunpack.c.l.b16 %v2373
      %v2669 = vunpack.c.l.b16 %v2374
      %v2670 = vunpack.c.l.b16 %v2375
      %v2671 = vunpack.c.l.b16 %v2376
      %v2672 = vunpack.c.l.b16 %v2377
      %v2673 = vunpack.c.l.b16 %v2378
      %v2674 = vunpack.c.l.b16 %v2379
      %v2675 = vunpack.c.l.b16 %v2380
      %v2676 = vunpack.c.l.b16 %v2381
      %v2677 = vunpack.c.l.b16 %v2382
      %v2678 = vunpack.c.l.b16 %v2383
      %v2679 = vunpack.c.l.b16 %v2384
      %v2680 = vunpack.c.l.b16 %v2385
      %v2681 = vunpack.c.l.b16 %v2386
      %v2682 = vunpack.c.l.b16 %v2387
      %v2683 = vunpack.c.l.b16 %v2388
      %v2684 = vunpack.c.l.b16 %v2389
      %v2685 = vunpack.c.l.b16 %v2390
      %v2686 = vunpack.c.l.b16 %v2391
      %v2687 = vunpack.c.l.b16 %v2392
      %v2688 = vunpack.c.l.b16 %v2393
      %v2689 = vunpack.c.l.b16 %v2394
      %v2690 = vunpack.c.l.b16 %v2395
      %v2691 = vunpack.c.l.b16 %v2396
      %v2692 = vunpack.c.l.b16 %v2397
      %v2693 = vunpack.c.l.b16 %v2398
      %v2694 = vunpack.c.l.b16 %v2399
      %v2695 = vunpack.c.l.b16 %v2400
      %v2696 = vunpack.c.l.b16 %v2401
      %v2697 = vunpack.c.l.b16 %v2402
      %v2698 = vunpack.c.l.b16 %v2403
      %v2699 = vunpack.c.l.b16 %v2404
      %v2700 = vunpack.c.l.b16 %v2405
      %v2701 = vunpack.c.l.b16 %v2406
      %v2702 = vunpack.c.l.b16 %v2407
      %v2703 = vunpack.c.l.b16 %v2408
      %v2704 = vunpack.c.l.b16 %v2409
      %v2705 = vpack.c.b16 %v2562, %v2561
      %v2706 = vpack.c.b16 %v2564, %v2563
      %v2707 = vpack.c.b16 %v2566, %v2565
      %v2708 = vpack.c.b16 %v2568, %v2567
      %v2709 = vpack.c.b16 %v2570, %v2569
      %v2710 = vpack.c.b16 %v2572, %v2571
      %v2711 = vpack.c.b16 %v2574, %v2573
      %v2712 = vpack.c.b16 %v2576, %v2575
      %v2713 = vpack.c.b16 %v2578, %v2577
      %v2714 = vpack.c.b16 %v2580, %v2579
      %v2715 = vpack.c.b16 %v2582, %v2581
      %v2716 = vpack.c.b16 %v2584, %v2583
      %v2717 = vpack.c.b16 %v2586, %v2585
      %v2718 = vpack.c.b16 %v2588, %v2587
      %v2719 = vpack.c.b16 %v2590, %v2589
      %v2720 = vpack.c.b16 %v2592, %v2591
      %v2721 = vpack.c.b16 %v2594, %v2593
      %v2722 = vpack.c.b16 %v2596, %v2595
      %v2723 = vpack.c.b16 %v2598, %v2597
      %v2724 = vpack.c.b16 %v2600, %v2599
      %v2725 = vpack.c.b16 %v2602, %v2601
      %v2726 = vpack.c.b16 %v2604, %v2603
      %v2727 = vpack.c.b16 %v2606, %v2605
      %v2728 = vpack.c.b16 %v2608, %v2607
      %v2729 = vpack.c.b16 %v2610, %v2609
      %v2730 = vpack.c.b16 %v2612, %v2611
      %v2731 = vpack.c.b16 %v2614, %v2613
      %v2732 = vpack.c.b16 %v2616, %v2615
      %v2733 = vpack.c.b16 %v2618, %v2617
      %v2734 = vpack.c.b16 %v2620, %v2619
      %v2735 = vpack.c.b16 %v2622, %v2621
      %v2736 = vpack.c.b16 %v2624, %v2623
      %v2737 = vpack.c.b16 %v2626, %v2625
      %v2738 = vpack.c.b16 %v2628, %v2627
      %v2739 = vpack.c.b16 %v2630, %v2629
      %v2740 = vpack.c.b16 %v2632, %v2631
      %v2741 = vpack.c.b16 %v2634, %v2633
      %v2742 = vpack.c.b16 %v2636, %v2635
      %v2743 = vpack.c.b16 %v2638, %v2637
      %v2744 = vpack.c.b16 %v2640, %v2639
      %v2745 = vpack.c.b16 %v2642, %v2641
      %v2746 = vpack.c.b16 %v2644, %v2643
      %v2747 = vpack.c.b16 %v2646, %v2645
      %v2748 = vpack.c.b16 %v2648, %v2647
      %v2749 = vpack.c.b16 %v2650, %v2649
      %v2750 = vpack.c.b16 %v2652, %v2651
      %v2751 = vpack.c.b16 %v2654, %v2653
      %v2752 = vpack.c.b16 %v2656, %v2655
      %v2753 = vpack.c.b16 %v2658, %v2657
      %v2754 = vpack.c.b16 %v2660, %v2659
      %v2755 = vpack.c.b16 %v2662, %v2661
      %v2756 = vpack.c.b16 %v2664, %v2663
      %v2757 = vpack.c.b16 %v2666, %v2665
      %v2758 = vpack.c.b16 %v2668, %v2667
      %v2759 = vpack.c.b16 %v2670, %v2669
      %v2760 = vpack.c.b16 %v2672, %v2671
      %v2761 = vpack.c.b16 %v2674, %v2673
      %v2762 = vpack.c.b16 %v2676, %v2675
      %v2763 = vpack.c.b16 %v2678, %v2677
      %v2764 = vpack.c.b16 %v2680, %v2679
      %v2765 = vpack.c.b16 %v2682, %v2681
      %v2766 = vpack.c.b16 %v2684, %v2683
      %v2767 = vpack.c.b16 %v2686, %v2685
      %v2768 = vpack.c.b16 %v2688, %v2687
      %v2769 = vpack.c.b16 %v2690, %v2689
      %v2770 = vpack.c.b16 %v2692, %v2691
      %v2771 = vpack.c.b16 %v2694, %v2693
      %v2772 = vpack.c.b16 %v2696, %v2695
      %v2773 = vpack.c.b16 %v2698, %v2697
      %v2774 = vpack.c.b16 %v2700, %v2699
      %v2775 = vpack.c.b16 %v2702, %v2701
      %v2776 = vpack.c.b16 %v2704, %v2703
      %2849 = vmatprep.subr.bf16.mxu0 0
      %2850 = vmatpush1.bf16.msra.mxu0 %v2705
      %2851 = vmatprep.subr.bf16.mxu0 0
      %2852 = vmatpush1.bf16.msra.mxu0 %v2706
      %2853 = vmatprep.subr.bf16.mxu0 0
      %2854 = vmatpush1.bf16.msra.mxu0 %v2707
      %2855 = vmatprep.subr.bf16.mxu0 0
      %2856 = vmatpush1.bf16.msra.mxu0 %v2708
      %2857 = vmatprep.subr.bf16.mxu0 0
      %2858 = vmatpush1.bf16.msra.mxu0 %v2709
      %2859 = vmatprep.subr.bf16.mxu0 0
      %2860 = vmatpush1.bf16.msra.mxu0 %v2710
      %2861 = vmatprep.subr.bf16.mxu0 0
      %2862 = vmatpush1.bf16.msra.mxu0 %v2711
      %2863 = vmatprep.subr.bf16.mxu0 0
      %2864 = vmatpush1.bf16.msra.mxu0 %v2712
      %2865 = vmatprep.subr.bf16.mxu0 0
      %2866 = vmatpush1.bf16.msra.mxu0 %v2713
      %2867 = vmatprep.subr.bf16.mxu0 0
      %2868 = vmatpush1.bf16.msra.mxu0 %v2714
      %2869 = vmatprep.subr.bf16.mxu0 0
      %2870 = vmatpush1.bf16.msra.mxu0 %v2715
      %2871 = vmatprep.subr.bf16.mxu0 0
      %2872 = vmatpush1.bf16.msra.mxu0 %v2716
      %2873 = vmatprep.subr.bf16.mxu0 0
      %2874 = vmatpush1.bf16.msra.mxu0 %v2717
      %2875 = vmatprep.subr.bf16.mxu0 0
      %2876 = vmatpush1.bf16.msra.mxu0 %v2718
      %2877 = vmatprep.subr.bf16.mxu0 0
      %2878 = vmatpush1.bf16.msra.mxu0 %v2719
      %2879 = vmatprep.subr.bf16.mxu0 0
      %2880 = vmatpush1.bf16.msra.mxu0 %v2720
      %2881 = vmatprep.mubr.bf16.mxu0 %v2159
      %2882 = vmatmul.mubr.bf16.gmra.mrb[0].mxu0 %v2158
      %v2883 = vpop.f32.mrb[0].mxu0
      %v2884 = vadd.f32 %v2415, %v2883
      %v2885 = vpop.f32.mrb[0].mxu0
      %v2886 = vpop.f32.mrb[0].mxu0
      %v2887 = vadd.f32 %v2415, %v2886
      %v2888 = vpop.f32.mrb[0].mxu0
      %2889 = vmatprep.mubr.bf16.mxu0 %v2168
      %2890 = vmatmul.mubr.bf16.gmra.mrb[0].mxu0 %v2167
      %v2891 = vpop.f32.mrb[0].mxu0
      %v2892 = vadd.f32 %v2415, %v2891
      %v2893 = vpop.f32.mrb[0].mxu0
      %v2894 = vpop.f32.mrb[0].mxu0
      %v2895 = vadd.f32 %v2415, %v2894
      %v2896 = vpop.f32.mrb[0].mxu0
      %2897 = vmatprep.mubr.bf16.mxu0 %v2177
      %2898 = vmatmul.mubr.bf16.gmra.mrb[0].mxu0 %v2176
      %v2899 = vpop.f32.mrb[0].mxu0
      %v2900 = vadd.f32 %v2415, %v2899
      %v2901 = vpop.f32.mrb[0].mxu0
      %v2902 = vpop.f32.mrb[0].mxu0
      %v2903 = vadd.f32 %v2415, %v2902
      %v2904 = vpop.f32.mrb[0].mxu0
      %2905 = vmatprep.mubr.bf16.mxu0 %v2186
      %2906 = vmatmul.mubr.bf16.gmra.mrb[0].mxu0 %v2185
      %v2907 = vpop.f32.mrb[0].mxu0
      %v2908 = vadd.f32 %v2415, %v2907
      %v2909 = vpop.f32.mrb[0].mxu0
      %v2910 = vpop.f32.mrb[0].mxu0
      %v2911 = vadd.f32 %v2415, %v2910
      %v2912 = vpop.f32.mrb[0].mxu0
      %2913 = vmatprep.mubr.bf16.mxu0 %v2195
      %2914 = vmatmul.mubr.bf16.gmra.mrb[0].mxu0 %v2194
      %v2915 = vpop.f32.mrb[0].mxu0
      %v2916 = vadd.f32 %v2415, %v2915
      %v2917 = vpop.f32.mrb[0].mxu0
      %v2918 = vpop.f32.mrb[0].mxu0
      %v2919 = vadd.f32 %v2415, %v2918
      %v2920 = vpop.f32.mrb[0].mxu0
      %2921 = vmatprep.mubr.bf16.mxu0 %v2204
      %2922 = vmatmul.mubr.bf16.gmra.mrb[0].mxu0 %v2203
      %v2923 = vpop.f32.mrb[0].mxu0
      %v2924 = vadd.f32 %v2415, %v2923
      %v2925 = vpop.f32.mrb[0].mxu0
      %v2926 = vpop.f32.mrb[0].mxu0
      %v2927 = vadd.f32 %v2415, %v2926
      %v2928 = vpop.f32.mrb[0].mxu0
      %2929 = vmatprep.mubr.bf16.mxu0 %v2213
      %2930 = vmatmul.mubr.bf16.gmra.mrb[0].mxu0 %v2212
      %v2931 = vpop.f32.mrb[0].mxu0
      %v2932 = vadd.f32 %v2415, %v2931
      %v2933 = vpop.f32.mrb[0].mxu0
      %v2934 = vpop.f32.mrb[0].mxu0
      %v2935 = vadd.f32 %v2415, %v2934
      %v2936 = vpop.f32.mrb[0].mxu0
      %2937 = vmatprep.mubr.bf16.mxu0 %v2222
      %2938 = vmatmul.mubr.bf16.gmra.mrb[0].mxu0 %v2221
      %v2939 = vpop.f32.mrb[0].mxu0
      %v2940 = vadd.f32 %v2415, %v2939
      %v2941 = vpop.f32.mrb[0].mxu0
      %v2942 = vpop.f32.mrb[0].mxu0
      %v2943 = vadd.f32 %v2415, %v2942
      %v2944 = vpop.f32.mrb[0].mxu0
      %2945 = vmatprep.mubr.bf16.mxu0 %v2231
      %2946 = vmatmul.mubr.bf16.gmra.mrb[0].mxu0 %v2230
      %v2947 = vpop.f32.mrb[0].mxu0
      %v2948 = vadd.f32 %v2415, %v2947
      %v2949 = vpop.f32.mrb[0].mxu0
      %v2950 = vpop.f32.mrb[0].mxu0
      %v2951 = vadd.f32 %v2415, %v2950
      %v2952 = vpop.f32.mrb[0].mxu0
      %2953 = vmatprep.mubr.bf16.mxu0 %v2240
      %2954 = vmatmul.mubr.bf16.gmra.mrb[0].mxu0 %v2239
      %v2955 = vpop.f32.mrb[0].mxu0
      %v2956 = vadd.f32 %v2415, %v2955
      %v2957 = vpop.f32.mrb[0].mxu0
      %v2958 = vpop.f32.mrb[0].mxu0
      %v2959 = vadd.f32 %v2415, %v2958
      %v2960 = vpop.f32.mrb[0].mxu0
      %2961 = vmatprep.mubr.bf16.mxu0 %v2249
      %2962 = vmatmul.mubr.bf16.gmra.mrb[0].mxu0 %v2248
      %v2963 = vpop.f32.mrb[0].mxu0
      %v2964 = vadd.f32 %v2415, %v2963
      %v2965 = vpop.f32.mrb[0].mxu0
      %v2966 = vpop.f32.mrb[0].mxu0
      %v2967 = vadd.f32 %v2415, %v2966
      %v2968 = vpop.f32.mrb[0].mxu0
      %2969 = vmatprep.mubr.bf16.mxu0 %v2258
      %2970 = vmatmul.mubr.bf16.gmra.mrb[0].mxu0 %v2257
      %v2971 = vpop.f32.mrb[0].mxu0
      %v2972 = vadd.f32 %v2415, %v2971
      %v2973 = vpop.f32.mrb[0].mxu0
      %v2974 = vpop.f32.mrb[0].mxu0
      %v2975 = vadd.f32 %v2415, %v2974
      %v2976 = vpop.f32.mrb[0].mxu0
      %2977 = vdwg.mxu0
      %2978 = vmatprep.subr.bf16.mxu0 0
      %2979 = vmatpush1.bf16.msra.mxu0 %v2721
      %2980 = vmatprep.subr.bf16.mxu0 0
      %2981 = vmatpush1.bf16.msra.mxu0 %v2722
      %2982 = vmatprep.subr.bf16.mxu0 0
      %2983 = vmatpush1.bf16.msra.mxu0 %v2723
      %2984 = vmatprep.subr.bf16.mxu0 0
      %2985 = vmatpush1.bf16.msra.mxu0 %v2724
      %2986 = vmatprep.subr.bf16.mxu0 0
      %2987 = vmatpush1.bf16.msra.mxu0 %v2725
      %2988 = vmatprep.subr.bf16.mxu0 0
      %2989 = vmatpush1.bf16.msra.mxu0 %v2726
      %2990 = vmatprep.subr.bf16.mxu0 0
      %2991 = vmatpush1.bf16.msra.mxu0 %v2727
      %2992 = vmatprep.subr.bf16.mxu0 0
      %2993 = vmatpush1.bf16.msra.mxu0 %v2728
      %2994 = vmatprep.subr.bf16.mxu0 0
      %2995 = vmatpush1.bf16.msra.mxu0 %v2729
      %2996 = vmatprep.subr.bf16.mxu0 0
      %2997 = vmatpush1.bf16.msra.mxu0 %v2730
      %2998 = vmatprep.subr.bf16.mxu0 0
      %2999 = vmatpush1.bf16.msra.mxu0 %v2731
      %3000 = vmatprep.subr.bf16.mxu0 0
      %3001 = vmatpush1.bf16.msra.mxu0 %v2732
      %3002 = vmatprep.subr.bf16.mxu0 0
      %3003 = vmatpush1.bf16.msra.mxu0 %v2733
      %3004 = vmatprep.subr.bf16.mxu0 0
      %3005 = vmatpush1.bf16.msra.mxu0 %v2734
      %3006 = vmatprep.subr.bf16.mxu0 0
      %3007 = vmatpush1.bf16.msra.mxu0 %v2735
      %3008 = vmatprep.subr.bf16.mxu0 0
      %3009 = vmatpush1.bf16.msra.mxu0 %v2736
      %3010 = vmatprep.mubr.bf16.mxu0 %v2161
      %3011 = vmatmul.mubr.bf16.gmra.mrb[0].mxu0 %v2160
      %v3012 = vpop.f32.mrb[0].mxu0
      %v3013 = vadd.f32 %v2884, %v3012
      %v3014 = vpop.f32.mrb[0].mxu0
      %v3015 = vpop.f32.mrb[0].mxu0
      %v3016 = vadd.f32 %v2887, %v3015
      %v3017 = vpop.f32.mrb[0].mxu0
      %3018 = vmatprep.mubr.bf16.mxu0 %v2170
      %3019 = vmatmul.mubr.bf16.gmra.mrb[0].mxu0 %v2169
      %v3020 = vpop.f32.mrb[0].mxu0
      %v3021 = vadd.f32 %v2892, %v3020
      %v3022 = vpop.f32.mrb[0].mxu0
      %v3023 = vpop.f32.mrb[0].mxu0
      %v3024 = vadd.f32 %v2895, %v3023
      %v3025 = vpop.f32.mrb[0].mxu0
      %3026 = vmatprep.mubr.bf16.mxu0 %v2179
      %3027 = vmatmul.mubr.bf16.gmra.mrb[0].mxu0 %v2178
      %v3028 = vpop.f32.mrb[0].mxu0
      %v3029 = vadd.f32 %v2900, %v3028
      %v3030 = vpop.f32.mrb[0].mxu0
      %v3031 = vpop.f32.mrb[0].mxu0
      %v3032 = vadd.f32 %v2903, %v3031
      %v3033 = vpop.f32.mrb[0].mxu0
      %3034 = vmatprep.mubr.bf16.mxu0 %v2188
      %3035 = vmatmul.mubr.bf16.gmra.mrb[0].mxu0 %v2187
      %v3036 = vpop.f32.mrb[0].mxu0
      %v3037 = vadd.f32 %v2908, %v3036
      %v3038 = vpop.f32.mrb[0].mxu0
      %v3039 = vpop.f32.mrb[0].mxu0
      %v3040 = vadd.f32 %v2911, %v3039
      %v3041 = vpop.f32.mrb[0].mxu0
      %3042 = vmatprep.mubr.bf16.mxu0 %v2197
      %3043 = vmatmul.mubr.bf16.gmra.mrb[0].mxu0 %v2196
      %v3044 = vpop.f32.mrb[0].mxu0
      %v3045 = vadd.f32 %v2916, %v3044
      %v3046 = vpop.f32.mrb[0].mxu0
      %v3047 = vpop.f32.mrb[0].mxu0
      %v3048 = vadd.f32 %v2919, %v3047
      %v3049 = vpop.f32.mrb[0].mxu0
      %3050 = vmatprep.mubr.bf16.mxu0 %v2206
      %3051 = vmatmul.mubr.bf16.gmra.mrb[0].mxu0 %v2205
      %v3052 = vpop.f32.mrb[0].mxu0
      %v3053 = vadd.f32 %v2924, %v3052
      %v3054 = vpop.f32.mrb[0].mxu0
      %v3055 = vpop.f32.mrb[0].mxu0
      %v3056 = vadd.f32 %v2927, %v3055
      %v3057 = vpop.f32.mrb[0].mxu0
      %3058 = vmatprep.mubr.bf16.mxu0 %v2215
      %3059 = vmatmul.mubr.bf16.gmra.mrb[0].mxu0 %v2214
      %v3060 = vpop.f32.mrb[0].mxu0
      %v3061 = vadd.f32 %v2932, %v3060
      %v3062 = vpop.f32.mrb[0].mxu0
      %v3063 = vpop.f32.mrb[0].mxu0
      %v3064 = vadd.f32 %v2935, %v3063
      %v3065 = vpop.f32.mrb[0].mxu0
      %3066 = vmatprep.mubr.bf16.mxu0 %v2224
      %3067 = vmatmul.mubr.bf16.gmra.mrb[0].mxu0 %v2223
      %v3068 = vpop.f32.mrb[0].mxu0
      %v3069 = vadd.f32 %v2940, %v3068
      %v3070 = vpop.f32.mrb[0].mxu0
      %v3071 = vpop.f32.mrb[0].mxu0
      %v3072 = vadd.f32 %v2943, %v3071
      %v3073 = vpop.f32.mrb[0].mxu0
      %3074 = vmatprep.mubr.bf16.mxu0 %v2233
      %3075 = vmatmul.mubr.bf16.gmra.mrb[0].mxu0 %v2232
      %v3076 = vpop.f32.mrb[0].mxu0
      %v3077 = vadd.f32 %v2948, %v3076
      %v3078 = vpop.f32.mrb[0].mxu0
      %v3079 = vpop.f32.mrb[0].mxu0
      %v3080 = vadd.f32 %v2951, %v3079
      %v3081 = vpop.f32.mrb[0].mxu0
      %3082 = vmatprep.mubr.bf16.mxu0 %v2242
      %3083 = vmatmul.mubr.bf16.gmra.mrb[0].mxu0 %v2241
      %v3084 = vpop.f32.mrb[0].mxu0
      %v3085 = vadd.f32 %v2956, %v3084
      %v3086 = vpop.f32.mrb[0].mxu0
      %v3087 = vpop.f32.mrb[0].mxu0
      %v3088 = vadd.f32 %v2959, %v3087
      %v3089 = vpop.f32.mrb[0].mxu0
      %3090 = vmatprep.mubr.bf16.mxu0 %v2251
      %3091 = vmatmul.mubr.bf16.gmra.mrb[0].mxu0 %v2250
      %v3092 = vpop.f32.mrb[0].mxu0
      %v3093 = vadd.f32 %v2964, %v3092
      %v3094 = vpop.f32.mrb[0].mxu0
      %v3095 = vpop.f32.mrb[0].mxu0
      %v3096 = vadd.f32 %v2967, %v3095
      %v3097 = vpop.f32.mrb[0].mxu0
      %3098 = vmatprep.mubr.bf16.mxu0 %v2260
      %3099 = vmatmul.mubr.bf16.gmra.mrb[0].mxu0 %v2259
      %v3100 = vpop.f32.mrb[0].mxu0
      %v3101 = vadd.f32 %v2972, %v3100
      %v3102 = vpop.f32.mrb[0].mxu0
      %v3103 = vpop.f32.mrb[0].mxu0
      %v3104 = vadd.f32 %v2975, %v3103
      %v3105 = vpop.f32.mrb[0].mxu0
      %3106 = vdwg.mxu0
      %3107 = vmatprep.subr.bf16.mxu0 0
      %3108 = vmatpush1.bf16.msra.mxu0 %v2737
      %3109 = vmatprep.subr.bf16.mxu0 0
      %3110 = vmatpush1.bf16.msra.mxu0 %v2738
      %3111 = vmatprep.subr.bf16.mxu0 0
      %3112 = vmatpush1.bf16.msra.mxu0 %v2739
      %3113 = vmatprep.subr.bf16.mxu0 0
      %3114 = vmatpush1.bf16.msra.mxu0 %v2740
      %3115 = vmatprep.subr.bf16.mxu0 0
      %3116 = vmatpush1.bf16.msra.mxu0 %v2741
      %3117 = vmatprep.subr.bf16.mxu0 0
      %3118 = vmatpush1.bf16.msra.mxu0 %v2742
      %3119 = vmatprep.subr.bf16.mxu0 0
      %3120 = vmatpush1.bf16.msra.mxu0 %v2743
      %3121 = vmatprep.subr.bf16.mxu0 0
      %3122 = vmatpush1.bf16.msra.mxu0 %v2744
      %3123 = vmatprep.subr.bf16.mxu0 0
      %3124 = vmatpush1.bf16.msra.mxu0 %v2745
      %3125 = vmatprep.subr.bf16.mxu0 0
      %3126 = vmatpush1.bf16.msra.mxu0 %v2746
      %3127 = vmatprep.subr.bf16.mxu0 0
      %3128 = vmatpush1.bf16.msra.mxu0 %v2747
      %3129 = vmatprep.subr.bf16.mxu0 0
      %3130 = vmatpush1.bf16.msra.mxu0 %v2748
      %3131 = vmatprep.subr.bf16.mxu0 0
      %3132 = vmatpush1.bf16.msra.mxu0 %v2749
      %3133 = vmatprep.subr.bf16.mxu0 0
      %3134 = vmatpush1.bf16.msra.mxu0 %v2750
      %3135 = vmatprep.subr.bf16.mxu0 0
      %3136 = vmatpush1.bf16.msra.mxu0 %v2751
      %3137 = vmatprep.subr.bf16.mxu0 0
      %3138 = vmatpush1.bf16.msra.mxu0 %v2752
      %3139 = vmatprep.mubr.bf16.mxu0 %v2163
      %3140 = vmatmul.mubr.bf16.gmra.mrb[0].mxu0 %v2162
      %v3141 = vpop.f32.mrb[0].mxu0
      %v3142 = vadd.f32 %v3013, %v3141
      %v3143 = vpop.f32.mrb[0].mxu0
      %v3144 = vpop.f32.mrb[0].mxu0
      %v3145 = vadd.f32 %v3016, %v3144
      %v3146 = vpop.f32.mrb[0].mxu0
      %3147 = vmatprep.mubr.bf16.mxu0 %v2172
      %3148 = vmatmul.mubr.bf16.gmra.mrb[0].mxu0 %v2171
      %v3149 = vpop.f32.mrb[0].mxu0
      %v3150 = vadd.f32 %v3021, %v3149
      %v3151 = vpop.f32.mrb[0].mxu0
      %v3152 = vpop.f32.mrb[0].mxu0
      %v3153 = vadd.f32 %v3024, %v3152
      %v3154 = vpop.f32.mrb[0].mxu0
      %3155 = vmatprep.mubr.bf16.mxu0 %v2181
      %3156 = vmatmul.mubr.bf16.gmra.mrb[0].mxu0 %v2180
      %v3157 = vpop.f32.mrb[0].mxu0
      %v3158 = vadd.f32 %v3029, %v3157
      %v3159 = vpop.f32.mrb[0].mxu0
      %v3160 = vpop.f32.mrb[0].mxu0
      %v3161 = vadd.f32 %v3032, %v3160
      %v3162 = vpop.f32.mrb[0].mxu0
      %3163 = vmatprep.mubr.bf16.mxu0 %v2190
      %3164 = vmatmul.mubr.bf16.gmra.mrb[0].mxu0 %v2189
      %v3165 = vpop.f32.mrb[0].mxu0
      %v3166 = vadd.f32 %v3037, %v3165
      %v3167 = vpop.f32.mrb[0].mxu0
      %v3168 = vpop.f32.mrb[0].mxu0
      %v3169 = vadd.f32 %v3040, %v3168
      %v3170 = vpop.f32.mrb[0].mxu0
      %3171 = vmatprep.mubr.bf16.mxu0 %v2199
      %3172 = vmatmul.mubr.bf16.gmra.mrb[0].mxu0 %v2198
      %v3173 = vpop.f32.mrb[0].mxu0
      %v3174 = vadd.f32 %v3045, %v3173
      %v3175 = vpop.f32.mrb[0].mxu0
      %v3176 = vpop.f32.mrb[0].mxu0
      %v3177 = vadd.f32 %v3048, %v3176
      %v3178 = vpop.f32.mrb[0].mxu0
      %3179 = vmatprep.mubr.bf16.mxu0 %v2208
      %3180 = vmatmul.mubr.bf16.gmra.mrb[0].mxu0 %v2207
      %v3181 = vpop.f32.mrb[0].mxu0
      %v3182 = vadd.f32 %v3053, %v3181
      %v3183 = vpop.f32.mrb[0].mxu0
      %v3184 = vpop.f32.mrb[0].mxu0
      %v3185 = vadd.f32 %v3056, %v3184
      %v3186 = vpop.f32.mrb[0].mxu0
      %3187 = vmatprep.mubr.bf16.mxu0 %v2217
      %3188 = vmatmul.mubr.bf16.gmra.mrb[0].mxu0 %v2216
      %v3189 = vpop.f32.mrb[0].mxu0
      %v3190 = vadd.f32 %v3061, %v3189
      %v3191 = vpop.f32.mrb[0].mxu0
      %v3192 = vpop.f32.mrb[0].mxu0
      %v3193 = vadd.f32 %v3064, %v3192
      %v3194 = vpop.f32.mrb[0].mxu0
      %3195 = vmatprep.mubr.bf16.mxu0 %v2226
      %3196 = vmatmul.mubr.bf16.gmra.mrb[0].mxu0 %v2225
      %v3197 = vpop.f32.mrb[0].mxu0
      %v3198 = vadd.f32 %v3069, %v3197
      %v3199 = vpop.f32.mrb[0].mxu0
      %v3200 = vpop.f32.mrb[0].mxu0
      %v3201 = vadd.f32 %v3072, %v3200
      %v3202 = vpop.f32.mrb[0].mxu0
      %3203 = vmatprep.mubr.bf16.mxu0 %v2235
      %3204 = vmatmul.mubr.bf16.gmra.mrb[0].mxu0 %v2234
      %v3205 = vpop.f32.mrb[0].mxu0
      %v3206 = vadd.f32 %v3077, %v3205
      %v3207 = vpop.f32.mrb[0].mxu0
      %v3208 = vpop.f32.mrb[0].mxu0
      %v3209 = vadd.f32 %v3080, %v3208
      %v3210 = vpop.f32.mrb[0].mxu0
      %3211 = vmatprep.mubr.bf16.mxu0 %v2244
      %3212 = vmatmul.mubr.bf16.gmra.mrb[0].mxu0 %v2243
      %v3213 = vpop.f32.mrb[0].mxu0
      %v3214 = vadd.f32 %v3085, %v3213
      %v3215 = vpop.f32.mrb[0].mxu0
      %v3216 = vpop.f32.mrb[0].mxu0
      %v3217 = vadd.f32 %v3088, %v3216
      %v3218 = vpop.f32.mrb[0].mxu0
      %3219 = vmatprep.mubr.bf16.mxu0 %v2253
      %3220 = vmatmul.mubr.bf16.gmra.mrb[0].mxu0 %v2252
      %v3221 = vpop.f32.mrb[0].mxu0
      %v3222 = vadd.f32 %v3093, %v3221
      %v3223 = vpop.f32.mrb[0].mxu0
      %v3224 = vpop.f32.mrb[0].mxu0
      %v3225 = vadd.f32 %v3096, %v3224
      %v3226 = vpop.f32.mrb[0].mxu0
      %3227 = vmatprep.mubr.bf16.mxu0 %v2262
      %3228 = vmatmul.mubr.bf16.gmra.mrb[0].mxu0 %v2261
      %v3229 = vpop.f32.mrb[0].mxu0
      %v3230 = vadd.f32 %v3101, %v3229
      %v3231 = vpop.f32.mrb[0].mxu0
      %v3232 = vpop.f32.mrb[0].mxu0
      %v3233 = vadd.f32 %v3104, %v3232
      %v3234 = vpop.f32.mrb[0].mxu0
      %3235 = vdwg.mxu0
      %3236 = vmatprep.subr.bf16.mxu0 0
      %3237 = vmatpush1.bf16.msra.mxu0 %v2753
      %3238 = vmatprep.subr.bf16.mxu0 0
      %3239 = vmatpush1.bf16.msra.mxu0 %v2754
      %3240 = vmatprep.subr.bf16.mxu0 0
      %3241 = vmatpush1.bf16.msra.mxu0 %v2755
      %3242 = vmatprep.subr.bf16.mxu0 0
      %3243 = vmatpush1.bf16.msra.mxu0 %v2756
      %3244 = vmatprep.subr.bf16.mxu0 0
      %3245 = vmatpush1.bf16.msra.mxu0 %v2757
      %3246 = vmatprep.subr.bf16.mxu0 0
      %3247 = vmatpush1.bf16.msra.mxu0 %v2758
      %3248 = vmatprep.subr.bf16.mxu0 0
      %3249 = vmatpush1.bf16.msra.mxu0 %v2759
      %3250 = vmatprep.subr.bf16.mxu0 0
      %3251 = vmatpush1.bf16.msra.mxu0 %v2760
      %3252 = vmatprep.subr.bf16.mxu0 0
      %3253 = vmatpush1.bf16.msra.mxu0 %v2761
      %3254 = vmatprep.subr.bf16.mxu0 0
      %3255 = vmatpush1.bf16.msra.mxu0 %v2762
      %3256 = vmatprep.subr.bf16.mxu0 0
      %3257 = vmatpush1.bf16.msra.mxu0 %v2763
      %3258 = vmatprep.subr.bf16.mxu0 0
      %3259 = vmatpush1.bf16.msra.mxu0 %v2764
      %3260 = vmatprep.subr.bf16.mxu0 0
      %3261 = vmatpush1.bf16.msra.mxu0 %v2765
      %3262 = vmatprep.subr.bf16.mxu0 0
      %3263 = vmatpush1.bf16.msra.mxu0 %v2766
      %3264 = vmatprep.subr.bf16.mxu0 0
      %3265 = vmatpush1.bf16.msra.mxu0 %v2767
      %3266 = vmatprep.subr.bf16.mxu0 0
      %3267 = vmatpush1.bf16.msra.mxu0 %v2768
      %3268 = vmatprep.mubr.bf16.mxu0 %v2165
      %3269 = vmatmul.mubr.bf16.gmra.mrb[0].mxu0 %v2164
      %v3270 = vpop.f32.mrb[0].mxu0
      %v3271 = vadd.f32 %v3142, %v3270
      %v3272 = vpop.f32.mrb[0].mxu0
      %v3273 = vpop.f32.mrb[0].mxu0
      %v3274 = vadd.f32 %v3145, %v3273
      %v3275 = vpop.f32.mrb[0].mxu0
      %3276 = vmatprep.mubr.bf16.mxu0 %v2174
      %3277 = vmatmul.mubr.bf16.gmra.mrb[0].mxu0 %v2173
      %v3278 = vpop.f32.mrb[0].mxu0
      %v3279 = vadd.f32 %v3150, %v3278
      %v3280 = vpop.f32.mrb[0].mxu0
      %v3281 = vpop.f32.mrb[0].mxu0
      %v3282 = vadd.f32 %v3153, %v3281
      %v3283 = vpop.f32.mrb[0].mxu0
      %3284 = vmatprep.mubr.bf16.mxu0 %v2183
      %3285 = vmatmul.mubr.bf16.gmra.mrb[0].mxu0 %v2182
      %v3286 = vpop.f32.mrb[0].mxu0
      %v3287 = vadd.f32 %v3158, %v3286
      %v3288 = vpop.f32.mrb[0].mxu0
      %v3289 = vpop.f32.mrb[0].mxu0
      %v3290 = vadd.f32 %v3161, %v3289
      %v3291 = vpop.f32.mrb[0].mxu0
      %3292 = vmatprep.mubr.bf16.mxu0 %v2192
      %3293 = vmatmul.mubr.bf16.gmra.mrb[0].mxu0 %v2191
      %v3294 = vpop.f32.mrb[0].mxu0
      %v3295 = vadd.f32 %v3166, %v3294
      %v3296 = vpop.f32.mrb[0].mxu0
      %v3297 = vpop.f32.mrb[0].mxu0
      %v3298 = vadd.f32 %v3169, %v3297
      %v3299 = vpop.f32.mrb[0].mxu0
      %3300 = vmatprep.mubr.bf16.mxu0 %v2201
      %3301 = vmatmul.mubr.bf16.gmra.mrb[0].mxu0 %v2200
      %v3302 = vpop.f32.mrb[0].mxu0
      %v3303 = vadd.f32 %v3174, %v3302
      %v3304 = vpop.f32.mrb[0].mxu0
      %v3305 = vpop.f32.mrb[0].mxu0
      %v3306 = vadd.f32 %v3177, %v3305
      %v3307 = vpop.f32.mrb[0].mxu0
      %3308 = vmatprep.mubr.bf16.mxu0 %v2210
      %3309 = vmatmul.mubr.bf16.gmra.mrb[0].mxu0 %v2209
      %v3310 = vpop.f32.mrb[0].mxu0
      %v3311 = vadd.f32 %v3182, %v3310
      %v3312 = vpop.f32.mrb[0].mxu0
      %v3313 = vpop.f32.mrb[0].mxu0
      %v3314 = vadd.f32 %v3185, %v3313
      %v3315 = vpop.f32.mrb[0].mxu0
      %3316 = vmatprep.mubr.bf16.mxu0 %v2219
      %3317 = vmatmul.mubr.bf16.gmra.mrb[0].mxu0 %v2218
      %v3318 = vpop.f32.mrb[0].mxu0
      %v3319 = vadd.f32 %v3190, %v3318
      %v3320 = vpop.f32.mrb[0].mxu0
      %v3321 = vpop.f32.mrb[0].mxu0
      %v3322 = vadd.f32 %v3193, %v3321
      %v3323 = vpop.f32.mrb[0].mxu0
      %3324 = vmatprep.mubr.bf16.mxu0 %v2228
      %3325 = vmatmul.mubr.bf16.gmra.mrb[0].mxu0 %v2227
      %v3326 = vpop.f32.mrb[0].mxu0
      %v3327 = vadd.f32 %v3198, %v3326
      %v3328 = vpop.f32.mrb[0].mxu0
      %v3329 = vpop.f32.mrb[0].mxu0
      %v3330 = vadd.f32 %v3201, %v3329
      %v3331 = vpop.f32.mrb[0].mxu0
      %3332 = vmatprep.mubr.bf16.mxu0 %v2237
      %3333 = vmatmul.mubr.bf16.gmra.mrb[0].mxu0 %v2236
      %v3334 = vpop.f32.mrb[0].mxu0
      %v3335 = vadd.f32 %v3206, %v3334
      %v3336 = vpop.f32.mrb[0].mxu0
      %v3337 = vpop.f32.mrb[0].mxu0
      %v3338 = vadd.f32 %v3209, %v3337
      %v3339 = vpop.f32.mrb[0].mxu0
      %3340 = vmatprep.mubr.bf16.mxu0 %v2246
      %3341 = vmatmul.mubr.bf16.gmra.mrb[0].mxu0 %v2245
      %v3342 = vpop.f32.mrb[0].mxu0
      %v3343 = vadd.f32 %v3214, %v3342
      %v3344 = vpop.f32.mrb[0].mxu0
      %v3345 = vpop.f32.mrb[0].mxu0
      %v3346 = vadd.f32 %v3217, %v3345
      %v3347 = vpop.f32.mrb[0].mxu0
      %3348 = vmatprep.mubr.bf16.mxu0 %v2255
      %3349 = vmatmul.mubr.bf16.gmra.mrb[0].mxu0 %v2254
      %v3350 = vpop.f32.mrb[0].mxu0
      %v3351 = vadd.f32 %v3222, %v3350
      %v3352 = vpop.f32.mrb[0].mxu0
      %v3353 = vpop.f32.mrb[0].mxu0
      %v3354 = vadd.f32 %v3225, %v3353
      %v3355 = vpop.f32.mrb[0].mxu0
      %3356 = vmatprep.mubr.bf16.mxu0 %v2264
      %3357 = vmatmul.mubr.bf16.gmra.mrb[0].mxu0 %v2263
      %v3358 = vpop.f32.mrb[0].mxu0
      %v3359 = vadd.f32 %v3230, %v3358
      %v3360 = vpop.f32.mrb[0].mxu0
      %v3361 = vpop.f32.mrb[0].mxu0
      %v3362 = vadd.f32 %v3233, %v3361
      %v3363 = vpop.f32.mrb[0].mxu0
      %3364 = vdwg.mxu0
      %3365 = vmatprep.subr.bf16.mxu0 0
      %3366 = vmatpush1.bf16.msra.mxu0 %v2769
      %3367 = vmatprep.subr.bf16.mxu0 0
      %3368 = vmatpush1.bf16.msra.mxu0 %v2770
      %3369 = vmatprep.subr.bf16.mxu0 0
      %3370 = vmatpush1.bf16.msra.mxu0 %v2771
      %3371 = vmatprep.subr.bf16.mxu0 0
      %3372 = vmatpush1.bf16.msra.mxu0 %v2772
      %3373 = vmatprep.subr.bf16.mxu0 0
      %3374 = vmatpush1.bf16.msra.mxu0 %v2773
      %3375 = vmatprep.subr.bf16.mxu0 0
      %3376 = vmatpush1.bf16.msra.mxu0 %v2774
      %3377 = vmatprep.subr.bf16.mxu0 0
      %3378 = vmatpush1.bf16.msra.mxu0 %v2775
      %3379 = vmatprep.subr.bf16.mxu0 0
      %3380 = vmatpush1.bf16.msra.mxu0 %v2776
      %3381 = vmatprep.subr.bf16.mxu0 0
      %3382 = vmatpush1.bf16.msra.mxu0 0
      %3383 = vmatprep.subr.bf16.mxu0 0
      %3384 = vmatpush1.bf16.msra.mxu0 0
      %3385 = vmatprep.subr.bf16.mxu0 0
      %3386 = vmatpush1.bf16.msra.mxu0 0
      %3387 = vmatprep.subr.bf16.mxu0 0
      %3388 = vmatpush1.bf16.msra.mxu0 0
      %3389 = vmatprep.subr.bf16.mxu0 0
      %3390 = vmatpush1.bf16.msra.mxu0 0
      %3391 = vmatprep.subr.bf16.mxu0 0
      %3392 = vmatpush1.bf16.msra.mxu0 0
      %3393 = vmatprep.subr.bf16.mxu0 0
      %3394 = vmatpush1.bf16.msra.mxu0 0
      %3395 = vmatprep.subr.bf16.mxu0 0
      %3396 = vmatpush1.bf16.msra.mxu0 0
      %3397 = vmatprep.mubr.bf16.mxu0 0
      %3398 = vmatmul.mubr.bf16.gmra.mrb[0].mxu0 %v2166
      %v3399 = vpop.f32.mrb[0].mxu0
      %v3400 = vadd.f32 %v3271, %v3399
      %v3401 = vpop.f32.mrb[0].mxu0
      %v3402 = vpop.f32.mrb[0].mxu0
      %v3403 = vadd.f32 %v3274, %v3402
      %v3404 = vpop.f32.mrb[0].mxu0
      %3405 = vmatprep.mubr.bf16.mxu0 0
      %3406 = vmatmul.mubr.bf16.gmra.mrb[0].mxu0 %v2175
      %v3407 = vpop.f32.mrb[0].mxu0
      %v3408 = vadd.f32 %v3279, %v3407
      %v3409 = vpop.f32.mrb[0].mxu0
      %v3410 = vpop.f32.mrb[0].mxu0
      %v3411 = vadd.f32 %v3282, %v3410
      %v3412 = vpop.f32.mrb[0].mxu0
      %3413 = vmatprep.mubr.bf16.mxu0 0
      %3414 = vmatmul.mubr.bf16.gmra.mrb[0].mxu0 %v2184
      %v3415 = vpop.f32.mrb[0].mxu0
      %v3416 = vadd.f32 %v3287, %v3415
      %v3417 = vpop.f32.mrb[0].mxu0
      %v3418 = vpop.f32.mrb[0].mxu0
      %v3419 = vadd.f32 %v3290, %v3418
      %v3420 = vpop.f32.mrb[0].mxu0
      %3421 = vmatprep.mubr.bf16.mxu0 0
      %3422 = vmatmul.mubr.bf16.gmra.mrb[0].mxu0 %v2193
      %v3423 = vpop.f32.mrb[0].mxu0
      %v3424 = vadd.f32 %v3295, %v3423
      %v3425 = vpop.f32.mrb[0].mxu0
      %v3426 = vpop.f32.mrb[0].mxu0
      %v3427 = vadd.f32 %v3298, %v3426
      %v3428 = vpop.f32.mrb[0].mxu0
      %3429 = vmatprep.mubr.bf16.mxu0 0
      %3430 = vmatmul.mubr.bf16.gmra.mrb[0].mxu0 %v2202
      %v3431 = vpop.f32.mrb[0].mxu0
      %v3432 = vadd.f32 %v3303, %v3431
      %v3433 = vpop.f32.mrb[0].mxu0
      %v3434 = vpop.f32.mrb[0].mxu0
      %v3435 = vadd.f32 %v3306, %v3434
      %v3436 = vpop.f32.mrb[0].mxu0
      %3437 = vmatprep.mubr.bf16.mxu0 0
      %3438 = vmatmul.mubr.bf16.gmra.mrb[0].mxu0 %v2211
      %v3439 = vpop.f32.mrb[0].mxu0
      %v3440 = vadd.f32 %v3311, %v3439
      %v3441 = vpop.f32.mrb[0].mxu0
      %v3442 = vpop.f32.mrb[0].mxu0
      %v3443 = vadd.f32 %v3314, %v3442
      %v3444 = vpop.f32.mrb[0].mxu0
      %3445 = vmatprep.mubr.bf16.mxu0 0
      %3446 = vmatmul.mubr.bf16.gmra.mrb[0].mxu0 %v2220
      %v3447 = vpop.f32.mrb[0].mxu0
      %v3448 = vadd.f32 %v3319, %v3447
      %v3449 = vpop.f32.mrb[0].mxu0
      %v3450 = vpop.f32.mrb[0].mxu0
      %v3451 = vadd.f32 %v3322, %v3450
      %v3452 = vpop.f32.mrb[0].mxu0
      %3453 = vmatprep.mubr.bf16.mxu0 0
      %3454 = vmatmul.mubr.bf16.gmra.mrb[0].mxu0 %v2229
      %v3455 = vpop.f32.mrb[0].mxu0
      %v3456 = vadd.f32 %v3327, %v3455
      %v3457 = vpop.f32.mrb[0].mxu0
      %v3458 = vpop.f32.mrb[0].mxu0
      %v3459 = vadd.f32 %v3330, %v3458
      %v3460 = vpop.f32.mrb[0].mxu0
      %3461 = vmatprep.mubr.bf16.mxu0 0
      %3462 = vmatmul.mubr.bf16.gmra.mrb[0].mxu0 %v2238
      %v3463 = vpop.f32.mrb[0].mxu0
      %v3464 = vadd.f32 %v3335, %v3463
      %v3465 = vpop.f32.mrb[0].mxu0
      %v3466 = vpop.f32.mrb[0].mxu0
      %v3467 = vadd.f32 %v3338, %v3466
      %v3468 = vpop.f32.mrb[0].mxu0
      %3469 = vmatprep.mubr.bf16.mxu0 0
      %3470 = vmatmul.mubr.bf16.gmra.mrb[0].mxu0 %v2247
      %v3471 = vpop.f32.mrb[0].mxu0
      %v3472 = vadd.f32 %v3343, %v3471
      %v3473 = vpop.f32.mrb[0].mxu0
      %v3474 = vpop.f32.mrb[0].mxu0
      %v3475 = vadd.f32 %v3346, %v3474
      %v3476 = vpop.f32.mrb[0].mxu0
      %3477 = vmatprep.mubr.bf16.mxu0 0
      %3478 = vmatmul.mubr.bf16.gmra.mrb[0].mxu0 %v2256
      %v3479 = vpop.f32.mrb[0].mxu0
      %v3480 = vadd.f32 %v3351, %v3479
      %v3481 = vpop.f32.mrb[0].mxu0
      %v3482 = vpop.f32.mrb[0].mxu0
      %v3483 = vadd.f32 %v3354, %v3482
      %v3484 = vpop.f32.mrb[0].mxu0
      %3485 = vmatprep.mubr.bf16.mxu0 0
      %3486 = vmatmul.mubr.bf16.gmra.mrb[0].mxu0 %v2265
      %v3487 = vpop.f32.mrb[0].mxu0
      %v3488 = vadd.f32 %v3359, %v3487
      %v3489 = vpop.f32.mrb[0].mxu0
      %v3490 = vpop.f32.mrb[0].mxu0
      %v3491 = vadd.f32 %v3362, %v3490
      %v3492 = vpop.f32.mrb[0].mxu0
      %3493 = vdwg.mxu0
      %v3494 = vld [vmem:[%s663] sm:$0xff]
      %v3495 = vld [vmem:[%s663 + $0x8] sm:$0xff]
      %v3496 = vld [vmem:[%s663 + $0x10] sm:$0xff]
      %v3497 = vld [vmem:[%s663 + $0x18] sm:$0xff]
      %v3498 = vld [vmem:[%s663 + $0x20] sm:$0xff]
      %v3499 = vld [vmem:[%s663 + $0x28] sm:$0xff]
      %v3500 = vld [vmem:[%s663 + $0x30] sm:$0xff]
      %v3501 = vld [vmem:[%s663 + $0x38] sm:$0xff]
      %v3502 = vld [vmem:[%s663 + $0x40] sm:$0xff]
      %v3503 = vld [vmem:[%s663 + $0x48] sm:$0xff]
      %v3504 = vld [vmem:[%s663 + $0x50] sm:$0xff]
      %v3505 = vld [vmem:[%s663 + $0x58] sm:$0xff]
      %v3506 = vld [vmem:[%s663 + $0x60] sm:$0xff]
      %v3507 = vld [vmem:[%s663 + $0x68] sm:$0xff]
      %v3508 = vld [vmem:[%s663 + $0x70] sm:$0xff]
      %v3509 = vld [vmem:[%s663 + $0x78] sm:$0xff]
      %v3510 = vld [vmem:[%s663 + $0x80] sm:$0xff]
      %v3511 = vld [vmem:[%s663 + $0x88] sm:$0xff]
      %v3512 = vld [vmem:[%s663 + $0x90] sm:$0xff]
      %v3513 = vld [vmem:[%s663 + $0x98] sm:$0xff]
      %v3514 = vld [vmem:[%s663 + $0xa0] sm:$0xff]
      %v3515 = vld [vmem:[%s663 + $0xa8] sm:$0xff]
      %v3516 = vld [vmem:[%s663 + $0xb0] sm:$0xff]
      %v3517 = vld [vmem:[%s663 + $0xb8] sm:$0xff]
      %3519 = vset.pattern.permute.xlu0 0
      %3520 = vperm.xlu0 %3519, %v3494
      %v3521 = vpop.permute.xlu0 %3520
      %3524 = vset.pattern.permute.xlu0 0
      %3525 = vperm.xlu0 %3524, %v3495
      %v3526 = vpop.permute.xlu0 %3525
      %3529 = vset.pattern.permute.xlu0 0
      %3530 = vperm.xlu0 %3529, %v3496
      %v3531 = vpop.permute.xlu0 %3530
      %3534 = vset.pattern.permute.xlu0 0
      %3535 = vperm.xlu0 %3534, %v3497
      %v3536 = vpop.permute.xlu0 %3535
      %3539 = vset.pattern.permute.xlu0 0
      %3540 = vperm.xlu0 %3539, %v3498
      %v3541 = vpop.permute.xlu0 %3540
      %3544 = vset.pattern.permute.xlu0 0
      %3545 = vperm.xlu0 %3544, %v3499
      %v3546 = vpop.permute.xlu0 %3545
      %3549 = vset.pattern.permute.xlu0 0
      %3550 = vperm.xlu0 %3549, %v3500
      %v3551 = vpop.permute.xlu0 %3550
      %3554 = vset.pattern.permute.xlu0 0
      %3555 = vperm.xlu0 %3554, %v3501
      %v3556 = vpop.permute.xlu0 %3555
      %3559 = vset.pattern.permute.xlu0 0
      %3560 = vperm.xlu0 %3559, %v3502
      %v3561 = vpop.permute.xlu0 %3560
      %3564 = vset.pattern.permute.xlu0 0
      %3565 = vperm.xlu0 %3564, %v3503
      %v3566 = vpop.permute.xlu0 %3565
      %3569 = vset.pattern.permute.xlu0 0
      %3570 = vperm.xlu0 %3569, %v3504
      %v3571 = vpop.permute.xlu0 %3570
      %3574 = vset.pattern.permute.xlu0 0
      %3575 = vperm.xlu0 %3574, %v3505
      %v3576 = vpop.permute.xlu0 %3575
      %3579 = vset.pattern.permute.xlu0 0
      %3580 = vperm.xlu0 %3579, %v3506
      %v3581 = vpop.permute.xlu0 %3580
      %3584 = vset.pattern.permute.xlu0 0
      %3585 = vperm.xlu0 %3584, %v3507
      %v3586 = vpop.permute.xlu0 %3585
      %3589 = vset.pattern.permute.xlu0 0
      %3590 = vperm.xlu0 %3589, %v3508
      %v3591 = vpop.permute.xlu0 %3590
      %3594 = vset.pattern.permute.xlu0 0
      %3595 = vperm.xlu0 %3594, %v3509
      %v3596 = vpop.permute.xlu0 %3595
      %3599 = vset.pattern.permute.xlu0 0
      %3600 = vperm.xlu0 %3599, %v3510
      %v3601 = vpop.permute.xlu0 %3600
      %3604 = vset.pattern.permute.xlu0 0
      %3605 = vperm.xlu0 %3604, %v3511
      %v3606 = vpop.permute.xlu0 %3605
      %3609 = vset.pattern.permute.xlu0 0
      %3610 = vperm.xlu0 %3609, %v3512
      %v3611 = vpop.permute.xlu0 %3610
      %3614 = vset.pattern.permute.xlu0 0
      %3615 = vperm.xlu0 %3614, %v3513
      %v3616 = vpop.permute.xlu0 %3615
      %3619 = vset.pattern.permute.xlu0 0
      %3620 = vperm.xlu0 %3619, %v3514
      %v3621 = vpop.permute.xlu0 %3620
      %3624 = vset.pattern.permute.xlu0 0
      %3625 = vperm.xlu0 %3624, %v3515
      %v3626 = vpop.permute.xlu0 %3625
      %3629 = vset.pattern.permute.xlu0 0
      %3630 = vperm.xlu0 %3629, %v3516
      %v3631 = vpop.permute.xlu0 %3630
      %3634 = vset.pattern.permute.xlu0 0
      %3635 = vperm.xlu0 %3634, %v3517
      %v3636 = vpop.permute.xlu0 %3635
      %v3638 = vmul.f32 %v3400, %v3521
      %v3639 = vmul.f32 %v3403, %v3526
      %v3640 = vmul.f32 %v3408, %v3531
      %v3641 = vmul.f32 %v3411, %v3536
      %v3642 = vmul.f32 %v3416, %v3541
      %v3643 = vmul.f32 %v3419, %v3546
      %v3644 = vmul.f32 %v3424, %v3551
      %v3645 = vmul.f32 %v3427, %v3556
      %v3646 = vmul.f32 %v3432, %v3561
      %v3647 = vmul.f32 %v3435, %v3566
      %v3648 = vmul.f32 %v3440, %v3571
      %v3649 = vmul.f32 %v3443, %v3576
      %v3650 = vmul.f32 %v3448, %v3581
      %v3651 = vmul.f32 %v3451, %v3586
      %v3652 = vmul.f32 %v3456, %v3591
      %v3653 = vmul.f32 %v3459, %v3596
      %v3654 = vmul.f32 %v3464, %v3601
      %v3655 = vmul.f32 %v3467, %v3606
      %v3656 = vmul.f32 %v3472, %v3611
      %v3657 = vmul.f32 %v3475, %v3616
      %v3658 = vmul.f32 %v3480, %v3621
      %v3659 = vmul.f32 %v3483, %v3626
      %v3660 = vmul.f32 %v3488, %v3631
      %v3661 = vmul.f32 %v3491, %v3636
      %3662 = vst [vmem:[%s687] sm:$0xff] %v3638
      %3663 = vst [vmem:[%s687 + $0x8] sm:$0xff] %v3639
      %3664 = vst [vmem:[%s687 + $0x10] sm:$0xff] %v3640
      %3665 = vst [vmem:[%s687 + $0x18] sm:$0xff] %v3641
      %3666 = vst [vmem:[%s687 + $0x20] sm:$0xff] %v3642
      %3667 = vst [vmem:[%s687 + $0x28] sm:$0xff] %v3643
      %3668 = vst [vmem:[%s687 + $0x30] sm:$0xff] %v3644
      %3669 = vst [vmem:[%s687 + $0x38] sm:$0xff] %v3645
      %3670 = vst [vmem:[%s687 + $0x40] sm:$0xff] %v3646
      %3671 = vst [vmem:[%s687 + $0x48] sm:$0xff] %v3647
      %3672 = vst [vmem:[%s687 + $0x50] sm:$0xff] %v3648
      %3673 = vst [vmem:[%s687 + $0x58] sm:$0xff] %v3649
      %3674 = vst [vmem:[%s687 + $0x60] sm:$0xff] %v3650
      %3675 = vst [vmem:[%s687 + $0x68] sm:$0xff] %v3651
      %3676 = vst [vmem:[%s687 + $0x70] sm:$0xff] %v3652
      %3677 = vst [vmem:[%s687 + $0x78] sm:$0xff] %v3653
      %3678 = vst [vmem:[%s687 + $0x80] sm:$0xff] %v3654
      %3679 = vst [vmem:[%s687 + $0x88] sm:$0xff] %v3655
      %3680 = vst [vmem:[%s687 + $0x90] sm:$0xff] %v3656
      %3681 = vst [vmem:[%s687 + $0x98] sm:$0xff] %v3657
      %3682 = vst [vmem:[%s687 + $0xa0] sm:$0xff] %v3658
      %3683 = vst [vmem:[%s687 + $0xa8] sm:$0xff] %v3659
      %3684 = vst [vmem:[%s687 + $0xb0] sm:$0xff] %v3660
      %3685 = vst [vmem:[%s687 + $0xb8] sm:$0xff] %v3661
      %v3686 = vadd.f32 %v3638, %v3639
      %v3687 = vadd.f32 %v3686, %v3640
      %v3688 = vadd.f32 %v3687, %v3641
      %v3689 = vadd.f32 %v3688, %v3642
      %v3690 = vadd.f32 %v3689, %v3643
      %v3691 = vadd.f32 %v3690, %v3644
      %v3692 = vadd.f32 %v3691, %v3645
      %v3693 = vadd.f32 %v3692, %v3646
      %v3694 = vadd.f32 %v3693, %v3647
      %v3695 = vadd.f32 %v3694, %v3648
      %v3696 = vadd.f32 %v3695, %v3649
      %v3697 = vadd.f32 %v3696, %v3650
      %v3698 = vadd.f32 %v3697, %v3651
      %v3699 = vadd.f32 %v3698, %v3652
      %v3700 = vadd.f32 %v3699, %v3653
      %v3701 = vadd.f32 %v3700, %v3654
      %v3702 = vadd.f32 %v3701, %v3655
      %v3703 = vadd.f32 %v3702, %v3656
      %v3704 = vadd.f32 %v3703, %v3657
      %v3705 = vadd.f32 %v3704, %v3658
      %v3706 = vadd.f32 %v3705, %v3659
      %v3707 = vadd.f32 %v3706, %v3660
      %v3708 = vadd.f32 %v3707, %v3661
      %v3709 = vrot.slane %v3708, 4
      %v3710 = vadd.f32 %v3708, %v3709
      %v3711 = vrot.slane %v3710, 2
      %v3712 = vadd.f32 %v3710, %v3711
      %v3713 = vrot.slane %v3712, 1
      %v3714 = vadd.f32 %v3712, %v3713
      %3715 = vst [vmem:[%s694] sm:$0x1] %v3714
      %v3716 = vmul.f32 %v3638, %v3638
      %v3717 = vmul.f32 %v3639, %v3639
      %v3718 = vmul.f32 %v3640, %v3640
      %v3719 = vmul.f32 %v3641, %v3641
      %v3720 = vmul.f32 %v3642, %v3642
      %v3721 = vmul.f32 %v3643, %v3643
      %v3722 = vmul.f32 %v3644, %v3644
      %v3723 = vmul.f32 %v3645, %v3645
      %v3724 = vmul.f32 %v3646, %v3646
      %v3725 = vmul.f32 %v3647, %v3647
      %v3726 = vmul.f32 %v3648, %v3648
      %v3727 = vmul.f32 %v3649, %v3649
      %v3728 = vmul.f32 %v3650, %v3650
      %v3729 = vmul.f32 %v3651, %v3651
      %v3730 = vmul.f32 %v3652, %v3652
      %v3731 = vmul.f32 %v3653, %v3653
      %v3732 = vmul.f32 %v3654, %v3654
      %v3733 = vmul.f32 %v3655, %v3655
      %v3734 = vmul.f32 %v3656, %v3656
      %v3735 = vmul.f32 %v3657, %v3657
      %v3736 = vmul.f32 %v3658, %v3658
      %v3737 = vmul.f32 %v3659, %v3659
      %v3738 = vmul.f32 %v3660, %v3660
      %v3739 = vmul.f32 %v3661, %v3661
      %v3740 = vadd.f32 %v3716, %v3717
      %v3741 = vadd.f32 %v3740, %v3718
      %v3742 = vadd.f32 %v3741, %v3719
      %v3743 = vadd.f32 %v3742, %v3720
      %v3744 = vadd.f32 %v3743, %v3721
      %v3745 = vadd.f32 %v3744, %v3722
      %v3746 = vadd.f32 %v3745, %v3723
      %v3747 = vadd.f32 %v3746, %v3724
      %v3748 = vadd.f32 %v3747, %v3725
      %v3749 = vadd.f32 %v3748, %v3726
      %v3750 = vadd.f32 %v3749, %v3727
      %v3751 = vadd.f32 %v3750, %v3728
      %v3752 = vadd.f32 %v3751, %v3729
      %v3753 = vadd.f32 %v3752, %v3730
      %v3754 = vadd.f32 %v3753, %v3731
      %v3755 = vadd.f32 %v3754, %v3732
      %v3756 = vadd.f32 %v3755, %v3733
      %v3757 = vadd.f32 %v3756, %v3734
      %v3758 = vadd.f32 %v3757, %v3735
      %v3759 = vadd.f32 %v3758, %v3736
      %v3760 = vadd.f32 %v3759, %v3737
      %v3761 = vadd.f32 %v3760, %v3738
      %v3762 = vadd.f32 %v3761, %v3739
      %v3763 = vrot.slane %v3762, 4
      %v3764 = vadd.f32 %v3762, %v3763
      %v3765 = vrot.slane %v3764, 2
      %v3766 = vadd.f32 %v3764, %v3765
      %v3767 = vrot.slane %v3766, 1
      %v3768 = vadd.f32 %v3766, %v3767
      %3769 = vst [vmem:[%s694 + $0x1] sm:$0x1] %v3768
      %s3770 = smul.u32 24, %s28
      %p3771 = scmp.lt.s32.totalorder %s27, 1
      %s3772 = scalar_select %p3771, %s27, 1
      %p3773 = scmp.lt.s32.totalorder %s3770, 47
      %s3774 = scalar_select %p3773, %s3770, 47
      %s3775 = smul.addr %s3772, 48
      %s3776 = sadd.s32 %s3774, %s3775
      %s3777 = smul.addr %s3776, 8
      %s3778 = scalar_lea.vmem %s10, %s3777
      %s3779 = smul.u32 %s27, 2
      %s3780 = sadd.s32 %s3779, %s28
      %p3781 = scmp.lt.s32.totalorder %s3780, 3
      %s3782 = scalar_select %p3781, %s3780, 3
      %s3783 = smul.addr %s3782, 2
      %s3784 = scalar_lea.vmem %s11, %s3783
      // Predicated region
      $region61: #{resblock_forward.4} parent=59 // pred_check
        %p3785 = pneg %p333
      $region62: #{resblock_forward.4} parent=59 // pred_check_branch
        %3787 = sbr.rel (%p3785) target = $region64
      $region63: #{resblock_forward.4} parent=59 // pred_region
        %s3788 = smul.u32 24, %s28
      $region64: #{resblock_forward.4} parent=59 // pred_fallthru
        _
      // Predicated region
      $region65: #{resblock_forward.4} parent=59 // pred_check
        %p3789 = pneg %p363
      $region66: #{resblock_forward.4} parent=59 // pred_check_branch
        %3791 = sbr.rel (%p3789) target = $region68
      $region67: #{resblock_forward.4} parent=59 // pred_region
        %s3792 = smul.u32 %s27, 2
        %s3793 = sadd.s32 %s3792, %s28
      $region68: #{resblock_forward.4} parent=59 // pred_fallthru
        _
    $region60: #{resblock_forward.4} parent=5 // pred_fallthru
      _
    %p3794 = scmp.le.s32.totalorder 2, %s18
    // Predicated region
    $region69: #{resblock_forward.4} parent=5 // pred_check
      %p3795 = pneg %p3794
    $region70: #{resblock_forward.4} parent=5 // pred_check_branch
      %3797 = sbr.rel (%p3795) target = $region72
    $region71: #{resblock_forward.4} parent=5 // pred_region
      %s3798 = ssub.s32 %s18, 2
      // Predicated region
      $region73: #{resblock_forward.4} parent=71 // pred_check
        %p3799 = pneg %p339
      $region74: #{resblock_forward.4} parent=71 // pred_check_branch
        %3801 = sbr.rel (%p3799) target = $region76
      $region75: #{resblock_forward.4} parent=71 // pred_region
        %s3802 = smul.u32 24, %s30
        %p3803 = scmp.lt.s32.totalorder %s29, 1
        %s3804 = scalar_select %p3803, %s29, 1
        %p3805 = scmp.lt.s32.totalorder %s3802, 47
        %s3806 = scalar_select %p3805, %s3802, 47
        %s3807 = smul.addr %s3804, 48
        %s3808 = sadd.s32 %s3806, %s3807
        %s3809 = smul.addr %s3808, 8
        %s3810 = scalar_lea.vmem %s10, %s3809
      $region76: #{resblock_forward.4} parent=71 // pred_fallthru
        _
      // Predicated region
      $region77: #{resblock_forward.4} parent=71 // pred_check
        %p3811 = pneg %p369
      $region78: #{resblock_forward.4} parent=71 // pred_check_branch
        %3813 = sbr.rel (%p3811) target = $region80
      $region79: #{resblock_forward.4} parent=71 // pred_region
        %s3814 = smul.u32 %s29, 2
        %s3815 = sadd.s32 %s3814, %s30
        %p3816 = scmp.lt.s32.totalorder %s3815, 3
        %s3817 = scalar_select %p3816, %s3815, 3
        %s3818 = smul.addr %s3817, 2
        %s3819 = scalar_lea.vmem %s11, %s3818
      $region80: #{resblock_forward.4} parent=71 // pred_fallthru
        _
    $region72: #{resblock_forward.4} parent=5 // pred_fallthru
      _
  $region6: #{resblock_forward.4} parent=0 // loop_footer
    %s22 = sadd.s32 1, %s18
  $region7: #{resblock_forward.4} parent=0 // loop_footer_branch
    %17 = sbr.rel target = $region3
  $region8: #{resblock_forward.4} parent=0 // loop_exit
    _

</llo_original>
